<compile_context>
chip_gen: v7x
topology: tpu7x:2x2x1
jax: 0.10.0
libtpu: 0.0.40
codegen_flags: <defaults>
</compile_context>

<pallas_src>
import math

import jax
import jax.numpy as jnp
from jax import lax
from jax.experimental import pallas as pl
from jax.experimental.pallas import tpu as pltpu

# -------------------- config (small synthetic sizes) --------------------
DEPTH      = 2
HIDDEN     = 32
NUM_HEADS  = 4
HEAD_DIM   = HIDDEN // NUM_HEADS
FFN_SIZE   = 64
GLIMPSES   = 2
EMBED_DIM  = 32
TOKEN_SIZE = 50
BATCH      = 2
SEQ        = 8
LN_EPS     = 1e-6
LANES      = 128
EXACT_DIV  = False   # True -> exact 1/x (bit-parity with torch softmax divide)

# -------------------- packed-slab layout (static row offsets) --------------------
# weight slab: each matrix stored as (rows, cols<=128) at lane 0, rows 8-aligned.
W_IH_OFF  = 0                           # (E, 3H)  input proj, gate order r|z|n
W_HR_OFF  = W_IH_OFF + EMBED_DIM        # (H, H)
W_HZ_OFF  = W_HR_OFF + HIDDEN
W_HN_OFF  = W_HZ_OFF + HIDDEN
SA_W_OFF  = W_HN_OFF + HIDDEN
SA_W_QKV  = 0                           # (H, 3H)
SA_W_MRG  = HIDDEN                      # (H, H), rows grouped per head (HEAD_DIM rows each)
SA_W_FF1  = 2 * HIDDEN                  # (H, F)
SA_W_FF2  = 3 * HIDDEN                  # (F, H)
SA_W_ROWS = 3 * HIDDEN + FFN_SIZE
AF_W_OFF  = SA_W_OFF + DEPTH * SA_W_ROWS
AF_W_FC   = 0                           # (H, H)
AF_W_G    = HIDDEN                      # (H, G)
AF_W_MRG  = 2 * HIDDEN                  # (G*H, H), glimpse g at rows g*H
W_ROWS    = AF_W_OFF + 2 * HIDDEN + GLIMPSES * HIDDEN       # = 576

# bias slab: one bias vector per row (lane 0-padded to 128 lanes).
B_GRU_ROW = 0                           # width 3H: [b_ir+b_hr | b_iz+b_hz | b_in]
B_HN_ROW  = 1                           # width H
SA_B_OFF  = 2
(SA_B_QKV, SA_B_MRG, SA_B_FF1, SA_B_FF2,
 SA_B_G1, SA_B_BE1, SA_B_G2, SA_B_BE2) = range(8)
SA_B_ROWS = 8
AF_B_OFF  = SA_B_OFF + DEPTH * SA_B_ROWS
AF_B_FC, AF_B_G, AF_B_MRG = 0, 1, 2
B_ROWS    = -(-(AF_B_OFF + 3) // 8) * 8                      # = 24


# -------------------- kernel helpers --------------------
def _recip(x):
    if EXACT_DIV:
        return 1.0 / x
    return pl.reciprocal(x, approx=True)


def _layer_norm(x2, gamma, beta):
    # MCAN/crec-style LayerNorm: unbiased std, divide by (std + eps)
    mean = jnp.mean(x2, axis=-1, keepdims=True)
    d = x2 - mean
    var = jnp.sum(d * d, axis=-1, keepdims=True) / (x2.shape[-1] - 1)
    return gamma * d / (jnp.sqrt(var) + LN_EPS) + beta


# -------------------- fused forward kernel (whole batch in one block) --------------------
def _fused_kernel(emb_ref, amask_ref, pcol_ref, w_ref, b_ref, out_ref, feat_scr):
    H, E, F, G = HIDDEN, EMBED_DIM, FFN_SIZE, GLIMPSES
    NH, HD = NUM_HEADS, HEAD_DIM
    B, T, BT = BATCH, SEQ, BATCH * SEQ
    scale = 1.0 / math.sqrt(HD)

    def Wm(row, nrows, ncols):     # static sub-block load from the weight slab
        return w_ref[row:row + nrows, 0:ncols]

    def Bv(row, ncols):            # static 1-row load from the bias slab
        return b_ref[row:row + 1, 0:ncols]

    xf = emb_ref[...]                              # (B*T, E)
    maskbig = amask_ref[...] > 0.0                 # (B*T, B*T)  True = masked (pad key or cross-batch)
    padcol = pcol_ref[...] > 0.0                   # (B, T, 1)   True = padded position

    # ---------------- GRU: input projections hoisted, recurrence batched over B ------------
    xi = jnp.dot(xf, Wm(W_IH_OFF, E, 3 * H),
                 preferred_element_type=jnp.float32) + Bv(B_GRU_ROW, 3 * H)     # (B*T, 3H)
    xi = xi.reshape(B, T, 3 * H)
    xi_r = xi[:, :, 0:H]                            # one-time lane splits (not on the serial chain)
    xi_z = xi[:, :, H:2 * H]
    xi_n = xi[:, :, 2 * H:3 * H]
    whr = Wm(W_HR_OFF, H, H)
    whz = Wm(W_HZ_OFF, H, H)
    whn = Wm(W_HN_OFF, H, H)
    bhn = Bv(B_HN_ROW, H)
    h = jnp.zeros((B, H), jnp.float32)
    for t in range(T):                              # T=8, static unroll; batch rows in sublanes
        r = jax.nn.sigmoid(xi_r[:, t, :] + jnp.dot(h, whr, preferred_element_type=jnp.float32))
        z = jax.nn.sigmoid(xi_z[:, t, :] + jnp.dot(h, whz, preferred_element_type=jnp.float32))
        n = jnp.tanh(xi_n[:, t, :] +
                     r * (jnp.dot(h, whn, preferred_element_type=jnp.float32) + bhn))
        h = (1.0 - z) * n + z * h
        feat_scr[:, t:t + 1, :] = h[:, None, :]     # write straight into VMEM scratch
    featf = feat_scr[...].reshape(BT, H)            # (B*T, H), tile-aligned reshape

    # ---------------- SA layers (flattened batch, 2-D matmuls only) --------------------------
    for l in range(DEPTH):
        wo = SA_W_OFF + l * SA_W_ROWS
        bo = SA_B_OFF + l * SA_B_ROWS
        qkv = jnp.dot(featf, Wm(wo + SA_W_QKV, H, 3 * H),
                      preferred_element_type=jnp.float32) + Bv(bo + SA_B_QKV, 3 * H)   # (B*T, 3H)
        acc = None
        for hh in range(NH):
            q = qkv[:, hh * HD:(hh + 1) * HD]                       # (B*T, hd)
            k = qkv[:, H + hh * HD:H + (hh + 1) * HD]
            v = qkv[:, 2 * H + hh * HD:2 * H + (hh + 1) * HD]
            s = lax.dot_general(q, k, (((1,), (1,)), ((), ())),
                                preferred_element_type=jnp.float32) * scale             # (B*T, B*T)
            s = jnp.where(maskbig, -1e9, s)        # pad keys AND cross-batch entries -> -1e9
            s = s - jnp.max(s, axis=-1, keepdims=True)
            e = jnp.exp(s)
            a = e * _recip(jnp.sum(e, axis=-1, keepdims=True))
            ctx = jnp.dot(a, v, preferred_element_type=jnp.float32)                     # (B*T, hd)
            part = jnp.dot(ctx, Wm(wo + SA_W_MRG + hh * HD, HD, H),
                           preferred_element_type=jnp.float32)                          # (B*T, H)
            acc = part if acc is None else acc + part
        atted = acc + Bv(bo + SA_B_MRG, H)
        y = _layer_norm(featf + atted, Bv(bo + SA_B_G1, H), Bv(bo + SA_B_BE1, H))
        ff = jnp.maximum(jnp.dot(y, Wm(wo + SA_W_FF1, H, F),
                                 preferred_element_type=jnp.float32) + Bv(bo + SA_B_FF1, F), 0.0)
        ff = jnp.dot(ff, Wm(wo + SA_W_FF2, F, H),
                     preferred_element_type=jnp.float32) + Bv(bo + SA_B_FF2, H)
        featf = _layer_norm(y + ff, Bv(bo + SA_B_G2, H), Bv(bo + SA_B_BE2, H))

    # ---------------- AttFlat ---------------------------------------------------------------
    hmid = jnp.maximum(jnp.dot(featf, Wm(AF_W_OFF + AF_W_FC, H, H),
                               preferred_element_type=jnp.float32) + Bv(AF_B_OFF + AF_B_FC, H), 0.0)
    att = jnp.dot(hmid, Wm(AF_W_OFF + AF_W_G, H, G),
                  preferred_element_type=jnp.float32) + Bv(AF_B_OFF + AF_B_G, G)        # (B*T, G)
    att = att.reshape(B, T, G)
    att = jnp.where(padcol, -1e9, att)
    att = att - jnp.max(att, axis=1, keepdims=True)
    e = jnp.exp(att)
    att = e * _recip(jnp.sum(e, axis=1, keepdims=True))                                  # softmax over T
    feat3 = featf.reshape(B, T, H)
    flat = Bv(AF_B_OFF + AF_B_MRG, H)                                                    # (1, H)
    for gi in range(G):                                                                  # G=2, static
        pooled = jnp.sum(att[:, :, gi:gi + 1] * feat3, axis=1)                           # (B, H)
        flat = flat + jnp.dot(pooled, Wm(AF_W_OFF + AF_W_MRG + gi * HIDDEN, H, H),
                              preferred_element_type=jnp.float32)

    # ---------------- single output slab: rows [0,B*T) = lang, rows [B*T,B*T+B) = flat -------
    out_ref[0:BT, :] = featf
    out_ref[BT:BT + B, :] = flat


# -------------------- pallas_call wrapper --------------------
def fused_forward(emb_flat, attn_mask, pad_col, wslab, bslab):
    BT = BATCH * SEQ
    return pl.pallas_call(
        _fused_kernel,
        grid=(1,),
        out_shape=jax.ShapeDtypeStruct((BT + BATCH, HIDDEN), jnp.float32),
        in_specs=[
            pl.BlockSpec(emb_flat.shape, lambda i: (0, 0)),
            pl.BlockSpec(attn_mask.shape, lambda i: (0, 0)),
            pl.BlockSpec(pad_col.shape, lambda i: (0, 0, 0)),
            pl.BlockSpec(wslab.shape, lambda i: (0, 0)),
            pl.BlockSpec(bslab.shape, lambda i: (0, 0)),
        ],
        out_specs=pl.BlockSpec((BT + BATCH, HIDDEN), lambda i: (0, 0)),
        scratch_shapes=[pltpu.VMEM((BATCH, SEQ, HIDDEN), jnp.float32)],
        compiler_params=pltpu.CompilerParams(dimension_semantics=("arbitrary",)),
    )(emb_flat, attn_mask, pad_col, wslab, bslab)


# -------------------- one-time parameter packing (runs at init, NOT in the jitted forward) --
def pack_params(params):
    wslab = jnp.zeros((W_ROWS, LANES), jnp.float32)
    bslab = jnp.zeros((B_ROWS, LANES), jnp.float32)

    def put(slab, row, mat):
        mat = jnp.asarray(mat, jnp.float32)
        return slab.at[row:row + mat.shape[0], 0:mat.shape[1]].set(mat)

    g = params["gru"]
    wslab = put(wslab, W_IH_OFF, jnp.concatenate([g["wir"], g["wiz"], g["win"]], axis=1))
    wslab = put(wslab, W_HR_OFF, g["whr"])
    wslab = put(wslab, W_HZ_OFF, g["whz"])
    wslab = put(wslab, W_HN_OFF, g["whn"])
    bslab = put(bslab, B_GRU_ROW,
                jnp.concatenate([g["bir"] + g["bhr"], g["biz"] + g["bhz"], g["bin"]], axis=1))
    bslab = put(bslab, B_HN_ROW, g["bhn"])

    def heads_in(w):   # (nh, H, hd) -> (H, nh*hd), head-major columns
        return jnp.transpose(w, (1, 0, 2)).reshape(HIDDEN, NUM_HEADS * HEAD_DIM)

    for l, p in enumerate(params["sa"]):
        wo = SA_W_OFF + l * SA_W_ROWS
        bo = SA_B_OFF + l * SA_B_ROWS
        wslab = put(wslab, wo + SA_W_QKV,
                    jnp.concatenate([heads_in(p["wq"]), heads_in(p["wk"]), heads_in(p["wv"])], axis=1))
        wslab = put(wslab, wo + SA_W_MRG, p["wm"].reshape(NUM_HEADS * HEAD_DIM, HIDDEN))
        wslab = put(wslab, wo + SA_W_FF1, p["w1"])
        wslab = put(wslab, wo + SA_W_FF2, p["w2"])
        bslab = put(bslab, bo + SA_B_QKV,
                    jnp.concatenate([p["bq"].reshape(1, -1), p["bk"].reshape(1, -1),
                                     p["bv"].reshape(1, -1)], axis=1))
        bslab = put(bslab, bo + SA_B_MRG, p["bm"])
        bslab = put(bslab, bo + SA_B_FF1, p["b1"])
        bslab = put(bslab, bo + SA_B_FF2, p["b2"])
        bslab = put(bslab, bo + SA_B_G1, p["g1"])
        bslab = put(bslab, bo + SA_B_BE1, p["be1"])
        bslab = put(bslab, bo + SA_B_G2, p["g2"])
        bslab = put(bslab, bo + SA_B_BE2, p["be2"])

    af = params["attflat"]
    wslab = put(wslab, AF_W_OFF + AF_W_FC, af["wfc"])
    wslab = put(wslab, AF_W_OFF + AF_W_G, af["wg"])
    for gi in range(GLIMPSES):
        wslab = put(wslab, AF_W_OFF + AF_W_MRG + gi * HIDDEN, af["wmerge"][gi])
    bslab = put(bslab, AF_B_OFF + AF_B_FC, af["bfc"])
    bslab = put(bslab, AF_B_OFF + AF_B_G, af["bg"])
    bslab = put(bslab, AF_B_OFF + AF_B_MRG, af["bmerge"])

    return params["embedding"].astype(jnp.float32), wslab, bslab


# -------------------- parameters (deterministic synthetic init, PyTorch layout) -------------
def init_params(key):
    keys = jax.random.split(key, 64)
    it = iter(keys)

    def u(shape, scale=0.1):
        return jax.random.uniform(next(it), shape, jnp.float32, -scale, scale)

    params = {"embedding": u((TOKEN_SIZE, EMBED_DIM), 0.5)}
    params["gru"] = {
        "wir": u((EMBED_DIM, HIDDEN)), "wiz": u((EMBED_DIM, HIDDEN)), "win": u((EMBED_DIM, HIDDEN)),
        "whr": u((HIDDEN, HIDDEN)),    "whz": u((HIDDEN, HIDDEN)),    "whn": u((HIDDEN, HIDDEN)),
        "bir": u((1, HIDDEN)), "biz": u((1, HIDDEN)), "bin": u((1, HIDDEN)),
        "bhr": u((1, HIDDEN)), "bhz": u((1, HIDDEN)), "bhn": u((1, HIDDEN)),
    }
    sa_layers = []
    for _ in range(DEPTH):
        sa_layers.append({
            "wq": u((NUM_HEADS, HIDDEN, HEAD_DIM)), "bq": u((NUM_HEADS, 1, HEAD_DIM)),
            "wk": u((NUM_HEADS, HIDDEN, HEAD_DIM)), "bk": u((NUM_HEADS, 1, HEAD_DIM)),
            "wv": u((NUM_HEADS, HIDDEN, HEAD_DIM)), "bv": u((NUM_HEADS, 1, HEAD_DIM)),
            "wm": u((NUM_HEADS, HEAD_DIM, HIDDEN)), "bm": u((1, HIDDEN)),
            "w1": u((HIDDEN, FFN_SIZE)), "b1": u((1, FFN_SIZE)),
            "w2": u((FFN_SIZE, HIDDEN)), "b2": u((1, HIDDEN)),
            "g1": jnp.ones((1, HIDDEN), jnp.float32), "be1": jnp.zeros((1, HIDDEN), jnp.float32),
            "g2": jnp.ones((1, HIDDEN), jnp.float32), "be2": jnp.zeros((1, HIDDEN), jnp.float32),
        })
    params["sa"] = sa_layers
    params["attflat"] = {
        "wfc": u((HIDDEN, HIDDEN)), "bfc": u((1, HIDDEN)),
        "wg": u((HIDDEN, GLIMPSES)), "bg": u((1, GLIMPSES)),
        "wmerge": u((GLIMPSES, HIDDEN, HIDDEN)), "bmerge": u((1, HIDDEN)),
    }
    return params


# -------------------- full forward (jitted; packed weights are precomputed inputs) ----------
def lstm_sa_forward(ques_ix, emb_table, wslab, bslab):
    B, T = ques_ix.shape
    # make_mask(ques_ix.unsqueeze(2)) -> (B, 1, 1, T) bool, True where token id == 0
    pad = (jnp.sum(jnp.abs(ques_ix[:, :, None]), axis=-1) == 0)                 # (B, T)
    lang_feat_mask = pad[:, None, None, :]                                       # (B, 1, 1, T)

    # (B*T, B*T) attention mask: masked if key position is padded OR belongs to another batch
    # element (lets the kernel batch attention as plain 2-D matmuls; masked weights are exactly 0).
    batch_id = jnp.arange(B * T, dtype=jnp.int32) // T
    cross = batch_id[:, None] != batch_id[None, :]
    attn_mask = (pad.reshape(-1)[None, :] | cross).astype(jnp.float32)           # (B*T, B*T)
    pad_col = pad.astype(jnp.float32)[:, :, None]                                # (B, T, 1)

    # TODO(synk): token-id gather (embedding lookup) has no clean in-kernel Pallas equivalent
    # at these sizes; kept as plain-JAX glue.
    emb = jnp.take(emb_table, ques_ix, axis=0).astype(jnp.float32)               # (B, T, E)
    emb_flat = emb.reshape(B * T, EMBED_DIM)

    out = fused_forward(emb_flat, attn_mask, pad_col, wslab, bslab)              # (B*T+B, H)
    lang_feat = out[:B * T].reshape(B, T, HIDDEN)
    flat_lang_feat = out[B * T:]
    return {"flat_lang_feat": flat_lang_feat,
            "lang_feat": lang_feat,
            "lang_feat_mask": lang_feat_mask}


if __name__ == "__main__":
    key = jax.random.PRNGKey(0)
    pkey, dkey = jax.random.split(key)
    params = init_params(pkey)
    emb_table, wslab, bslab = pack_params(params)   # one-time repack, outside the jitted forward

    ques_ix = jax.random.randint(dkey, (BATCH, SEQ), 1, TOKEN_SIZE, dtype=jnp.int32)
    # add some padding tokens (id 0) to exercise the mask
    ques_ix = ques_ix.at[0, 6:].set(0)
    ques_ix = ques_ix.at[1, 4:].set(0)

    fwd = jax.jit(lstm_sa_forward)
    out = fwd(ques_ix, emb_table, wslab, bslab)
    jax.block_until_ready(out["flat_lang_feat"])
    jax.block_until_ready(out["lang_feat"])

    assert out["flat_lang_feat"].shape == (BATCH, HIDDEN)
    assert out["lang_feat"].shape == (BATCH, SEQ, HIDDEN)
    assert out["lang_feat_mask"].shape == (BATCH, 1, 1, SEQ)
    assert bool(jnp.all(jnp.isfinite(out["flat_lang_feat"])))
    assert bool(jnp.all(jnp.isfinite(out["lang_feat"])))
    print("KERNEL_OK")
</pallas_src>

<mosaic_0001>
module attributes {stable_mosaic.version = 11 : i64} {
  func.func @_fused_kernel(%arg0: i32, %arg1: memref<16x32xf32, #tpu.memory_space<vmem>>, %arg2: memref<16x16xf32, #tpu.memory_space<vmem>>, %arg3: memref<2x8x1xf32, #tpu.memory_space<vmem>>, %arg4: memref<576x128xf32, #tpu.memory_space<vmem>>, %arg5: memref<24x128xf32, #tpu.memory_space<vmem>>, %arg6: memref<18x32xf32, #tpu.memory_space<vmem>>, %arg7: memref<2x8x32xf32, #tpu.memory_space<vmem>>) attributes {dimension_semantics = [#tpu.dimension_semantics<arbitrary>], iteration_bounds = array<i64: 1>, scalar_prefetch = 0 : i64, scratch_operands = 1 : i64, tpu.core_type = #tpu.core_type<tc>, window_params = [{pipeline_mode = #tpu.pipeline_mode<synchronous>, transform_indices = @transform_0, window_bounds = array<i64: 16, 32>}, {pipeline_mode = #tpu.pipeline_mode<synchronous>, transform_indices = @transform_1, window_bounds = array<i64: 16, 16>}, {pipeline_mode = #tpu.pipeline_mode<synchronous>, transform_indices = @transform_2, window_bounds = array<i64: 2, 8, 1>}, {pipeline_mode = #tpu.pipeline_mode<synchronous>, transform_indices = @transform_3, window_bounds = array<i64: 576, 128>}, {pipeline_mode = #tpu.pipeline_mode<synchronous>, transform_indices = @transform_4, window_bounds = array<i64: 24, 128>}, {pipeline_mode = #tpu.pipeline_mode<synchronous>, transform_indices = @transform_5, window_bounds = array<i64: 18, 32>}]} {
    %c0 = arith.constant 0 : index
    %c0_0 = arith.constant 0 : index
    %0 = vector.load %arg1[%c0, %c0_0] : memref<16x32xf32, #tpu.memory_space<vmem>>, vector<16x32xf32>
    %c0_1 = arith.constant 0 : index
    %c0_2 = arith.constant 0 : index
    %1 = vector.load %arg2[%c0_1, %c0_2] : memref<16x16xf32, #tpu.memory_space<vmem>>, vector<16x16xf32>
    %cst = arith.constant 0.000000e+00 : f32
    %2 = vector.broadcast %cst : f32 to vector<16x16xf32>
    %3 = arith.cmpf ogt, %1, %2 : vector<16x16xf32>
    %c0_3 = arith.constant 0 : index
    %c0_4 = arith.constant 0 : index
    %c0_5 = arith.constant 0 : index
    %4 = vector.load %arg3[%c0_3, %c0_4, %c0_5] : memref<2x8x1xf32, #tpu.memory_space<vmem>>, vector<2x8x1xf32>
    %cst_6 = arith.constant 0.000000e+00 : f32
    %5 = vector.broadcast %cst_6 : f32 to vector<2x8x1xf32>
    %6 = arith.cmpf ogt, %4, %5 : vector<2x8x1xf32>
    %c0_7 = arith.constant 0 : index
    %c0_8 = arith.constant 0 : index
    %7 = vector.load %arg4[%c0_7, %c0_8] : memref<576x128xf32, #tpu.memory_space<vmem>>, vector<32x96xf32>
    %cst_9 = arith.constant dense<0.000000e+00> : vector<16x96xf32>
    %8 = tpu.matmul %0, %7, %cst_9 {dimension_numbers = #tpu.dot_dimension_numbers<[1], [0], [0], [1], [0, 0, 1, 1], [], []>} : vector<16x32xf32>, vector<32x96xf32>, vector<16x96xf32> -> vector<16x96xf32>
    %c0_10 = arith.constant 0 : index
    %c0_11 = arith.constant 0 : index
    %9 = vector.load %arg5[%c0_10, %c0_11] : memref<24x128xf32, #tpu.memory_space<vmem>>, vector<1x96xf32>
    %10 = vector.broadcast %9 : vector<1x96xf32> to vector<16x96xf32>
    %11 = arith.addf %8, %10 : vector<16x96xf32>
    %12 = vector.shape_cast %11 : vector<16x96xf32> to vector<2x8x96xf32>
    %13 = vector.extract_strided_slice %12 {offsets = [0, 0, 0], sizes = [2, 8, 32], strides = [1, 1, 1]} : vector<2x8x96xf32> to vector<2x8x32xf32>
    %14 = vector.extract_strided_slice %12 {offsets = [0, 0, 32], sizes = [2, 8, 32], strides = [1, 1, 1]} : vector<2x8x96xf32> to vector<2x8x32xf32>
    %15 = vector.extract_strided_slice %12 {offsets = [0, 0, 64], sizes = [2, 8, 32], strides = [1, 1, 1]} : vector<2x8x96xf32> to vector<2x8x32xf32>
    %c32 = arith.constant 32 : index
    %c0_12 = arith.constant 0 : index
    %16 = vector.load %arg4[%c32, %c0_12] : memref<576x128xf32, #tpu.memory_space<vmem>>, vector<32x32xf32>
    %c64 = arith.constant 64 : index
    %c0_13 = arith.constant 0 : index
    %17 = vector.load %arg4[%c64, %c0_13] : memref<576x128xf32, #tpu.memory_space<vmem>>, vector<32x32xf32>
    %c96 = arith.constant 96 : index
    %c0_14 = arith.constant 0 : index
    %18 = vector.load %arg4[%c96, %c0_14] : memref<576x128xf32, #tpu.memory_space<vmem>>, vector<32x32xf32>
    %c1 = arith.constant 1 : index
    %c0_15 = arith.constant 0 : index
    %19 = vector.load %arg5[%c1, %c0_15] : memref<24x128xf32, #tpu.memory_space<vmem>>, vector<1x32xf32>
    %cst_16 = arith.constant 0.000000e+00 : f32
    %20 = vector.broadcast %cst_16 : f32 to vector<2x32xf32>
    %21 = vector.extract_strided_slice %13 {offsets = [0, 0, 0], sizes = [2, 1, 32], strides = [1, 1, 1]} : vector<2x8x32xf32> to vector<2x1x32xf32>
    %22 = vector.shape_cast %21 : vector<2x1x32xf32> to vector<2x32xf32>
    %cst_17 = arith.constant dense<0.000000e+00> : vector<2x32xf32>
    %23 = tpu.matmul %20, %16, %cst_17 {dimension_numbers = #tpu.dot_dimension_numbers<[1], [0], [0], [1], [0, 0, 1, 1], [], []>} : vector<2x32xf32>, vector<32x32xf32>, vector<2x32xf32> -> vector<2x32xf32>
    %24 = arith.addf %22, %23 : vector<2x32xf32>
    %25 = arith.negf %24 : vector<2x32xf32>
    %26 = math.exp %25 : vector<2x32xf32>
    %cst_18 = arith.constant 1.000000e+00 : f32
    %27 = vector.broadcast %cst_18 : f32 to vector<2x32xf32>
    %28 = arith.addf %27, %26 : vector<2x32xf32>
    %29 = arith.divf %27, %28 : vector<2x32xf32>
    %30 = vector.extract_strided_slice %14 {offsets = [0, 0, 0], sizes = [2, 1, 32], strides = [1, 1, 1]} : vector<2x8x32xf32> to vector<2x1x32xf32>
    %31 = vector.shape_cast %30 : vector<2x1x32xf32> to vector<2x32xf32>
    %cst_19 = arith.constant dense<0.000000e+00> : vector<2x32xf32>
    %32 = tpu.matmul %20, %17, %cst_19 {dimension_numbers = #tpu.dot_dimension_numbers<[1], [0], [0], [1], [0, 0, 1, 1], [], []>} : vector<2x32xf32>, vector<32x32xf32>, vector<2x32xf32> -> vector<2x32xf32>
    %33 = arith.addf %31, %32 : vector<2x32xf32>
    %34 = arith.negf %33 : vector<2x32xf32>
    %35 = math.exp %34 : vector<2x32xf32>
    %cst_20 = arith.constant 1.000000e+00 : f32
    %36 = vector.broadcast %cst_20 : f32 to vector<2x32xf32>
    %37 = arith.addf %36, %35 : vector<2x32xf32>
    %38 = arith.divf %36, %37 : vector<2x32xf32>
    %39 = vector.extract_strided_slice %15 {offsets = [0, 0, 0], sizes = [2, 1, 32], strides = [1, 1, 1]} : vector<2x8x32xf32> to vector<2x1x32xf32>
    %40 = vector.shape_cast %39 : vector<2x1x32xf32> to vector<2x32xf32>
    %cst_21 = arith.constant dense<0.000000e+00> : vector<2x32xf32>
    %41 = tpu.matmul %20, %18, %cst_21 {dimension_numbers = #tpu.dot_dimension_numbers<[1], [0], [0], [1], [0, 0, 1, 1], [], []>} : vector<2x32xf32>, vector<32x32xf32>, vector<2x32xf32> -> vector<2x32xf32>
    %42 = vector.broadcast %19 : vector<1x32xf32> to vector<2x32xf32>
    %43 = arith.addf %41, %42 : vector<2x32xf32>
    %44 = arith.mulf %29, %43 : vector<2x32xf32>
    %45 = arith.addf %40, %44 : vector<2x32xf32>
    %46 = math.tanh %45 : vector<2x32xf32>
    %cst_22 = arith.constant 1.000000e+00 : f32
    %47 = vector.broadcast %cst_22 : f32 to vector<2x32xf32>
    %48 = arith.subf %47, %38 : vector<2x32xf32>
    %49 = arith.mulf %48, %46 : vector<2x32xf32>
    %50 = arith.mulf %38, %20 : vector<2x32xf32>
    %51 = arith.addf %49, %50 : vector<2x32xf32>
    %52 = vector.shape_cast %51 : vector<2x32xf32> to vector<2x1x32xf32>
    %c0_23 = arith.constant 0 : index
    %c0_24 = arith.constant 0 : index
    %c0_25 = arith.constant 0 : index
    %53 = vector.load %arg7[%c0_23, %c0_24, %c0_25] : memref<2x8x32xf32, #tpu.memory_space<vmem>>, vector<2x1x32xf32>
    tpu.vector_store %arg7[%c0_23, %c0_24, %c0_25], %52 {strides = array<i32>} : memref<2x8x32xf32, #tpu.memory_space<vmem>>, vector<2x1x32xf32>,
    %54 = vector.extract_strided_slice %13 {offsets = [0, 1, 0], sizes = [2, 1, 32], strides = [1, 1, 1]} : vector<2x8x32xf32> to vector<2x1x32xf32>
    %55 = vector.shape_cast %54 : vector<2x1x32xf32> to vector<2x32xf32>
    %cst_26 = arith.constant dense<0.000000e+00> : vector<2x32xf32>
    %56 = tpu.matmul %51, %16, %cst_26 {dimension_numbers = #tpu.dot_dimension_numbers<[1], [0], [0], [1], [0, 0, 1, 1], [], []>} : vector<2x32xf32>, vector<32x32xf32>, vector<2x32xf32> -> vector<2x32xf32>
    %57 = arith.addf %55, %56 : vector<2x32xf32>
    %58 = arith.negf %57 : vector<2x32xf32>
    %59 = math.exp %58 : vector<2x32xf32>
    %cst_27 = arith.constant 1.000000e+00 : f32
    %60 = vector.broadcast %cst_27 : f32 to vector<2x32xf32>
    %61 = arith.addf %60, %59 : vector<2x32xf32>
    %62 = arith.divf %60, %61 : vector<2x32xf32>
    %63 = vector.extract_strided_slice %14 {offsets = [0, 1, 0], sizes = [2, 1, 32], strides = [1, 1, 1]} : vector<2x8x32xf32> to vector<2x1x32xf32>
    %64 = vector.shape_cast %63 : vector<2x1x32xf32> to vector<2x32xf32>
    %cst_28 = arith.constant dense<0.000000e+00> : vector<2x32xf32>
    %65 = tpu.matmul %51, %17, %cst_28 {dimension_numbers = #tpu.dot_dimension_numbers<[1], [0], [0], [1], [0, 0, 1, 1], [], []>} : vector<2x32xf32>, vector<32x32xf32>, vector<2x32xf32> -> vector<2x32xf32>
    %66 = arith.addf %64, %65 : vector<2x32xf32>
    %67 = arith.negf %66 : vector<2x32xf32>
    %68 = math.exp %67 : vector<2x32xf32>
    %cst_29 = arith.constant 1.000000e+00 : f32
    %69 = vector.broadcast %cst_29 : f32 to vector<2x32xf32>
    %70 = arith.addf %69, %68 : vector<2x32xf32>
    %71 = arith.divf %69, %70 : vector<2x32xf32>
    %72 = vector.extract_strided_slice %15 {offsets = [0, 1, 0], sizes = [2, 1, 32], strides = [1, 1, 1]} : vector<2x8x32xf32> to vector<2x1x32xf32>
    %73 = vector.shape_cast %72 : vector<2x1x32xf32> to vector<2x32xf32>
    %cst_30 = arith.constant dense<0.000000e+00> : vector<2x32xf32>
    %74 = tpu.matmul %51, %18, %cst_30 {dimension_numbers = #tpu.dot_dimension_numbers<[1], [0], [0], [1], [0, 0, 1, 1], [], []>} : vector<2x32xf32>, vector<32x32xf32>, vector<2x32xf32> -> vector<2x32xf32>
    %75 = vector.broadcast %19 : vector<1x32xf32> to vector<2x32xf32>
    %76 = arith.addf %74, %75 : vector<2x32xf32>
    %77 = arith.mulf %62, %76 : vector<2x32xf32>
    %78 = arith.addf %73, %77 : vector<2x32xf32>
    %79 = math.tanh %78 : vector<2x32xf32>
    %cst_31 = arith.constant 1.000000e+00 : f32
    %80 = vector.broadcast %cst_31 : f32 to vector<2x32xf32>
    %81 = arith.subf %80, %71 : vector<2x32xf32>
    %82 = arith.mulf %81, %79 : vector<2x32xf32>
    %83 = arith.mulf %71, %51 : vector<2x32xf32>
    %84 = arith.addf %82, %83 : vector<2x32xf32>
    %85 = vector.shape_cast %84 : vector<2x32xf32> to vector<2x1x32xf32>
    %c0_32 = arith.constant 0 : index
    %c1_33 = arith.constant 1 : index
    %c0_34 = arith.constant 0 : index
    %86 = vector.load %arg7[%c0_32, %c1_33, %c0_34] : memref<2x8x32xf32, #tpu.memory_space<vmem>>, vector<2x1x32xf32>
    tpu.vector_store %arg7[%c0_32, %c1_33, %c0_34], %85 {strides = array<i32>} : memref<2x8x32xf32, #tpu.memory_space<vmem>>, vector<2x1x32xf32>,
    %87 = vector.extract_strided_slice %13 {offsets = [0, 2, 0], sizes = [2, 1, 32], strides = [1, 1, 1]} : vector<2x8x32xf32> to vector<2x1x32xf32>
    %88 = vector.shape_cast %87 : vector<2x1x32xf32> to vector<2x32xf32>
    %cst_35 = arith.constant dense<0.000000e+00> : vector<2x32xf32>
    %89 = tpu.matmul %84, %16, %cst_35 {dimension_numbers = #tpu.dot_dimension_numbers<[1], [0], [0], [1], [0, 0, 1, 1], [], []>} : vector<2x32xf32>, vector<32x32xf32>, vector<2x32xf32> -> vector<2x32xf32>
    %90 = arith.addf %88, %89 : vector<2x32xf32>
    %91 = arith.negf %90 : vector<2x32xf32>
    %92 = math.exp %91 : vector<2x32xf32>
    %cst_36 = arith.constant 1.000000e+00 : f32
    %93 = vector.broadcast %cst_36 : f32 to vector<2x32xf32>
    %94 = arith.addf %93, %92 : vector<2x32xf32>
    %95 = arith.divf %93, %94 : vector<2x32xf32>
    %96 = vector.extract_strided_slice %14 {offsets = [0, 2, 0], sizes = [2, 1, 32], strides = [1, 1, 1]} : vector<2x8x32xf32> to vector<2x1x32xf32>
    %97 = vector.shape_cast %96 : vector<2x1x32xf32> to vector<2x32xf32>
    %cst_37 = arith.constant dense<0.000000e+00> : vector<2x32xf32>
    %98 = tpu.matmul %84, %17, %cst_37 {dimension_numbers = #tpu.dot_dimension_numbers<[1], [0], [0], [1], [0, 0, 1, 1], [], []>} : vector<2x32xf32>, vector<32x32xf32>, vector<2x32xf32> -> vector<2x32xf32>
    %99 = arith.addf %97, %98 : vector<2x32xf32>
    %100 = arith.negf %99 : vector<2x32xf32>
    %101 = math.exp %100 : vector<2x32xf32>
    %cst_38 = arith.constant 1.000000e+00 : f32
    %102 = vector.broadcast %cst_38 : f32 to vector<2x32xf32>
    %103 = arith.addf %102, %101 : vector<2x32xf32>
    %104 = arith.divf %102, %103 : vector<2x32xf32>
    %105 = vector.extract_strided_slice %15 {offsets = [0, 2, 0], sizes = [2, 1, 32], strides = [1, 1, 1]} : vector<2x8x32xf32> to vector<2x1x32xf32>
    %106 = vector.shape_cast %105 : vector<2x1x32xf32> to vector<2x32xf32>
    %cst_39 = arith.constant dense<0.000000e+00> : vector<2x32xf32>
    %107 = tpu.matmul %84, %18, %cst_39 {dimension_numbers = #tpu.dot_dimension_numbers<[1], [0], [0], [1], [0, 0, 1, 1], [], []>} : vector<2x32xf32>, vector<32x32xf32>, vector<2x32xf32> -> vector<2x32xf32>
    %108 = vector.broadcast %19 : vector<1x32xf32> to vector<2x32xf32>
    %109 = arith.addf %107, %108 : vector<2x32xf32>
    %110 = arith.mulf %95, %109 : vector<2x32xf32>
    %111 = arith.addf %106, %110 : vector<2x32xf32>
    %112 = math.tanh %111 : vector<2x32xf32>
    %cst_40 = arith.constant 1.000000e+00 : f32
    %113 = vector.broadcast %cst_40 : f32 to vector<2x32xf32>
    %114 = arith.subf %113, %104 : vector<2x32xf32>
    %115 = arith.mulf %114, %112 : vector<2x32xf32>
    %116 = arith.mulf %104, %84 : vector<2x32xf32>
    %117 = arith.addf %115, %116 : vector<2x32xf32>
    %118 = vector.shape_cast %117 : vector<2x32xf32> to vector<2x1x32xf32>
    %c0_41 = arith.constant 0 : index
    %c2 = arith.constant 2 : index
    %c0_42 = arith.constant 0 : index
    %119 = vector.load %arg7[%c0_41, %c2, %c0_42] : memref<2x8x32xf32, #tpu.memory_space<vmem>>, vector<2x1x32xf32>
    tpu.vector_store %arg7[%c0_41, %c2, %c0_42], %118 {strides = array<i32>} : memref<2x8x32xf32, #tpu.memory_space<vmem>>, vector<2x1x32xf32>,
    %120 = vector.extract_strided_slice %13 {offsets = [0, 3, 0], sizes = [2, 1, 32], strides = [1, 1, 1]} : vector<2x8x32xf32> to vector<2x1x32xf32>
    %121 = vector.shape_cast %120 : vector<2x1x32xf32> to vector<2x32xf32>
    %cst_43 = arith.constant dense<0.000000e+00> : vector<2x32xf32>
    %122 = tpu.matmul %117, %16, %cst_43 {dimension_numbers = #tpu.dot_dimension_numbers<[1], [0], [0], [1], [0, 0, 1, 1], [], []>} : vector<2x32xf32>, vector<32x32xf32>, vector<2x32xf32> -> vector<2x32xf32>
    %123 = arith.addf %121, %122 : vector<2x32xf32>
    %124 = arith.negf %123 : vector<2x32xf32>
    %125 = math.exp %124 : vector<2x32xf32>
    %cst_44 = arith.constant 1.000000e+00 : f32
    %126 = vector.broadcast %cst_44 : f32 to vector<2x32xf32>
    %127 = arith.addf %126, %125 : vector<2x32xf32>
    %128 = arith.divf %126, %127 : vector<2x32xf32>
    %129 = vector.extract_strided_slice %14 {offsets = [0, 3, 0], sizes = [2, 1, 32], strides = [1, 1, 1]} : vector<2x8x32xf32> to vector<2x1x32xf32>
    %130 = vector.shape_cast %129 : vector<2x1x32xf32> to vector<2x32xf32>
    %cst_45 = arith.constant dense<0.000000e+00> : vector<2x32xf32>
    %131 = tpu.matmul %117, %17, %cst_45 {dimension_numbers = #tpu.dot_dimension_numbers<[1], [0], [0], [1], [0, 0, 1, 1], [], []>} : vector<2x32xf32>, vector<32x32xf32>, vector<2x32xf32> -> vector<2x32xf32>
    %132 = arith.addf %130, %131 : vector<2x32xf32>
    %133 = arith.negf %132 : vector<2x32xf32>
    %134 = math.exp %133 : vector<2x32xf32>
    %cst_46 = arith.constant 1.000000e+00 : f32
    %135 = vector.broadcast %cst_46 : f32 to vector<2x32xf32>
    %136 = arith.addf %135, %134 : vector<2x32xf32>
    %137 = arith.divf %135, %136 : vector<2x32xf32>
    %138 = vector.extract_strided_slice %15 {offsets = [0, 3, 0], sizes = [2, 1, 32], strides = [1, 1, 1]} : vector<2x8x32xf32> to vector<2x1x32xf32>
    %139 = vector.shape_cast %138 : vector<2x1x32xf32> to vector<2x32xf32>
    %cst_47 = arith.constant dense<0.000000e+00> : vector<2x32xf32>
    %140 = tpu.matmul %117, %18, %cst_47 {dimension_numbers = #tpu.dot_dimension_numbers<[1], [0], [0], [1], [0, 0, 1, 1], [], []>} : vector<2x32xf32>, vector<32x32xf32>, vector<2x32xf32> -> vector<2x32xf32>
    %141 = vector.broadcast %19 : vector<1x32xf32> to vector<2x32xf32>
    %142 = arith.addf %140, %141 : vector<2x32xf32>
    %143 = arith.mulf %128, %142 : vector<2x32xf32>
    %144 = arith.addf %139, %143 : vector<2x32xf32>
    %145 = math.tanh %144 : vector<2x32xf32>
    %cst_48 = arith.constant 1.000000e+00 : f32
    %146 = vector.broadcast %cst_48 : f32 to vector<2x32xf32>
    %147 = arith.subf %146, %137 : vector<2x32xf32>
    %148 = arith.mulf %147, %145 : vector<2x32xf32>
    %149 = arith.mulf %137, %117 : vector<2x32xf32>
    %150 = arith.addf %148, %149 : vector<2x32xf32>
    %151 = vector.shape_cast %150 : vector<2x32xf32> to vector<2x1x32xf32>
    %c0_49 = arith.constant 0 : index
    %c3 = arith.constant 3 : index
    %c0_50 = arith.constant 0 : index
    %152 = vector.load %arg7[%c0_49, %c3, %c0_50] : memref<2x8x32xf32, #tpu.memory_space<vmem>>, vector<2x1x32xf32>
    tpu.vector_store %arg7[%c0_49, %c3, %c0_50], %151 {strides = array<i32>} : memref<2x8x32xf32, #tpu.memory_space<vmem>>, vector<2x1x32xf32>,
    %153 = vector.extract_strided_slice %13 {offsets = [0, 4, 0], sizes = [2, 1, 32], strides = [1, 1, 1]} : vector<2x8x32xf32> to vector<2x1x32xf32>
    %154 = vector.shape_cast %153 : vector<2x1x32xf32> to vector<2x32xf32>
    %cst_51 = arith.constant dense<0.000000e+00> : vector<2x32xf32>
    %155 = tpu.matmul %150, %16, %cst_51 {dimension_numbers = #tpu.dot_dimension_numbers<[1], [0], [0], [1], [0, 0, 1, 1], [], []>} : vector<2x32xf32>, vector<32x32xf32>, vector<2x32xf32> -> vector<2x32xf32>
    %156 = arith.addf %154, %155 : vector<2x32xf32>
    %157 = arith.negf %156 : vector<2x32xf32>
    %158 = math.exp %157 : vector<2x32xf32>
    %cst_52 = arith.constant 1.000000e+00 : f32
    %159 = vector.broadcast %cst_52 : f32 to vector<2x32xf32>
    %160 = arith.addf %159, %158 : vector<2x32xf32>
    %161 = arith.divf %159, %160 : vector<2x32xf32>
    %162 = vector.extract_strided_slice %14 {offsets = [0, 4, 0], sizes = [2, 1, 32], strides = [1, 1, 1]} : vector<2x8x32xf32> to vector<2x1x32xf32>
    %163 = vector.shape_cast %162 : vector<2x1x32xf32> to vector<2x32xf32>
    %cst_53 = arith.constant dense<0.000000e+00> : vector<2x32xf32>
    %164 = tpu.matmul %150, %17, %cst_53 {dimension_numbers = #tpu.dot_dimension_numbers<[1], [0], [0], [1], [0, 0, 1, 1], [], []>} : vector<2x32xf32>, vector<32x32xf32>, vector<2x32xf32> -> vector<2x32xf32>
    %165 = arith.addf %163, %164 : vector<2x32xf32>
    %166 = arith.negf %165 : vector<2x32xf32>
    %167 = math.exp %166 : vector<2x32xf32>
    %cst_54 = arith.constant 1.000000e+00 : f32
    %168 = vector.broadcast %cst_54 : f32 to vector<2x32xf32>
    %169 = arith.addf %168, %167 : vector<2x32xf32>
    %170 = arith.divf %168, %169 : vector<2x32xf32>
    %171 = vector.extract_strided_slice %15 {offsets = [0, 4, 0], sizes = [2, 1, 32], strides = [1, 1, 1]} : vector<2x8x32xf32> to vector<2x1x32xf32>
    %172 = vector.shape_cast %171 : vector<2x1x32xf32> to vector<2x32xf32>
    %cst_55 = arith.constant dense<0.000000e+00> : vector<2x32xf32>
    %173 = tpu.matmul %150, %18, %cst_55 {dimension_numbers = #tpu.dot_dimension_numbers<[1], [0], [0], [1], [0, 0, 1, 1], [], []>} : vector<2x32xf32>, vector<32x32xf32>, vector<2x32xf32> -> vector<2x32xf32>
    %174 = vector.broadcast %19 : vector<1x32xf32> to vector<2x32xf32>
    %175 = arith.addf %173, %174 : vector<2x32xf32>
    %176 = arith.mulf %161, %175 : vector<2x32xf32>
    %177 = arith.addf %172, %176 : vector<2x32xf32>
    %178 = math.tanh %177 : vector<2x32xf32>
    %cst_56 = arith.constant 1.000000e+00 : f32
    %179 = vector.broadcast %cst_56 : f32 to vector<2x32xf32>
    %180 = arith.subf %179, %170 : vector<2x32xf32>
    %181 = arith.mulf %180, %178 : vector<2x32xf32>
    %182 = arith.mulf %170, %150 : vector<2x32xf32>
    %183 = arith.addf %181, %182 : vector<2x32xf32>
    %184 = vector.shape_cast %183 : vector<2x32xf32> to vector<2x1x32xf32>
    %c0_57 = arith.constant 0 : index
    %c4 = arith.constant 4 : index
    %c0_58 = arith.constant 0 : index
    %185 = vector.load %arg7[%c0_57, %c4, %c0_58] : memref<2x8x32xf32, #tpu.memory_space<vmem>>, vector<2x1x32xf32>
    tpu.vector_store %arg7[%c0_57, %c4, %c0_58], %184 {strides = array<i32>} : memref<2x8x32xf32, #tpu.memory_space<vmem>>, vector<2x1x32xf32>,
    %186 = vector.extract_strided_slice %13 {offsets = [0, 5, 0], sizes = [2, 1, 32], strides = [1, 1, 1]} : vector<2x8x32xf32> to vector<2x1x32xf32>
    %187 = vector.shape_cast %186 : vector<2x1x32xf32> to vector<2x32xf32>
    %cst_59 = arith.constant dense<0.000000e+00> : vector<2x32xf32>
    %188 = tpu.matmul %183, %16, %cst_59 {dimension_numbers = #tpu.dot_dimension_numbers<[1], [0], [0], [1], [0, 0, 1, 1], [], []>} : vector<2x32xf32>, vector<32x32xf32>, vector<2x32xf32> -> vector<2x32xf32>
    %189 = arith.addf %187, %188 : vector<2x32xf32>
    %190 = arith.negf %189 : vector<2x32xf32>
    %191 = math.exp %190 : vector<2x32xf32>
    %cst_60 = arith.constant 1.000000e+00 : f32
    %192 = vector.broadcast %cst_60 : f32 to vector<2x32xf32>
    %193 = arith.addf %192, %191 : vector<2x32xf32>
    %194 = arith.divf %192, %193 : vector<2x32xf32>
    %195 = vector.extract_strided_slice %14 {offsets = [0, 5, 0], sizes = [2, 1, 32], strides = [1, 1, 1]} : vector<2x8x32xf32> to vector<2x1x32xf32>
    %196 = vector.shape_cast %195 : vector<2x1x32xf32> to vector<2x32xf32>
    %cst_61 = arith.constant dense<0.000000e+00> : vector<2x32xf32>
    %197 = tpu.matmul %183, %17, %cst_61 {dimension_numbers = #tpu.dot_dimension_numbers<[1], [0], [0], [1], [0, 0, 1, 1], [], []>} : vector<2x32xf32>, vector<32x32xf32>, vector<2x32xf32> -> vector<2x32xf32>
    %198 = arith.addf %196, %197 : vector<2x32xf32>
    %199 = arith.negf %198 : vector<2x32xf32>
    %200 = math.exp %199 : vector<2x32xf32>
    %cst_62 = arith.constant 1.000000e+00 : f32
    %201 = vector.broadcast %cst_62 : f32 to vector<2x32xf32>
    %202 = arith.addf %201, %200 : vector<2x32xf32>
    %203 = arith.divf %201, %202 : vector<2x32xf32>
    %204 = vector.extract_strided_slice %15 {offsets = [0, 5, 0], sizes = [2, 1, 32], strides = [1, 1, 1]} : vector<2x8x32xf32> to vector<2x1x32xf32>
    %205 = vector.shape_cast %204 : vector<2x1x32xf32> to vector<2x32xf32>
    %cst_63 = arith.constant dense<0.000000e+00> : vector<2x32xf32>
    %206 = tpu.matmul %183, %18, %cst_63 {dimension_numbers = #tpu.dot_dimension_numbers<[1], [0], [0], [1], [0, 0, 1, 1], [], []>} : vector<2x32xf32>, vector<32x32xf32>, vector<2x32xf32> -> vector<2x32xf32>
    %207 = vector.broadcast %19 : vector<1x32xf32> to vector<2x32xf32>
    %208 = arith.addf %206, %207 : vector<2x32xf32>
    %209 = arith.mulf %194, %208 : vector<2x32xf32>
    %210 = arith.addf %205, %209 : vector<2x32xf32>
    %211 = math.tanh %210 : vector<2x32xf32>
    %cst_64 = arith.constant 1.000000e+00 : f32
    %212 = vector.broadcast %cst_64 : f32 to vector<2x32xf32>
    %213 = arith.subf %212, %203 : vector<2x32xf32>
    %214 = arith.mulf %213, %211 : vector<2x32xf32>
    %215 = arith.mulf %203, %183 : vector<2x32xf32>
    %216 = arith.addf %214, %215 : vector<2x32xf32>
    %217 = vector.shape_cast %216 : vector<2x32xf32> to vector<2x1x32xf32>
    %c0_65 = arith.constant 0 : index
    %c5 = arith.constant 5 : index
    %c0_66 = arith.constant 0 : index
    %218 = vector.load %arg7[%c0_65, %c5, %c0_66] : memref<2x8x32xf32, #tpu.memory_space<vmem>>, vector<2x1x32xf32>
    tpu.vector_store %arg7[%c0_65, %c5, %c0_66], %217 {strides = array<i32>} : memref<2x8x32xf32, #tpu.memory_space<vmem>>, vector<2x1x32xf32>,
    %219 = vector.extract_strided_slice %13 {offsets = [0, 6, 0], sizes = [2, 1, 32], strides = [1, 1, 1]} : vector<2x8x32xf32> to vector<2x1x32xf32>
    %220 = vector.shape_cast %219 : vector<2x1x32xf32> to vector<2x32xf32>
    %cst_67 = arith.constant dense<0.000000e+00> : vector<2x32xf32>
    %221 = tpu.matmul %216, %16, %cst_67 {dimension_numbers = #tpu.dot_dimension_numbers<[1], [0], [0], [1], [0, 0, 1, 1], [], []>} : vector<2x32xf32>, vector<32x32xf32>, vector<2x32xf32> -> vector<2x32xf32>
    %222 = arith.addf %220, %221 : vector<2x32xf32>
    %223 = arith.negf %222 : vector<2x32xf32>
    %224 = math.exp %223 : vector<2x32xf32>
    %cst_68 = arith.constant 1.000000e+00 : f32
    %225 = vector.broadcast %cst_68 : f32 to vector<2x32xf32>
    %226 = arith.addf %225, %224 : vector<2x32xf32>
    %227 = arith.divf %225, %226 : vector<2x32xf32>
    %228 = vector.extract_strided_slice %14 {offsets = [0, 6, 0], sizes = [2, 1, 32], strides = [1, 1, 1]} : vector<2x8x32xf32> to vector<2x1x32xf32>
    %229 = vector.shape_cast %228 : vector<2x1x32xf32> to vector<2x32xf32>
    %cst_69 = arith.constant dense<0.000000e+00> : vector<2x32xf32>
    %230 = tpu.matmul %216, %17, %cst_69 {dimension_numbers = #tpu.dot_dimension_numbers<[1], [0], [0], [1], [0, 0, 1, 1], [], []>} : vector<2x32xf32>, vector<32x32xf32>, vector<2x32xf32> -> vector<2x32xf32>
    %231 = arith.addf %229, %230 : vector<2x32xf32>
    %232 = arith.negf %231 : vector<2x32xf32>
    %233 = math.exp %232 : vector<2x32xf32>
    %cst_70 = arith.constant 1.000000e+00 : f32
    %234 = vector.broadcast %cst_70 : f32 to vector<2x32xf32>
    %235 = arith.addf %234, %233 : vector<2x32xf32>
    %236 = arith.divf %234, %235 : vector<2x32xf32>
    %237 = vector.extract_strided_slice %15 {offsets = [0, 6, 0], sizes = [2, 1, 32], strides = [1, 1, 1]} : vector<2x8x32xf32> to vector<2x1x32xf32>
    %238 = vector.shape_cast %237 : vector<2x1x32xf32> to vector<2x32xf32>
    %cst_71 = arith.constant dense<0.000000e+00> : vector<2x32xf32>
    %239 = tpu.matmul %216, %18, %cst_71 {dimension_numbers = #tpu.dot_dimension_numbers<[1], [0], [0], [1], [0, 0, 1, 1], [], []>} : vector<2x32xf32>, vector<32x32xf32>, vector<2x32xf32> -> vector<2x32xf32>
    %240 = vector.broadcast %19 : vector<1x32xf32> to vector<2x32xf32>
    %241 = arith.addf %239, %240 : vector<2x32xf32>
    %242 = arith.mulf %227, %241 : vector<2x32xf32>
    %243 = arith.addf %238, %242 : vector<2x32xf32>
    %244 = math.tanh %243 : vector<2x32xf32>
    %cst_72 = arith.constant 1.000000e+00 : f32
    %245 = vector.broadcast %cst_72 : f32 to vector<2x32xf32>
    %246 = arith.subf %245, %236 : vector<2x32xf32>
    %247 = arith.mulf %246, %244 : vector<2x32xf32>
    %248 = arith.mulf %236, %216 : vector<2x32xf32>
    %249 = arith.addf %247, %248 : vector<2x32xf32>
    %250 = vector.shape_cast %249 : vector<2x32xf32> to vector<2x1x32xf32>
    %c0_73 = arith.constant 0 : index
    %c6 = arith.constant 6 : index
    %c0_74 = arith.constant 0 : index
    %251 = vector.load %arg7[%c0_73, %c6, %c0_74] : memref<2x8x32xf32, #tpu.memory_space<vmem>>, vector<2x1x32xf32>
    tpu.vector_store %arg7[%c0_73, %c6, %c0_74], %250 {strides = array<i32>} : memref<2x8x32xf32, #tpu.memory_space<vmem>>, vector<2x1x32xf32>,
    %252 = vector.extract_strided_slice %13 {offsets = [0, 7, 0], sizes = [2, 1, 32], strides = [1, 1, 1]} : vector<2x8x32xf32> to vector<2x1x32xf32>
    %253 = vector.shape_cast %252 : vector<2x1x32xf32> to vector<2x32xf32>
    %cst_75 = arith.constant dense<0.000000e+00> : vector<2x32xf32>
    %254 = tpu.matmul %249, %16, %cst_75 {dimension_numbers = #tpu.dot_dimension_numbers<[1], [0], [0], [1], [0, 0, 1, 1], [], []>} : vector<2x32xf32>, vector<32x32xf32>, vector<2x32xf32> -> vector<2x32xf32>
    %255 = arith.addf %253, %254 : vector<2x32xf32>
    %256 = arith.negf %255 : vector<2x32xf32>
    %257 = math.exp %256 : vector<2x32xf32>
    %cst_76 = arith.constant 1.000000e+00 : f32
    %258 = vector.broadcast %cst_76 : f32 to vector<2x32xf32>
    %259 = arith.addf %258, %257 : vector<2x32xf32>
    %260 = arith.divf %258, %259 : vector<2x32xf32>
    %261 = vector.extract_strided_slice %14 {offsets = [0, 7, 0], sizes = [2, 1, 32], strides = [1, 1, 1]} : vector<2x8x32xf32> to vector<2x1x32xf32>
    %262 = vector.shape_cast %261 : vector<2x1x32xf32> to vector<2x32xf32>
    %cst_77 = arith.constant dense<0.000000e+00> : vector<2x32xf32>
    %263 = tpu.matmul %249, %17, %cst_77 {dimension_numbers = #tpu.dot_dimension_numbers<[1], [0], [0], [1], [0, 0, 1, 1], [], []>} : vector<2x32xf32>, vector<32x32xf32>, vector<2x32xf32> -> vector<2x32xf32>
    %264 = arith.addf %262, %263 : vector<2x32xf32>
    %265 = arith.negf %264 : vector<2x32xf32>
    %266 = math.exp %265 : vector<2x32xf32>
    %cst_78 = arith.constant 1.000000e+00 : f32
    %267 = vector.broadcast %cst_78 : f32 to vector<2x32xf32>
    %268 = arith.addf %267, %266 : vector<2x32xf32>
    %269 = arith.divf %267, %268 : vector<2x32xf32>
    %270 = vector.extract_strided_slice %15 {offsets = [0, 7, 0], sizes = [2, 1, 32], strides = [1, 1, 1]} : vector<2x8x32xf32> to vector<2x1x32xf32>
    %271 = vector.shape_cast %270 : vector<2x1x32xf32> to vector<2x32xf32>
    %cst_79 = arith.constant dense<0.000000e+00> : vector<2x32xf32>
    %272 = tpu.matmul %249, %18, %cst_79 {dimension_numbers = #tpu.dot_dimension_numbers<[1], [0], [0], [1], [0, 0, 1, 1], [], []>} : vector<2x32xf32>, vector<32x32xf32>, vector<2x32xf32> -> vector<2x32xf32>
    %273 = vector.broadcast %19 : vector<1x32xf32> to vector<2x32xf32>
    %274 = arith.addf %272, %273 : vector<2x32xf32>
    %275 = arith.mulf %260, %274 : vector<2x32xf32>
    %276 = arith.addf %271, %275 : vector<2x32xf32>
    %277 = math.tanh %276 : vector<2x32xf32>
    %cst_80 = arith.constant 1.000000e+00 : f32
    %278 = vector.broadcast %cst_80 : f32 to vector<2x32xf32>
    %279 = arith.subf %278, %269 : vector<2x32xf32>
    %280 = arith.mulf %279, %277 : vector<2x32xf32>
    %281 = arith.mulf %269, %249 : vector<2x32xf32>
    %282 = arith.addf %280, %281 : vector<2x32xf32>
    %283 = vector.shape_cast %282 : vector<2x32xf32> to vector<2x1x32xf32>
    %c0_81 = arith.constant 0 : index
    %c7 = arith.constant 7 : index
    %c0_82 = arith.constant 0 : index
    %284 = vector.load %arg7[%c0_81, %c7, %c0_82] : memref<2x8x32xf32, #tpu.memory_space<vmem>>, vector<2x1x32xf32>
    tpu.vector_store %arg7[%c0_81, %c7, %c0_82], %283 {strides = array<i32>} : memref<2x8x32xf32, #tpu.memory_space<vmem>>, vector<2x1x32xf32>,
    %c0_83 = arith.constant 0 : index
    %c0_84 = arith.constant 0 : index
    %c0_85 = arith.constant 0 : index
    %285 = vector.load %arg7[%c0_83, %c0_84, %c0_85] : memref<2x8x32xf32, #tpu.memory_space<vmem>>, vector<2x8x32xf32>
    %286 = vector.shape_cast %285 : vector<2x8x32xf32> to vector<16x32xf32>
    %c128 = arith.constant 128 : index
    %c0_86 = arith.constant 0 : index
    %287 = vector.load %arg4[%c128, %c0_86] : memref<576x128xf32, #tpu.memory_space<vmem>>, vector<32x96xf32>
    %cst_87 = arith.constant dense<0.000000e+00> : vector<16x96xf32>
    %288 = tpu.matmul %286, %287, %cst_87 {dimension_numbers = #tpu.dot_dimension_numbers<[1], [0], [0], [1], [0, 0, 1, 1], [], []>} : vector<16x32xf32>, vector<32x96xf32>, vector<16x96xf32> -> vector<16x96xf32>
    %c2_88 = arith.constant 2 : index
    %c0_89 = arith.constant 0 : index
    %289 = vector.load %arg5[%c2_88, %c0_89] : memref<24x128xf32, #tpu.memory_space<vmem>>, vector<1x96xf32>
    %290 = vector.broadcast %289 : vector<1x96xf32> to vector<16x96xf32>
    %291 = arith.addf %288, %290 : vector<16x96xf32>
    %292 = vector.extract_strided_slice %291 {offsets = [0, 0], sizes = [16, 8], strides = [1, 1]} : vector<16x96xf32> to vector<16x8xf32>
    %293 = vector.extract_strided_slice %291 {offsets = [0, 32], sizes = [16, 8], strides = [1, 1]} : vector<16x96xf32> to vector<16x8xf32>
    %294 = vector.extract_strided_slice %291 {offsets = [0, 64], sizes = [16, 8], strides = [1, 1]} : vector<16x96xf32> to vector<16x8xf32>
    %cst_90 = arith.constant dense<0.000000e+00> : vector<16x16xf32>
    %295 = tpu.matmul %292, %293, %cst_90 {dimension_numbers = #tpu.dot_dimension_numbers<[1], [1], [0], [0], [0, 0, 1, 0], [], []>} : vector<16x8xf32>, vector<16x8xf32>, vector<16x16xf32> -> vector<16x16xf32>
    %cst_91 = arith.constant 0.353553385 : f32
    %296 = vector.broadcast %cst_91 : f32 to vector<16x16xf32>
    %297 = arith.mulf %295, %296 : vector<16x16xf32>
    %cst_92 = arith.constant -1.000000e+09 : f32
    %298 = vector.broadcast %cst_92 : f32 to vector<16x16xf32>
    %299 = arith.select %3, %298, %297 : vector<16x16xi1>, vector<16x16xf32>
    %cst_93 = arith.constant dense<0xFF800000> : vector<16xf32>
    %300 = vector.multi_reduction <maximumf>, %299, %cst_93 [1] : vector<16x16xf32> to vector<16xf32>
    %301 = vector.shape_cast %300 : vector<16xf32> to vector<16x1xf32>
    %302 = vector.broadcast %301 : vector<16x1xf32> to vector<16x16xf32>
    %303 = arith.subf %299, %302 : vector<16x16xf32>
    %304 = math.exp %303 : vector<16x16xf32>
    %cst_94 = arith.constant dense<0.000000e+00> : vector<16xf32>
    %305 = vector.multi_reduction <add>, %304, %cst_94 [1] : vector<16x16xf32> to vector<16xf32>
    %306 = vector.shape_cast %305 : vector<16xf32> to vector<16x1xf32>
    %307 = tpu.reciprocal %306 {approx = true} : vector<16x1xf32> -> vector<16x1xf32>
    %308 = vector.broadcast %307 : vector<16x1xf32> to vector<16x16xf32>
    %309 = arith.mulf %304, %308 : vector<16x16xf32>
    %cst_95 = arith.constant dense<0.000000e+00> : vector<16x8xf32>
    %310 = tpu.matmul %309, %294, %cst_95 {dimension_numbers = #tpu.dot_dimension_numbers<[1], [0], [0], [1], [0, 0, 1, 1], [], []>} : vector<16x16xf32>, vector<16x8xf32>, vector<16x8xf32> -> vector<16x8xf32>
    %c160 = arith.constant 160 : index
    %c0_96 = arith.constant 0 : index
    %311 = vector.load %arg4[%c160, %c0_96] : memref<576x128xf32, #tpu.memory_space<vmem>>, vector<8x32xf32>
    %cst_97 = arith.constant dense<0.000000e+00> : vector<16x32xf32>
    %312 = tpu.matmul %310, %311, %cst_97 {dimension_numbers = #tpu.dot_dimension_numbers<[1], [0], [0], [1], [0, 0, 1, 1], [], []>} : vector<16x8xf32>, vector<8x32xf32>, vector<16x32xf32> -> vector<16x32xf32>
    %313 = vector.extract_strided_slice %291 {offsets = [0, 8], sizes = [16, 8], strides = [1, 1]} : vector<16x96xf32> to vector<16x8xf32>
    %314 = vector.extract_strided_slice %291 {offsets = [0, 40], sizes = [16, 8], strides = [1, 1]} : vector<16x96xf32> to vector<16x8xf32>
    %315 = vector.extract_strided_slice %291 {offsets = [0, 72], sizes = [16, 8], strides = [1, 1]} : vector<16x96xf32> to vector<16x8xf32>
    %cst_98 = arith.constant dense<0.000000e+00> : vector<16x16xf32>
    %316 = tpu.matmul %313, %314, %cst_98 {dimension_numbers = #tpu.dot_dimension_numbers<[1], [1], [0], [0], [0, 0, 1, 0], [], []>} : vector<16x8xf32>, vector<16x8xf32>, vector<16x16xf32> -> vector<16x16xf32>
    %cst_99 = arith.constant 0.353553385 : f32
    %317 = vector.broadcast %cst_99 : f32 to vector<16x16xf32>
    %318 = arith.mulf %316, %317 : vector<16x16xf32>
    %cst_100 = arith.constant -1.000000e+09 : f32
    %319 = vector.broadcast %cst_100 : f32 to vector<16x16xf32>
    %320 = arith.select %3, %319, %318 : vector<16x16xi1>, vector<16x16xf32>
    %cst_101 = arith.constant dense<0xFF800000> : vector<16xf32>
    %321 = vector.multi_reduction <maximumf>, %320, %cst_101 [1] : vector<16x16xf32> to vector<16xf32>
    %322 = vector.shape_cast %321 : vector<16xf32> to vector<16x1xf32>
    %323 = vector.broadcast %322 : vector<16x1xf32> to vector<16x16xf32>
    %324 = arith.subf %320, %323 : vector<16x16xf32>
    %325 = math.exp %324 : vector<16x16xf32>
    %cst_102 = arith.constant dense<0.000000e+00> : vector<16xf32>
    %326 = vector.multi_reduction <add>, %325, %cst_102 [1] : vector<16x16xf32> to vector<16xf32>
    %327 = vector.shape_cast %326 : vector<16xf32> to vector<16x1xf32>
    %328 = tpu.reciprocal %327 {approx = true} : vector<16x1xf32> -> vector<16x1xf32>
    %329 = vector.broadcast %328 : vector<16x1xf32> to vector<16x16xf32>
    %330 = arith.mulf %325, %329 : vector<16x16xf32>
    %cst_103 = arith.constant dense<0.000000e+00> : vector<16x8xf32>
    %331 = tpu.matmul %330, %315, %cst_103 {dimension_numbers = #tpu.dot_dimension_numbers<[1], [0], [0], [1], [0, 0, 1, 1], [], []>} : vector<16x16xf32>, vector<16x8xf32>, vector<16x8xf32> -> vector<16x8xf32>
    %c168 = arith.constant 168 : index
    %c0_104 = arith.constant 0 : index
    %332 = vector.load %arg4[%c168, %c0_104] : memref<576x128xf32, #tpu.memory_space<vmem>>, vector<8x32xf32>
    %cst_105 = arith.constant dense<0.000000e+00> : vector<16x32xf32>
    %333 = tpu.matmul %331, %332, %cst_105 {dimension_numbers = #tpu.dot_dimension_numbers<[1], [0], [0], [1], [0, 0, 1, 1], [], []>} : vector<16x8xf32>, vector<8x32xf32>, vector<16x32xf32> -> vector<16x32xf32>
    %334 = arith.addf %312, %333 : vector<16x32xf32>
    %335 = vector.extract_strided_slice %291 {offsets = [0, 16], sizes = [16, 8], strides = [1, 1]} : vector<16x96xf32> to vector<16x8xf32>
    %336 = vector.extract_strided_slice %291 {offsets = [0, 48], sizes = [16, 8], strides = [1, 1]} : vector<16x96xf32> to vector<16x8xf32>
    %337 = vector.extract_strided_slice %291 {offsets = [0, 80], sizes = [16, 8], strides = [1, 1]} : vector<16x96xf32> to vector<16x8xf32>
    %cst_106 = arith.constant dense<0.000000e+00> : vector<16x16xf32>
    %338 = tpu.matmul %335, %336, %cst_106 {dimension_numbers = #tpu.dot_dimension_numbers<[1], [1], [0], [0], [0, 0, 1, 0], [], []>} : vector<16x8xf32>, vector<16x8xf32>, vector<16x16xf32> -> vector<16x16xf32>
    %cst_107 = arith.constant 0.353553385 : f32
    %339 = vector.broadcast %cst_107 : f32 to vector<16x16xf32>
    %340 = arith.mulf %338, %339 : vector<16x16xf32>
    %cst_108 = arith.constant -1.000000e+09 : f32
    %341 = vector.broadcast %cst_108 : f32 to vector<16x16xf32>
    %342 = arith.select %3, %341, %340 : vector<16x16xi1>, vector<16x16xf32>
    %cst_109 = arith.constant dense<0xFF800000> : vector<16xf32>
    %343 = vector.multi_reduction <maximumf>, %342, %cst_109 [1] : vector<16x16xf32> to vector<16xf32>
    %344 = vector.shape_cast %343 : vector<16xf32> to vector<16x1xf32>
    %345 = vector.broadcast %344 : vector<16x1xf32> to vector<16x16xf32>
    %346 = arith.subf %342, %345 : vector<16x16xf32>
    %347 = math.exp %346 : vector<16x16xf32>
    %cst_110 = arith.constant dense<0.000000e+00> : vector<16xf32>
    %348 = vector.multi_reduction <add>, %347, %cst_110 [1] : vector<16x16xf32> to vector<16xf32>
    %349 = vector.shape_cast %348 : vector<16xf32> to vector<16x1xf32>
    %350 = tpu.reciprocal %349 {approx = true} : vector<16x1xf32> -> vector<16x1xf32>
    %351 = vector.broadcast %350 : vector<16x1xf32> to vector<16x16xf32>
    %352 = arith.mulf %347, %351 : vector<16x16xf32>
    %cst_111 = arith.constant dense<0.000000e+00> : vector<16x8xf32>
    %353 = tpu.matmul %352, %337, %cst_111 {dimension_numbers = #tpu.dot_dimension_numbers<[1], [0], [0], [1], [0, 0, 1, 1], [], []>} : vector<16x16xf32>, vector<16x8xf32>, vector<16x8xf32> -> vector<16x8xf32>
    %c176 = arith.constant 176 : index
    %c0_112 = arith.constant 0 : index
    %354 = vector.load %arg4[%c176, %c0_112] : memref<576x128xf32, #tpu.memory_space<vmem>>, vector<8x32xf32>
    %cst_113 = arith.constant dense<0.000000e+00> : vector<16x32xf32>
    %355 = tpu.matmul %353, %354, %cst_113 {dimension_numbers = #tpu.dot_dimension_numbers<[1], [0], [0], [1], [0, 0, 1, 1], [], []>} : vector<16x8xf32>, vector<8x32xf32>, vector<16x32xf32> -> vector<16x32xf32>
    %356 = arith.addf %334, %355 : vector<16x32xf32>
    %357 = vector.extract_strided_slice %291 {offsets = [0, 24], sizes = [16, 8], strides = [1, 1]} : vector<16x96xf32> to vector<16x8xf32>
    %358 = vector.extract_strided_slice %291 {offsets = [0, 56], sizes = [16, 8], strides = [1, 1]} : vector<16x96xf32> to vector<16x8xf32>
    %359 = vector.extract_strided_slice %291 {offsets = [0, 88], sizes = [16, 8], strides = [1, 1]} : vector<16x96xf32> to vector<16x8xf32>
    %cst_114 = arith.constant dense<0.000000e+00> : vector<16x16xf32>
    %360 = tpu.matmul %357, %358, %cst_114 {dimension_numbers = #tpu.dot_dimension_numbers<[1], [1], [0], [0], [0, 0, 1, 0], [], []>} : vector<16x8xf32>, vector<16x8xf32>, vector<16x16xf32> -> vector<16x16xf32>
    %cst_115 = arith.constant 0.353553385 : f32
    %361 = vector.broadcast %cst_115 : f32 to vector<16x16xf32>
    %362 = arith.mulf %360, %361 : vector<16x16xf32>
    %cst_116 = arith.constant -1.000000e+09 : f32
    %363 = vector.broadcast %cst_116 : f32 to vector<16x16xf32>
    %364 = arith.select %3, %363, %362 : vector<16x16xi1>, vector<16x16xf32>
    %cst_117 = arith.constant dense<0xFF800000> : vector<16xf32>
    %365 = vector.multi_reduction <maximumf>, %364, %cst_117 [1] : vector<16x16xf32> to vector<16xf32>
    %366 = vector.shape_cast %365 : vector<16xf32> to vector<16x1xf32>
    %367 = vector.broadcast %366 : vector<16x1xf32> to vector<16x16xf32>
    %368 = arith.subf %364, %367 : vector<16x16xf32>
    %369 = math.exp %368 : vector<16x16xf32>
    %cst_118 = arith.constant dense<0.000000e+00> : vector<16xf32>
    %370 = vector.multi_reduction <add>, %369, %cst_118 [1] : vector<16x16xf32> to vector<16xf32>
    %371 = vector.shape_cast %370 : vector<16xf32> to vector<16x1xf32>
    %372 = tpu.reciprocal %371 {approx = true} : vector<16x1xf32> -> vector<16x1xf32>
    %373 = vector.broadcast %372 : vector<16x1xf32> to vector<16x16xf32>
    %374 = arith.mulf %369, %373 : vector<16x16xf32>
    %cst_119 = arith.constant dense<0.000000e+00> : vector<16x8xf32>
    %375 = tpu.matmul %374, %359, %cst_119 {dimension_numbers = #tpu.dot_dimension_numbers<[1], [0], [0], [1], [0, 0, 1, 1], [], []>} : vector<16x16xf32>, vector<16x8xf32>, vector<16x8xf32> -> vector<16x8xf32>
    %c184 = arith.constant 184 : index
    %c0_120 = arith.constant 0 : index
    %376 = vector.load %arg4[%c184, %c0_120] : memref<576x128xf32, #tpu.memory_space<vmem>>, vector<8x32xf32>
    %cst_121 = arith.constant dense<0.000000e+00> : vector<16x32xf32>
    %377 = tpu.matmul %375, %376, %cst_121 {dimension_numbers = #tpu.dot_dimension_numbers<[1], [0], [0], [1], [0, 0, 1, 1], [], []>} : vector<16x8xf32>, vector<8x32xf32>, vector<16x32xf32> -> vector<16x32xf32>
    %378 = arith.addf %356, %377 : vector<16x32xf32>
    %c3_122 = arith.constant 3 : index
    %c0_123 = arith.constant 0 : index
    %379 = vector.load %arg5[%c3_122, %c0_123] : memref<24x128xf32, #tpu.memory_space<vmem>>, vector<1x32xf32>
    %380 = vector.broadcast %379 : vector<1x32xf32> to vector<16x32xf32>
    %381 = arith.addf %378, %380 : vector<16x32xf32>
    %382 = arith.addf %286, %381 : vector<16x32xf32>
    %c6_124 = arith.constant 6 : index
    %c0_125 = arith.constant 0 : index
    %383 = vector.load %arg5[%c6_124, %c0_125] : memref<24x128xf32, #tpu.memory_space<vmem>>, vector<1x32xf32>
    %c7_126 = arith.constant 7 : index
    %c0_127 = arith.constant 0 : index
    %384 = vector.load %arg5[%c7_126, %c0_127] : memref<24x128xf32, #tpu.memory_space<vmem>>, vector<1x32xf32>
    %cst_128 = arith.constant dense<0.000000e+00> : vector<16xf32>
    %385 = vector.multi_reduction <add>, %382, %cst_128 [1] : vector<16x32xf32> to vector<16xf32>
    %386 = vector.shape_cast %385 : vector<16xf32> to vector<16x1xf32>
    %cst_129 = arith.constant 3.200000e+01 : f32
    %387 = vector.broadcast %cst_129 : f32 to vector<16x1xf32>
    %388 = arith.divf %386, %387 : vector<16x1xf32>
    %389 = vector.broadcast %388 : vector<16x1xf32> to vector<16x32xf32>
    %390 = arith.subf %382, %389 : vector<16x32xf32>
    %391 = arith.mulf %390, %390 : vector<16x32xf32>
    %cst_130 = arith.constant dense<0.000000e+00> : vector<16xf32>
    %392 = vector.multi_reduction <add>, %391, %cst_130 [1] : vector<16x32xf32> to vector<16xf32>
    %393 = vector.shape_cast %392 : vector<16xf32> to vector<16x1xf32>
    %cst_131 = arith.constant 3.100000e+01 : f32
    %394 = vector.broadcast %cst_131 : f32 to vector<16x1xf32>
    %395 = arith.divf %393, %394 : vector<16x1xf32>
    %396 = vector.broadcast %383 : vector<1x32xf32> to vector<16x32xf32>
    %397 = arith.mulf %396, %390 : vector<16x32xf32>
    %398 = math.sqrt %395 : vector<16x1xf32>
    %cst_132 = arith.constant 9.99999997E-7 : f32
    %399 = vector.broadcast %cst_132 : f32 to vector<16x1xf32>
    %400 = arith.addf %398, %399 : vector<16x1xf32>
    %401 = vector.broadcast %400 : vector<16x1xf32> to vector<16x32xf32>
    %402 = arith.divf %397, %401 : vector<16x32xf32>
    %403 = vector.broadcast %384 : vector<1x32xf32> to vector<16x32xf32>
    %404 = arith.addf %402, %403 : vector<16x32xf32>
    %c192 = arith.constant 192 : index
    %c0_133 = arith.constant 0 : index
    %405 = vector.load %arg4[%c192, %c0_133] : memref<576x128xf32, #tpu.memory_space<vmem>>, vector<32x64xf32>
    %cst_134 = arith.constant dense<0.000000e+00> : vector<16x64xf32>
    %406 = tpu.matmul %404, %405, %cst_134 {dimension_numbers = #tpu.dot_dimension_numbers<[1], [0], [0], [1], [0, 0, 1, 1], [], []>} : vector<16x32xf32>, vector<32x64xf32>, vector<16x64xf32> -> vector<16x64xf32>
    %c4_135 = arith.constant 4 : index
    %c0_136 = arith.constant 0 : index
    %407 = vector.load %arg5[%c4_135, %c0_136] : memref<24x128xf32, #tpu.memory_space<vmem>>, vector<1x64xf32>
    %408 = vector.broadcast %407 : vector<1x64xf32> to vector<16x64xf32>
    %409 = arith.addf %406, %408 : vector<16x64xf32>
    %cst_137 = arith.constant 0.000000e+00 : f32
    %410 = vector.broadcast %cst_137 : f32 to vector<16x64xf32>
    %411 = arith.maximumf %409, %410 : vector<16x64xf32>
    %c224 = arith.constant 224 : index
    %c0_138 = arith.constant 0 : index
    %412 = vector.load %arg4[%c224, %c0_138] : memref<576x128xf32, #tpu.memory_space<vmem>>, vector<64x32xf32>
    %cst_139 = arith.constant dense<0.000000e+00> : vector<16x32xf32>
    %413 = tpu.matmul %411, %412, %cst_139 {dimension_numbers = #tpu.dot_dimension_numbers<[1], [0], [0], [1], [0, 0, 1, 1], [], []>} : vector<16x64xf32>, vector<64x32xf32>, vector<16x32xf32> -> vector<16x32xf32>
    %c5_140 = arith.constant 5 : index
    %c0_141 = arith.constant 0 : index
    %414 = vector.load %arg5[%c5_140, %c0_141] : memref<24x128xf32, #tpu.memory_space<vmem>>, vector<1x32xf32>
    %415 = vector.broadcast %414 : vector<1x32xf32> to vector<16x32xf32>
    %416 = arith.addf %413, %415 : vector<16x32xf32>
    %417 = arith.addf %404, %416 : vector<16x32xf32>
    %c8 = arith.constant 8 : index
    %c0_142 = arith.constant 0 : index
    %418 = vector.load %arg5[%c8, %c0_142] : memref<24x128xf32, #tpu.memory_space<vmem>>, vector<1x32xf32>
    %c9 = arith.constant 9 : index
    %c0_143 = arith.constant 0 : index
    %419 = vector.load %arg5[%c9, %c0_143] : memref<24x128xf32, #tpu.memory_space<vmem>>, vector<1x32xf32>
    %cst_144 = arith.constant dense<0.000000e+00> : vector<16xf32>
    %420 = vector.multi_reduction <add>, %417, %cst_144 [1] : vector<16x32xf32> to vector<16xf32>
    %421 = vector.shape_cast %420 : vector<16xf32> to vector<16x1xf32>
    %cst_145 = arith.constant 3.200000e+01 : f32
    %422 = vector.broadcast %cst_145 : f32 to vector<16x1xf32>
    %423 = arith.divf %421, %422 : vector<16x1xf32>
    %424 = vector.broadcast %423 : vector<16x1xf32> to vector<16x32xf32>
    %425 = arith.subf %417, %424 : vector<16x32xf32>
    %426 = arith.mulf %425, %425 : vector<16x32xf32>
    %cst_146 = arith.constant dense<0.000000e+00> : vector<16xf32>
    %427 = vector.multi_reduction <add>, %426, %cst_146 [1] : vector<16x32xf32> to vector<16xf32>
    %428 = vector.shape_cast %427 : vector<16xf32> to vector<16x1xf32>
    %cst_147 = arith.constant 3.100000e+01 : f32
    %429 = vector.broadcast %cst_147 : f32 to vector<16x1xf32>
    %430 = arith.divf %428, %429 : vector<16x1xf32>
    %431 = vector.broadcast %418 : vector<1x32xf32> to vector<16x32xf32>
    %432 = arith.mulf %431, %425 : vector<16x32xf32>
    %433 = math.sqrt %430 : vector<16x1xf32>
    %cst_148 = arith.constant 9.99999997E-7 : f32
    %434 = vector.broadcast %cst_148 : f32 to vector<16x1xf32>
    %435 = arith.addf %433, %434 : vector<16x1xf32>
    %436 = vector.broadcast %435 : vector<16x1xf32> to vector<16x32xf32>
    %437 = arith.divf %432, %436 : vector<16x32xf32>
    %438 = vector.broadcast %419 : vector<1x32xf32> to vector<16x32xf32>
    %439 = arith.addf %437, %438 : vector<16x32xf32>
    %c288 = arith.constant 288 : index
    %c0_149 = arith.constant 0 : index
    %440 = vector.load %arg4[%c288, %c0_149] : memref<576x128xf32, #tpu.memory_space<vmem>>, vector<32x96xf32>
    %cst_150 = arith.constant dense<0.000000e+00> : vector<16x96xf32>
    %441 = tpu.matmul %439, %440, %cst_150 {dimension_numbers = #tpu.dot_dimension_numbers<[1], [0], [0], [1], [0, 0, 1, 1], [], []>} : vector<16x32xf32>, vector<32x96xf32>, vector<16x96xf32> -> vector<16x96xf32>
    %c10 = arith.constant 10 : index
    %c0_151 = arith.constant 0 : index
    %442 = vector.load %arg5[%c10, %c0_151] : memref<24x128xf32, #tpu.memory_space<vmem>>, vector<1x96xf32>
    %443 = vector.broadcast %442 : vector<1x96xf32> to vector<16x96xf32>
    %444 = arith.addf %441, %443 : vector<16x96xf32>
    %445 = vector.extract_strided_slice %444 {offsets = [0, 0], sizes = [16, 8], strides = [1, 1]} : vector<16x96xf32> to vector<16x8xf32>
    %446 = vector.extract_strided_slice %444 {offsets = [0, 32], sizes = [16, 8], strides = [1, 1]} : vector<16x96xf32> to vector<16x8xf32>
    %447 = vector.extract_strided_slice %444 {offsets = [0, 64], sizes = [16, 8], strides = [1, 1]} : vector<16x96xf32> to vector<16x8xf32>
    %cst_152 = arith.constant dense<0.000000e+00> : vector<16x16xf32>
    %448 = tpu.matmul %445, %446, %cst_152 {dimension_numbers = #tpu.dot_dimension_numbers<[1], [1], [0], [0], [0, 0, 1, 0], [], []>} : vector<16x8xf32>, vector<16x8xf32>, vector<16x16xf32> -> vector<16x16xf32>
    %cst_153 = arith.constant 0.353553385 : f32
    %449 = vector.broadcast %cst_153 : f32 to vector<16x16xf32>
    %450 = arith.mulf %448, %449 : vector<16x16xf32>
    %cst_154 = arith.constant -1.000000e+09 : f32
    %451 = vector.broadcast %cst_154 : f32 to vector<16x16xf32>
    %452 = arith.select %3, %451, %450 : vector<16x16xi1>, vector<16x16xf32>
    %cst_155 = arith.constant dense<0xFF800000> : vector<16xf32>
    %453 = vector.multi_reduction <maximumf>, %452, %cst_155 [1] : vector<16x16xf32> to vector<16xf32>
    %454 = vector.shape_cast %453 : vector<16xf32> to vector<16x1xf32>
    %455 = vector.broadcast %454 : vector<16x1xf32> to vector<16x16xf32>
    %456 = arith.subf %452, %455 : vector<16x16xf32>
    %457 = math.exp %456 : vector<16x16xf32>
    %cst_156 = arith.constant dense<0.000000e+00> : vector<16xf32>
    %458 = vector.multi_reduction <add>, %457, %cst_156 [1] : vector<16x16xf32> to vector<16xf32>
    %459 = vector.shape_cast %458 : vector<16xf32> to vector<16x1xf32>
    %460 = tpu.reciprocal %459 {approx = true} : vector<16x1xf32> -> vector<16x1xf32>
    %461 = vector.broadcast %460 : vector<16x1xf32> to vector<16x16xf32>
    %462 = arith.mulf %457, %461 : vector<16x16xf32>
    %cst_157 = arith.constant dense<0.000000e+00> : vector<16x8xf32>
    %463 = tpu.matmul %462, %447, %cst_157 {dimension_numbers = #tpu.dot_dimension_numbers<[1], [0], [0], [1], [0, 0, 1, 1], [], []>} : vector<16x16xf32>, vector<16x8xf32>, vector<16x8xf32> -> vector<16x8xf32>
    %c320 = arith.constant 320 : index
    %c0_158 = arith.constant 0 : index
    %464 = vector.load %arg4[%c320, %c0_158] : memref<576x128xf32, #tpu.memory_space<vmem>>, vector<8x32xf32>
    %cst_159 = arith.constant dense<0.000000e+00> : vector<16x32xf32>
    %465 = tpu.matmul %463, %464, %cst_159 {dimension_numbers = #tpu.dot_dimension_numbers<[1], [0], [0], [1], [0, 0, 1, 1], [], []>} : vector<16x8xf32>, vector<8x32xf32>, vector<16x32xf32> -> vector<16x32xf32>
    %466 = vector.extract_strided_slice %444 {offsets = [0, 8], sizes = [16, 8], strides = [1, 1]} : vector<16x96xf32> to vector<16x8xf32>
    %467 = vector.extract_strided_slice %444 {offsets = [0, 40], sizes = [16, 8], strides = [1, 1]} : vector<16x96xf32> to vector<16x8xf32>
    %468 = vector.extract_strided_slice %444 {offsets = [0, 72], sizes = [16, 8], strides = [1, 1]} : vector<16x96xf32> to vector<16x8xf32>
    %cst_160 = arith.constant dense<0.000000e+00> : vector<16x16xf32>
    %469 = tpu.matmul %466, %467, %cst_160 {dimension_numbers = #tpu.dot_dimension_numbers<[1], [1], [0], [0], [0, 0, 1, 0], [], []>} : vector<16x8xf32>, vector<16x8xf32>, vector<16x16xf32> -> vector<16x16xf32>
    %cst_161 = arith.constant 0.353553385 : f32
    %470 = vector.broadcast %cst_161 : f32 to vector<16x16xf32>
    %471 = arith.mulf %469, %470 : vector<16x16xf32>
    %cst_162 = arith.constant -1.000000e+09 : f32
    %472 = vector.broadcast %cst_162 : f32 to vector<16x16xf32>
    %473 = arith.select %3, %472, %471 : vector<16x16xi1>, vector<16x16xf32>
    %cst_163 = arith.constant dense<0xFF800000> : vector<16xf32>
    %474 = vector.multi_reduction <maximumf>, %473, %cst_163 [1] : vector<16x16xf32> to vector<16xf32>
    %475 = vector.shape_cast %474 : vector<16xf32> to vector<16x1xf32>
    %476 = vector.broadcast %475 : vector<16x1xf32> to vector<16x16xf32>
    %477 = arith.subf %473, %476 : vector<16x16xf32>
    %478 = math.exp %477 : vector<16x16xf32>
    %cst_164 = arith.constant dense<0.000000e+00> : vector<16xf32>
    %479 = vector.multi_reduction <add>, %478, %cst_164 [1] : vector<16x16xf32> to vector<16xf32>
    %480 = vector.shape_cast %479 : vector<16xf32> to vector<16x1xf32>
    %481 = tpu.reciprocal %480 {approx = true} : vector<16x1xf32> -> vector<16x1xf32>
    %482 = vector.broadcast %481 : vector<16x1xf32> to vector<16x16xf32>
    %483 = arith.mulf %478, %482 : vector<16x16xf32>
    %cst_165 = arith.constant dense<0.000000e+00> : vector<16x8xf32>
    %484 = tpu.matmul %483, %468, %cst_165 {dimension_numbers = #tpu.dot_dimension_numbers<[1], [0], [0], [1], [0, 0, 1, 1], [], []>} : vector<16x16xf32>, vector<16x8xf32>, vector<16x8xf32> -> vector<16x8xf32>
    %c328 = arith.constant 328 : index
    %c0_166 = arith.constant 0 : index
    %485 = vector.load %arg4[%c328, %c0_166] : memref<576x128xf32, #tpu.memory_space<vmem>>, vector<8x32xf32>
    %cst_167 = arith.constant dense<0.000000e+00> : vector<16x32xf32>
    %486 = tpu.matmul %484, %485, %cst_167 {dimension_numbers = #tpu.dot_dimension_numbers<[1], [0], [0], [1], [0, 0, 1, 1], [], []>} : vector<16x8xf32>, vector<8x32xf32>, vector<16x32xf32> -> vector<16x32xf32>
    %487 = arith.addf %465, %486 : vector<16x32xf32>
    %488 = vector.extract_strided_slice %444 {offsets = [0, 16], sizes = [16, 8], strides = [1, 1]} : vector<16x96xf32> to vector<16x8xf32>
    %489 = vector.extract_strided_slice %444 {offsets = [0, 48], sizes = [16, 8], strides = [1, 1]} : vector<16x96xf32> to vector<16x8xf32>
    %490 = vector.extract_strided_slice %444 {offsets = [0, 80], sizes = [16, 8], strides = [1, 1]} : vector<16x96xf32> to vector<16x8xf32>
    %cst_168 = arith.constant dense<0.000000e+00> : vector<16x16xf32>
    %491 = tpu.matmul %488, %489, %cst_168 {dimension_numbers = #tpu.dot_dimension_numbers<[1], [1], [0], [0], [0, 0, 1, 0], [], []>} : vector<16x8xf32>, vector<16x8xf32>, vector<16x16xf32> -> vector<16x16xf32>
    %cst_169 = arith.constant 0.353553385 : f32
    %492 = vector.broadcast %cst_169 : f32 to vector<16x16xf32>
    %493 = arith.mulf %491, %492 : vector<16x16xf32>
    %cst_170 = arith.constant -1.000000e+09 : f32
    %494 = vector.broadcast %cst_170 : f32 to vector<16x16xf32>
    %495 = arith.select %3, %494, %493 : vector<16x16xi1>, vector<16x16xf32>
    %cst_171 = arith.constant dense<0xFF800000> : vector<16xf32>
    %496 = vector.multi_reduction <maximumf>, %495, %cst_171 [1] : vector<16x16xf32> to vector<16xf32>
    %497 = vector.shape_cast %496 : vector<16xf32> to vector<16x1xf32>
    %498 = vector.broadcast %497 : vector<16x1xf32> to vector<16x16xf32>
    %499 = arith.subf %495, %498 : vector<16x16xf32>
    %500 = math.exp %499 : vector<16x16xf32>
    %cst_172 = arith.constant dense<0.000000e+00> : vector<16xf32>
    %501 = vector.multi_reduction <add>, %500, %cst_172 [1] : vector<16x16xf32> to vector<16xf32>
    %502 = vector.shape_cast %501 : vector<16xf32> to vector<16x1xf32>
    %503 = tpu.reciprocal %502 {approx = true} : vector<16x1xf32> -> vector<16x1xf32>
    %504 = vector.broadcast %503 : vector<16x1xf32> to vector<16x16xf32>
    %505 = arith.mulf %500, %504 : vector<16x16xf32>
    %cst_173 = arith.constant dense<0.000000e+00> : vector<16x8xf32>
    %506 = tpu.matmul %505, %490, %cst_173 {dimension_numbers = #tpu.dot_dimension_numbers<[1], [0], [0], [1], [0, 0, 1, 1], [], []>} : vector<16x16xf32>, vector<16x8xf32>, vector<16x8xf32> -> vector<16x8xf32>
    %c336 = arith.constant 336 : index
    %c0_174 = arith.constant 0 : index
    %507 = vector.load %arg4[%c336, %c0_174] : memref<576x128xf32, #tpu.memory_space<vmem>>, vector<8x32xf32>
    %cst_175 = arith.constant dense<0.000000e+00> : vector<16x32xf32>
    %508 = tpu.matmul %506, %507, %cst_175 {dimension_numbers = #tpu.dot_dimension_numbers<[1], [0], [0], [1], [0, 0, 1, 1], [], []>} : vector<16x8xf32>, vector<8x32xf32>, vector<16x32xf32> -> vector<16x32xf32>
    %509 = arith.addf %487, %508 : vector<16x32xf32>
    %510 = vector.extract_strided_slice %444 {offsets = [0, 24], sizes = [16, 8], strides = [1, 1]} : vector<16x96xf32> to vector<16x8xf32>
    %511 = vector.extract_strided_slice %444 {offsets = [0, 56], sizes = [16, 8], strides = [1, 1]} : vector<16x96xf32> to vector<16x8xf32>
    %512 = vector.extract_strided_slice %444 {offsets = [0, 88], sizes = [16, 8], strides = [1, 1]} : vector<16x96xf32> to vector<16x8xf32>
    %cst_176 = arith.constant dense<0.000000e+00> : vector<16x16xf32>
    %513 = tpu.matmul %510, %511, %cst_176 {dimension_numbers = #tpu.dot_dimension_numbers<[1], [1], [0], [0], [0, 0, 1, 0], [], []>} : vector<16x8xf32>, vector<16x8xf32>, vector<16x16xf32> -> vector<16x16xf32>
    %cst_177 = arith.constant 0.353553385 : f32
    %514 = vector.broadcast %cst_177 : f32 to vector<16x16xf32>
    %515 = arith.mulf %513, %514 : vector<16x16xf32>
    %cst_178 = arith.constant -1.000000e+09 : f32
    %516 = vector.broadcast %cst_178 : f32 to vector<16x16xf32>
    %517 = arith.select %3, %516, %515 : vector<16x16xi1>, vector<16x16xf32>
    %cst_179 = arith.constant dense<0xFF800000> : vector<16xf32>
    %518 = vector.multi_reduction <maximumf>, %517, %cst_179 [1] : vector<16x16xf32> to vector<16xf32>
    %519 = vector.shape_cast %518 : vector<16xf32> to vector<16x1xf32>
    %520 = vector.broadcast %519 : vector<16x1xf32> to vector<16x16xf32>
    %521 = arith.subf %517, %520 : vector<16x16xf32>
    %522 = math.exp %521 : vector<16x16xf32>
    %cst_180 = arith.constant dense<0.000000e+00> : vector<16xf32>
    %523 = vector.multi_reduction <add>, %522, %cst_180 [1] : vector<16x16xf32> to vector<16xf32>
    %524 = vector.shape_cast %523 : vector<16xf32> to vector<16x1xf32>
    %525 = tpu.reciprocal %524 {approx = true} : vector<16x1xf32> -> vector<16x1xf32>
    %526 = vector.broadcast %525 : vector<16x1xf32> to vector<16x16xf32>
    %527 = arith.mulf %522, %526 : vector<16x16xf32>
    %cst_181 = arith.constant dense<0.000000e+00> : vector<16x8xf32>
    %528 = tpu.matmul %527, %512, %cst_181 {dimension_numbers = #tpu.dot_dimension_numbers<[1], [0], [0], [1], [0, 0, 1, 1], [], []>} : vector<16x16xf32>, vector<16x8xf32>, vector<16x8xf32> -> vector<16x8xf32>
    %c344 = arith.constant 344 : index
    %c0_182 = arith.constant 0 : index
    %529 = vector.load %arg4[%c344, %c0_182] : memref<576x128xf32, #tpu.memory_space<vmem>>, vector<8x32xf32>
    %cst_183 = arith.constant dense<0.000000e+00> : vector<16x32xf32>
    %530 = tpu.matmul %528, %529, %cst_183 {dimension_numbers = #tpu.dot_dimension_numbers<[1], [0], [0], [1], [0, 0, 1, 1], [], []>} : vector<16x8xf32>, vector<8x32xf32>, vector<16x32xf32> -> vector<16x32xf32>
    %531 = arith.addf %509, %530 : vector<16x32xf32>
    %c11 = arith.constant 11 : index
    %c0_184 = arith.constant 0 : index
    %532 = vector.load %arg5[%c11, %c0_184] : memref<24x128xf32, #tpu.memory_space<vmem>>, vector<1x32xf32>
    %533 = vector.broadcast %532 : vector<1x32xf32> to vector<16x32xf32>
    %534 = arith.addf %531, %533 : vector<16x32xf32>
    %535 = arith.addf %439, %534 : vector<16x32xf32>
    %c14 = arith.constant 14 : index
    %c0_185 = arith.constant 0 : index
    %536 = vector.load %arg5[%c14, %c0_185] : memref<24x128xf32, #tpu.memory_space<vmem>>, vector<1x32xf32>
    %c15 = arith.constant 15 : index
    %c0_186 = arith.constant 0 : index
    %537 = vector.load %arg5[%c15, %c0_186] : memref<24x128xf32, #tpu.memory_space<vmem>>, vector<1x32xf32>
    %cst_187 = arith.constant dense<0.000000e+00> : vector<16xf32>
    %538 = vector.multi_reduction <add>, %535, %cst_187 [1] : vector<16x32xf32> to vector<16xf32>
    %539 = vector.shape_cast %538 : vector<16xf32> to vector<16x1xf32>
    %cst_188 = arith.constant 3.200000e+01 : f32
    %540 = vector.broadcast %cst_188 : f32 to vector<16x1xf32>
    %541 = arith.divf %539, %540 : vector<16x1xf32>
    %542 = vector.broadcast %541 : vector<16x1xf32> to vector<16x32xf32>
    %543 = arith.subf %535, %542 : vector<16x32xf32>
    %544 = arith.mulf %543, %543 : vector<16x32xf32>
    %cst_189 = arith.constant dense<0.000000e+00> : vector<16xf32>
    %545 = vector.multi_reduction <add>, %544, %cst_189 [1] : vector<16x32xf32> to vector<16xf32>
    %546 = vector.shape_cast %545 : vector<16xf32> to vector<16x1xf32>
    %cst_190 = arith.constant 3.100000e+01 : f32
    %547 = vector.broadcast %cst_190 : f32 to vector<16x1xf32>
    %548 = arith.divf %546, %547 : vector<16x1xf32>
    %549 = vector.broadcast %536 : vector<1x32xf32> to vector<16x32xf32>
    %550 = arith.mulf %549, %543 : vector<16x32xf32>
    %551 = math.sqrt %548 : vector<16x1xf32>
    %cst_191 = arith.constant 9.99999997E-7 : f32
    %552 = vector.broadcast %cst_191 : f32 to vector<16x1xf32>
    %553 = arith.addf %551, %552 : vector<16x1xf32>
    %554 = vector.broadcast %553 : vector<16x1xf32> to vector<16x32xf32>
    %555 = arith.divf %550, %554 : vector<16x32xf32>
    %556 = vector.broadcast %537 : vector<1x32xf32> to vector<16x32xf32>
    %557 = arith.addf %555, %556 : vector<16x32xf32>
    %c352 = arith.constant 352 : index
    %c0_192 = arith.constant 0 : index
    %558 = vector.load %arg4[%c352, %c0_192] : memref<576x128xf32, #tpu.memory_space<vmem>>, vector<32x64xf32>
    %cst_193 = arith.constant dense<0.000000e+00> : vector<16x64xf32>
    %559 = tpu.matmul %557, %558, %cst_193 {dimension_numbers = #tpu.dot_dimension_numbers<[1], [0], [0], [1], [0, 0, 1, 1], [], []>} : vector<16x32xf32>, vector<32x64xf32>, vector<16x64xf32> -> vector<16x64xf32>
    %c12 = arith.constant 12 : index
    %c0_194 = arith.constant 0 : index
    %560 = vector.load %arg5[%c12, %c0_194] : memref<24x128xf32, #tpu.memory_space<vmem>>, vector<1x64xf32>
    %561 = vector.broadcast %560 : vector<1x64xf32> to vector<16x64xf32>
    %562 = arith.addf %559, %561 : vector<16x64xf32>
    %cst_195 = arith.constant 0.000000e+00 : f32
    %563 = vector.broadcast %cst_195 : f32 to vector<16x64xf32>
    %564 = arith.maximumf %562, %563 : vector<16x64xf32>
    %c384 = arith.constant 384 : index
    %c0_196 = arith.constant 0 : index
    %565 = vector.load %arg4[%c384, %c0_196] : memref<576x128xf32, #tpu.memory_space<vmem>>, vector<64x32xf32>
    %cst_197 = arith.constant dense<0.000000e+00> : vector<16x32xf32>
    %566 = tpu.matmul %564, %565, %cst_197 {dimension_numbers = #tpu.dot_dimension_numbers<[1], [0], [0], [1], [0, 0, 1, 1], [], []>} : vector<16x64xf32>, vector<64x32xf32>, vector<16x32xf32> -> vector<16x32xf32>
    %c13 = arith.constant 13 : index
    %c0_198 = arith.constant 0 : index
    %567 = vector.load %arg5[%c13, %c0_198] : memref<24x128xf32, #tpu.memory_space<vmem>>, vector<1x32xf32>
    %568 = vector.broadcast %567 : vector<1x32xf32> to vector<16x32xf32>
    %569 = arith.addf %566, %568 : vector<16x32xf32>
    %570 = arith.addf %557, %569 : vector<16x32xf32>
    %c16 = arith.constant 16 : index
    %c0_199 = arith.constant 0 : index
    %571 = vector.load %arg5[%c16, %c0_199] : memref<24x128xf32, #tpu.memory_space<vmem>>, vector<1x32xf32>
    %c17 = arith.constant 17 : index
    %c0_200 = arith.constant 0 : index
    %572 = vector.load %arg5[%c17, %c0_200] : memref<24x128xf32, #tpu.memory_space<vmem>>, vector<1x32xf32>
    %cst_201 = arith.constant dense<0.000000e+00> : vector<16xf32>
    %573 = vector.multi_reduction <add>, %570, %cst_201 [1] : vector<16x32xf32> to vector<16xf32>
    %574 = vector.shape_cast %573 : vector<16xf32> to vector<16x1xf32>
    %cst_202 = arith.constant 3.200000e+01 : f32
    %575 = vector.broadcast %cst_202 : f32 to vector<16x1xf32>
    %576 = arith.divf %574, %575 : vector<16x1xf32>
    %577 = vector.broadcast %576 : vector<16x1xf32> to vector<16x32xf32>
    %578 = arith.subf %570, %577 : vector<16x32xf32>
    %579 = arith.mulf %578, %578 : vector<16x32xf32>
    %cst_203 = arith.constant dense<0.000000e+00> : vector<16xf32>
    %580 = vector.multi_reduction <add>, %579, %cst_203 [1] : vector<16x32xf32> to vector<16xf32>
    %581 = vector.shape_cast %580 : vector<16xf32> to vector<16x1xf32>
    %cst_204 = arith.constant 3.100000e+01 : f32
    %582 = vector.broadcast %cst_204 : f32 to vector<16x1xf32>
    %583 = arith.divf %581, %582 : vector<16x1xf32>
    %584 = vector.broadcast %571 : vector<1x32xf32> to vector<16x32xf32>
    %585 = arith.mulf %584, %578 : vector<16x32xf32>
    %586 = math.sqrt %583 : vector<16x1xf32>
    %cst_205 = arith.constant 9.99999997E-7 : f32
    %587 = vector.broadcast %cst_205 : f32 to vector<16x1xf32>
    %588 = arith.addf %586, %587 : vector<16x1xf32>
    %589 = vector.broadcast %588 : vector<16x1xf32> to vector<16x32xf32>
    %590 = arith.divf %585, %589 : vector<16x32xf32>
    %591 = vector.broadcast %572 : vector<1x32xf32> to vector<16x32xf32>
    %592 = arith.addf %590, %591 : vector<16x32xf32>
    %c448 = arith.constant 448 : index
    %c0_206 = arith.constant 0 : index
    %593 = vector.load %arg4[%c448, %c0_206] : memref<576x128xf32, #tpu.memory_space<vmem>>, vector<32x32xf32>
    %cst_207 = arith.constant dense<0.000000e+00> : vector<16x32xf32>
    %594 = tpu.matmul %592, %593, %cst_207 {dimension_numbers = #tpu.dot_dimension_numbers<[1], [0], [0], [1], [0, 0, 1, 1], [], []>} : vector<16x32xf32>, vector<32x32xf32>, vector<16x32xf32> -> vector<16x32xf32>
    %c18 = arith.constant 18 : index
    %c0_208 = arith.constant 0 : index
    %595 = vector.load %arg5[%c18, %c0_208] : memref<24x128xf32, #tpu.memory_space<vmem>>, vector<1x32xf32>
    %596 = vector.broadcast %595 : vector<1x32xf32> to vector<16x32xf32>
    %597 = arith.addf %594, %596 : vector<16x32xf32>
    %cst_209 = arith.constant 0.000000e+00 : f32
    %598 = vector.broadcast %cst_209 : f32 to vector<16x32xf32>
    %599 = arith.maximumf %597, %598 : vector<16x32xf32>
    %c480 = arith.constant 480 : index
    %c0_210 = arith.constant 0 : index
    %600 = vector.load %arg4[%c480, %c0_210] : memref<576x128xf32, #tpu.memory_space<vmem>>, vector<32x2xf32>
    %cst_211 = arith.constant dense<0.000000e+00> : vector<16x2xf32>
    %601 = tpu.matmul %599, %600, %cst_211 {dimension_numbers = #tpu.dot_dimension_numbers<[1], [0], [0], [1], [0, 0, 1, 1], [], []>} : vector<16x32xf32>, vector<32x2xf32>, vector<16x2xf32> -> vector<16x2xf32>
    %c19 = arith.constant 19 : index
    %c0_212 = arith.constant 0 : index
    %602 = vector.load %arg5[%c19, %c0_212] : memref<24x128xf32, #tpu.memory_space<vmem>>, vector<1x2xf32>
    %603 = vector.broadcast %602 : vector<1x2xf32> to vector<16x2xf32>
    %604 = arith.addf %601, %603 : vector<16x2xf32>
    %605 = vector.shape_cast %604 : vector<16x2xf32> to vector<2x8x2xf32>
    %cst_213 = arith.constant -1.000000e+09 : f32
    %606 = vector.shape_cast %6 : vector<2x8x1xi1> to vector<2x8x1xi1>
    %607 = vector.broadcast %606 : vector<2x8x1xi1> to vector<2x8x2xi1>
    %608 = vector.broadcast %cst_213 : f32 to vector<2x8x2xf32>
    %609 = arith.select %607, %608, %605 : vector<2x8x2xi1>, vector<2x8x2xf32>
    %cst_214 = arith.constant dense<0xFF800000> : vector<2x2xf32>
    %610 = vector.multi_reduction <maximumf>, %609, %cst_214 [1] : vector<2x8x2xf32> to vector<2x2xf32>
    %611 = vector.shape_cast %610 : vector<2x2xf32> to vector<2x1x2xf32>
    %612 = vector.broadcast %611 : vector<2x1x2xf32> to vector<2x8x2xf32>
    %613 = arith.subf %609, %612 : vector<2x8x2xf32>
    %614 = math.exp %613 : vector<2x8x2xf32>
    %cst_215 = arith.constant dense<0.000000e+00> : vector<2x2xf32>
    %615 = vector.multi_reduction <add>, %614, %cst_215 [1] : vector<2x8x2xf32> to vector<2x2xf32>
    %616 = vector.shape_cast %615 : vector<2x2xf32> to vector<2x1x2xf32>
    %617 = tpu.reciprocal %616 {approx = true} : vector<2x1x2xf32> -> vector<2x1x2xf32>
    %618 = vector.broadcast %617 : vector<2x1x2xf32> to vector<2x8x2xf32>
    %619 = arith.mulf %614, %618 : vector<2x8x2xf32>
    %620 = vector.shape_cast %592 : vector<16x32xf32> to vector<2x8x32xf32>
    %c20 = arith.constant 20 : index
    %c0_216 = arith.constant 0 : index
    %621 = vector.load %arg5[%c20, %c0_216] : memref<24x128xf32, #tpu.memory_space<vmem>>, vector<1x32xf32>
    %622 = vector.extract_strided_slice %619 {offsets = [0, 0, 0], sizes = [2, 8, 1], strides = [1, 1, 1]} : vector<2x8x2xf32> to vector<2x8x1xf32>
    %623 = vector.broadcast %622 : vector<2x8x1xf32> to vector<2x8x32xf32>
    %624 = arith.mulf %623, %620 : vector<2x8x32xf32>
    %cst_217 = arith.constant dense<0.000000e+00> : vector<2x32xf32>
    %625 = vector.multi_reduction <add>, %624, %cst_217 [1] : vector<2x8x32xf32> to vector<2x32xf32>
    %c512 = arith.constant 512 : index
    %c0_218 = arith.constant 0 : index
    %626 = vector.load %arg4[%c512, %c0_218] : memref<576x128xf32, #tpu.memory_space<vmem>>, vector<32x32xf32>
    %cst_219 = arith.constant dense<0.000000e+00> : vector<2x32xf32>
    %627 = tpu.matmul %625, %626, %cst_219 {dimension_numbers = #tpu.dot_dimension_numbers<[1], [0], [0], [1], [0, 0, 1, 1], [], []>} : vector<2x32xf32>, vector<32x32xf32>, vector<2x32xf32> -> vector<2x32xf32>
    %628 = vector.broadcast %621 : vector<1x32xf32> to vector<2x32xf32>
    %629 = arith.addf %628, %627 : vector<2x32xf32>
    %630 = vector.extract_strided_slice %619 {offsets = [0, 0, 1], sizes = [2, 8, 1], strides = [1, 1, 1]} : vector<2x8x2xf32> to vector<2x8x1xf32>
    %631 = vector.broadcast %630 : vector<2x8x1xf32> to vector<2x8x32xf32>
    %632 = arith.mulf %631, %620 : vector<2x8x32xf32>
    %cst_220 = arith.constant dense<0.000000e+00> : vector<2x32xf32>
    %633 = vector.multi_reduction <add>, %632, %cst_220 [1] : vector<2x8x32xf32> to vector<2x32xf32>
    %c544 = arith.constant 544 : index
    %c0_221 = arith.constant 0 : index
    %634 = vector.load %arg4[%c544, %c0_221] : memref<576x128xf32, #tpu.memory_space<vmem>>, vector<32x32xf32>
    %cst_222 = arith.constant dense<0.000000e+00> : vector<2x32xf32>
    %635 = tpu.matmul %633, %634, %cst_222 {dimension_numbers = #tpu.dot_dimension_numbers<[1], [0], [0], [1], [0, 0, 1, 1], [], []>} : vector<2x32xf32>, vector<32x32xf32>, vector<2x32xf32> -> vector<2x32xf32>
    %636 = arith.addf %629, %635 : vector<2x32xf32>
    %c0_223 = arith.constant 0 : index
    %c0_224 = arith.constant 0 : index
    %637 = vector.load %arg6[%c0_223, %c0_224] : memref<18x32xf32, #tpu.memory_space<vmem>>, vector<16x32xf32>
    tpu.vector_store %arg6[%c0_223, %c0_224], %592 {strides = array<i32>} : memref<18x32xf32, #tpu.memory_space<vmem>>, vector<16x32xf32>,
    %c16_225 = arith.constant 16 : index
    %c0_226 = arith.constant 0 : index
    %638 = vector.load %arg6[%c16_225, %c0_226] : memref<18x32xf32, #tpu.memory_space<vmem>>, vector<2x32xf32>
    tpu.vector_store %arg6[%c16_225, %c0_226], %636 {strides = array<i32>} : memref<18x32xf32, #tpu.memory_space<vmem>>, vector<2x32xf32>,
    return
  }
  func.func @transform_0(%arg0: i32) -> (i32, i32) {
    %c0_i32 = arith.constant 0 : i32
    %c0_i32_0 = arith.constant 0 : i32
    %c0_i32_1 = arith.constant 0 : i32
    return %c0_i32, %c0_i32_0 : i32, i32
  }
  func.func @transform_1(%arg0: i32) -> (i32, i32) {
    %c0_i32 = arith.constant 0 : i32
    %c0_i32_0 = arith.constant 0 : i32
    %c0_i32_1 = arith.constant 0 : i32
    return %c0_i32, %c0_i32_0 : i32, i32
  }
  func.func @transform_2(%arg0: i32) -> (i32, i32, i32) {
    %c0_i32 = arith.constant 0 : i32
    %c0_i32_0 = arith.constant 0 : i32
    %c0_i32_1 = arith.constant 0 : i32
    %c0_i32_2 = arith.constant 0 : i32
    return %c0_i32, %c0_i32_0, %c0_i32_1 : i32, i32, i32
  }
  func.func @transform_3(%arg0: i32) -> (i32, i32) {
    %c0_i32 = arith.constant 0 : i32
    %c0_i32_0 = arith.constant 0 : i32
    %c0_i32_1 = arith.constant 0 : i32
    return %c0_i32, %c0_i32_0 : i32, i32
  }
  func.func @transform_4(%arg0: i32) -> (i32, i32) {
    %c0_i32 = arith.constant 0 : i32
    %c0_i32_0 = arith.constant 0 : i32
    %c0_i32_1 = arith.constant 0 : i32
    return %c0_i32, %c0_i32_0 : i32, i32
  }
  func.func @transform_5(%arg0: i32) -> (i32, i32) {
    %c0_i32 = arith.constant 0 : i32
    %c0_i32_0 = arith.constant 0 : i32
    %c0_i32_1 = arith.constant 0 : i32
    return %c0_i32, %c0_i32_0 : i32, i32
  }
}

</mosaic_0001>

<llo_original>
// kernel: lstm_sa_forward.1
$region0: #{lstm_sa_forward.1}
  #allocation0 [shape = 'u32[]', space=smem, size = 0x4, offset = 0x4, fixed_abs, tag = 'smem constant byte address 0x4 - core index']
  #allocation1 [shape = 'u32[144,128]{1,0:T(1,128)}', space=vmem, size = 0x12000, scoped, tag = 'internal scratch']
  #allocation2 [shape = 'f32[2,8,32]{2,1,0:T(8,128)}', space=vmem, size = 0x2000, scoped, tag = 'scratch operand']
  %s0 = inlined_call_operand.vmem [shape: f32[16,32], index: 0, kind: input, shape index: {}]
  %s1 = inlined_call_operand.vmem [shape: f32[16,16], index: 1, kind: input, shape index: {}]
  %s2 = inlined_call_operand.vmem [shape: f32[2,8,1], index: 2, kind: input, shape index: {}]
  %s3 = inlined_call_operand.hbm [shape: f32[576,128], index: 3, kind: input, shape index: {}]
  %s4 = inlined_call_operand.vmem [shape: f32[24,128], index: 4, kind: input, shape index: {}]
  %s5 = inlined_call_operand.vmem [shape: f32[18,32], index: 5, kind: output, shape index: {}]
  %s6 = sld [smem:[#allocation0]]
  $region34: #{lstm_sa_forward.1} parent=0
    _
  %s8 = ssub.s32 1, %s6
  %s9 = scalar_select 0, %s8, %s6
  $region1: #{lstm_sa_forward.1} parent=0
    #allocation3 [shape = 'u8[294912]{0}', space=vmem, size = 0x48000, scoped, tag = 'input window, operand 3, single buffered']
    #allocation4 [shape = 's32[1]{0}', space=sflag, size = 0x4, scoped, tag = 'scoped memory for lstm_sa_forward.1']
    %10 = vsyncpa [#allocation4], 0
    // Predicated region
    $region2: #{lstm_sa_forward.1} parent=1 // pred_check
      _
    $region3: #{lstm_sa_forward.1} parent=1 // pred_check_branch
      %12 = sbr.rel (0) target = $region5
    $region4: #{lstm_sa_forward.1} parent=1 // pred_region
      _
    $region5: #{lstm_sa_forward.1} parent=1 // pred_fallthru
      _
    // Predicated region
    $region6: #{lstm_sa_forward.1} parent=1 // pred_check
      _
    $region7: #{lstm_sa_forward.1} parent=1 // pred_check_branch
      %14 = sbr.rel (0) target = $region9
    $region8: #{lstm_sa_forward.1} parent=1 // pred_region
      _
    $region9: #{lstm_sa_forward.1} parent=1 // pred_fallthru
      _
    // Predicated region
    $region10: #{lstm_sa_forward.1} parent=1 // pred_check
      _
    $region11: #{lstm_sa_forward.1} parent=1 // pred_check_branch
      %16 = sbr.rel (0) target = $region13
    $region12: #{lstm_sa_forward.1} parent=1 // pred_region
      _
    $region13: #{lstm_sa_forward.1} parent=1 // pred_fallthru
      _
    // Predicated region
    $region14: #{lstm_sa_forward.1} parent=1 // pred_check
      _
    $region15: #{lstm_sa_forward.1} parent=1 // pred_check_branch
      %18 = sbr.rel (0) target = $region17
    $region16: #{lstm_sa_forward.1} parent=1 // pred_region
      %s20 = ssub.s32 9216, 9216
      %21 = vsyncadd [#allocation4], %s20
      %s22 = sshll.u32 [#allocation3], 4
      %s23 = int_to_ptr.vmem [resolvable:$true] %s22
      %28 = dma.hbm_to_vmem [thread:$0]  %s3, 9216, %s23, [#allocation4], 128, 128, 8
    $region17: #{lstm_sa_forward.1} parent=1 // pred_fallthru
      _
    // Predicated region
    $region18: #{lstm_sa_forward.1} parent=1 // pred_check
      _
    $region19: #{lstm_sa_forward.1} parent=1 // pred_check_branch
      %30 = sbr.rel (0) target = $region21
    $region20: #{lstm_sa_forward.1} parent=1 // pred_region
      _
    $region21: #{lstm_sa_forward.1} parent=1 // pred_fallthru
      _
    // Predicated region
    $region22: #{lstm_sa_forward.1} parent=1 // pred_check
      _
    $region23: #{lstm_sa_forward.1} parent=1 // pred_check_branch
      %32 = sbr.rel (0) target = $region25
    $region24: #{lstm_sa_forward.1} parent=1 // pred_region
      %33 = dma.done [#allocation4], 9216
    $region25: #{lstm_sa_forward.1} parent=1 // pred_fallthru
      _
    %v34 = vld [vmem:[%s0] sm:$0xff]
    %v35 = vld [vmem:[%s0 + $0x8] sm:$0xff]
    %v36 = vld [vmem:[%s1] sm:$0xff]
    %v37 = vld [vmem:[%s1 + $0x8] sm:$0xff]
    %vm38 = vcmp.gt.f32.partialorder %v36, 0.0
    %vm39 = vcmp.gt.f32.partialorder %v37, 0.0
    %v40 = vld [vmem:[%s2] sm:$0xff]
    %v41 = vld [vmem:[%s2 + $0x8] sm:$0xff]
    %vm42 = vcmp.gt.f32.partialorder %v40, 0.0
    %vm43 = vcmp.gt.f32.partialorder %v41, 0.0
    %v44 = vld [vmem:[#allocation3] sm:$0xff]
    %v45 = vld [vmem:[#allocation3 + $0x8] sm:$0xff]
    %v46 = vld [vmem:[#allocation3 + $0x10] sm:$0xff]
    %v47 = vld [vmem:[#allocation3 + $0x18] sm:$0xff]
    %v48 = vld [vmem:[%s4] sm:$0x1]
    %v49 = vlaneseq
    %v50 = vshrl.u32 %v49, 7
    %v51 = vsub.s32 0, %v50
    %v52 = vrot.slane %v48, %v51
    %vm53 = vcmask 261120
    %v55 = vsel %vm53, %v34, 0
    %v58 = vsel %vm53, %v35, 0
    %60 = vmatprep.subr.mxu0 0.0
    %61 = vmatpush1.msra.mxu0 %v44
    %62 = vmatprep.subr.mxu0 0.0
    %63 = vmatpush1.msra.mxu0 %v45
    %64 = vmatprep.subr.mxu0 0.0
    %65 = vmatpush1.msra.mxu0 %v46
    %66 = vmatprep.subr.mxu0 0.0
    %67 = vmatpush1.msra.mxu0 %v47
    %68 = vmatprep.subr.mxu0 0.0
    %69 = vmatpush1.msra.mxu0 0.0
    %70 = vmatprep.subr.mxu0 0.0
    %71 = vmatpush1.msra.mxu0 0.0
    %72 = vmatprep.subr.mxu0 0.0
    %73 = vmatpush1.msra.mxu0 0.0
    %74 = vmatprep.subr.mxu0 0.0
    %75 = vmatpush1.msra.mxu0 0.0
    %76 = vmatprep.subr.mxu0 0.0
    %77 = vmatpush1.msra.mxu0 0.0
    %78 = vmatprep.subr.mxu0 0.0
    %79 = vmatpush1.msra.mxu0 0.0
    %80 = vmatprep.subr.mxu0 0.0
    %81 = vmatpush1.msra.mxu0 0.0
    %82 = vmatprep.subr.mxu0 0.0
    %83 = vmatpush1.msra.mxu0 0.0
    %84 = vmatprep.subr.mxu0 0.0
    %85 = vmatpush1.msra.mxu0 0.0
    %86 = vmatprep.subr.mxu0 0.0
    %87 = vmatpush1.msra.mxu0 0.0
    %88 = vmatprep.subr.mxu0 0.0
    %89 = vmatpush1.msra.mxu0 0.0
    %90 = vmatprep.subr.mxu0 0.0
    %91 = vmatpush1.msra.mxu0 0.0
    %92 = vmatprep.subr.mxu0 0.0
    %93 = vmatpush1.msra.mxu0 0.0
    %94 = vmatprep.subr.mxu0 0.0
    %95 = vmatpush1.msra.mxu0 0.0
    %96 = vmatprep.subr.mxu0 0.0
    %97 = vmatpush1.msra.mxu0 0.0
    %98 = vmatprep.subr.mxu0 0.0
    %99 = vmatpush1.msra.mxu0 0.0
    %100 = vmatprep.subr.mxu0 0.0
    %101 = vmatpush1.msra.mxu0 0.0
    %102 = vmatprep.subr.mxu0 0.0
    %103 = vmatpush1.msra.mxu0 0.0
    %104 = vmatprep.subr.mxu0 0.0
    %105 = vmatpush1.msra.mxu0 0.0
    %106 = vmatprep.subr.mxu0 0.0
    %107 = vmatpush1.msra.mxu0 0.0
    %108 = vmatprep.subr.mxu0 0.0
    %109 = vmatpush1.msra.mxu0 0.0
    %110 = vmatprep.subr.mxu0 0.0
    %111 = vmatpush1.msra.mxu0 0.0
    %112 = vmatprep.subr.mxu0 0.0
    %113 = vmatpush1.msra.mxu0 0.0
    %114 = vmatprep.subr.mxu0 0.0
    %115 = vmatpush1.msra.mxu0 0.0
    %116 = vmatprep.subr.mxu0 0.0
    %117 = vmatpush1.msra.mxu0 0.0
    %118 = vmatprep.subr.mxu0 0.0
    %119 = vmatpush1.msra.mxu0 0.0
    %120 = vmatprep.subr.mxu0 0.0
    %121 = vmatpush1.msra.mxu0 0.0
    %122 = vmatprep.subr.mxu0 0.0
    %123 = vmatpush1.msra.mxu0 0.0
    %124 = vmatprep.mubr.f32.mxu0 0.0
    %125 = vmatmul.mubr.f32.gmra.mrb[0].mxu0 %v55
    %v126 = vpop.f32.mrb[0].mxu0
    %v127 = vadd.f32 %v52, %v126
    %v128 = vpop.f32.mrb[0].mxu0
    %129 = vmatprep.mubr.f32.mxu0 0.0
    %130 = vmatmul.mubr.f32.gmra.mrb[0].mxu0 %v58
    %v131 = vpop.f32.mrb[0].mxu0
    %v132 = vadd.f32 %v52, %v131
    %v133 = vpop.f32.mrb[0].mxu0
    %134 = vdwg.mxu0
    %v135 = vld [vmem:[#allocation3 + $0x20] sm:$0xff]
    %v136 = vld [vmem:[#allocation3 + $0x28] sm:$0xff]
    %v137 = vld [vmem:[#allocation3 + $0x30] sm:$0xff]
    %v138 = vld [vmem:[#allocation3 + $0x38] sm:$0xff]
    %v139 = vld [vmem:[#allocation3 + $0x40] sm:$0xff]
    %v140 = vld [vmem:[#allocation3 + $0x48] sm:$0xff]
    %v141 = vld [vmem:[#allocation3 + $0x50] sm:$0xff]
    %v142 = vld [vmem:[#allocation3 + $0x58] sm:$0xff]
    %v143 = vld [vmem:[#allocation3 + $0x60] sm:$0xff]
    %v144 = vld [vmem:[#allocation3 + $0x68] sm:$0xff]
    %v145 = vld [vmem:[#allocation3 + $0x70] sm:$0xff]
    %v146 = vld [vmem:[#allocation3 + $0x78] sm:$0xff]
    %v147 = vld [vmem:[%s4 + $0x1] sm:$0x1]
    %v149 = vsel %vm53, 0.0, 0
    %151 = vmatprep.subr.mxu0 0.0
    %152 = vmatpush1.msra.mxu0 %v135
    %153 = vmatprep.subr.mxu0 0.0
    %154 = vmatpush1.msra.mxu0 %v136
    %155 = vmatprep.subr.mxu0 0.0
    %156 = vmatpush1.msra.mxu0 %v137
    %157 = vmatprep.subr.mxu0 0.0
    %158 = vmatpush1.msra.mxu0 %v138
    %159 = vmatprep.subr.mxu0 0.0
    %160 = vmatpush1.msra.mxu0 0.0
    %161 = vmatprep.subr.mxu0 0.0
    %162 = vmatpush1.msra.mxu0 0.0
    %163 = vmatprep.subr.mxu0 0.0
    %164 = vmatpush1.msra.mxu0 0.0
    %165 = vmatprep.subr.mxu0 0.0
    %166 = vmatpush1.msra.mxu0 0.0
    %167 = vmatprep.subr.mxu0 0.0
    %168 = vmatpush1.msra.mxu0 0.0
    %169 = vmatprep.subr.mxu0 0.0
    %170 = vmatpush1.msra.mxu0 0.0
    %171 = vmatprep.subr.mxu0 0.0
    %172 = vmatpush1.msra.mxu0 0.0
    %173 = vmatprep.subr.mxu0 0.0
    %174 = vmatpush1.msra.mxu0 0.0
    %175 = vmatprep.subr.mxu0 0.0
    %176 = vmatpush1.msra.mxu0 0.0
    %177 = vmatprep.subr.mxu0 0.0
    %178 = vmatpush1.msra.mxu0 0.0
    %179 = vmatprep.subr.mxu0 0.0
    %180 = vmatpush1.msra.mxu0 0.0
    %181 = vmatprep.subr.mxu0 0.0
    %182 = vmatpush1.msra.mxu0 0.0
    %183 = vmatprep.subr.mxu0 0.0
    %184 = vmatpush1.msra.mxu0 0.0
    %185 = vmatprep.subr.mxu0 0.0
    %186 = vmatpush1.msra.mxu0 0.0
    %187 = vmatprep.subr.mxu0 0.0
    %188 = vmatpush1.msra.mxu0 0.0
    %189 = vmatprep.subr.mxu0 0.0
    %190 = vmatpush1.msra.mxu0 0.0
    %191 = vmatprep.subr.mxu0 0.0
    %192 = vmatpush1.msra.mxu0 0.0
    %193 = vmatprep.subr.mxu0 0.0
    %194 = vmatpush1.msra.mxu0 0.0
    %195 = vmatprep.subr.mxu0 0.0
    %196 = vmatpush1.msra.mxu0 0.0
    %197 = vmatprep.subr.mxu0 0.0
    %198 = vmatpush1.msra.mxu0 0.0
    %199 = vmatprep.subr.mxu0 0.0
    %200 = vmatpush1.msra.mxu0 0.0
    %201 = vmatprep.subr.mxu0 0.0
    %202 = vmatpush1.msra.mxu0 0.0
    %203 = vmatprep.subr.mxu0 0.0
    %204 = vmatpush1.msra.mxu0 0.0
    %205 = vmatprep.subr.mxu0 0.0
    %206 = vmatpush1.msra.mxu0 0.0
    %207 = vmatprep.subr.mxu0 0.0
    %208 = vmatpush1.msra.mxu0 0.0
    %209 = vmatprep.subr.mxu0 0.0
    %210 = vmatpush1.msra.mxu0 0.0
    %211 = vmatprep.subr.mxu0 0.0
    %212 = vmatpush1.msra.mxu0 0.0
    %213 = vmatprep.subr.mxu0 0.0
    %214 = vmatpush1.msra.mxu0 0.0
    %215 = vmatprep.mubr.f32.mxu0 0.0
    %216 = vmatmul.mubr.f32.gmra.mrb[0].mxu0 %v149
    %v217 = vpop.f32.mrb[0].mxu0
    %v218 = vadd.f32 0.0, %v217
    %v219 = vpop.f32.mrb[0].mxu0
    %220 = vdwg.mxu0
    %v222 = vrot.slane %v218, 1
    %v225 = vadd.f32 %v127, %v218
    %v226 = vadd.f32 %v132, %v222
    %v227 = vxor.u32 %v225, 2147483648
    %v228 = vxor.u32 %v226, 2147483648
    %v229 = vmul.f32 %v227, 1.442695
    %v230 = vpow.pop %v229
    %v231 = vmul.f32 %v228, 1.442695
    %v232 = vpow.pop %v231
    %v233 = vadd.f32 %v230, 1.0
    %v234 = vadd.f32 %v232, 1.0
    %v235 = vrcp.pop %v233
    %v236 = vmul.f32 1.0, %v235
    %v237 = vrcp.pop %v234
    %v238 = vmul.f32 1.0, %v237
    %239 = vmatprep.subr.mxu0 0.0
    %240 = vmatpush1.msra.mxu0 %v139
    %241 = vmatprep.subr.mxu0 0.0
    %242 = vmatpush1.msra.mxu0 %v140
    %243 = vmatprep.subr.mxu0 0.0
    %244 = vmatpush1.msra.mxu0 %v141
    %245 = vmatprep.subr.mxu0 0.0
    %246 = vmatpush1.msra.mxu0 %v142
    %247 = vmatprep.subr.mxu0 0.0
    %248 = vmatpush1.msra.mxu0 0.0
    %249 = vmatprep.subr.mxu0 0.0
    %250 = vmatpush1.msra.mxu0 0.0
    %251 = vmatprep.subr.mxu0 0.0
    %252 = vmatpush1.msra.mxu0 0.0
    %253 = vmatprep.subr.mxu0 0.0
    %254 = vmatpush1.msra.mxu0 0.0
    %255 = vmatprep.subr.mxu0 0.0
    %256 = vmatpush1.msra.mxu0 0.0
    %257 = vmatprep.subr.mxu0 0.0
    %258 = vmatpush1.msra.mxu0 0.0
    %259 = vmatprep.subr.mxu0 0.0
    %260 = vmatpush1.msra.mxu0 0.0
    %261 = vmatprep.subr.mxu0 0.0
    %262 = vmatpush1.msra.mxu0 0.0
    %263 = vmatprep.subr.mxu0 0.0
    %264 = vmatpush1.msra.mxu0 0.0
    %265 = vmatprep.subr.mxu0 0.0
    %266 = vmatpush1.msra.mxu0 0.0
    %267 = vmatprep.subr.mxu0 0.0
    %268 = vmatpush1.msra.mxu0 0.0
    %269 = vmatprep.subr.mxu0 0.0
    %270 = vmatpush1.msra.mxu0 0.0
    %271 = vmatprep.subr.mxu0 0.0
    %272 = vmatpush1.msra.mxu0 0.0
    %273 = vmatprep.subr.mxu0 0.0
    %274 = vmatpush1.msra.mxu0 0.0
    %275 = vmatprep.subr.mxu0 0.0
    %276 = vmatpush1.msra.mxu0 0.0
    %277 = vmatprep.subr.mxu0 0.0
    %278 = vmatpush1.msra.mxu0 0.0
    %279 = vmatprep.subr.mxu0 0.0
    %280 = vmatpush1.msra.mxu0 0.0
    %281 = vmatprep.subr.mxu0 0.0
    %282 = vmatpush1.msra.mxu0 0.0
    %283 = vmatprep.subr.mxu0 0.0
    %284 = vmatpush1.msra.mxu0 0.0
    %285 = vmatprep.subr.mxu0 0.0
    %286 = vmatpush1.msra.mxu0 0.0
    %287 = vmatprep.subr.mxu0 0.0
    %288 = vmatpush1.msra.mxu0 0.0
    %289 = vmatprep.subr.mxu0 0.0
    %290 = vmatpush1.msra.mxu0 0.0
    %291 = vmatprep.subr.mxu0 0.0
    %292 = vmatpush1.msra.mxu0 0.0
    %293 = vmatprep.subr.mxu0 0.0
    %294 = vmatpush1.msra.mxu0 0.0
    %295 = vmatprep.subr.mxu0 0.0
    %296 = vmatpush1.msra.mxu0 0.0
    %297 = vmatprep.subr.mxu0 0.0
    %298 = vmatpush1.msra.mxu0 0.0
    %299 = vmatprep.subr.mxu0 0.0
    %300 = vmatpush1.msra.mxu0 0.0
    %301 = vmatprep.subr.mxu0 0.0
    %302 = vmatpush1.msra.mxu0 0.0
    %303 = vmatprep.mubr.f32.mxu0 0.0
    %304 = vmatmul.mubr.f32.gmra.mrb[0].mxu0 %v149
    %v305 = vpop.f32.mrb[0].mxu0
    %v306 = vadd.f32 0.0, %v305
    %v307 = vpop.f32.mrb[0].mxu0
    %308 = vdwg.mxu0
    %v310 = vrot.slane %v306, 1
    %311 = vrot.lane.b32.xlu0 %v306, 32
    %v312 = vpop.permute.xlu0 %311
    %313 = vrot.lane.b32.xlu0 %v310, 32
    %v314 = vpop.permute.xlu0 %313
    %v317 = vadd.f32 %v127, %v312
    %v318 = vadd.f32 %v132, %v314
    %v319 = vxor.u32 %v317, 2147483648
    %v320 = vxor.u32 %v318, 2147483648
    %v321 = vmul.f32 %v319, 1.442695
    %v322 = vpow.pop %v321
    %v323 = vmul.f32 %v320, 1.442695
    %v324 = vpow.pop %v323
    %v325 = vadd.f32 %v322, 1.0
    %v326 = vadd.f32 %v324, 1.0
    %v327 = vrcp.pop %v325
    %v328 = vmul.f32 1.0, %v327
    %v329 = vrcp.pop %v326
    %v330 = vmul.f32 1.0, %v329
    %v331 = vlaneseq
    %v332 = vshrl.u32 %v331, 7
    %v333 = vsub.s32 0, %v332
    %v334 = vrot.slane %v147, %v333
    %335 = vmatprep.subr.mxu0 0.0
    %336 = vmatpush1.msra.mxu0 %v143
    %337 = vmatprep.subr.mxu0 0.0
    %338 = vmatpush1.msra.mxu0 %v144
    %339 = vmatprep.subr.mxu0 0.0
    %340 = vmatpush1.msra.mxu0 %v145
    %341 = vmatprep.subr.mxu0 0.0
    %342 = vmatpush1.msra.mxu0 %v146
    %343 = vmatprep.subr.mxu0 0.0
    %344 = vmatpush1.msra.mxu0 0.0
    %345 = vmatprep.subr.mxu0 0.0
    %346 = vmatpush1.msra.mxu0 0.0
    %347 = vmatprep.subr.mxu0 0.0
    %348 = vmatpush1.msra.mxu0 0.0
    %349 = vmatprep.subr.mxu0 0.0
    %350 = vmatpush1.msra.mxu0 0.0
    %351 = vmatprep.subr.mxu0 0.0
    %352 = vmatpush1.msra.mxu0 0.0
    %353 = vmatprep.subr.mxu0 0.0
    %354 = vmatpush1.msra.mxu0 0.0
    %355 = vmatprep.subr.mxu0 0.0
    %356 = vmatpush1.msra.mxu0 0.0
    %357 = vmatprep.subr.mxu0 0.0
    %358 = vmatpush1.msra.mxu0 0.0
    %359 = vmatprep.subr.mxu0 0.0
    %360 = vmatpush1.msra.mxu0 0.0
    %361 = vmatprep.subr.mxu0 0.0
    %362 = vmatpush1.msra.mxu0 0.0
    %363 = vmatprep.subr.mxu0 0.0
    %364 = vmatpush1.msra.mxu0 0.0
    %365 = vmatprep.subr.mxu0 0.0
    %366 = vmatpush1.msra.mxu0 0.0
    %367 = vmatprep.subr.mxu0 0.0
    %368 = vmatpush1.msra.mxu0 0.0
    %369 = vmatprep.subr.mxu0 0.0
    %370 = vmatpush1.msra.mxu0 0.0
    %371 = vmatprep.subr.mxu0 0.0
    %372 = vmatpush1.msra.mxu0 0.0
    %373 = vmatprep.subr.mxu0 0.0
    %374 = vmatpush1.msra.mxu0 0.0
    %375 = vmatprep.subr.mxu0 0.0
    %376 = vmatpush1.msra.mxu0 0.0
    %377 = vmatprep.subr.mxu0 0.0
    %378 = vmatpush1.msra.mxu0 0.0
    %379 = vmatprep.subr.mxu0 0.0
    %380 = vmatpush1.msra.mxu0 0.0
    %381 = vmatprep.subr.mxu0 0.0
    %382 = vmatpush1.msra.mxu0 0.0
    %383 = vmatprep.subr.mxu0 0.0
    %384 = vmatpush1.msra.mxu0 0.0
    %385 = vmatprep.subr.mxu0 0.0
    %386 = vmatpush1.msra.mxu0 0.0
    %387 = vmatprep.subr.mxu0 0.0
    %388 = vmatpush1.msra.mxu0 0.0
    %389 = vmatprep.subr.mxu0 0.0
    %390 = vmatpush1.msra.mxu0 0.0
    %391 = vmatprep.subr.mxu0 0.0
    %392 = vmatpush1.msra.mxu0 0.0
    %393 = vmatprep.subr.mxu0 0.0
    %394 = vmatpush1.msra.mxu0 0.0
    %395 = vmatprep.subr.mxu0 0.0
    %396 = vmatpush1.msra.mxu0 0.0
    %397 = vmatprep.subr.mxu0 0.0
    %398 = vmatpush1.msra.mxu0 0.0
    %399 = vmatprep.mubr.f32.mxu0 0.0
    %400 = vmatmul.mubr.f32.gmra.mrb[0].mxu0 %v149
    %v401 = vpop.f32.mrb[0].mxu0
    %v402 = vadd.f32 %v334, %v401
    %v403 = vpop.f32.mrb[0].mxu0
    %404 = vdwg.mxu0
    %v406 = vrot.slane %v402, 1
    %v409 = vmul.f32 %v236, %v402
    %v410 = vmul.f32 %v238, %v406
    %413 = vrot.lane.b32.xlu0 %v409, 64
    %v414 = vpop.permute.xlu0 %413
    %415 = vrot.lane.b32.xlu0 %v410, 64
    %v416 = vpop.permute.xlu0 %415
    %v419 = vadd.f32 %v127, %v414
    %v420 = vadd.f32 %v132, %v416
    %v421 = vtanh.pop %v419
    %v422 = vtanh.pop %v420
    %v423 = vsub.f32 1.0, %v328
    %v424 = vsub.f32 1.0, %v330
    %427 = vrot.lane.b32.xlu0 %v421, 96
    %v428 = vpop.permute.xlu0 %427
    %429 = vrot.lane.b32.xlu0 %v422, 96
    %v430 = vpop.permute.xlu0 %429
    %v433 = vmul.f32 %v423, %v428
    %v434 = vmul.f32 %v424, %v430
    %v435 = vmul.f32 %v328, 0.0
    %v436 = vmul.f32 %v330, 0.0
    %v437 = vadd.f32 %v433, %v435
    %v438 = vadd.f32 %v434, %v436
    %441 = vrot.lane.b32.xlu0 %v437, 96
    %v442 = vpop.permute.xlu0 %441
    %443 = vrot.lane.b32.xlu0 %v438, 96
    %v444 = vpop.permute.xlu0 %443
    %vm447 = vcmask 253952
    %448 = vst.msk [vmem:[#allocation2] sm:$0x1] %vm447, %v442
    %449 = vst.msk [vmem:[#allocation2 + $0x8] sm:$0x1] %vm447, %v444
    %v450 = vrot.slane %v438, 7
    %vm451 = vcmask 1041409
    %v452 = vsel %vm451, %v450, %v437
    %453 = vrot.lane.b32.xlu0 %v452, 96
    %v454 = vpop.permute.xlu0 %453
    %v455 = vsel %vm53, %v454, 0
    %457 = vmatprep.subr.mxu0 0.0
    %458 = vmatpush1.msra.mxu0 %v135
    %459 = vmatprep.subr.mxu0 0.0
    %460 = vmatpush1.msra.mxu0 %v136
    %461 = vmatprep.subr.mxu0 0.0
    %462 = vmatpush1.msra.mxu0 %v137
    %463 = vmatprep.subr.mxu0 0.0
    %464 = vmatpush1.msra.mxu0 %v138
    %465 = vmatprep.subr.mxu0 0.0
    %466 = vmatpush1.msra.mxu0 0.0
    %467 = vmatprep.subr.mxu0 0.0
    %468 = vmatpush1.msra.mxu0 0.0
    %469 = vmatprep.subr.mxu0 0.0
    %470 = vmatpush1.msra.mxu0 0.0
    %471 = vmatprep.subr.mxu0 0.0
    %472 = vmatpush1.msra.mxu0 0.0
    %473 = vmatprep.subr.mxu0 0.0
    %474 = vmatpush1.msra.mxu0 0.0
    %475 = vmatprep.subr.mxu0 0.0
    %476 = vmatpush1.msra.mxu0 0.0
    %477 = vmatprep.subr.mxu0 0.0
    %478 = vmatpush1.msra.mxu0 0.0
    %479 = vmatprep.subr.mxu0 0.0
    %480 = vmatpush1.msra.mxu0 0.0
    %481 = vmatprep.subr.mxu0 0.0
    %482 = vmatpush1.msra.mxu0 0.0
    %483 = vmatprep.subr.mxu0 0.0
    %484 = vmatpush1.msra.mxu0 0.0
    %485 = vmatprep.subr.mxu0 0.0
    %486 = vmatpush1.msra.mxu0 0.0
    %487 = vmatprep.subr.mxu0 0.0
    %488 = vmatpush1.msra.mxu0 0.0
    %489 = vmatprep.subr.mxu0 0.0
    %490 = vmatpush1.msra.mxu0 0.0
    %491 = vmatprep.subr.mxu0 0.0
    %492 = vmatpush1.msra.mxu0 0.0
    %493 = vmatprep.subr.mxu0 0.0
    %494 = vmatpush1.msra.mxu0 0.0
    %495 = vmatprep.subr.mxu0 0.0
    %496 = vmatpush1.msra.mxu0 0.0
    %497 = vmatprep.subr.mxu0 0.0
    %498 = vmatpush1.msra.mxu0 0.0
    %499 = vmatprep.subr.mxu0 0.0
    %500 = vmatpush1.msra.mxu0 0.0
    %501 = vmatprep.subr.mxu0 0.0
    %502 = vmatpush1.msra.mxu0 0.0
    %503 = vmatprep.subr.mxu0 0.0
    %504 = vmatpush1.msra.mxu0 0.0
    %505 = vmatprep.subr.mxu0 0.0
    %506 = vmatpush1.msra.mxu0 0.0
    %507 = vmatprep.subr.mxu0 0.0
    %508 = vmatpush1.msra.mxu0 0.0
    %509 = vmatprep.subr.mxu0 0.0
    %510 = vmatpush1.msra.mxu0 0.0
    %511 = vmatprep.subr.mxu0 0.0
    %512 = vmatpush1.msra.mxu0 0.0
    %513 = vmatprep.subr.mxu0 0.0
    %514 = vmatpush1.msra.mxu0 0.0
    %515 = vmatprep.subr.mxu0 0.0
    %516 = vmatpush1.msra.mxu0 0.0
    %517 = vmatprep.subr.mxu0 0.0
    %518 = vmatpush1.msra.mxu0 0.0
    %519 = vmatprep.subr.mxu0 0.0
    %520 = vmatpush1.msra.mxu0 0.0
    %521 = vmatprep.mubr.f32.mxu0 0.0
    %522 = vmatmul.mubr.f32.gmra.mrb[0].mxu0 %v455
    %v523 = vpop.f32.mrb[0].mxu0
    %v524 = vadd.f32 0.0, %v523
    %v525 = vpop.f32.mrb[0].mxu0
    %526 = vdwg.mxu0
    %v528 = vrot.slane %v524, 7
    %v531 = vadd.f32 %v127, %v528
    %v532 = vadd.f32 %v132, %v524
    %v533 = vxor.u32 %v531, 2147483648
    %v534 = vxor.u32 %v532, 2147483648
    %v535 = vmul.f32 %v533, 1.442695
    %v536 = vpow.pop %v535
    %v537 = vmul.f32 %v534, 1.442695
    %v538 = vpow.pop %v537
    %v539 = vadd.f32 %v536, 1.0
    %v540 = vadd.f32 %v538, 1.0
    %v541 = vrcp.pop %v539
    %v542 = vmul.f32 1.0, %v541
    %v543 = vrcp.pop %v540
    %v544 = vmul.f32 1.0, %v543
    %545 = vmatprep.subr.mxu0 0.0
    %546 = vmatpush1.msra.mxu0 %v139
    %547 = vmatprep.subr.mxu0 0.0
    %548 = vmatpush1.msra.mxu0 %v140
    %549 = vmatprep.subr.mxu0 0.0
    %550 = vmatpush1.msra.mxu0 %v141
    %551 = vmatprep.subr.mxu0 0.0
    %552 = vmatpush1.msra.mxu0 %v142
    %553 = vmatprep.subr.mxu0 0.0
    %554 = vmatpush1.msra.mxu0 0.0
    %555 = vmatprep.subr.mxu0 0.0
    %556 = vmatpush1.msra.mxu0 0.0
    %557 = vmatprep.subr.mxu0 0.0
    %558 = vmatpush1.msra.mxu0 0.0
    %559 = vmatprep.subr.mxu0 0.0
    %560 = vmatpush1.msra.mxu0 0.0
    %561 = vmatprep.subr.mxu0 0.0
    %562 = vmatpush1.msra.mxu0 0.0
    %563 = vmatprep.subr.mxu0 0.0
    %564 = vmatpush1.msra.mxu0 0.0
    %565 = vmatprep.subr.mxu0 0.0
    %566 = vmatpush1.msra.mxu0 0.0
    %567 = vmatprep.subr.mxu0 0.0
    %568 = vmatpush1.msra.mxu0 0.0
    %569 = vmatprep.subr.mxu0 0.0
    %570 = vmatpush1.msra.mxu0 0.0
    %571 = vmatprep.subr.mxu0 0.0
    %572 = vmatpush1.msra.mxu0 0.0
    %573 = vmatprep.subr.mxu0 0.0
    %574 = vmatpush1.msra.mxu0 0.0
    %575 = vmatprep.subr.mxu0 0.0
    %576 = vmatpush1.msra.mxu0 0.0
    %577 = vmatprep.subr.mxu0 0.0
    %578 = vmatpush1.msra.mxu0 0.0
    %579 = vmatprep.subr.mxu0 0.0
    %580 = vmatpush1.msra.mxu0 0.0
    %581 = vmatprep.subr.mxu0 0.0
    %582 = vmatpush1.msra.mxu0 0.0
    %583 = vmatprep.subr.mxu0 0.0
    %584 = vmatpush1.msra.mxu0 0.0
    %585 = vmatprep.subr.mxu0 0.0
    %586 = vmatpush1.msra.mxu0 0.0
    %587 = vmatprep.subr.mxu0 0.0
    %588 = vmatpush1.msra.mxu0 0.0
    %589 = vmatprep.subr.mxu0 0.0
    %590 = vmatpush1.msra.mxu0 0.0
    %591 = vmatprep.subr.mxu0 0.0
    %592 = vmatpush1.msra.mxu0 0.0
    %593 = vmatprep.subr.mxu0 0.0
    %594 = vmatpush1.msra.mxu0 0.0
    %595 = vmatprep.subr.mxu0 0.0
    %596 = vmatpush1.msra.mxu0 0.0
    %597 = vmatprep.subr.mxu0 0.0
    %598 = vmatpush1.msra.mxu0 0.0
    %599 = vmatprep.subr.mxu0 0.0
    %600 = vmatpush1.msra.mxu0 0.0
    %601 = vmatprep.subr.mxu0 0.0
    %602 = vmatpush1.msra.mxu0 0.0
    %603 = vmatprep.subr.mxu0 0.0
    %604 = vmatpush1.msra.mxu0 0.0
    %605 = vmatprep.subr.mxu0 0.0
    %606 = vmatpush1.msra.mxu0 0.0
    %607 = vmatprep.subr.mxu0 0.0
    %608 = vmatpush1.msra.mxu0 0.0
    %609 = vmatprep.mubr.f32.mxu0 0.0
    %610 = vmatmul.mubr.f32.gmra.mrb[0].mxu0 %v455
    %v611 = vpop.f32.mrb[0].mxu0
    %v612 = vadd.f32 0.0, %v611
    %v613 = vpop.f32.mrb[0].mxu0
    %614 = vdwg.mxu0
    %v616 = vrot.slane %v612, 7
    %617 = vrot.lane.b32.xlu0 %v616, 32
    %v618 = vpop.permute.xlu0 %617
    %619 = vrot.lane.b32.xlu0 %v612, 32
    %v620 = vpop.permute.xlu0 %619
    %v623 = vadd.f32 %v127, %v618
    %v624 = vadd.f32 %v132, %v620
    %v625 = vxor.u32 %v623, 2147483648
    %v626 = vxor.u32 %v624, 2147483648
    %v627 = vmul.f32 %v625, 1.442695
    %v628 = vpow.pop %v627
    %v629 = vmul.f32 %v626, 1.442695
    %v630 = vpow.pop %v629
    %v631 = vadd.f32 %v628, 1.0
    %v632 = vadd.f32 %v630, 1.0
    %v633 = vrcp.pop %v631
    %v634 = vmul.f32 1.0, %v633
    %v635 = vrcp.pop %v632
    %v636 = vmul.f32 1.0, %v635
    %637 = vmatprep.subr.mxu0 0.0
    %638 = vmatpush1.msra.mxu0 %v143
    %639 = vmatprep.subr.mxu0 0.0
    %640 = vmatpush1.msra.mxu0 %v144
    %641 = vmatprep.subr.mxu0 0.0
    %642 = vmatpush1.msra.mxu0 %v145
    %643 = vmatprep.subr.mxu0 0.0
    %644 = vmatpush1.msra.mxu0 %v146
    %645 = vmatprep.subr.mxu0 0.0
    %646 = vmatpush1.msra.mxu0 0.0
    %647 = vmatprep.subr.mxu0 0.0
    %648 = vmatpush1.msra.mxu0 0.0
    %649 = vmatprep.subr.mxu0 0.0
    %650 = vmatpush1.msra.mxu0 0.0
    %651 = vmatprep.subr.mxu0 0.0
    %652 = vmatpush1.msra.mxu0 0.0
    %653 = vmatprep.subr.mxu0 0.0
    %654 = vmatpush1.msra.mxu0 0.0
    %655 = vmatprep.subr.mxu0 0.0
    %656 = vmatpush1.msra.mxu0 0.0
    %657 = vmatprep.subr.mxu0 0.0
    %658 = vmatpush1.msra.mxu0 0.0
    %659 = vmatprep.subr.mxu0 0.0
    %660 = vmatpush1.msra.mxu0 0.0
    %661 = vmatprep.subr.mxu0 0.0
    %662 = vmatpush1.msra.mxu0 0.0
    %663 = vmatprep.subr.mxu0 0.0
    %664 = vmatpush1.msra.mxu0 0.0
    %665 = vmatprep.subr.mxu0 0.0
    %666 = vmatpush1.msra.mxu0 0.0
    %667 = vmatprep.subr.mxu0 0.0
    %668 = vmatpush1.msra.mxu0 0.0
    %669 = vmatprep.subr.mxu0 0.0
    %670 = vmatpush1.msra.mxu0 0.0
    %671 = vmatprep.subr.mxu0 0.0
    %672 = vmatpush1.msra.mxu0 0.0
    %673 = vmatprep.subr.mxu0 0.0
    %674 = vmatpush1.msra.mxu0 0.0
    %675 = vmatprep.subr.mxu0 0.0
    %676 = vmatpush1.msra.mxu0 0.0
    %677 = vmatprep.subr.mxu0 0.0
    %678 = vmatpush1.msra.mxu0 0.0
    %679 = vmatprep.subr.mxu0 0.0
    %680 = vmatpush1.msra.mxu0 0.0
    %681 = vmatprep.subr.mxu0 0.0
    %682 = vmatpush1.msra.mxu0 0.0
    %683 = vmatprep.subr.mxu0 0.0
    %684 = vmatpush1.msra.mxu0 0.0
    %685 = vmatprep.subr.mxu0 0.0
    %686 = vmatpush1.msra.mxu0 0.0
    %687 = vmatprep.subr.mxu0 0.0
    %688 = vmatpush1.msra.mxu0 0.0
    %689 = vmatprep.subr.mxu0 0.0
    %690 = vmatpush1.msra.mxu0 0.0
    %691 = vmatprep.subr.mxu0 0.0
    %692 = vmatpush1.msra.mxu0 0.0
    %693 = vmatprep.subr.mxu0 0.0
    %694 = vmatpush1.msra.mxu0 0.0
    %695 = vmatprep.subr.mxu0 0.0
    %696 = vmatpush1.msra.mxu0 0.0
    %697 = vmatprep.subr.mxu0 0.0
    %698 = vmatpush1.msra.mxu0 0.0
    %699 = vmatprep.subr.mxu0 0.0
    %700 = vmatpush1.msra.mxu0 0.0
    %701 = vmatprep.mubr.f32.mxu0 0.0
    %702 = vmatmul.mubr.f32.gmra.mrb[0].mxu0 %v455
    %v703 = vpop.f32.mrb[0].mxu0
    %v704 = vadd.f32 %v334, %v703
    %v705 = vpop.f32.mrb[0].mxu0
    %706 = vdwg.mxu0
    %v708 = vrot.slane %v704, 7
    %v711 = vmul.f32 %v542, %v708
    %v712 = vmul.f32 %v544, %v704
    %715 = vrot.lane.b32.xlu0 %v711, 64
    %v716 = vpop.permute.xlu0 %715
    %717 = vrot.lane.b32.xlu0 %v712, 64
    %v718 = vpop.permute.xlu0 %717
    %v721 = vadd.f32 %v127, %v716
    %v722 = vadd.f32 %v132, %v718
    %v723 = vtanh.pop %v721
    %v724 = vtanh.pop %v722
    %v725 = vsub.f32 1.0, %v634
    %v726 = vsub.f32 1.0, %v636
    %729 = vrot.lane.b32.xlu0 %v723, 96
    %v730 = vpop.permute.xlu0 %729
    %731 = vrot.lane.b32.xlu0 %v724, 96
    %v732 = vpop.permute.xlu0 %731
    %v735 = vmul.f32 %v725, %v730
    %v736 = vmul.f32 %v726, %v732
    %v737 = vrot.slane %v437, 7
    %v740 = vmul.f32 %v634, %v737
    %v741 = vmul.f32 %v636, %v450
    %v742 = vadd.f32 %v735, %v740
    %v743 = vadd.f32 %v736, %v741
    %746 = vrot.lane.b32.xlu0 %v742, 96
    %v747 = vpop.permute.xlu0 %746
    %748 = vrot.lane.b32.xlu0 %v743, 96
    %v749 = vpop.permute.xlu0 %748
    %vm752 = vcmask 254977
    %753 = vst.msk [vmem:[#allocation2] sm:$0x2] %vm752, %v747
    %754 = vst.msk [vmem:[#allocation2 + $0x8] sm:$0x2] %vm752, %v749
    %v755 = vrot.slane %v742, 1
    %v756 = vsel %vm451, %v743, %v755
    %757 = vrot.lane.b32.xlu0 %v756, 96
    %v758 = vpop.permute.xlu0 %757
    %v759 = vsel %vm53, %v758, 0
    %761 = vmatprep.subr.mxu0 0.0
    %762 = vmatpush1.msra.mxu0 %v135
    %763 = vmatprep.subr.mxu0 0.0
    %764 = vmatpush1.msra.mxu0 %v136
    %765 = vmatprep.subr.mxu0 0.0
    %766 = vmatpush1.msra.mxu0 %v137
    %767 = vmatprep.subr.mxu0 0.0
    %768 = vmatpush1.msra.mxu0 %v138
    %769 = vmatprep.subr.mxu0 0.0
    %770 = vmatpush1.msra.mxu0 0.0
    %771 = vmatprep.subr.mxu0 0.0
    %772 = vmatpush1.msra.mxu0 0.0
    %773 = vmatprep.subr.mxu0 0.0
    %774 = vmatpush1.msra.mxu0 0.0
    %775 = vmatprep.subr.mxu0 0.0
    %776 = vmatpush1.msra.mxu0 0.0
    %777 = vmatprep.subr.mxu0 0.0
    %778 = vmatpush1.msra.mxu0 0.0
    %779 = vmatprep.subr.mxu0 0.0
    %780 = vmatpush1.msra.mxu0 0.0
    %781 = vmatprep.subr.mxu0 0.0
    %782 = vmatpush1.msra.mxu0 0.0
    %783 = vmatprep.subr.mxu0 0.0
    %784 = vmatpush1.msra.mxu0 0.0
    %785 = vmatprep.subr.mxu0 0.0
    %786 = vmatpush1.msra.mxu0 0.0
    %787 = vmatprep.subr.mxu0 0.0
    %788 = vmatpush1.msra.mxu0 0.0
    %789 = vmatprep.subr.mxu0 0.0
    %790 = vmatpush1.msra.mxu0 0.0
    %791 = vmatprep.subr.mxu0 0.0
    %792 = vmatpush1.msra.mxu0 0.0
    %793 = vmatprep.subr.mxu0 0.0
    %794 = vmatpush1.msra.mxu0 0.0
    %795 = vmatprep.subr.mxu0 0.0
    %796 = vmatpush1.msra.mxu0 0.0
    %797 = vmatprep.subr.mxu0 0.0
    %798 = vmatpush1.msra.mxu0 0.0
    %799 = vmatprep.subr.mxu0 0.0
    %800 = vmatpush1.msra.mxu0 0.0
    %801 = vmatprep.subr.mxu0 0.0
    %802 = vmatpush1.msra.mxu0 0.0
    %803 = vmatprep.subr.mxu0 0.0
    %804 = vmatpush1.msra.mxu0 0.0
    %805 = vmatprep.subr.mxu0 0.0
    %806 = vmatpush1.msra.mxu0 0.0
    %807 = vmatprep.subr.mxu0 0.0
    %808 = vmatpush1.msra.mxu0 0.0
    %809 = vmatprep.subr.mxu0 0.0
    %810 = vmatpush1.msra.mxu0 0.0
    %811 = vmatprep.subr.mxu0 0.0
    %812 = vmatpush1.msra.mxu0 0.0
    %813 = vmatprep.subr.mxu0 0.0
    %814 = vmatpush1.msra.mxu0 0.0
    %815 = vmatprep.subr.mxu0 0.0
    %816 = vmatpush1.msra.mxu0 0.0
    %817 = vmatprep.subr.mxu0 0.0
    %818 = vmatpush1.msra.mxu0 0.0
    %819 = vmatprep.subr.mxu0 0.0
    %820 = vmatpush1.msra.mxu0 0.0
    %821 = vmatprep.subr.mxu0 0.0
    %822 = vmatpush1.msra.mxu0 0.0
    %823 = vmatprep.subr.mxu0 0.0
    %824 = vmatpush1.msra.mxu0 0.0
    %825 = vmatprep.mubr.f32.mxu0 0.0
    %826 = vmatmul.mubr.f32.gmra.mrb[0].mxu0 %v759
    %v827 = vpop.f32.mrb[0].mxu0
    %v828 = vadd.f32 0.0, %v827
    %v829 = vpop.f32.mrb[0].mxu0
    %830 = vdwg.mxu0
    %v832 = vrot.slane %v828, 6
    %v833 = vrot.slane %v828, 7
    %v836 = vadd.f32 %v127, %v832
    %v837 = vadd.f32 %v132, %v833
    %v838 = vxor.u32 %v836, 2147483648
    %v839 = vxor.u32 %v837, 2147483648
    %v840 = vmul.f32 %v838, 1.442695
    %v841 = vpow.pop %v840
    %v842 = vmul.f32 %v839, 1.442695
    %v843 = vpow.pop %v842
    %v844 = vadd.f32 %v841, 1.0
    %v845 = vadd.f32 %v843, 1.0
    %v846 = vrcp.pop %v844
    %v847 = vmul.f32 1.0, %v846
    %v848 = vrcp.pop %v845
    %v849 = vmul.f32 1.0, %v848
    %850 = vmatprep.subr.mxu0 0.0
    %851 = vmatpush1.msra.mxu0 %v139
    %852 = vmatprep.subr.mxu0 0.0
    %853 = vmatpush1.msra.mxu0 %v140
    %854 = vmatprep.subr.mxu0 0.0
    %855 = vmatpush1.msra.mxu0 %v141
    %856 = vmatprep.subr.mxu0 0.0
    %857 = vmatpush1.msra.mxu0 %v142
    %858 = vmatprep.subr.mxu0 0.0
    %859 = vmatpush1.msra.mxu0 0.0
    %860 = vmatprep.subr.mxu0 0.0
    %861 = vmatpush1.msra.mxu0 0.0
    %862 = vmatprep.subr.mxu0 0.0
    %863 = vmatpush1.msra.mxu0 0.0
    %864 = vmatprep.subr.mxu0 0.0
    %865 = vmatpush1.msra.mxu0 0.0
    %866 = vmatprep.subr.mxu0 0.0
    %867 = vmatpush1.msra.mxu0 0.0
    %868 = vmatprep.subr.mxu0 0.0
    %869 = vmatpush1.msra.mxu0 0.0
    %870 = vmatprep.subr.mxu0 0.0
    %871 = vmatpush1.msra.mxu0 0.0
    %872 = vmatprep.subr.mxu0 0.0
    %873 = vmatpush1.msra.mxu0 0.0
    %874 = vmatprep.subr.mxu0 0.0
    %875 = vmatpush1.msra.mxu0 0.0
    %876 = vmatprep.subr.mxu0 0.0
    %877 = vmatpush1.msra.mxu0 0.0
    %878 = vmatprep.subr.mxu0 0.0
    %879 = vmatpush1.msra.mxu0 0.0
    %880 = vmatprep.subr.mxu0 0.0
    %881 = vmatpush1.msra.mxu0 0.0
    %882 = vmatprep.subr.mxu0 0.0
    %883 = vmatpush1.msra.mxu0 0.0
    %884 = vmatprep.subr.mxu0 0.0
    %885 = vmatpush1.msra.mxu0 0.0
    %886 = vmatprep.subr.mxu0 0.0
    %887 = vmatpush1.msra.mxu0 0.0
    %888 = vmatprep.subr.mxu0 0.0
    %889 = vmatpush1.msra.mxu0 0.0
    %890 = vmatprep.subr.mxu0 0.0
    %891 = vmatpush1.msra.mxu0 0.0
    %892 = vmatprep.subr.mxu0 0.0
    %893 = vmatpush1.msra.mxu0 0.0
    %894 = vmatprep.subr.mxu0 0.0
    %895 = vmatpush1.msra.mxu0 0.0
    %896 = vmatprep.subr.mxu0 0.0
    %897 = vmatpush1.msra.mxu0 0.0
    %898 = vmatprep.subr.mxu0 0.0
    %899 = vmatpush1.msra.mxu0 0.0
    %900 = vmatprep.subr.mxu0 0.0
    %901 = vmatpush1.msra.mxu0 0.0
    %902 = vmatprep.subr.mxu0 0.0
    %903 = vmatpush1.msra.mxu0 0.0
    %904 = vmatprep.subr.mxu0 0.0
    %905 = vmatpush1.msra.mxu0 0.0
    %906 = vmatprep.subr.mxu0 0.0
    %907 = vmatpush1.msra.mxu0 0.0
    %908 = vmatprep.subr.mxu0 0.0
    %909 = vmatpush1.msra.mxu0 0.0
    %910 = vmatprep.subr.mxu0 0.0
    %911 = vmatpush1.msra.mxu0 0.0
    %912 = vmatprep.subr.mxu0 0.0
    %913 = vmatpush1.msra.mxu0 0.0
    %914 = vmatprep.mubr.f32.mxu0 0.0
    %915 = vmatmul.mubr.f32.gmra.mrb[0].mxu0 %v759
    %v916 = vpop.f32.mrb[0].mxu0
    %v917 = vadd.f32 0.0, %v916
    %v918 = vpop.f32.mrb[0].mxu0
    %919 = vdwg.mxu0
    %v921 = vrot.slane %v917, 6
    %v922 = vrot.slane %v917, 7
    %923 = vrot.lane.b32.xlu0 %v921, 32
    %v924 = vpop.permute.xlu0 %923
    %925 = vrot.lane.b32.xlu0 %v922, 32
    %v926 = vpop.permute.xlu0 %925
    %v929 = vadd.f32 %v127, %v924
    %v930 = vadd.f32 %v132, %v926
    %v931 = vxor.u32 %v929, 2147483648
    %v932 = vxor.u32 %v930, 2147483648
    %v933 = vmul.f32 %v931, 1.442695
    %v934 = vpow.pop %v933
    %v935 = vmul.f32 %v932, 1.442695
    %v936 = vpow.pop %v935
    %v937 = vadd.f32 %v934, 1.0
    %v938 = vadd.f32 %v936, 1.0
    %v939 = vrcp.pop %v937
    %v940 = vmul.f32 1.0, %v939
    %v941 = vrcp.pop %v938
    %v942 = vmul.f32 1.0, %v941
    %943 = vmatprep.subr.mxu0 0.0
    %944 = vmatpush1.msra.mxu0 %v143
    %945 = vmatprep.subr.mxu0 0.0
    %946 = vmatpush1.msra.mxu0 %v144
    %947 = vmatprep.subr.mxu0 0.0
    %948 = vmatpush1.msra.mxu0 %v145
    %949 = vmatprep.subr.mxu0 0.0
    %950 = vmatpush1.msra.mxu0 %v146
    %951 = vmatprep.subr.mxu0 0.0
    %952 = vmatpush1.msra.mxu0 0.0
    %953 = vmatprep.subr.mxu0 0.0
    %954 = vmatpush1.msra.mxu0 0.0
    %955 = vmatprep.subr.mxu0 0.0
    %956 = vmatpush1.msra.mxu0 0.0
    %957 = vmatprep.subr.mxu0 0.0
    %958 = vmatpush1.msra.mxu0 0.0
    %959 = vmatprep.subr.mxu0 0.0
    %960 = vmatpush1.msra.mxu0 0.0
    %961 = vmatprep.subr.mxu0 0.0
    %962 = vmatpush1.msra.mxu0 0.0
    %963 = vmatprep.subr.mxu0 0.0
    %964 = vmatpush1.msra.mxu0 0.0
    %965 = vmatprep.subr.mxu0 0.0
    %966 = vmatpush1.msra.mxu0 0.0
    %967 = vmatprep.subr.mxu0 0.0
    %968 = vmatpush1.msra.mxu0 0.0
    %969 = vmatprep.subr.mxu0 0.0
    %970 = vmatpush1.msra.mxu0 0.0
    %971 = vmatprep.subr.mxu0 0.0
    %972 = vmatpush1.msra.mxu0 0.0
    %973 = vmatprep.subr.mxu0 0.0
    %974 = vmatpush1.msra.mxu0 0.0
    %975 = vmatprep.subr.mxu0 0.0
    %976 = vmatpush1.msra.mxu0 0.0
    %977 = vmatprep.subr.mxu0 0.0
    %978 = vmatpush1.msra.mxu0 0.0
    %979 = vmatprep.subr.mxu0 0.0
    %980 = vmatpush1.msra.mxu0 0.0
    %981 = vmatprep.subr.mxu0 0.0
    %982 = vmatpush1.msra.mxu0 0.0
    %983 = vmatprep.subr.mxu0 0.0
    %984 = vmatpush1.msra.mxu0 0.0
    %985 = vmatprep.subr.mxu0 0.0
    %986 = vmatpush1.msra.mxu0 0.0
    %987 = vmatprep.subr.mxu0 0.0
    %988 = vmatpush1.msra.mxu0 0.0
    %989 = vmatprep.subr.mxu0 0.0
    %990 = vmatpush1.msra.mxu0 0.0
    %991 = vmatprep.subr.mxu0 0.0
    %992 = vmatpush1.msra.mxu0 0.0
    %993 = vmatprep.subr.mxu0 0.0
    %994 = vmatpush1.msra.mxu0 0.0
    %995 = vmatprep.subr.mxu0 0.0
    %996 = vmatpush1.msra.mxu0 0.0
    %997 = vmatprep.subr.mxu0 0.0
    %998 = vmatpush1.msra.mxu0 0.0
    %999 = vmatprep.subr.mxu0 0.0
    %1000 = vmatpush1.msra.mxu0 0.0
    %1001 = vmatprep.subr.mxu0 0.0
    %1002 = vmatpush1.msra.mxu0 0.0
    %1003 = vmatprep.subr.mxu0 0.0
    %1004 = vmatpush1.msra.mxu0 0.0
    %1005 = vmatprep.subr.mxu0 0.0
    %1006 = vmatpush1.msra.mxu0 0.0
    %1007 = vmatprep.mubr.f32.mxu0 0.0
    %1008 = vmatmul.mubr.f32.gmra.mrb[0].mxu0 %v759
    %v1009 = vpop.f32.mrb[0].mxu0
    %v1010 = vadd.f32 %v334, %v1009
    %v1011 = vpop.f32.mrb[0].mxu0
    %1012 = vdwg.mxu0
    %v1014 = vrot.slane %v1010, 6
    %v1015 = vrot.slane %v1010, 7
    %v1018 = vmul.f32 %v847, %v1014
    %v1019 = vmul.f32 %v849, %v1015
    %1022 = vrot.lane.b32.xlu0 %v1018, 64
    %v1023 = vpop.permute.xlu0 %1022
    %1024 = vrot.lane.b32.xlu0 %v1019, 64
    %v1025 = vpop.permute.xlu0 %1024
    %v1028 = vadd.f32 %v127, %v1023
    %v1029 = vadd.f32 %v132, %v1025
    %v1030 = vtanh.pop %v1028
    %v1031 = vtanh.pop %v1029
    %v1032 = vsub.f32 1.0, %v940
    %v1033 = vsub.f32 1.0, %v942
    %1036 = vrot.lane.b32.xlu0 %v1030, 96
    %v1037 = vpop.permute.xlu0 %1036
    %1038 = vrot.lane.b32.xlu0 %v1031, 96
    %v1039 = vpop.permute.xlu0 %1038
    %v1042 = vmul.f32 %v1032, %v1037
    %v1043 = vmul.f32 %v1033, %v1039
    %v1044 = vrot.slane %v742, 7
    %v1045 = vrot.slane %v743, 7
    %v1048 = vmul.f32 %v940, %v1044
    %v1049 = vmul.f32 %v942, %v1045
    %v1050 = vadd.f32 %v1042, %v1048
    %v1051 = vadd.f32 %v1043, %v1049
    %1054 = vrot.lane.b32.xlu0 %v1050, 96
    %v1055 = vpop.permute.xlu0 %1054
    %1056 = vrot.lane.b32.xlu0 %v1051, 96
    %v1057 = vpop.permute.xlu0 %1056
    %vm1060 = vcmask 256002
    %1061 = vst.msk [vmem:[#allocation2] sm:$0x4] %vm1060, %v1055
    %1062 = vst.msk [vmem:[#allocation2 + $0x8] sm:$0x4] %vm1060, %v1057
    %v1063 = vrot.slane %v1050, 2
    %v1064 = vrot.slane %v1051, 1
    %v1065 = vsel %vm451, %v1064, %v1063
    %1066 = vrot.lane.b32.xlu0 %v1065, 96
    %v1067 = vpop.permute.xlu0 %1066
    %v1068 = vsel %vm53, %v1067, 0
    %1070 = vmatprep.subr.mxu0 0.0
    %1071 = vmatpush1.msra.mxu0 %v135
    %1072 = vmatprep.subr.mxu0 0.0
    %1073 = vmatpush1.msra.mxu0 %v136
    %1074 = vmatprep.subr.mxu0 0.0
    %1075 = vmatpush1.msra.mxu0 %v137
    %1076 = vmatprep.subr.mxu0 0.0
    %1077 = vmatpush1.msra.mxu0 %v138
    %1078 = vmatprep.subr.mxu0 0.0
    %1079 = vmatpush1.msra.mxu0 0.0
    %1080 = vmatprep.subr.mxu0 0.0
    %1081 = vmatpush1.msra.mxu0 0.0
    %1082 = vmatprep.subr.mxu0 0.0
    %1083 = vmatpush1.msra.mxu0 0.0
    %1084 = vmatprep.subr.mxu0 0.0
    %1085 = vmatpush1.msra.mxu0 0.0
    %1086 = vmatprep.subr.mxu0 0.0
    %1087 = vmatpush1.msra.mxu0 0.0
    %1088 = vmatprep.subr.mxu0 0.0
    %1089 = vmatpush1.msra.mxu0 0.0
    %1090 = vmatprep.subr.mxu0 0.0
    %1091 = vmatpush1.msra.mxu0 0.0
    %1092 = vmatprep.subr.mxu0 0.0
    %1093 = vmatpush1.msra.mxu0 0.0
    %1094 = vmatprep.subr.mxu0 0.0
    %1095 = vmatpush1.msra.mxu0 0.0
    %1096 = vmatprep.subr.mxu0 0.0
    %1097 = vmatpush1.msra.mxu0 0.0
    %1098 = vmatprep.subr.mxu0 0.0
    %1099 = vmatpush1.msra.mxu0 0.0
    %1100 = vmatprep.subr.mxu0 0.0
    %1101 = vmatpush1.msra.mxu0 0.0
    %1102 = vmatprep.subr.mxu0 0.0
    %1103 = vmatpush1.msra.mxu0 0.0
    %1104 = vmatprep.subr.mxu0 0.0
    %1105 = vmatpush1.msra.mxu0 0.0
    %1106 = vmatprep.subr.mxu0 0.0
    %1107 = vmatpush1.msra.mxu0 0.0
    %1108 = vmatprep.subr.mxu0 0.0
    %1109 = vmatpush1.msra.mxu0 0.0
    %1110 = vmatprep.subr.mxu0 0.0
    %1111 = vmatpush1.msra.mxu0 0.0
    %1112 = vmatprep.subr.mxu0 0.0
    %1113 = vmatpush1.msra.mxu0 0.0
    %1114 = vmatprep.subr.mxu0 0.0
    %1115 = vmatpush1.msra.mxu0 0.0
    %1116 = vmatprep.subr.mxu0 0.0
    %1117 = vmatpush1.msra.mxu0 0.0
    %1118 = vmatprep.subr.mxu0 0.0
    %1119 = vmatpush1.msra.mxu0 0.0
    %1120 = vmatprep.subr.mxu0 0.0
    %1121 = vmatpush1.msra.mxu0 0.0
    %1122 = vmatprep.subr.mxu0 0.0
    %1123 = vmatpush1.msra.mxu0 0.0
    %1124 = vmatprep.subr.mxu0 0.0
    %1125 = vmatpush1.msra.mxu0 0.0
    %1126 = vmatprep.subr.mxu0 0.0
    %1127 = vmatpush1.msra.mxu0 0.0
    %1128 = vmatprep.subr.mxu0 0.0
    %1129 = vmatpush1.msra.mxu0 0.0
    %1130 = vmatprep.subr.mxu0 0.0
    %1131 = vmatpush1.msra.mxu0 0.0
    %1132 = vmatprep.subr.mxu0 0.0
    %1133 = vmatpush1.msra.mxu0 0.0
    %1134 = vmatprep.mubr.f32.mxu0 0.0
    %1135 = vmatmul.mubr.f32.gmra.mrb[0].mxu0 %v1068
    %v1136 = vpop.f32.mrb[0].mxu0
    %v1137 = vadd.f32 0.0, %v1136
    %v1138 = vpop.f32.mrb[0].mxu0
    %1139 = vdwg.mxu0
    %v1141 = vrot.slane %v1137, 5
    %v1142 = vrot.slane %v1137, 6
    %v1145 = vadd.f32 %v127, %v1141
    %v1146 = vadd.f32 %v132, %v1142
    %v1147 = vxor.u32 %v1145, 2147483648
    %v1148 = vxor.u32 %v1146, 2147483648
    %v1149 = vmul.f32 %v1147, 1.442695
    %v1150 = vpow.pop %v1149
    %v1151 = vmul.f32 %v1148, 1.442695
    %v1152 = vpow.pop %v1151
    %v1153 = vadd.f32 %v1150, 1.0
    %v1154 = vadd.f32 %v1152, 1.0
    %v1155 = vrcp.pop %v1153
    %v1156 = vmul.f32 1.0, %v1155
    %v1157 = vrcp.pop %v1154
    %v1158 = vmul.f32 1.0, %v1157
    %1159 = vmatprep.subr.mxu0 0.0
    %1160 = vmatpush1.msra.mxu0 %v139
    %1161 = vmatprep.subr.mxu0 0.0
    %1162 = vmatpush1.msra.mxu0 %v140
    %1163 = vmatprep.subr.mxu0 0.0
    %1164 = vmatpush1.msra.mxu0 %v141
    %1165 = vmatprep.subr.mxu0 0.0
    %1166 = vmatpush1.msra.mxu0 %v142
    %1167 = vmatprep.subr.mxu0 0.0
    %1168 = vmatpush1.msra.mxu0 0.0
    %1169 = vmatprep.subr.mxu0 0.0
    %1170 = vmatpush1.msra.mxu0 0.0
    %1171 = vmatprep.subr.mxu0 0.0
    %1172 = vmatpush1.msra.mxu0 0.0
    %1173 = vmatprep.subr.mxu0 0.0
    %1174 = vmatpush1.msra.mxu0 0.0
    %1175 = vmatprep.subr.mxu0 0.0
    %1176 = vmatpush1.msra.mxu0 0.0
    %1177 = vmatprep.subr.mxu0 0.0
    %1178 = vmatpush1.msra.mxu0 0.0
    %1179 = vmatprep.subr.mxu0 0.0
    %1180 = vmatpush1.msra.mxu0 0.0
    %1181 = vmatprep.subr.mxu0 0.0
    %1182 = vmatpush1.msra.mxu0 0.0
    %1183 = vmatprep.subr.mxu0 0.0
    %1184 = vmatpush1.msra.mxu0 0.0
    %1185 = vmatprep.subr.mxu0 0.0
    %1186 = vmatpush1.msra.mxu0 0.0
    %1187 = vmatprep.subr.mxu0 0.0
    %1188 = vmatpush1.msra.mxu0 0.0
    %1189 = vmatprep.subr.mxu0 0.0
    %1190 = vmatpush1.msra.mxu0 0.0
    %1191 = vmatprep.subr.mxu0 0.0
    %1192 = vmatpush1.msra.mxu0 0.0
    %1193 = vmatprep.subr.mxu0 0.0
    %1194 = vmatpush1.msra.mxu0 0.0
    %1195 = vmatprep.subr.mxu0 0.0
    %1196 = vmatpush1.msra.mxu0 0.0
    %1197 = vmatprep.subr.mxu0 0.0
    %1198 = vmatpush1.msra.mxu0 0.0
    %1199 = vmatprep.subr.mxu0 0.0
    %1200 = vmatpush1.msra.mxu0 0.0
    %1201 = vmatprep.subr.mxu0 0.0
    %1202 = vmatpush1.msra.mxu0 0.0
    %1203 = vmatprep.subr.mxu0 0.0
    %1204 = vmatpush1.msra.mxu0 0.0
    %1205 = vmatprep.subr.mxu0 0.0
    %1206 = vmatpush1.msra.mxu0 0.0
    %1207 = vmatprep.subr.mxu0 0.0
    %1208 = vmatpush1.msra.mxu0 0.0
    %1209 = vmatprep.subr.mxu0 0.0
    %1210 = vmatpush1.msra.mxu0 0.0
    %1211 = vmatprep.subr.mxu0 0.0
    %1212 = vmatpush1.msra.mxu0 0.0
    %1213 = vmatprep.subr.mxu0 0.0
    %1214 = vmatpush1.msra.mxu0 0.0
    %1215 = vmatprep.subr.mxu0 0.0
    %1216 = vmatpush1.msra.mxu0 0.0
    %1217 = vmatprep.subr.mxu0 0.0
    %1218 = vmatpush1.msra.mxu0 0.0
    %1219 = vmatprep.subr.mxu0 0.0
    %1220 = vmatpush1.msra.mxu0 0.0
    %1221 = vmatprep.subr.mxu0 0.0
    %1222 = vmatpush1.msra.mxu0 0.0
    %1223 = vmatprep.mubr.f32.mxu0 0.0
    %1224 = vmatmul.mubr.f32.gmra.mrb[0].mxu0 %v1068
    %v1225 = vpop.f32.mrb[0].mxu0
    %v1226 = vadd.f32 0.0, %v1225
    %v1227 = vpop.f32.mrb[0].mxu0
    %1228 = vdwg.mxu0
    %v1230 = vrot.slane %v1226, 5
    %v1231 = vrot.slane %v1226, 6
    %1232 = vrot.lane.b32.xlu0 %v1230, 32
    %v1233 = vpop.permute.xlu0 %1232
    %1234 = vrot.lane.b32.xlu0 %v1231, 32
    %v1235 = vpop.permute.xlu0 %1234
    %v1238 = vadd.f32 %v127, %v1233
    %v1239 = vadd.f32 %v132, %v1235
    %v1240 = vxor.u32 %v1238, 2147483648
    %v1241 = vxor.u32 %v1239, 2147483648
    %v1242 = vmul.f32 %v1240, 1.442695
    %v1243 = vpow.pop %v1242
    %v1244 = vmul.f32 %v1241, 1.442695
    %v1245 = vpow.pop %v1244
    %v1246 = vadd.f32 %v1243, 1.0
    %v1247 = vadd.f32 %v1245, 1.0
    %v1248 = vrcp.pop %v1246
    %v1249 = vmul.f32 1.0, %v1248
    %v1250 = vrcp.pop %v1247
    %v1251 = vmul.f32 1.0, %v1250
    %1252 = vmatprep.subr.mxu0 0.0
    %1253 = vmatpush1.msra.mxu0 %v143
    %1254 = vmatprep.subr.mxu0 0.0
    %1255 = vmatpush1.msra.mxu0 %v144
    %1256 = vmatprep.subr.mxu0 0.0
    %1257 = vmatpush1.msra.mxu0 %v145
    %1258 = vmatprep.subr.mxu0 0.0
    %1259 = vmatpush1.msra.mxu0 %v146
    %1260 = vmatprep.subr.mxu0 0.0
    %1261 = vmatpush1.msra.mxu0 0.0
    %1262 = vmatprep.subr.mxu0 0.0
    %1263 = vmatpush1.msra.mxu0 0.0
    %1264 = vmatprep.subr.mxu0 0.0
    %1265 = vmatpush1.msra.mxu0 0.0
    %1266 = vmatprep.subr.mxu0 0.0
    %1267 = vmatpush1.msra.mxu0 0.0
    %1268 = vmatprep.subr.mxu0 0.0
    %1269 = vmatpush1.msra.mxu0 0.0
    %1270 = vmatprep.subr.mxu0 0.0
    %1271 = vmatpush1.msra.mxu0 0.0
    %1272 = vmatprep.subr.mxu0 0.0
    %1273 = vmatpush1.msra.mxu0 0.0
    %1274 = vmatprep.subr.mxu0 0.0
    %1275 = vmatpush1.msra.mxu0 0.0
    %1276 = vmatprep.subr.mxu0 0.0
    %1277 = vmatpush1.msra.mxu0 0.0
    %1278 = vmatprep.subr.mxu0 0.0
    %1279 = vmatpush1.msra.mxu0 0.0
    %1280 = vmatprep.subr.mxu0 0.0
    %1281 = vmatpush1.msra.mxu0 0.0
    %1282 = vmatprep.subr.mxu0 0.0
    %1283 = vmatpush1.msra.mxu0 0.0
    %1284 = vmatprep.subr.mxu0 0.0
    %1285 = vmatpush1.msra.mxu0 0.0
    %1286 = vmatprep.subr.mxu0 0.0
    %1287 = vmatpush1.msra.mxu0 0.0
    %1288 = vmatprep.subr.mxu0 0.0
    %1289 = vmatpush1.msra.mxu0 0.0
    %1290 = vmatprep.subr.mxu0 0.0
    %1291 = vmatpush1.msra.mxu0 0.0
    %1292 = vmatprep.subr.mxu0 0.0
    %1293 = vmatpush1.msra.mxu0 0.0
    %1294 = vmatprep.subr.mxu0 0.0
    %1295 = vmatpush1.msra.mxu0 0.0
    %1296 = vmatprep.subr.mxu0 0.0
    %1297 = vmatpush1.msra.mxu0 0.0
    %1298 = vmatprep.subr.mxu0 0.0
    %1299 = vmatpush1.msra.mxu0 0.0
    %1300 = vmatprep.subr.mxu0 0.0
    %1301 = vmatpush1.msra.mxu0 0.0
    %1302 = vmatprep.subr.mxu0 0.0
    %1303 = vmatpush1.msra.mxu0 0.0
    %1304 = vmatprep.subr.mxu0 0.0
    %1305 = vmatpush1.msra.mxu0 0.0
    %1306 = vmatprep.subr.mxu0 0.0
    %1307 = vmatpush1.msra.mxu0 0.0
    %1308 = vmatprep.subr.mxu0 0.0
    %1309 = vmatpush1.msra.mxu0 0.0
    %1310 = vmatprep.subr.mxu0 0.0
    %1311 = vmatpush1.msra.mxu0 0.0
    %1312 = vmatprep.subr.mxu0 0.0
    %1313 = vmatpush1.msra.mxu0 0.0
    %1314 = vmatprep.subr.mxu0 0.0
    %1315 = vmatpush1.msra.mxu0 0.0
    %1316 = vmatprep.mubr.f32.mxu0 0.0
    %1317 = vmatmul.mubr.f32.gmra.mrb[0].mxu0 %v1068
    %v1318 = vpop.f32.mrb[0].mxu0
    %v1319 = vadd.f32 %v334, %v1318
    %v1320 = vpop.f32.mrb[0].mxu0
    %1321 = vdwg.mxu0
    %v1323 = vrot.slane %v1319, 5
    %v1324 = vrot.slane %v1319, 6
    %v1327 = vmul.f32 %v1156, %v1323
    %v1328 = vmul.f32 %v1158, %v1324
    %1331 = vrot.lane.b32.xlu0 %v1327, 64
    %v1332 = vpop.permute.xlu0 %1331
    %1333 = vrot.lane.b32.xlu0 %v1328, 64
    %v1334 = vpop.permute.xlu0 %1333
    %v1337 = vadd.f32 %v127, %v1332
    %v1338 = vadd.f32 %v132, %v1334
    %v1339 = vtanh.pop %v1337
    %v1340 = vtanh.pop %v1338
    %v1341 = vsub.f32 1.0, %v1249
    %v1342 = vsub.f32 1.0, %v1251
    %1345 = vrot.lane.b32.xlu0 %v1339, 96
    %v1346 = vpop.permute.xlu0 %1345
    %1347 = vrot.lane.b32.xlu0 %v1340, 96
    %v1348 = vpop.permute.xlu0 %1347
    %v1351 = vmul.f32 %v1341, %v1346
    %v1352 = vmul.f32 %v1342, %v1348
    %v1353 = vrot.slane %v1050, 7
    %v1354 = vrot.slane %v1051, 7
    %v1357 = vmul.f32 %v1249, %v1353
    %v1358 = vmul.f32 %v1251, %v1354
    %v1359 = vadd.f32 %v1351, %v1357
    %v1360 = vadd.f32 %v1352, %v1358
    %1363 = vrot.lane.b32.xlu0 %v1359, 96
    %v1364 = vpop.permute.xlu0 %1363
    %1365 = vrot.lane.b32.xlu0 %v1360, 96
    %v1366 = vpop.permute.xlu0 %1365
    %vm1369 = vcmask 257027
    %1370 = vst.msk [vmem:[#allocation2] sm:$0x8] %vm1369, %v1364
    %1371 = vst.msk [vmem:[#allocation2 + $0x8] sm:$0x8] %vm1369, %v1366
    %v1372 = vrot.slane %v1359, 3
    %v1373 = vrot.slane %v1360, 2
    %v1374 = vsel %vm451, %v1373, %v1372
    %1375 = vrot.lane.b32.xlu0 %v1374, 96
    %v1376 = vpop.permute.xlu0 %1375
    %v1377 = vsel %vm53, %v1376, 0
    %1379 = vmatprep.subr.mxu0 0.0
    %1380 = vmatpush1.msra.mxu0 %v135
    %1381 = vmatprep.subr.mxu0 0.0
    %1382 = vmatpush1.msra.mxu0 %v136
    %1383 = vmatprep.subr.mxu0 0.0
    %1384 = vmatpush1.msra.mxu0 %v137
    %1385 = vmatprep.subr.mxu0 0.0
    %1386 = vmatpush1.msra.mxu0 %v138
    %1387 = vmatprep.subr.mxu0 0.0
    %1388 = vmatpush1.msra.mxu0 0.0
    %1389 = vmatprep.subr.mxu0 0.0
    %1390 = vmatpush1.msra.mxu0 0.0
    %1391 = vmatprep.subr.mxu0 0.0
    %1392 = vmatpush1.msra.mxu0 0.0
    %1393 = vmatprep.subr.mxu0 0.0
    %1394 = vmatpush1.msra.mxu0 0.0
    %1395 = vmatprep.subr.mxu0 0.0
    %1396 = vmatpush1.msra.mxu0 0.0
    %1397 = vmatprep.subr.mxu0 0.0
    %1398 = vmatpush1.msra.mxu0 0.0
    %1399 = vmatprep.subr.mxu0 0.0
    %1400 = vmatpush1.msra.mxu0 0.0
    %1401 = vmatprep.subr.mxu0 0.0
    %1402 = vmatpush1.msra.mxu0 0.0
    %1403 = vmatprep.subr.mxu0 0.0
    %1404 = vmatpush1.msra.mxu0 0.0
    %1405 = vmatprep.subr.mxu0 0.0
    %1406 = vmatpush1.msra.mxu0 0.0
    %1407 = vmatprep.subr.mxu0 0.0
    %1408 = vmatpush1.msra.mxu0 0.0
    %1409 = vmatprep.subr.mxu0 0.0
    %1410 = vmatpush1.msra.mxu0 0.0
    %1411 = vmatprep.subr.mxu0 0.0
    %1412 = vmatpush1.msra.mxu0 0.0
    %1413 = vmatprep.subr.mxu0 0.0
    %1414 = vmatpush1.msra.mxu0 0.0
    %1415 = vmatprep.subr.mxu0 0.0
    %1416 = vmatpush1.msra.mxu0 0.0
    %1417 = vmatprep.subr.mxu0 0.0
    %1418 = vmatpush1.msra.mxu0 0.0
    %1419 = vmatprep.subr.mxu0 0.0
    %1420 = vmatpush1.msra.mxu0 0.0
    %1421 = vmatprep.subr.mxu0 0.0
    %1422 = vmatpush1.msra.mxu0 0.0
    %1423 = vmatprep.subr.mxu0 0.0
    %1424 = vmatpush1.msra.mxu0 0.0
    %1425 = vmatprep.subr.mxu0 0.0
    %1426 = vmatpush1.msra.mxu0 0.0
    %1427 = vmatprep.subr.mxu0 0.0
    %1428 = vmatpush1.msra.mxu0 0.0
    %1429 = vmatprep.subr.mxu0 0.0
    %1430 = vmatpush1.msra.mxu0 0.0
    %1431 = vmatprep.subr.mxu0 0.0
    %1432 = vmatpush1.msra.mxu0 0.0
    %1433 = vmatprep.subr.mxu0 0.0
    %1434 = vmatpush1.msra.mxu0 0.0
    %1435 = vmatprep.subr.mxu0 0.0
    %1436 = vmatpush1.msra.mxu0 0.0
    %1437 = vmatprep.subr.mxu0 0.0
    %1438 = vmatpush1.msra.mxu0 0.0
    %1439 = vmatprep.subr.mxu0 0.0
    %1440 = vmatpush1.msra.mxu0 0.0
    %1441 = vmatprep.subr.mxu0 0.0
    %1442 = vmatpush1.msra.mxu0 0.0
    %1443 = vmatprep.mubr.f32.mxu0 0.0
    %1444 = vmatmul.mubr.f32.gmra.mrb[0].mxu0 %v1377
    %v1445 = vpop.f32.mrb[0].mxu0
    %v1446 = vadd.f32 0.0, %v1445
    %v1447 = vpop.f32.mrb[0].mxu0
    %1448 = vdwg.mxu0
    %v1450 = vrot.slane %v1446, 4
    %v1451 = vrot.slane %v1446, 5
    %v1454 = vadd.f32 %v127, %v1450
    %v1455 = vadd.f32 %v132, %v1451
    %v1456 = vxor.u32 %v1454, 2147483648
    %v1457 = vxor.u32 %v1455, 2147483648
    %v1458 = vmul.f32 %v1456, 1.442695
    %v1459 = vpow.pop %v1458
    %v1460 = vmul.f32 %v1457, 1.442695
    %v1461 = vpow.pop %v1460
    %v1462 = vadd.f32 %v1459, 1.0
    %v1463 = vadd.f32 %v1461, 1.0
    %v1464 = vrcp.pop %v1462
    %v1465 = vmul.f32 1.0, %v1464
    %v1466 = vrcp.pop %v1463
    %v1467 = vmul.f32 1.0, %v1466
    %1468 = vmatprep.subr.mxu0 0.0
    %1469 = vmatpush1.msra.mxu0 %v139
    %1470 = vmatprep.subr.mxu0 0.0
    %1471 = vmatpush1.msra.mxu0 %v140
    %1472 = vmatprep.subr.mxu0 0.0
    %1473 = vmatpush1.msra.mxu0 %v141
    %1474 = vmatprep.subr.mxu0 0.0
    %1475 = vmatpush1.msra.mxu0 %v142
    %1476 = vmatprep.subr.mxu0 0.0
    %1477 = vmatpush1.msra.mxu0 0.0
    %1478 = vmatprep.subr.mxu0 0.0
    %1479 = vmatpush1.msra.mxu0 0.0
    %1480 = vmatprep.subr.mxu0 0.0
    %1481 = vmatpush1.msra.mxu0 0.0
    %1482 = vmatprep.subr.mxu0 0.0
    %1483 = vmatpush1.msra.mxu0 0.0
    %1484 = vmatprep.subr.mxu0 0.0
    %1485 = vmatpush1.msra.mxu0 0.0
    %1486 = vmatprep.subr.mxu0 0.0
    %1487 = vmatpush1.msra.mxu0 0.0
    %1488 = vmatprep.subr.mxu0 0.0
    %1489 = vmatpush1.msra.mxu0 0.0
    %1490 = vmatprep.subr.mxu0 0.0
    %1491 = vmatpush1.msra.mxu0 0.0
    %1492 = vmatprep.subr.mxu0 0.0
    %1493 = vmatpush1.msra.mxu0 0.0
    %1494 = vmatprep.subr.mxu0 0.0
    %1495 = vmatpush1.msra.mxu0 0.0
    %1496 = vmatprep.subr.mxu0 0.0
    %1497 = vmatpush1.msra.mxu0 0.0
    %1498 = vmatprep.subr.mxu0 0.0
    %1499 = vmatpush1.msra.mxu0 0.0
    %1500 = vmatprep.subr.mxu0 0.0
    %1501 = vmatpush1.msra.mxu0 0.0
    %1502 = vmatprep.subr.mxu0 0.0
    %1503 = vmatpush1.msra.mxu0 0.0
    %1504 = vmatprep.subr.mxu0 0.0
    %1505 = vmatpush1.msra.mxu0 0.0
    %1506 = vmatprep.subr.mxu0 0.0
    %1507 = vmatpush1.msra.mxu0 0.0
    %1508 = vmatprep.subr.mxu0 0.0
    %1509 = vmatpush1.msra.mxu0 0.0
    %1510 = vmatprep.subr.mxu0 0.0
    %1511 = vmatpush1.msra.mxu0 0.0
    %1512 = vmatprep.subr.mxu0 0.0
    %1513 = vmatpush1.msra.mxu0 0.0
    %1514 = vmatprep.subr.mxu0 0.0
    %1515 = vmatpush1.msra.mxu0 0.0
    %1516 = vmatprep.subr.mxu0 0.0
    %1517 = vmatpush1.msra.mxu0 0.0
    %1518 = vmatprep.subr.mxu0 0.0
    %1519 = vmatpush1.msra.mxu0 0.0
    %1520 = vmatprep.subr.mxu0 0.0
    %1521 = vmatpush1.msra.mxu0 0.0
    %1522 = vmatprep.subr.mxu0 0.0
    %1523 = vmatpush1.msra.mxu0 0.0
    %1524 = vmatprep.subr.mxu0 0.0
    %1525 = vmatpush1.msra.mxu0 0.0
    %1526 = vmatprep.subr.mxu0 0.0
    %1527 = vmatpush1.msra.mxu0 0.0
    %1528 = vmatprep.subr.mxu0 0.0
    %1529 = vmatpush1.msra.mxu0 0.0
    %1530 = vmatprep.subr.mxu0 0.0
    %1531 = vmatpush1.msra.mxu0 0.0
    %1532 = vmatprep.mubr.f32.mxu0 0.0
    %1533 = vmatmul.mubr.f32.gmra.mrb[0].mxu0 %v1377
    %v1534 = vpop.f32.mrb[0].mxu0
    %v1535 = vadd.f32 0.0, %v1534
    %v1536 = vpop.f32.mrb[0].mxu0
    %1537 = vdwg.mxu0
    %v1539 = vrot.slane %v1535, 4
    %v1540 = vrot.slane %v1535, 5
    %1541 = vrot.lane.b32.xlu0 %v1539, 32
    %v1542 = vpop.permute.xlu0 %1541
    %1543 = vrot.lane.b32.xlu0 %v1540, 32
    %v1544 = vpop.permute.xlu0 %1543
    %v1547 = vadd.f32 %v127, %v1542
    %v1548 = vadd.f32 %v132, %v1544
    %v1549 = vxor.u32 %v1547, 2147483648
    %v1550 = vxor.u32 %v1548, 2147483648
    %v1551 = vmul.f32 %v1549, 1.442695
    %v1552 = vpow.pop %v1551
    %v1553 = vmul.f32 %v1550, 1.442695
    %v1554 = vpow.pop %v1553
    %v1555 = vadd.f32 %v1552, 1.0
    %v1556 = vadd.f32 %v1554, 1.0
    %v1557 = vrcp.pop %v1555
    %v1558 = vmul.f32 1.0, %v1557
    %v1559 = vrcp.pop %v1556
    %v1560 = vmul.f32 1.0, %v1559
    %1561 = vmatprep.subr.mxu0 0.0
    %1562 = vmatpush1.msra.mxu0 %v143
    %1563 = vmatprep.subr.mxu0 0.0
    %1564 = vmatpush1.msra.mxu0 %v144
    %1565 = vmatprep.subr.mxu0 0.0
    %1566 = vmatpush1.msra.mxu0 %v145
    %1567 = vmatprep.subr.mxu0 0.0
    %1568 = vmatpush1.msra.mxu0 %v146
    %1569 = vmatprep.subr.mxu0 0.0
    %1570 = vmatpush1.msra.mxu0 0.0
    %1571 = vmatprep.subr.mxu0 0.0
    %1572 = vmatpush1.msra.mxu0 0.0
    %1573 = vmatprep.subr.mxu0 0.0
    %1574 = vmatpush1.msra.mxu0 0.0
    %1575 = vmatprep.subr.mxu0 0.0
    %1576 = vmatpush1.msra.mxu0 0.0
    %1577 = vmatprep.subr.mxu0 0.0
    %1578 = vmatpush1.msra.mxu0 0.0
    %1579 = vmatprep.subr.mxu0 0.0
    %1580 = vmatpush1.msra.mxu0 0.0
    %1581 = vmatprep.subr.mxu0 0.0
    %1582 = vmatpush1.msra.mxu0 0.0
    %1583 = vmatprep.subr.mxu0 0.0
    %1584 = vmatpush1.msra.mxu0 0.0
    %1585 = vmatprep.subr.mxu0 0.0
    %1586 = vmatpush1.msra.mxu0 0.0
    %1587 = vmatprep.subr.mxu0 0.0
    %1588 = vmatpush1.msra.mxu0 0.0
    %1589 = vmatprep.subr.mxu0 0.0
    %1590 = vmatpush1.msra.mxu0 0.0
    %1591 = vmatprep.subr.mxu0 0.0
    %1592 = vmatpush1.msra.mxu0 0.0
    %1593 = vmatprep.subr.mxu0 0.0
    %1594 = vmatpush1.msra.mxu0 0.0
    %1595 = vmatprep.subr.mxu0 0.0
    %1596 = vmatpush1.msra.mxu0 0.0
    %1597 = vmatprep.subr.mxu0 0.0
    %1598 = vmatpush1.msra.mxu0 0.0
    %1599 = vmatprep.subr.mxu0 0.0
    %1600 = vmatpush1.msra.mxu0 0.0
    %1601 = vmatprep.subr.mxu0 0.0
    %1602 = vmatpush1.msra.mxu0 0.0
    %1603 = vmatprep.subr.mxu0 0.0
    %1604 = vmatpush1.msra.mxu0 0.0
    %1605 = vmatprep.subr.mxu0 0.0
    %1606 = vmatpush1.msra.mxu0 0.0
    %1607 = vmatprep.subr.mxu0 0.0
    %1608 = vmatpush1.msra.mxu0 0.0
    %1609 = vmatprep.subr.mxu0 0.0
    %1610 = vmatpush1.msra.mxu0 0.0
    %1611 = vmatprep.subr.mxu0 0.0
    %1612 = vmatpush1.msra.mxu0 0.0
    %1613 = vmatprep.subr.mxu0 0.0
    %1614 = vmatpush1.msra.mxu0 0.0
    %1615 = vmatprep.subr.mxu0 0.0
    %1616 = vmatpush1.msra.mxu0 0.0
    %1617 = vmatprep.subr.mxu0 0.0
    %1618 = vmatpush1.msra.mxu0 0.0
    %1619 = vmatprep.subr.mxu0 0.0
    %1620 = vmatpush1.msra.mxu0 0.0
    %1621 = vmatprep.subr.mxu0 0.0
    %1622 = vmatpush1.msra.mxu0 0.0
    %1623 = vmatprep.subr.mxu0 0.0
    %1624 = vmatpush1.msra.mxu0 0.0
    %1625 = vmatprep.mubr.f32.mxu0 0.0
    %1626 = vmatmul.mubr.f32.gmra.mrb[0].mxu0 %v1377
    %v1627 = vpop.f32.mrb[0].mxu0
    %v1628 = vadd.f32 %v334, %v1627
    %v1629 = vpop.f32.mrb[0].mxu0
    %1630 = vdwg.mxu0
    %v1632 = vrot.slane %v1628, 4
    %v1633 = vrot.slane %v1628, 5
    %v1636 = vmul.f32 %v1465, %v1632
    %v1637 = vmul.f32 %v1467, %v1633
    %1640 = vrot.lane.b32.xlu0 %v1636, 64
    %v1641 = vpop.permute.xlu0 %1640
    %1642 = vrot.lane.b32.xlu0 %v1637, 64
    %v1643 = vpop.permute.xlu0 %1642
    %v1646 = vadd.f32 %v127, %v1641
    %v1647 = vadd.f32 %v132, %v1643
    %v1648 = vtanh.pop %v1646
    %v1649 = vtanh.pop %v1647
    %v1650 = vsub.f32 1.0, %v1558
    %v1651 = vsub.f32 1.0, %v1560
    %1654 = vrot.lane.b32.xlu0 %v1648, 96
    %v1655 = vpop.permute.xlu0 %1654
    %1656 = vrot.lane.b32.xlu0 %v1649, 96
    %v1657 = vpop.permute.xlu0 %1656
    %v1660 = vmul.f32 %v1650, %v1655
    %v1661 = vmul.f32 %v1651, %v1657
    %v1662 = vrot.slane %v1359, 7
    %v1663 = vrot.slane %v1360, 7
    %v1666 = vmul.f32 %v1558, %v1662
    %v1667 = vmul.f32 %v1560, %v1663
    %v1668 = vadd.f32 %v1660, %v1666
    %v1669 = vadd.f32 %v1661, %v1667
    %1672 = vrot.lane.b32.xlu0 %v1668, 96
    %v1673 = vpop.permute.xlu0 %1672
    %1674 = vrot.lane.b32.xlu0 %v1669, 96
    %v1675 = vpop.permute.xlu0 %1674
    %vm1678 = vcmask 258052
    %1679 = vst.msk [vmem:[#allocation2] sm:$0x10] %vm1678, %v1673
    %1680 = vst.msk [vmem:[#allocation2 + $0x8] sm:$0x10] %vm1678, %v1675
    %v1681 = vrot.slane %v1668, 4
    %v1682 = vrot.slane %v1669, 3
    %v1683 = vsel %vm451, %v1682, %v1681
    %1684 = vrot.lane.b32.xlu0 %v1683, 96
    %v1685 = vpop.permute.xlu0 %1684
    %v1686 = vsel %vm53, %v1685, 0
    %1688 = vmatprep.subr.mxu0 0.0
    %1689 = vmatpush1.msra.mxu0 %v135
    %1690 = vmatprep.subr.mxu0 0.0
    %1691 = vmatpush1.msra.mxu0 %v136
    %1692 = vmatprep.subr.mxu0 0.0
    %1693 = vmatpush1.msra.mxu0 %v137
    %1694 = vmatprep.subr.mxu0 0.0
    %1695 = vmatpush1.msra.mxu0 %v138
    %1696 = vmatprep.subr.mxu0 0.0
    %1697 = vmatpush1.msra.mxu0 0.0
    %1698 = vmatprep.subr.mxu0 0.0
    %1699 = vmatpush1.msra.mxu0 0.0
    %1700 = vmatprep.subr.mxu0 0.0
    %1701 = vmatpush1.msra.mxu0 0.0
    %1702 = vmatprep.subr.mxu0 0.0
    %1703 = vmatpush1.msra.mxu0 0.0
    %1704 = vmatprep.subr.mxu0 0.0
    %1705 = vmatpush1.msra.mxu0 0.0
    %1706 = vmatprep.subr.mxu0 0.0
    %1707 = vmatpush1.msra.mxu0 0.0
    %1708 = vmatprep.subr.mxu0 0.0
    %1709 = vmatpush1.msra.mxu0 0.0
    %1710 = vmatprep.subr.mxu0 0.0
    %1711 = vmatpush1.msra.mxu0 0.0
    %1712 = vmatprep.subr.mxu0 0.0
    %1713 = vmatpush1.msra.mxu0 0.0
    %1714 = vmatprep.subr.mxu0 0.0
    %1715 = vmatpush1.msra.mxu0 0.0
    %1716 = vmatprep.subr.mxu0 0.0
    %1717 = vmatpush1.msra.mxu0 0.0
    %1718 = vmatprep.subr.mxu0 0.0
    %1719 = vmatpush1.msra.mxu0 0.0
    %1720 = vmatprep.subr.mxu0 0.0
    %1721 = vmatpush1.msra.mxu0 0.0
    %1722 = vmatprep.subr.mxu0 0.0
    %1723 = vmatpush1.msra.mxu0 0.0
    %1724 = vmatprep.subr.mxu0 0.0
    %1725 = vmatpush1.msra.mxu0 0.0
    %1726 = vmatprep.subr.mxu0 0.0
    %1727 = vmatpush1.msra.mxu0 0.0
    %1728 = vmatprep.subr.mxu0 0.0
    %1729 = vmatpush1.msra.mxu0 0.0
    %1730 = vmatprep.subr.mxu0 0.0
    %1731 = vmatpush1.msra.mxu0 0.0
    %1732 = vmatprep.subr.mxu0 0.0
    %1733 = vmatpush1.msra.mxu0 0.0
    %1734 = vmatprep.subr.mxu0 0.0
    %1735 = vmatpush1.msra.mxu0 0.0
    %1736 = vmatprep.subr.mxu0 0.0
    %1737 = vmatpush1.msra.mxu0 0.0
    %1738 = vmatprep.subr.mxu0 0.0
    %1739 = vmatpush1.msra.mxu0 0.0
    %1740 = vmatprep.subr.mxu0 0.0
    %1741 = vmatpush1.msra.mxu0 0.0
    %1742 = vmatprep.subr.mxu0 0.0
    %1743 = vmatpush1.msra.mxu0 0.0
    %1744 = vmatprep.subr.mxu0 0.0
    %1745 = vmatpush1.msra.mxu0 0.0
    %1746 = vmatprep.subr.mxu0 0.0
    %1747 = vmatpush1.msra.mxu0 0.0
    %1748 = vmatprep.subr.mxu0 0.0
    %1749 = vmatpush1.msra.mxu0 0.0
    %1750 = vmatprep.subr.mxu0 0.0
    %1751 = vmatpush1.msra.mxu0 0.0
    %1752 = vmatprep.mubr.f32.mxu0 0.0
    %1753 = vmatmul.mubr.f32.gmra.mrb[0].mxu0 %v1686
    %v1754 = vpop.f32.mrb[0].mxu0
    %v1755 = vadd.f32 0.0, %v1754
    %v1756 = vpop.f32.mrb[0].mxu0
    %1757 = vdwg.mxu0
    %v1759 = vrot.slane %v1755, 3
    %v1760 = vrot.slane %v1755, 4
    %v1763 = vadd.f32 %v127, %v1759
    %v1764 = vadd.f32 %v132, %v1760
    %v1765 = vxor.u32 %v1763, 2147483648
    %v1766 = vxor.u32 %v1764, 2147483648
    %v1767 = vmul.f32 %v1765, 1.442695
    %v1768 = vpow.pop %v1767
    %v1769 = vmul.f32 %v1766, 1.442695
    %v1770 = vpow.pop %v1769
    %v1771 = vadd.f32 %v1768, 1.0
    %v1772 = vadd.f32 %v1770, 1.0
    %v1773 = vrcp.pop %v1771
    %v1774 = vmul.f32 1.0, %v1773
    %v1775 = vrcp.pop %v1772
    %v1776 = vmul.f32 1.0, %v1775
    %1777 = vmatprep.subr.mxu0 0.0
    %1778 = vmatpush1.msra.mxu0 %v139
    %1779 = vmatprep.subr.mxu0 0.0
    %1780 = vmatpush1.msra.mxu0 %v140
    %1781 = vmatprep.subr.mxu0 0.0
    %1782 = vmatpush1.msra.mxu0 %v141
    %1783 = vmatprep.subr.mxu0 0.0
    %1784 = vmatpush1.msra.mxu0 %v142
    %1785 = vmatprep.subr.mxu0 0.0
    %1786 = vmatpush1.msra.mxu0 0.0
    %1787 = vmatprep.subr.mxu0 0.0
    %1788 = vmatpush1.msra.mxu0 0.0
    %1789 = vmatprep.subr.mxu0 0.0
    %1790 = vmatpush1.msra.mxu0 0.0
    %1791 = vmatprep.subr.mxu0 0.0
    %1792 = vmatpush1.msra.mxu0 0.0
    %1793 = vmatprep.subr.mxu0 0.0
    %1794 = vmatpush1.msra.mxu0 0.0
    %1795 = vmatprep.subr.mxu0 0.0
    %1796 = vmatpush1.msra.mxu0 0.0
    %1797 = vmatprep.subr.mxu0 0.0
    %1798 = vmatpush1.msra.mxu0 0.0
    %1799 = vmatprep.subr.mxu0 0.0
    %1800 = vmatpush1.msra.mxu0 0.0
    %1801 = vmatprep.subr.mxu0 0.0
    %1802 = vmatpush1.msra.mxu0 0.0
    %1803 = vmatprep.subr.mxu0 0.0
    %1804 = vmatpush1.msra.mxu0 0.0
    %1805 = vmatprep.subr.mxu0 0.0
    %1806 = vmatpush1.msra.mxu0 0.0
    %1807 = vmatprep.subr.mxu0 0.0
    %1808 = vmatpush1.msra.mxu0 0.0
    %1809 = vmatprep.subr.mxu0 0.0
    %1810 = vmatpush1.msra.mxu0 0.0
    %1811 = vmatprep.subr.mxu0 0.0
    %1812 = vmatpush1.msra.mxu0 0.0
    %1813 = vmatprep.subr.mxu0 0.0
    %1814 = vmatpush1.msra.mxu0 0.0
    %1815 = vmatprep.subr.mxu0 0.0
    %1816 = vmatpush1.msra.mxu0 0.0
    %1817 = vmatprep.subr.mxu0 0.0
    %1818 = vmatpush1.msra.mxu0 0.0
    %1819 = vmatprep.subr.mxu0 0.0
    %1820 = vmatpush1.msra.mxu0 0.0
    %1821 = vmatprep.subr.mxu0 0.0
    %1822 = vmatpush1.msra.mxu0 0.0
    %1823 = vmatprep.subr.mxu0 0.0
    %1824 = vmatpush1.msra.mxu0 0.0
    %1825 = vmatprep.subr.mxu0 0.0
    %1826 = vmatpush1.msra.mxu0 0.0
    %1827 = vmatprep.subr.mxu0 0.0
    %1828 = vmatpush1.msra.mxu0 0.0
    %1829 = vmatprep.subr.mxu0 0.0
    %1830 = vmatpush1.msra.mxu0 0.0
    %1831 = vmatprep.subr.mxu0 0.0
    %1832 = vmatpush1.msra.mxu0 0.0
    %1833 = vmatprep.subr.mxu0 0.0
    %1834 = vmatpush1.msra.mxu0 0.0
    %1835 = vmatprep.subr.mxu0 0.0
    %1836 = vmatpush1.msra.mxu0 0.0
    %1837 = vmatprep.subr.mxu0 0.0
    %1838 = vmatpush1.msra.mxu0 0.0
    %1839 = vmatprep.subr.mxu0 0.0
    %1840 = vmatpush1.msra.mxu0 0.0
    %1841 = vmatprep.mubr.f32.mxu0 0.0
    %1842 = vmatmul.mubr.f32.gmra.mrb[0].mxu0 %v1686
    %v1843 = vpop.f32.mrb[0].mxu0
    %v1844 = vadd.f32 0.0, %v1843
    %v1845 = vpop.f32.mrb[0].mxu0
    %1846 = vdwg.mxu0
    %v1848 = vrot.slane %v1844, 3
    %v1849 = vrot.slane %v1844, 4
    %1850 = vrot.lane.b32.xlu0 %v1848, 32
    %v1851 = vpop.permute.xlu0 %1850
    %1852 = vrot.lane.b32.xlu0 %v1849, 32
    %v1853 = vpop.permute.xlu0 %1852
    %v1856 = vadd.f32 %v127, %v1851
    %v1857 = vadd.f32 %v132, %v1853
    %v1858 = vxor.u32 %v1856, 2147483648
    %v1859 = vxor.u32 %v1857, 2147483648
    %v1860 = vmul.f32 %v1858, 1.442695
    %v1861 = vpow.pop %v1860
    %v1862 = vmul.f32 %v1859, 1.442695
    %v1863 = vpow.pop %v1862
    %v1864 = vadd.f32 %v1861, 1.0
    %v1865 = vadd.f32 %v1863, 1.0
    %v1866 = vrcp.pop %v1864
    %v1867 = vmul.f32 1.0, %v1866
    %v1868 = vrcp.pop %v1865
    %v1869 = vmul.f32 1.0, %v1868
    %1870 = vmatprep.subr.mxu0 0.0
    %1871 = vmatpush1.msra.mxu0 %v143
    %1872 = vmatprep.subr.mxu0 0.0
    %1873 = vmatpush1.msra.mxu0 %v144
    %1874 = vmatprep.subr.mxu0 0.0
    %1875 = vmatpush1.msra.mxu0 %v145
    %1876 = vmatprep.subr.mxu0 0.0
    %1877 = vmatpush1.msra.mxu0 %v146
    %1878 = vmatprep.subr.mxu0 0.0
    %1879 = vmatpush1.msra.mxu0 0.0
    %1880 = vmatprep.subr.mxu0 0.0
    %1881 = vmatpush1.msra.mxu0 0.0
    %1882 = vmatprep.subr.mxu0 0.0
    %1883 = vmatpush1.msra.mxu0 0.0
    %1884 = vmatprep.subr.mxu0 0.0
    %1885 = vmatpush1.msra.mxu0 0.0
    %1886 = vmatprep.subr.mxu0 0.0
    %1887 = vmatpush1.msra.mxu0 0.0
    %1888 = vmatprep.subr.mxu0 0.0
    %1889 = vmatpush1.msra.mxu0 0.0
    %1890 = vmatprep.subr.mxu0 0.0
    %1891 = vmatpush1.msra.mxu0 0.0
    %1892 = vmatprep.subr.mxu0 0.0
    %1893 = vmatpush1.msra.mxu0 0.0
    %1894 = vmatprep.subr.mxu0 0.0
    %1895 = vmatpush1.msra.mxu0 0.0
    %1896 = vmatprep.subr.mxu0 0.0
    %1897 = vmatpush1.msra.mxu0 0.0
    %1898 = vmatprep.subr.mxu0 0.0
    %1899 = vmatpush1.msra.mxu0 0.0
    %1900 = vmatprep.subr.mxu0 0.0
    %1901 = vmatpush1.msra.mxu0 0.0
    %1902 = vmatprep.subr.mxu0 0.0
    %1903 = vmatpush1.msra.mxu0 0.0
    %1904 = vmatprep.subr.mxu0 0.0
    %1905 = vmatpush1.msra.mxu0 0.0
    %1906 = vmatprep.subr.mxu0 0.0
    %1907 = vmatpush1.msra.mxu0 0.0
    %1908 = vmatprep.subr.mxu0 0.0
    %1909 = vmatpush1.msra.mxu0 0.0
    %1910 = vmatprep.subr.mxu0 0.0
    %1911 = vmatpush1.msra.mxu0 0.0
    %1912 = vmatprep.subr.mxu0 0.0
    %1913 = vmatpush1.msra.mxu0 0.0
    %1914 = vmatprep.subr.mxu0 0.0
    %1915 = vmatpush1.msra.mxu0 0.0
    %1916 = vmatprep.subr.mxu0 0.0
    %1917 = vmatpush1.msra.mxu0 0.0
    %1918 = vmatprep.subr.mxu0 0.0
    %1919 = vmatpush1.msra.mxu0 0.0
    %1920 = vmatprep.subr.mxu0 0.0
    %1921 = vmatpush1.msra.mxu0 0.0
    %1922 = vmatprep.subr.mxu0 0.0
    %1923 = vmatpush1.msra.mxu0 0.0
    %1924 = vmatprep.subr.mxu0 0.0
    %1925 = vmatpush1.msra.mxu0 0.0
    %1926 = vmatprep.subr.mxu0 0.0
    %1927 = vmatpush1.msra.mxu0 0.0
    %1928 = vmatprep.subr.mxu0 0.0
    %1929 = vmatpush1.msra.mxu0 0.0
    %1930 = vmatprep.subr.mxu0 0.0
    %1931 = vmatpush1.msra.mxu0 0.0
    %1932 = vmatprep.subr.mxu0 0.0
    %1933 = vmatpush1.msra.mxu0 0.0
    %1934 = vmatprep.mubr.f32.mxu0 0.0
    %1935 = vmatmul.mubr.f32.gmra.mrb[0].mxu0 %v1686
    %v1936 = vpop.f32.mrb[0].mxu0
    %v1937 = vadd.f32 %v334, %v1936
    %v1938 = vpop.f32.mrb[0].mxu0
    %1939 = vdwg.mxu0
    %v1941 = vrot.slane %v1937, 3
    %v1942 = vrot.slane %v1937, 4
    %v1945 = vmul.f32 %v1774, %v1941
    %v1946 = vmul.f32 %v1776, %v1942
    %1949 = vrot.lane.b32.xlu0 %v1945, 64
    %v1950 = vpop.permute.xlu0 %1949
    %1951 = vrot.lane.b32.xlu0 %v1946, 64
    %v1952 = vpop.permute.xlu0 %1951
    %v1955 = vadd.f32 %v127, %v1950
    %v1956 = vadd.f32 %v132, %v1952
    %v1957 = vtanh.pop %v1955
    %v1958 = vtanh.pop %v1956
    %v1959 = vsub.f32 1.0, %v1867
    %v1960 = vsub.f32 1.0, %v1869
    %1963 = vrot.lane.b32.xlu0 %v1957, 96
    %v1964 = vpop.permute.xlu0 %1963
    %1965 = vrot.lane.b32.xlu0 %v1958, 96
    %v1966 = vpop.permute.xlu0 %1965
    %v1969 = vmul.f32 %v1959, %v1964
    %v1970 = vmul.f32 %v1960, %v1966
    %v1971 = vrot.slane %v1668, 7
    %v1972 = vrot.slane %v1669, 7
    %v1975 = vmul.f32 %v1867, %v1971
    %v1976 = vmul.f32 %v1869, %v1972
    %v1977 = vadd.f32 %v1969, %v1975
    %v1978 = vadd.f32 %v1970, %v1976
    %1981 = vrot.lane.b32.xlu0 %v1977, 96
    %v1982 = vpop.permute.xlu0 %1981
    %1983 = vrot.lane.b32.xlu0 %v1978, 96
    %v1984 = vpop.permute.xlu0 %1983
    %vm1987 = vcmask 259077
    %1988 = vst.msk [vmem:[#allocation2] sm:$0x20] %vm1987, %v1982
    %1989 = vst.msk [vmem:[#allocation2 + $0x8] sm:$0x20] %vm1987, %v1984
    %v1990 = vrot.slane %v1977, 5
    %v1991 = vrot.slane %v1978, 4
    %v1992 = vsel %vm451, %v1991, %v1990
    %1993 = vrot.lane.b32.xlu0 %v1992, 96
    %v1994 = vpop.permute.xlu0 %1993
    %v1995 = vsel %vm53, %v1994, 0
    %1997 = vmatprep.subr.mxu0 0.0
    %1998 = vmatpush1.msra.mxu0 %v135
    %1999 = vmatprep.subr.mxu0 0.0
    %2000 = vmatpush1.msra.mxu0 %v136
    %2001 = vmatprep.subr.mxu0 0.0
    %2002 = vmatpush1.msra.mxu0 %v137
    %2003 = vmatprep.subr.mxu0 0.0
    %2004 = vmatpush1.msra.mxu0 %v138
    %2005 = vmatprep.subr.mxu0 0.0
    %2006 = vmatpush1.msra.mxu0 0.0
    %2007 = vmatprep.subr.mxu0 0.0
    %2008 = vmatpush1.msra.mxu0 0.0
    %2009 = vmatprep.subr.mxu0 0.0
    %2010 = vmatpush1.msra.mxu0 0.0
    %2011 = vmatprep.subr.mxu0 0.0
    %2012 = vmatpush1.msra.mxu0 0.0
    %2013 = vmatprep.subr.mxu0 0.0
    %2014 = vmatpush1.msra.mxu0 0.0
    %2015 = vmatprep.subr.mxu0 0.0
    %2016 = vmatpush1.msra.mxu0 0.0
    %2017 = vmatprep.subr.mxu0 0.0
    %2018 = vmatpush1.msra.mxu0 0.0
    %2019 = vmatprep.subr.mxu0 0.0
    %2020 = vmatpush1.msra.mxu0 0.0
    %2021 = vmatprep.subr.mxu0 0.0
    %2022 = vmatpush1.msra.mxu0 0.0
    %2023 = vmatprep.subr.mxu0 0.0
    %2024 = vmatpush1.msra.mxu0 0.0
    %2025 = vmatprep.subr.mxu0 0.0
    %2026 = vmatpush1.msra.mxu0 0.0
    %2027 = vmatprep.subr.mxu0 0.0
    %2028 = vmatpush1.msra.mxu0 0.0
    %2029 = vmatprep.subr.mxu0 0.0
    %2030 = vmatpush1.msra.mxu0 0.0
    %2031 = vmatprep.subr.mxu0 0.0
    %2032 = vmatpush1.msra.mxu0 0.0
    %2033 = vmatprep.subr.mxu0 0.0
    %2034 = vmatpush1.msra.mxu0 0.0
    %2035 = vmatprep.subr.mxu0 0.0
    %2036 = vmatpush1.msra.mxu0 0.0
    %2037 = vmatprep.subr.mxu0 0.0
    %2038 = vmatpush1.msra.mxu0 0.0
    %2039 = vmatprep.subr.mxu0 0.0
    %2040 = vmatpush1.msra.mxu0 0.0
    %2041 = vmatprep.subr.mxu0 0.0
    %2042 = vmatpush1.msra.mxu0 0.0
    %2043 = vmatprep.subr.mxu0 0.0
    %2044 = vmatpush1.msra.mxu0 0.0
    %2045 = vmatprep.subr.mxu0 0.0
    %2046 = vmatpush1.msra.mxu0 0.0
    %2047 = vmatprep.subr.mxu0 0.0
    %2048 = vmatpush1.msra.mxu0 0.0
    %2049 = vmatprep.subr.mxu0 0.0
    %2050 = vmatpush1.msra.mxu0 0.0
    %2051 = vmatprep.subr.mxu0 0.0
    %2052 = vmatpush1.msra.mxu0 0.0
    %2053 = vmatprep.subr.mxu0 0.0
    %2054 = vmatpush1.msra.mxu0 0.0
    %2055 = vmatprep.subr.mxu0 0.0
    %2056 = vmatpush1.msra.mxu0 0.0
    %2057 = vmatprep.subr.mxu0 0.0
    %2058 = vmatpush1.msra.mxu0 0.0
    %2059 = vmatprep.subr.mxu0 0.0
    %2060 = vmatpush1.msra.mxu0 0.0
    %2061 = vmatprep.mubr.f32.mxu0 0.0
    %2062 = vmatmul.mubr.f32.gmra.mrb[0].mxu0 %v1995
    %v2063 = vpop.f32.mrb[0].mxu0
    %v2064 = vadd.f32 0.0, %v2063
    %v2065 = vpop.f32.mrb[0].mxu0
    %2066 = vdwg.mxu0
    %v2068 = vrot.slane %v2064, 2
    %v2069 = vrot.slane %v2064, 3
    %v2072 = vadd.f32 %v127, %v2068
    %v2073 = vadd.f32 %v132, %v2069
    %v2074 = vxor.u32 %v2072, 2147483648
    %v2075 = vxor.u32 %v2073, 2147483648
    %v2076 = vmul.f32 %v2074, 1.442695
    %v2077 = vpow.pop %v2076
    %v2078 = vmul.f32 %v2075, 1.442695
    %v2079 = vpow.pop %v2078
    %v2080 = vadd.f32 %v2077, 1.0
    %v2081 = vadd.f32 %v2079, 1.0
    %v2082 = vrcp.pop %v2080
    %v2083 = vmul.f32 1.0, %v2082
    %v2084 = vrcp.pop %v2081
    %v2085 = vmul.f32 1.0, %v2084
    %2086 = vmatprep.subr.mxu0 0.0
    %2087 = vmatpush1.msra.mxu0 %v139
    %2088 = vmatprep.subr.mxu0 0.0
    %2089 = vmatpush1.msra.mxu0 %v140
    %2090 = vmatprep.subr.mxu0 0.0
    %2091 = vmatpush1.msra.mxu0 %v141
    %2092 = vmatprep.subr.mxu0 0.0
    %2093 = vmatpush1.msra.mxu0 %v142
    %2094 = vmatprep.subr.mxu0 0.0
    %2095 = vmatpush1.msra.mxu0 0.0
    %2096 = vmatprep.subr.mxu0 0.0
    %2097 = vmatpush1.msra.mxu0 0.0
    %2098 = vmatprep.subr.mxu0 0.0
    %2099 = vmatpush1.msra.mxu0 0.0
    %2100 = vmatprep.subr.mxu0 0.0
    %2101 = vmatpush1.msra.mxu0 0.0
    %2102 = vmatprep.subr.mxu0 0.0
    %2103 = vmatpush1.msra.mxu0 0.0
    %2104 = vmatprep.subr.mxu0 0.0
    %2105 = vmatpush1.msra.mxu0 0.0
    %2106 = vmatprep.subr.mxu0 0.0
    %2107 = vmatpush1.msra.mxu0 0.0
    %2108 = vmatprep.subr.mxu0 0.0
    %2109 = vmatpush1.msra.mxu0 0.0
    %2110 = vmatprep.subr.mxu0 0.0
    %2111 = vmatpush1.msra.mxu0 0.0
    %2112 = vmatprep.subr.mxu0 0.0
    %2113 = vmatpush1.msra.mxu0 0.0
    %2114 = vmatprep.subr.mxu0 0.0
    %2115 = vmatpush1.msra.mxu0 0.0
    %2116 = vmatprep.subr.mxu0 0.0
    %2117 = vmatpush1.msra.mxu0 0.0
    %2118 = vmatprep.subr.mxu0 0.0
    %2119 = vmatpush1.msra.mxu0 0.0
    %2120 = vmatprep.subr.mxu0 0.0
    %2121 = vmatpush1.msra.mxu0 0.0
    %2122 = vmatprep.subr.mxu0 0.0
    %2123 = vmatpush1.msra.mxu0 0.0
    %2124 = vmatprep.subr.mxu0 0.0
    %2125 = vmatpush1.msra.mxu0 0.0
    %2126 = vmatprep.subr.mxu0 0.0
    %2127 = vmatpush1.msra.mxu0 0.0
    %2128 = vmatprep.subr.mxu0 0.0
    %2129 = vmatpush1.msra.mxu0 0.0
    %2130 = vmatprep.subr.mxu0 0.0
    %2131 = vmatpush1.msra.mxu0 0.0
    %2132 = vmatprep.subr.mxu0 0.0
    %2133 = vmatpush1.msra.mxu0 0.0
    %2134 = vmatprep.subr.mxu0 0.0
    %2135 = vmatpush1.msra.mxu0 0.0
    %2136 = vmatprep.subr.mxu0 0.0
    %2137 = vmatpush1.msra.mxu0 0.0
    %2138 = vmatprep.subr.mxu0 0.0
    %2139 = vmatpush1.msra.mxu0 0.0
    %2140 = vmatprep.subr.mxu0 0.0
    %2141 = vmatpush1.msra.mxu0 0.0
    %2142 = vmatprep.subr.mxu0 0.0
    %2143 = vmatpush1.msra.mxu0 0.0
    %2144 = vmatprep.subr.mxu0 0.0
    %2145 = vmatpush1.msra.mxu0 0.0
    %2146 = vmatprep.subr.mxu0 0.0
    %2147 = vmatpush1.msra.mxu0 0.0
    %2148 = vmatprep.subr.mxu0 0.0
    %2149 = vmatpush1.msra.mxu0 0.0
    %2150 = vmatprep.mubr.f32.mxu0 0.0
    %2151 = vmatmul.mubr.f32.gmra.mrb[0].mxu0 %v1995
    %v2152 = vpop.f32.mrb[0].mxu0
    %v2153 = vadd.f32 0.0, %v2152
    %v2154 = vpop.f32.mrb[0].mxu0
    %2155 = vdwg.mxu0
    %v2157 = vrot.slane %v2153, 2
    %v2158 = vrot.slane %v2153, 3
    %2159 = vrot.lane.b32.xlu0 %v2157, 32
    %v2160 = vpop.permute.xlu0 %2159
    %2161 = vrot.lane.b32.xlu0 %v2158, 32
    %v2162 = vpop.permute.xlu0 %2161
    %v2165 = vadd.f32 %v127, %v2160
    %v2166 = vadd.f32 %v132, %v2162
    %v2167 = vxor.u32 %v2165, 2147483648
    %v2168 = vxor.u32 %v2166, 2147483648
    %v2169 = vmul.f32 %v2167, 1.442695
    %v2170 = vpow.pop %v2169
    %v2171 = vmul.f32 %v2168, 1.442695
    %v2172 = vpow.pop %v2171
    %v2173 = vadd.f32 %v2170, 1.0
    %v2174 = vadd.f32 %v2172, 1.0
    %v2175 = vrcp.pop %v2173
    %v2176 = vmul.f32 1.0, %v2175
    %v2177 = vrcp.pop %v2174
    %v2178 = vmul.f32 1.0, %v2177
    %2179 = vmatprep.subr.mxu0 0.0
    %2180 = vmatpush1.msra.mxu0 %v143
    %2181 = vmatprep.subr.mxu0 0.0
    %2182 = vmatpush1.msra.mxu0 %v144
    %2183 = vmatprep.subr.mxu0 0.0
    %2184 = vmatpush1.msra.mxu0 %v145
    %2185 = vmatprep.subr.mxu0 0.0
    %2186 = vmatpush1.msra.mxu0 %v146
    %2187 = vmatprep.subr.mxu0 0.0
    %2188 = vmatpush1.msra.mxu0 0.0
    %2189 = vmatprep.subr.mxu0 0.0
    %2190 = vmatpush1.msra.mxu0 0.0
    %2191 = vmatprep.subr.mxu0 0.0
    %2192 = vmatpush1.msra.mxu0 0.0
    %2193 = vmatprep.subr.mxu0 0.0
    %2194 = vmatpush1.msra.mxu0 0.0
    %2195 = vmatprep.subr.mxu0 0.0
    %2196 = vmatpush1.msra.mxu0 0.0
    %2197 = vmatprep.subr.mxu0 0.0
    %2198 = vmatpush1.msra.mxu0 0.0
    %2199 = vmatprep.subr.mxu0 0.0
    %2200 = vmatpush1.msra.mxu0 0.0
    %2201 = vmatprep.subr.mxu0 0.0
    %2202 = vmatpush1.msra.mxu0 0.0
    %2203 = vmatprep.subr.mxu0 0.0
    %2204 = vmatpush1.msra.mxu0 0.0
    %2205 = vmatprep.subr.mxu0 0.0
    %2206 = vmatpush1.msra.mxu0 0.0
    %2207 = vmatprep.subr.mxu0 0.0
    %2208 = vmatpush1.msra.mxu0 0.0
    %2209 = vmatprep.subr.mxu0 0.0
    %2210 = vmatpush1.msra.mxu0 0.0
    %2211 = vmatprep.subr.mxu0 0.0
    %2212 = vmatpush1.msra.mxu0 0.0
    %2213 = vmatprep.subr.mxu0 0.0
    %2214 = vmatpush1.msra.mxu0 0.0
    %2215 = vmatprep.subr.mxu0 0.0
    %2216 = vmatpush1.msra.mxu0 0.0
    %2217 = vmatprep.subr.mxu0 0.0
    %2218 = vmatpush1.msra.mxu0 0.0
    %2219 = vmatprep.subr.mxu0 0.0
    %2220 = vmatpush1.msra.mxu0 0.0
    %2221 = vmatprep.subr.mxu0 0.0
    %2222 = vmatpush1.msra.mxu0 0.0
    %2223 = vmatprep.subr.mxu0 0.0
    %2224 = vmatpush1.msra.mxu0 0.0
    %2225 = vmatprep.subr.mxu0 0.0
    %2226 = vmatpush1.msra.mxu0 0.0
    %2227 = vmatprep.subr.mxu0 0.0
    %2228 = vmatpush1.msra.mxu0 0.0
    %2229 = vmatprep.subr.mxu0 0.0
    %2230 = vmatpush1.msra.mxu0 0.0
    %2231 = vmatprep.subr.mxu0 0.0
    %2232 = vmatpush1.msra.mxu0 0.0
    %2233 = vmatprep.subr.mxu0 0.0
    %2234 = vmatpush1.msra.mxu0 0.0
    %2235 = vmatprep.subr.mxu0 0.0
    %2236 = vmatpush1.msra.mxu0 0.0
    %2237 = vmatprep.subr.mxu0 0.0
    %2238 = vmatpush1.msra.mxu0 0.0
    %2239 = vmatprep.subr.mxu0 0.0
    %2240 = vmatpush1.msra.mxu0 0.0
    %2241 = vmatprep.subr.mxu0 0.0
    %2242 = vmatpush1.msra.mxu0 0.0
    %2243 = vmatprep.mubr.f32.mxu0 0.0
    %2244 = vmatmul.mubr.f32.gmra.mrb[0].mxu0 %v1995
    %v2245 = vpop.f32.mrb[0].mxu0
    %v2246 = vadd.f32 %v334, %v2245
    %v2247 = vpop.f32.mrb[0].mxu0
    %2248 = vdwg.mxu0
    %v2250 = vrot.slane %v2246, 2
    %v2251 = vrot.slane %v2246, 3
    %v2254 = vmul.f32 %v2083, %v2250
    %v2255 = vmul.f32 %v2085, %v2251
    %2258 = vrot.lane.b32.xlu0 %v2254, 64
    %v2259 = vpop.permute.xlu0 %2258
    %2260 = vrot.lane.b32.xlu0 %v2255, 64
    %v2261 = vpop.permute.xlu0 %2260
    %v2264 = vadd.f32 %v127, %v2259
    %v2265 = vadd.f32 %v132, %v2261
    %v2266 = vtanh.pop %v2264
    %v2267 = vtanh.pop %v2265
    %v2268 = vsub.f32 1.0, %v2176
    %v2269 = vsub.f32 1.0, %v2178
    %2272 = vrot.lane.b32.xlu0 %v2266, 96
    %v2273 = vpop.permute.xlu0 %2272
    %2274 = vrot.lane.b32.xlu0 %v2267, 96
    %v2275 = vpop.permute.xlu0 %2274
    %v2278 = vmul.f32 %v2268, %v2273
    %v2279 = vmul.f32 %v2269, %v2275
    %v2280 = vrot.slane %v1977, 7
    %v2281 = vrot.slane %v1978, 7
    %v2284 = vmul.f32 %v2176, %v2280
    %v2285 = vmul.f32 %v2178, %v2281
    %v2286 = vadd.f32 %v2278, %v2284
    %v2287 = vadd.f32 %v2279, %v2285
    %2290 = vrot.lane.b32.xlu0 %v2286, 96
    %v2291 = vpop.permute.xlu0 %2290
    %2292 = vrot.lane.b32.xlu0 %v2287, 96
    %v2293 = vpop.permute.xlu0 %2292
    %vm2296 = vcmask 260102
    %2297 = vst.msk [vmem:[#allocation2] sm:$0x40] %vm2296, %v2291
    %2298 = vst.msk [vmem:[#allocation2 + $0x8] sm:$0x40] %vm2296, %v2293
    %v2299 = vrot.slane %v2286, 6
    %v2300 = vrot.slane %v2287, 5
    %v2301 = vsel %vm451, %v2300, %v2299
    %2302 = vrot.lane.b32.xlu0 %v2301, 96
    %v2303 = vpop.permute.xlu0 %2302
    %v2304 = vsel %vm53, %v2303, 0
    %2306 = vmatprep.subr.mxu0 0.0
    %2307 = vmatpush1.msra.mxu0 %v135
    %2308 = vmatprep.subr.mxu0 0.0
    %2309 = vmatpush1.msra.mxu0 %v136
    %2310 = vmatprep.subr.mxu0 0.0
    %2311 = vmatpush1.msra.mxu0 %v137
    %2312 = vmatprep.subr.mxu0 0.0
    %2313 = vmatpush1.msra.mxu0 %v138
    %2314 = vmatprep.subr.mxu0 0.0
    %2315 = vmatpush1.msra.mxu0 0.0
    %2316 = vmatprep.subr.mxu0 0.0
    %2317 = vmatpush1.msra.mxu0 0.0
    %2318 = vmatprep.subr.mxu0 0.0
    %2319 = vmatpush1.msra.mxu0 0.0
    %2320 = vmatprep.subr.mxu0 0.0
    %2321 = vmatpush1.msra.mxu0 0.0
    %2322 = vmatprep.subr.mxu0 0.0
    %2323 = vmatpush1.msra.mxu0 0.0
    %2324 = vmatprep.subr.mxu0 0.0
    %2325 = vmatpush1.msra.mxu0 0.0
    %2326 = vmatprep.subr.mxu0 0.0
    %2327 = vmatpush1.msra.mxu0 0.0
    %2328 = vmatprep.subr.mxu0 0.0
    %2329 = vmatpush1.msra.mxu0 0.0
    %2330 = vmatprep.subr.mxu0 0.0
    %2331 = vmatpush1.msra.mxu0 0.0
    %2332 = vmatprep.subr.mxu0 0.0
    %2333 = vmatpush1.msra.mxu0 0.0
    %2334 = vmatprep.subr.mxu0 0.0
    %2335 = vmatpush1.msra.mxu0 0.0
    %2336 = vmatprep.subr.mxu0 0.0
    %2337 = vmatpush1.msra.mxu0 0.0
    %2338 = vmatprep.subr.mxu0 0.0
    %2339 = vmatpush1.msra.mxu0 0.0
    %2340 = vmatprep.subr.mxu0 0.0
    %2341 = vmatpush1.msra.mxu0 0.0
    %2342 = vmatprep.subr.mxu0 0.0
    %2343 = vmatpush1.msra.mxu0 0.0
    %2344 = vmatprep.subr.mxu0 0.0
    %2345 = vmatpush1.msra.mxu0 0.0
    %2346 = vmatprep.subr.mxu0 0.0
    %2347 = vmatpush1.msra.mxu0 0.0
    %2348 = vmatprep.subr.mxu0 0.0
    %2349 = vmatpush1.msra.mxu0 0.0
    %2350 = vmatprep.subr.mxu0 0.0
    %2351 = vmatpush1.msra.mxu0 0.0
    %2352 = vmatprep.subr.mxu0 0.0
    %2353 = vmatpush1.msra.mxu0 0.0
    %2354 = vmatprep.subr.mxu0 0.0
    %2355 = vmatpush1.msra.mxu0 0.0
    %2356 = vmatprep.subr.mxu0 0.0
    %2357 = vmatpush1.msra.mxu0 0.0
    %2358 = vmatprep.subr.mxu0 0.0
    %2359 = vmatpush1.msra.mxu0 0.0
    %2360 = vmatprep.subr.mxu0 0.0
    %2361 = vmatpush1.msra.mxu0 0.0
    %2362 = vmatprep.subr.mxu0 0.0
    %2363 = vmatpush1.msra.mxu0 0.0
    %2364 = vmatprep.subr.mxu0 0.0
    %2365 = vmatpush1.msra.mxu0 0.0
    %2366 = vmatprep.subr.mxu0 0.0
    %2367 = vmatpush1.msra.mxu0 0.0
    %2368 = vmatprep.subr.mxu0 0.0
    %2369 = vmatpush1.msra.mxu0 0.0
    %2370 = vmatprep.mubr.f32.mxu0 0.0
    %2371 = vmatmul.mubr.f32.gmra.mrb[0].mxu0 %v2304
    %v2372 = vpop.f32.mrb[0].mxu0
    %v2373 = vadd.f32 0.0, %v2372
    %v2374 = vpop.f32.mrb[0].mxu0
    %2375 = vdwg.mxu0
    %v2377 = vrot.slane %v2373, 1
    %v2378 = vrot.slane %v2373, 2
    %v2381 = vadd.f32 %v127, %v2377
    %v2382 = vadd.f32 %v132, %v2378
    %v2383 = vxor.u32 %v2381, 2147483648
    %v2384 = vxor.u32 %v2382, 2147483648
    %v2385 = vmul.f32 %v2383, 1.442695
    %v2386 = vpow.pop %v2385
    %v2387 = vmul.f32 %v2384, 1.442695
    %v2388 = vpow.pop %v2387
    %v2389 = vadd.f32 %v2386, 1.0
    %v2390 = vadd.f32 %v2388, 1.0
    %v2391 = vrcp.pop %v2389
    %v2392 = vmul.f32 1.0, %v2391
    %v2393 = vrcp.pop %v2390
    %v2394 = vmul.f32 1.0, %v2393
    %2395 = vmatprep.subr.mxu0 0.0
    %2396 = vmatpush1.msra.mxu0 %v139
    %2397 = vmatprep.subr.mxu0 0.0
    %2398 = vmatpush1.msra.mxu0 %v140
    %2399 = vmatprep.subr.mxu0 0.0
    %2400 = vmatpush1.msra.mxu0 %v141
    %2401 = vmatprep.subr.mxu0 0.0
    %2402 = vmatpush1.msra.mxu0 %v142
    %2403 = vmatprep.subr.mxu0 0.0
    %2404 = vmatpush1.msra.mxu0 0.0
    %2405 = vmatprep.subr.mxu0 0.0
    %2406 = vmatpush1.msra.mxu0 0.0
    %2407 = vmatprep.subr.mxu0 0.0
    %2408 = vmatpush1.msra.mxu0 0.0
    %2409 = vmatprep.subr.mxu0 0.0
    %2410 = vmatpush1.msra.mxu0 0.0
    %2411 = vmatprep.subr.mxu0 0.0
    %2412 = vmatpush1.msra.mxu0 0.0
    %2413 = vmatprep.subr.mxu0 0.0
    %2414 = vmatpush1.msra.mxu0 0.0
    %2415 = vmatprep.subr.mxu0 0.0
    %2416 = vmatpush1.msra.mxu0 0.0
    %2417 = vmatprep.subr.mxu0 0.0
    %2418 = vmatpush1.msra.mxu0 0.0
    %2419 = vmatprep.subr.mxu0 0.0
    %2420 = vmatpush1.msra.mxu0 0.0
    %2421 = vmatprep.subr.mxu0 0.0
    %2422 = vmatpush1.msra.mxu0 0.0
    %2423 = vmatprep.subr.mxu0 0.0
    %2424 = vmatpush1.msra.mxu0 0.0
    %2425 = vmatprep.subr.mxu0 0.0
    %2426 = vmatpush1.msra.mxu0 0.0
    %2427 = vmatprep.subr.mxu0 0.0
    %2428 = vmatpush1.msra.mxu0 0.0
    %2429 = vmatprep.subr.mxu0 0.0
    %2430 = vmatpush1.msra.mxu0 0.0
    %2431 = vmatprep.subr.mxu0 0.0
    %2432 = vmatpush1.msra.mxu0 0.0
    %2433 = vmatprep.subr.mxu0 0.0
    %2434 = vmatpush1.msra.mxu0 0.0
    %2435 = vmatprep.subr.mxu0 0.0
    %2436 = vmatpush1.msra.mxu0 0.0
    %2437 = vmatprep.subr.mxu0 0.0
    %2438 = vmatpush1.msra.mxu0 0.0
    %2439 = vmatprep.subr.mxu0 0.0
    %2440 = vmatpush1.msra.mxu0 0.0
    %2441 = vmatprep.subr.mxu0 0.0
    %2442 = vmatpush1.msra.mxu0 0.0
    %2443 = vmatprep.subr.mxu0 0.0
    %2444 = vmatpush1.msra.mxu0 0.0
    %2445 = vmatprep.subr.mxu0 0.0
    %2446 = vmatpush1.msra.mxu0 0.0
    %2447 = vmatprep.subr.mxu0 0.0
    %2448 = vmatpush1.msra.mxu0 0.0
    %2449 = vmatprep.subr.mxu0 0.0
    %2450 = vmatpush1.msra.mxu0 0.0
    %2451 = vmatprep.subr.mxu0 0.0
    %2452 = vmatpush1.msra.mxu0 0.0
    %2453 = vmatprep.subr.mxu0 0.0
    %2454 = vmatpush1.msra.mxu0 0.0
    %2455 = vmatprep.subr.mxu0 0.0
    %2456 = vmatpush1.msra.mxu0 0.0
    %2457 = vmatprep.subr.mxu0 0.0
    %2458 = vmatpush1.msra.mxu0 0.0
    %2459 = vmatprep.mubr.f32.mxu0 0.0
    %2460 = vmatmul.mubr.f32.gmra.mrb[0].mxu0 %v2304
    %v2461 = vpop.f32.mrb[0].mxu0
    %v2462 = vadd.f32 0.0, %v2461
    %v2463 = vpop.f32.mrb[0].mxu0
    %2464 = vdwg.mxu0
    %v2466 = vrot.slane %v2462, 1
    %v2467 = vrot.slane %v2462, 2
    %2468 = vrot.lane.b32.xlu0 %v2466, 32
    %v2469 = vpop.permute.xlu0 %2468
    %2470 = vrot.lane.b32.xlu0 %v2467, 32
    %v2471 = vpop.permute.xlu0 %2470
    %v2474 = vadd.f32 %v127, %v2469
    %v2475 = vadd.f32 %v132, %v2471
    %v2476 = vxor.u32 %v2474, 2147483648
    %v2477 = vxor.u32 %v2475, 2147483648
    %v2478 = vmul.f32 %v2476, 1.442695
    %v2479 = vpow.pop %v2478
    %v2480 = vmul.f32 %v2477, 1.442695
    %v2481 = vpow.pop %v2480
    %v2482 = vadd.f32 %v2479, 1.0
    %v2483 = vadd.f32 %v2481, 1.0
    %v2484 = vrcp.pop %v2482
    %v2485 = vmul.f32 1.0, %v2484
    %v2486 = vrcp.pop %v2483
    %v2487 = vmul.f32 1.0, %v2486
    %2488 = vmatprep.subr.mxu0 0.0
    %2489 = vmatpush1.msra.mxu0 %v143
    %2490 = vmatprep.subr.mxu0 0.0
    %2491 = vmatpush1.msra.mxu0 %v144
    %2492 = vmatprep.subr.mxu0 0.0
    %2493 = vmatpush1.msra.mxu0 %v145
    %2494 = vmatprep.subr.mxu0 0.0
    %2495 = vmatpush1.msra.mxu0 %v146
    %2496 = vmatprep.subr.mxu0 0.0
    %2497 = vmatpush1.msra.mxu0 0.0
    %2498 = vmatprep.subr.mxu0 0.0
    %2499 = vmatpush1.msra.mxu0 0.0
    %2500 = vmatprep.subr.mxu0 0.0
    %2501 = vmatpush1.msra.mxu0 0.0
    %2502 = vmatprep.subr.mxu0 0.0
    %2503 = vmatpush1.msra.mxu0 0.0
    %2504 = vmatprep.subr.mxu0 0.0
    %2505 = vmatpush1.msra.mxu0 0.0
    %2506 = vmatprep.subr.mxu0 0.0
    %2507 = vmatpush1.msra.mxu0 0.0
    %2508 = vmatprep.subr.mxu0 0.0
    %2509 = vmatpush1.msra.mxu0 0.0
    %2510 = vmatprep.subr.mxu0 0.0
    %2511 = vmatpush1.msra.mxu0 0.0
    %2512 = vmatprep.subr.mxu0 0.0
    %2513 = vmatpush1.msra.mxu0 0.0
    %2514 = vmatprep.subr.mxu0 0.0
    %2515 = vmatpush1.msra.mxu0 0.0
    %2516 = vmatprep.subr.mxu0 0.0
    %2517 = vmatpush1.msra.mxu0 0.0
    %2518 = vmatprep.subr.mxu0 0.0
    %2519 = vmatpush1.msra.mxu0 0.0
    %2520 = vmatprep.subr.mxu0 0.0
    %2521 = vmatpush1.msra.mxu0 0.0
    %2522 = vmatprep.subr.mxu0 0.0
    %2523 = vmatpush1.msra.mxu0 0.0
    %2524 = vmatprep.subr.mxu0 0.0
    %2525 = vmatpush1.msra.mxu0 0.0
    %2526 = vmatprep.subr.mxu0 0.0
    %2527 = vmatpush1.msra.mxu0 0.0
    %2528 = vmatprep.subr.mxu0 0.0
    %2529 = vmatpush1.msra.mxu0 0.0
    %2530 = vmatprep.subr.mxu0 0.0
    %2531 = vmatpush1.msra.mxu0 0.0
    %2532 = vmatprep.subr.mxu0 0.0
    %2533 = vmatpush1.msra.mxu0 0.0
    %2534 = vmatprep.subr.mxu0 0.0
    %2535 = vmatpush1.msra.mxu0 0.0
    %2536 = vmatprep.subr.mxu0 0.0
    %2537 = vmatpush1.msra.mxu0 0.0
    %2538 = vmatprep.subr.mxu0 0.0
    %2539 = vmatpush1.msra.mxu0 0.0
    %2540 = vmatprep.subr.mxu0 0.0
    %2541 = vmatpush1.msra.mxu0 0.0
    %2542 = vmatprep.subr.mxu0 0.0
    %2543 = vmatpush1.msra.mxu0 0.0
    %2544 = vmatprep.subr.mxu0 0.0
    %2545 = vmatpush1.msra.mxu0 0.0
    %2546 = vmatprep.subr.mxu0 0.0
    %2547 = vmatpush1.msra.mxu0 0.0
    %2548 = vmatprep.subr.mxu0 0.0
    %2549 = vmatpush1.msra.mxu0 0.0
    %2550 = vmatprep.subr.mxu0 0.0
    %2551 = vmatpush1.msra.mxu0 0.0
    %2552 = vmatprep.mubr.f32.mxu0 0.0
    %2553 = vmatmul.mubr.f32.gmra.mrb[0].mxu0 %v2304
    %v2554 = vpop.f32.mrb[0].mxu0
    %v2555 = vadd.f32 %v334, %v2554
    %v2556 = vpop.f32.mrb[0].mxu0
    %2557 = vdwg.mxu0
    %v2559 = vrot.slane %v2555, 1
    %v2560 = vrot.slane %v2555, 2
    %v2563 = vmul.f32 %v2392, %v2559
    %v2564 = vmul.f32 %v2394, %v2560
    %2567 = vrot.lane.b32.xlu0 %v2563, 64
    %v2568 = vpop.permute.xlu0 %2567
    %2569 = vrot.lane.b32.xlu0 %v2564, 64
    %v2570 = vpop.permute.xlu0 %2569
    %v2573 = vadd.f32 %v127, %v2568
    %v2574 = vadd.f32 %v132, %v2570
    %v2575 = vtanh.pop %v2573
    %v2576 = vtanh.pop %v2574
    %v2577 = vsub.f32 1.0, %v2485
    %v2578 = vsub.f32 1.0, %v2487
    %2581 = vrot.lane.b32.xlu0 %v2575, 96
    %v2582 = vpop.permute.xlu0 %2581
    %2583 = vrot.lane.b32.xlu0 %v2576, 96
    %v2584 = vpop.permute.xlu0 %2583
    %v2587 = vmul.f32 %v2577, %v2582
    %v2588 = vmul.f32 %v2578, %v2584
    %v2589 = vrot.slane %v2286, 7
    %v2590 = vrot.slane %v2287, 7
    %v2593 = vmul.f32 %v2485, %v2589
    %v2594 = vmul.f32 %v2487, %v2590
    %v2595 = vadd.f32 %v2587, %v2593
    %v2596 = vadd.f32 %v2588, %v2594
    %2599 = vrot.lane.b32.xlu0 %v2595, 96
    %v2600 = vpop.permute.xlu0 %2599
    %2601 = vrot.lane.b32.xlu0 %v2596, 96
    %v2602 = vpop.permute.xlu0 %2601
    %vm2605 = vcmask 261127
    %2606 = vst.msk [vmem:[#allocation2] sm:$0x80] %vm2605, %v2600
    %2607 = vst.msk [vmem:[#allocation2 + $0x8] sm:$0x80] %vm2605, %v2602
    %v2608 = vld [vmem:[#allocation2] sm:$0xff]
    %v2609 = vld [vmem:[#allocation2 + $0x8] sm:$0xff]
    %v2610 = vld [vmem:[#allocation3 + $0x80] sm:$0xff]
    %v2611 = vld [vmem:[#allocation3 + $0x88] sm:$0xff]
    %v2612 = vld [vmem:[#allocation3 + $0x90] sm:$0xff]
    %v2613 = vld [vmem:[#allocation3 + $0x98] sm:$0xff]
    %v2614 = vld [vmem:[%s4 + $0x2] sm:$0x1]
    %v2615 = vlaneseq
    %v2616 = vshrl.u32 %v2615, 7
    %v2617 = vsub.s32 0, %v2616
    %v2618 = vrot.slane %v2614, %v2617
    %v2620 = vsel %vm53, %v2608, 0
    %v2623 = vsel %vm53, %v2609, 0
    %2625 = vmatprep.subr.mxu0 0.0
    %2626 = vmatpush1.msra.mxu0 %v2610
    %2627 = vmatprep.subr.mxu0 0.0
    %2628 = vmatpush1.msra.mxu0 %v2611
    %2629 = vmatprep.subr.mxu0 0.0
    %2630 = vmatpush1.msra.mxu0 %v2612
    %2631 = vmatprep.subr.mxu0 0.0
    %2632 = vmatpush1.msra.mxu0 %v2613
    %2633 = vmatprep.subr.mxu0 0.0
    %2634 = vmatpush1.msra.mxu0 0.0
    %2635 = vmatprep.subr.mxu0 0.0
    %2636 = vmatpush1.msra.mxu0 0.0
    %2637 = vmatprep.subr.mxu0 0.0
    %2638 = vmatpush1.msra.mxu0 0.0
    %2639 = vmatprep.subr.mxu0 0.0
    %2640 = vmatpush1.msra.mxu0 0.0
    %2641 = vmatprep.subr.mxu0 0.0
    %2642 = vmatpush1.msra.mxu0 0.0
    %2643 = vmatprep.subr.mxu0 0.0
    %2644 = vmatpush1.msra.mxu0 0.0
    %2645 = vmatprep.subr.mxu0 0.0
    %2646 = vmatpush1.msra.mxu0 0.0
    %2647 = vmatprep.subr.mxu0 0.0
    %2648 = vmatpush1.msra.mxu0 0.0
    %2649 = vmatprep.subr.mxu0 0.0
    %2650 = vmatpush1.msra.mxu0 0.0
    %2651 = vmatprep.subr.mxu0 0.0
    %2652 = vmatpush1.msra.mxu0 0.0
    %2653 = vmatprep.subr.mxu0 0.0
    %2654 = vmatpush1.msra.mxu0 0.0
    %2655 = vmatprep.subr.mxu0 0.0
    %2656 = vmatpush1.msra.mxu0 0.0
    %2657 = vmatprep.subr.mxu0 0.0
    %2658 = vmatpush1.msra.mxu0 0.0
    %2659 = vmatprep.subr.mxu0 0.0
    %2660 = vmatpush1.msra.mxu0 0.0
    %2661 = vmatprep.subr.mxu0 0.0
    %2662 = vmatpush1.msra.mxu0 0.0
    %2663 = vmatprep.subr.mxu0 0.0
    %2664 = vmatpush1.msra.mxu0 0.0
    %2665 = vmatprep.subr.mxu0 0.0
    %2666 = vmatpush1.msra.mxu0 0.0
    %2667 = vmatprep.subr.mxu0 0.0
    %2668 = vmatpush1.msra.mxu0 0.0
    %2669 = vmatprep.subr.mxu0 0.0
    %2670 = vmatpush1.msra.mxu0 0.0
    %2671 = vmatprep.subr.mxu0 0.0
    %2672 = vmatpush1.msra.mxu0 0.0
    %2673 = vmatprep.subr.mxu0 0.0
    %2674 = vmatpush1.msra.mxu0 0.0
    %2675 = vmatprep.subr.mxu0 0.0
    %2676 = vmatpush1.msra.mxu0 0.0
    %2677 = vmatprep.subr.mxu0 0.0
    %2678 = vmatpush1.msra.mxu0 0.0
    %2679 = vmatprep.subr.mxu0 0.0
    %2680 = vmatpush1.msra.mxu0 0.0
    %2681 = vmatprep.subr.mxu0 0.0
    %2682 = vmatpush1.msra.mxu0 0.0
    %2683 = vmatprep.subr.mxu0 0.0
    %2684 = vmatpush1.msra.mxu0 0.0
    %2685 = vmatprep.subr.mxu0 0.0
    %2686 = vmatpush1.msra.mxu0 0.0
    %2687 = vmatprep.subr.mxu0 0.0
    %2688 = vmatpush1.msra.mxu0 0.0
    %2689 = vmatprep.mubr.f32.mxu0 0.0
    %2690 = vmatmul.mubr.f32.gmra.mrb[0].mxu0 %v2620
    %v2691 = vpop.f32.mrb[0].mxu0
    %v2692 = vadd.f32 %v2618, %v2691
    %v2693 = vpop.f32.mrb[0].mxu0
    %2694 = vmatprep.mubr.f32.mxu0 0.0
    %2695 = vmatmul.mubr.f32.gmra.mrb[0].mxu0 %v2623
    %v2696 = vpop.f32.mrb[0].mxu0
    %v2697 = vadd.f32 %v2618, %v2696
    %v2698 = vpop.f32.mrb[0].mxu0
    %2699 = vdwg.mxu0
    %2702 = vrot.lane.b32.xlu0 %v2692, 96
    %v2703 = vpop.permute.xlu0 %2702
    %2704 = vrot.lane.b32.xlu0 %v2697, 96
    %v2705 = vpop.permute.xlu0 %2704
    %vm2706 = vcmask 64512
    %v2707 = vsel %vm2706, %v2692, 0
    %v2709 = vsel %vm2706, %v2697, 0
    %v2711 = vsel %vm2706, %v2703, 0
    %v2713 = vsel %vm2706, %v2705, 0
    %2715 = vmatprep.subr.mxu0 0.0
    %2716 = vmatpush1.xpose.msra.mxu0 %v2711
    %2717 = vmatprep.subr.mxu0 0.0
    %2718 = vmatpush1.xpose.msra.mxu0 %v2713
    %2719 = vmatprep.subr.mxu0 0.0
    %2720 = vmatpush1.xpose.msra.mxu0 0.0
    %2721 = vmatprep.subr.mxu0 0.0
    %2722 = vmatpush1.xpose.msra.mxu0 0.0
    %2723 = vmatprep.subr.mxu0 0.0
    %2724 = vmatpush1.xpose.msra.mxu0 0.0
    %2725 = vmatprep.subr.mxu0 0.0
    %2726 = vmatpush1.xpose.msra.mxu0 0.0
    %2727 = vmatprep.subr.mxu0 0.0
    %2728 = vmatpush1.xpose.msra.mxu0 0.0
    %2729 = vmatprep.subr.mxu0 0.0
    %2730 = vmatpush1.xpose.msra.mxu0 0.0
    %2731 = vmatprep.subr.mxu0 0.0
    %2732 = vmatpush1.xpose.msra.mxu0 0.0
    %2733 = vmatprep.subr.mxu0 0.0
    %2734 = vmatpush1.xpose.msra.mxu0 0.0
    %2735 = vmatprep.subr.mxu0 0.0
    %2736 = vmatpush1.xpose.msra.mxu0 0.0
    %2737 = vmatprep.subr.mxu0 0.0
    %2738 = vmatpush1.xpose.msra.mxu0 0.0
    %2739 = vmatprep.subr.mxu0 0.0
    %2740 = vmatpush1.xpose.msra.mxu0 0.0
    %2741 = vmatprep.subr.mxu0 0.0
    %2742 = vmatpush1.xpose.msra.mxu0 0.0
    %2743 = vmatprep.subr.mxu0 0.0
    %2744 = vmatpush1.xpose.msra.mxu0 0.0
    %2745 = vmatprep.subr.mxu0 0.0
    %2746 = vmatpush1.xpose.msra.mxu0 0.0
    %2747 = vmatprep.subr.mxu0 0.0
    %2748 = vmatpush1.xpose.msra.mxu0 0.0
    %2749 = vmatprep.subr.mxu0 0.0
    %2750 = vmatpush1.xpose.msra.mxu0 0.0
    %2751 = vmatprep.subr.mxu0 0.0
    %2752 = vmatpush1.xpose.msra.mxu0 0.0
    %2753 = vmatprep.subr.mxu0 0.0
    %2754 = vmatpush1.xpose.msra.mxu0 0.0
    %2755 = vmatprep.subr.mxu0 0.0
    %2756 = vmatpush1.xpose.msra.mxu0 0.0
    %2757 = vmatprep.subr.mxu0 0.0
    %2758 = vmatpush1.xpose.msra.mxu0 0.0
    %2759 = vmatprep.subr.mxu0 0.0
    %2760 = vmatpush1.xpose.msra.mxu0 0.0
    %2761 = vmatprep.subr.mxu0 0.0
    %2762 = vmatpush1.xpose.msra.mxu0 0.0
    %2763 = vmatprep.subr.mxu0 0.0
    %2764 = vmatpush1.xpose.msra.mxu0 0.0
    %2765 = vmatprep.subr.mxu0 0.0
    %2766 = vmatpush1.xpose.msra.mxu0 0.0
    %2767 = vmatprep.subr.mxu0 0.0
    %2768 = vmatpush1.xpose.msra.mxu0 0.0
    %2769 = vmatprep.subr.mxu0 0.0
    %2770 = vmatpush1.xpose.msra.mxu0 0.0
    %2771 = vmatprep.subr.mxu0 0.0
    %2772 = vmatpush1.xpose.msra.mxu0 0.0
    %2773 = vmatprep.subr.mxu0 0.0
    %2774 = vmatpush1.xpose.msra.mxu0 0.0
    %2775 = vmatprep.subr.mxu0 0.0
    %2776 = vmatpush1.xpose.msra.mxu0 0.0
    %2777 = vmatprep.subr.mxu0 0.0
    %2778 = vmatpush1.xpose.msra.mxu0 0.0
    %2779 = vmatprep.mubr.f32.mxu0 0.0
    %2780 = vmatmul.mubr.f32.gmra.mrb[0].mxu0 %v2707
    %v2781 = vpop.f32.mrb[0].mxu0
    %v2782 = vadd.f32 0.0, %v2781
    %v2783 = vpop.f32.mrb[0].mxu0
    %2784 = vmatprep.mubr.f32.mxu0 0.0
    %2785 = vmatmul.mubr.f32.gmra.mrb[0].mxu0 %v2709
    %v2786 = vpop.f32.mrb[0].mxu0
    %v2787 = vadd.f32 0.0, %v2786
    %v2788 = vpop.f32.mrb[0].mxu0
    %2789 = vdwg.mxu0
    %v2790 = vmul.f32 %v2782, 0.35355338
    %v2791 = vmul.f32 %v2787, 0.35355338
    %v2792 = vsel %vm38, -1e+09, %v2790
    %v2793 = vsel %vm39, -1e+09, %v2791
    %vm2794 = vcmask 130048
    %v2795 = vsel %vm2794, %v2792, -inf
    %2796 = vmax.xlane.f32.xlu0 %v2795
    %v2797 = vpop.xlane.xlu0 %2796
    %v2798 = vsel %vm2794, %v2793, -inf
    %2799 = vmax.xlane.f32.xlu0 %v2798
    %v2800 = vpop.xlane.xlu0 %2799
    %v2801 = vsub.f32 %v2792, %v2797
    %v2802 = vsub.f32 %v2793, %v2800
    %v2803 = vmul.f32 %v2801, 1.442695
    %v2804 = vpow.pop %v2803
    %v2805 = vmul.f32 %v2802, 1.442695
    %v2806 = vpow.pop %v2805
    %v2807 = vsel %vm2794, %v2804, 0.0
    %2808 = vadd.xlane.f32.xlu0 %v2807
    %v2809 = vpop.xlane.xlu0 %2808
    %v2810 = vsel %vm2794, %v2806, 0.0
    %2811 = vadd.xlane.f32.xlu0 %v2810
    %v2812 = vpop.xlane.xlu0 %2811
    %v2813 = vrcp.pop %v2809
    %v2814 = vrcp.pop %v2812
    %v2815 = vmul.f32 %v2804, %v2813
    %v2816 = vmul.f32 %v2806, %v2814
    %2817 = vrot.lane.b32.xlu0 %v2692, 64
    %v2818 = vpop.permute.xlu0 %2817
    %2819 = vrot.lane.b32.xlu0 %v2697, 64
    %v2820 = vpop.permute.xlu0 %2819
    %v2824 = vsel %vm2794, %v2815, 0
    %v2827 = vsel %vm2794, %v2816, 0
    %2829 = vmatprep.subr.mxu0 0.0
    %2830 = vmatpush1.msra.mxu0 %v2818
    %2831 = vmatprep.subr.mxu0 0.0
    %2832 = vmatpush1.msra.mxu0 %v2820
    %2833 = vmatprep.subr.mxu0 0.0
    %2834 = vmatpush1.msra.mxu0 0.0
    %2835 = vmatprep.subr.mxu0 0.0
    %2836 = vmatpush1.msra.mxu0 0.0
    %2837 = vmatprep.subr.mxu0 0.0
    %2838 = vmatpush1.msra.mxu0 0.0
    %2839 = vmatprep.subr.mxu0 0.0
    %2840 = vmatpush1.msra.mxu0 0.0
    %2841 = vmatprep.subr.mxu0 0.0
    %2842 = vmatpush1.msra.mxu0 0.0
    %2843 = vmatprep.subr.mxu0 0.0
    %2844 = vmatpush1.msra.mxu0 0.0
    %2845 = vmatprep.subr.mxu0 0.0
    %2846 = vmatpush1.msra.mxu0 0.0
    %2847 = vmatprep.subr.mxu0 0.0
    %2848 = vmatpush1.msra.mxu0 0.0
    %2849 = vmatprep.subr.mxu0 0.0
    %2850 = vmatpush1.msra.mxu0 0.0
    %2851 = vmatprep.subr.mxu0 0.0
    %2852 = vmatpush1.msra.mxu0 0.0
    %2853 = vmatprep.subr.mxu0 0.0
    %2854 = vmatpush1.msra.mxu0 0.0
    %2855 = vmatprep.subr.mxu0 0.0
    %2856 = vmatpush1.msra.mxu0 0.0
    %2857 = vmatprep.subr.mxu0 0.0
    %2858 = vmatpush1.msra.mxu0 0.0
    %2859 = vmatprep.subr.mxu0 0.0
    %2860 = vmatpush1.msra.mxu0 0.0
    %2861 = vmatprep.subr.mxu0 0.0
    %2862 = vmatpush1.msra.mxu0 0.0
    %2863 = vmatprep.subr.mxu0 0.0
    %2864 = vmatpush1.msra.mxu0 0.0
    %2865 = vmatprep.subr.mxu0 0.0
    %2866 = vmatpush1.msra.mxu0 0.0
    %2867 = vmatprep.subr.mxu0 0.0
    %2868 = vmatpush1.msra.mxu0 0.0
    %2869 = vmatprep.subr.mxu0 0.0
    %2870 = vmatpush1.msra.mxu0 0.0
    %2871 = vmatprep.subr.mxu0 0.0
    %2872 = vmatpush1.msra.mxu0 0.0
    %2873 = vmatprep.subr.mxu0 0.0
    %2874 = vmatpush1.msra.mxu0 0.0
    %2875 = vmatprep.subr.mxu0 0.0
    %2876 = vmatpush1.msra.mxu0 0.0
    %2877 = vmatprep.subr.mxu0 0.0
    %2878 = vmatpush1.msra.mxu0 0.0
    %2879 = vmatprep.subr.mxu0 0.0
    %2880 = vmatpush1.msra.mxu0 0.0
    %2881 = vmatprep.subr.mxu0 0.0
    %2882 = vmatpush1.msra.mxu0 0.0
    %2883 = vmatprep.subr.mxu0 0.0
    %2884 = vmatpush1.msra.mxu0 0.0
    %2885 = vmatprep.subr.mxu0 0.0
    %2886 = vmatpush1.msra.mxu0 0.0
    %2887 = vmatprep.subr.mxu0 0.0
    %2888 = vmatpush1.msra.mxu0 0.0
    %2889 = vmatprep.subr.mxu0 0.0
    %2890 = vmatpush1.msra.mxu0 0.0
    %2891 = vmatprep.subr.mxu0 0.0
    %2892 = vmatpush1.msra.mxu0 0.0
    %2893 = vmatprep.mubr.f32.mxu0 0.0
    %2894 = vmatmul.mubr.f32.gmra.mrb[0].mxu0 %v2824
    %v2895 = vpop.f32.mrb[0].mxu0
    %v2896 = vadd.f32 0.0, %v2895
    %v2897 = vpop.f32.mrb[0].mxu0
    %2898 = vmatprep.mubr.f32.mxu0 0.0
    %2899 = vmatmul.mubr.f32.gmra.mrb[0].mxu0 %v2827
    %v2900 = vpop.f32.mrb[0].mxu0
    %v2901 = vadd.f32 0.0, %v2900
    %v2902 = vpop.f32.mrb[0].mxu0
    %2903 = vdwg.mxu0
    %v2904 = vld [vmem:[#allocation3 + $0xa0] sm:$0xff]
    %2905 = vrot.lane.b32.xlu0 %v2692, 120
    %v2906 = vpop.permute.xlu0 %2905
    %2907 = vrot.lane.b32.xlu0 %v2697, 120
    %v2908 = vpop.permute.xlu0 %2907
    %2909 = vrot.lane.b32.xlu0 %v2692, 88
    %v2910 = vpop.permute.xlu0 %2909
    %2911 = vrot.lane.b32.xlu0 %v2697, 88
    %v2912 = vpop.permute.xlu0 %2911
    %v2913 = vsel %vm2706, %v2906, 0
    %v2915 = vsel %vm2706, %v2908, 0
    %v2917 = vsel %vm2706, %v2910, 0
    %v2919 = vsel %vm2706, %v2912, 0
    %2921 = vmatprep.subr.mxu0 0.0
    %2922 = vmatpush1.xpose.msra.mxu0 %v2917
    %2923 = vmatprep.subr.mxu0 0.0
    %2924 = vmatpush1.xpose.msra.mxu0 %v2919
    %2925 = vmatprep.subr.mxu0 0.0
    %2926 = vmatpush1.xpose.msra.mxu0 0.0
    %2927 = vmatprep.subr.mxu0 0.0
    %2928 = vmatpush1.xpose.msra.mxu0 0.0
    %2929 = vmatprep.subr.mxu0 0.0
    %2930 = vmatpush1.xpose.msra.mxu0 0.0
    %2931 = vmatprep.subr.mxu0 0.0
    %2932 = vmatpush1.xpose.msra.mxu0 0.0
    %2933 = vmatprep.subr.mxu0 0.0
    %2934 = vmatpush1.xpose.msra.mxu0 0.0
    %2935 = vmatprep.subr.mxu0 0.0
    %2936 = vmatpush1.xpose.msra.mxu0 0.0
    %2937 = vmatprep.subr.mxu0 0.0
    %2938 = vmatpush1.xpose.msra.mxu0 0.0
    %2939 = vmatprep.subr.mxu0 0.0
    %2940 = vmatpush1.xpose.msra.mxu0 0.0
    %2941 = vmatprep.subr.mxu0 0.0
    %2942 = vmatpush1.xpose.msra.mxu0 0.0
    %2943 = vmatprep.subr.mxu0 0.0
    %2944 = vmatpush1.xpose.msra.mxu0 0.0
    %2945 = vmatprep.subr.mxu0 0.0
    %2946 = vmatpush1.xpose.msra.mxu0 0.0
    %2947 = vmatprep.subr.mxu0 0.0
    %2948 = vmatpush1.xpose.msra.mxu0 0.0
    %2949 = vmatprep.subr.mxu0 0.0
    %2950 = vmatpush1.xpose.msra.mxu0 0.0
    %2951 = vmatprep.subr.mxu0 0.0
    %2952 = vmatpush1.xpose.msra.mxu0 0.0
    %2953 = vmatprep.subr.mxu0 0.0
    %2954 = vmatpush1.xpose.msra.mxu0 0.0
    %2955 = vmatprep.subr.mxu0 0.0
    %2956 = vmatpush1.xpose.msra.mxu0 0.0
    %2957 = vmatprep.subr.mxu0 0.0
    %2958 = vmatpush1.xpose.msra.mxu0 0.0
    %2959 = vmatprep.subr.mxu0 0.0
    %2960 = vmatpush1.xpose.msra.mxu0 0.0
    %2961 = vmatprep.subr.mxu0 0.0
    %2962 = vmatpush1.xpose.msra.mxu0 0.0
    %2963 = vmatprep.subr.mxu0 0.0
    %2964 = vmatpush1.xpose.msra.mxu0 0.0
    %2965 = vmatprep.subr.mxu0 0.0
    %2966 = vmatpush1.xpose.msra.mxu0 0.0
    %2967 = vmatprep.subr.mxu0 0.0
    %2968 = vmatpush1.xpose.msra.mxu0 0.0
    %2969 = vmatprep.subr.mxu0 0.0
    %2970 = vmatpush1.xpose.msra.mxu0 0.0
    %2971 = vmatprep.subr.mxu0 0.0
    %2972 = vmatpush1.xpose.msra.mxu0 0.0
    %2973 = vmatprep.subr.mxu0 0.0
    %2974 = vmatpush1.xpose.msra.mxu0 0.0
    %2975 = vmatprep.subr.mxu0 0.0
    %2976 = vmatpush1.xpose.msra.mxu0 0.0
    %2977 = vmatprep.subr.mxu0 0.0
    %2978 = vmatpush1.xpose.msra.mxu0 0.0
    %2979 = vmatprep.subr.mxu0 0.0
    %2980 = vmatpush1.xpose.msra.mxu0 0.0
    %2981 = vmatprep.subr.mxu0 0.0
    %2982 = vmatpush1.xpose.msra.mxu0 0.0
    %2983 = vmatprep.subr.mxu0 0.0
    %2984 = vmatpush1.xpose.msra.mxu0 0.0
    %2985 = vmatprep.mubr.f32.mxu0 0.0
    %2986 = vmatmul.mubr.f32.gmra.mrb[0].mxu0 %v2913
    %v2987 = vpop.f32.mrb[0].mxu0
    %v2988 = vadd.f32 0.0, %v2987
    %v2989 = vpop.f32.mrb[0].mxu0
    %2990 = vmatprep.mubr.f32.mxu0 0.0
    %2991 = vmatmul.mubr.f32.gmra.mrb[0].mxu0 %v2915
    %v2992 = vpop.f32.mrb[0].mxu0
    %v2993 = vadd.f32 0.0, %v2992
    %v2994 = vpop.f32.mrb[0].mxu0
    %2995 = vdwg.mxu0
    %v2996 = vmul.f32 %v2988, 0.35355338
    %v2997 = vmul.f32 %v2993, 0.35355338
    %v2998 = vsel %vm38, -1e+09, %v2996
    %v2999 = vsel %vm39, -1e+09, %v2997
    %v3000 = vsel %vm2794, %v2998, -inf
    %3001 = vmax.xlane.f32.xlu0 %v3000
    %v3002 = vpop.xlane.xlu0 %3001
    %v3003 = vsel %vm2794, %v2999, -inf
    %3004 = vmax.xlane.f32.xlu0 %v3003
    %v3005 = vpop.xlane.xlu0 %3004
    %v3006 = vsub.f32 %v2998, %v3002
    %v3007 = vsub.f32 %v2999, %v3005
    %v3008 = vmul.f32 %v3006, 1.442695
    %v3009 = vpow.pop %v3008
    %v3010 = vmul.f32 %v3007, 1.442695
    %v3011 = vpow.pop %v3010
    %v3012 = vsel %vm2794, %v3009, 0.0
    %3013 = vadd.xlane.f32.xlu0 %v3012
    %v3014 = vpop.xlane.xlu0 %3013
    %v3015 = vsel %vm2794, %v3011, 0.0
    %3016 = vadd.xlane.f32.xlu0 %v3015
    %v3017 = vpop.xlane.xlu0 %3016
    %v3018 = vrcp.pop %v3014
    %v3019 = vrcp.pop %v3017
    %v3020 = vmul.f32 %v3009, %v3018
    %v3021 = vmul.f32 %v3011, %v3019
    %3022 = vrot.lane.b32.xlu0 %v2692, 56
    %v3023 = vpop.permute.xlu0 %3022
    %3024 = vrot.lane.b32.xlu0 %v2697, 56
    %v3025 = vpop.permute.xlu0 %3024
    %v3029 = vsel %vm2794, %v3020, 0
    %v3032 = vsel %vm2794, %v3021, 0
    %3034 = vmatprep.subr.mxu0 0.0
    %3035 = vmatpush1.msra.mxu0 %v3023
    %3036 = vmatprep.subr.mxu0 0.0
    %3037 = vmatpush1.msra.mxu0 %v3025
    %3038 = vmatprep.subr.mxu0 0.0
    %3039 = vmatpush1.msra.mxu0 0.0
    %3040 = vmatprep.subr.mxu0 0.0
    %3041 = vmatpush1.msra.mxu0 0.0
    %3042 = vmatprep.subr.mxu0 0.0
    %3043 = vmatpush1.msra.mxu0 0.0
    %3044 = vmatprep.subr.mxu0 0.0
    %3045 = vmatpush1.msra.mxu0 0.0
    %3046 = vmatprep.subr.mxu0 0.0
    %3047 = vmatpush1.msra.mxu0 0.0
    %3048 = vmatprep.subr.mxu0 0.0
    %3049 = vmatpush1.msra.mxu0 0.0
    %3050 = vmatprep.subr.mxu0 0.0
    %3051 = vmatpush1.msra.mxu0 0.0
    %3052 = vmatprep.subr.mxu0 0.0
    %3053 = vmatpush1.msra.mxu0 0.0
    %3054 = vmatprep.subr.mxu0 0.0
    %3055 = vmatpush1.msra.mxu0 0.0
    %3056 = vmatprep.subr.mxu0 0.0
    %3057 = vmatpush1.msra.mxu0 0.0
    %3058 = vmatprep.subr.mxu0 0.0
    %3059 = vmatpush1.msra.mxu0 0.0
    %3060 = vmatprep.subr.mxu0 0.0
    %3061 = vmatpush1.msra.mxu0 0.0
    %3062 = vmatprep.subr.mxu0 0.0
    %3063 = vmatpush1.msra.mxu0 0.0
    %3064 = vmatprep.subr.mxu0 0.0
    %3065 = vmatpush1.msra.mxu0 0.0
    %3066 = vmatprep.subr.mxu0 0.0
    %3067 = vmatpush1.msra.mxu0 0.0
    %3068 = vmatprep.subr.mxu0 0.0
    %3069 = vmatpush1.msra.mxu0 0.0
    %3070 = vmatprep.subr.mxu0 0.0
    %3071 = vmatpush1.msra.mxu0 0.0
    %3072 = vmatprep.subr.mxu0 0.0
    %3073 = vmatpush1.msra.mxu0 0.0
    %3074 = vmatprep.subr.mxu0 0.0
    %3075 = vmatpush1.msra.mxu0 0.0
    %3076 = vmatprep.subr.mxu0 0.0
    %3077 = vmatpush1.msra.mxu0 0.0
    %3078 = vmatprep.subr.mxu0 0.0
    %3079 = vmatpush1.msra.mxu0 0.0
    %3080 = vmatprep.subr.mxu0 0.0
    %3081 = vmatpush1.msra.mxu0 0.0
    %3082 = vmatprep.subr.mxu0 0.0
    %3083 = vmatpush1.msra.mxu0 0.0
    %3084 = vmatprep.subr.mxu0 0.0
    %3085 = vmatpush1.msra.mxu0 0.0
    %3086 = vmatprep.subr.mxu0 0.0
    %3087 = vmatpush1.msra.mxu0 0.0
    %3088 = vmatprep.subr.mxu0 0.0
    %3089 = vmatpush1.msra.mxu0 0.0
    %3090 = vmatprep.subr.mxu0 0.0
    %3091 = vmatpush1.msra.mxu0 0.0
    %3092 = vmatprep.subr.mxu0 0.0
    %3093 = vmatpush1.msra.mxu0 0.0
    %3094 = vmatprep.subr.mxu0 0.0
    %3095 = vmatpush1.msra.mxu0 0.0
    %3096 = vmatprep.subr.mxu0 0.0
    %3097 = vmatpush1.msra.mxu0 0.0
    %3098 = vmatprep.mubr.f32.mxu0 0.0
    %3099 = vmatmul.mubr.f32.gmra.mrb[0].mxu0 %v3029
    %v3100 = vpop.f32.mrb[0].mxu0
    %v3101 = vadd.f32 0.0, %v3100
    %v3102 = vpop.f32.mrb[0].mxu0
    %3103 = vmatprep.mubr.f32.mxu0 0.0
    %3104 = vmatmul.mubr.f32.gmra.mrb[0].mxu0 %v3032
    %v3105 = vpop.f32.mrb[0].mxu0
    %v3106 = vadd.f32 0.0, %v3105
    %v3107 = vpop.f32.mrb[0].mxu0
    %3108 = vdwg.mxu0
    %v3109 = vld [vmem:[#allocation3 + $0xa8] sm:$0xff]
    %v3111 = vsel %vm2706, %v3101, 0
    %v3114 = vsel %vm2706, %v3106, 0
    %3116 = vmatprep.subr.mxu0 0.0
    %3117 = vmatpush1.msra.mxu0 %v3109
    %3118 = vmatprep.subr.mxu0 0.0
    %3119 = vmatpush1.msra.mxu0 0.0
    %3120 = vmatprep.subr.mxu0 0.0
    %3121 = vmatpush1.msra.mxu0 0.0
    %3122 = vmatprep.subr.mxu0 0.0
    %3123 = vmatpush1.msra.mxu0 0.0
    %3124 = vmatprep.subr.mxu0 0.0
    %3125 = vmatpush1.msra.mxu0 0.0
    %3126 = vmatprep.subr.mxu0 0.0
    %3127 = vmatpush1.msra.mxu0 0.0
    %3128 = vmatprep.subr.mxu0 0.0
    %3129 = vmatpush1.msra.mxu0 0.0
    %3130 = vmatprep.subr.mxu0 0.0
    %3131 = vmatpush1.msra.mxu0 0.0
    %3132 = vmatprep.subr.mxu0 0.0
    %3133 = vmatpush1.msra.mxu0 0.0
    %3134 = vmatprep.subr.mxu0 0.0
    %3135 = vmatpush1.msra.mxu0 0.0
    %3136 = vmatprep.subr.mxu0 0.0
    %3137 = vmatpush1.msra.mxu0 0.0
    %3138 = vmatprep.subr.mxu0 0.0
    %3139 = vmatpush1.msra.mxu0 0.0
    %3140 = vmatprep.subr.mxu0 0.0
    %3141 = vmatpush1.msra.mxu0 0.0
    %3142 = vmatprep.subr.mxu0 0.0
    %3143 = vmatpush1.msra.mxu0 0.0
    %3144 = vmatprep.subr.mxu0 0.0
    %3145 = vmatpush1.msra.mxu0 0.0
    %3146 = vmatprep.subr.mxu0 0.0
    %3147 = vmatpush1.msra.mxu0 0.0
    %3148 = vmatprep.subr.mxu0 0.0
    %3149 = vmatpush1.msra.mxu0 0.0
    %3150 = vmatprep.subr.mxu0 0.0
    %3151 = vmatpush1.msra.mxu0 0.0
    %3152 = vmatprep.subr.mxu0 0.0
    %3153 = vmatpush1.msra.mxu0 0.0
    %3154 = vmatprep.subr.mxu0 0.0
    %3155 = vmatpush1.msra.mxu0 0.0
    %3156 = vmatprep.subr.mxu0 0.0
    %3157 = vmatpush1.msra.mxu0 0.0
    %3158 = vmatprep.subr.mxu0 0.0
    %3159 = vmatpush1.msra.mxu0 0.0
    %3160 = vmatprep.subr.mxu0 0.0
    %3161 = vmatpush1.msra.mxu0 0.0
    %3162 = vmatprep.subr.mxu0 0.0
    %3163 = vmatpush1.msra.mxu0 0.0
    %3164 = vmatprep.subr.mxu0 0.0
    %3165 = vmatpush1.msra.mxu0 0.0
    %3166 = vmatprep.subr.mxu0 0.0
    %3167 = vmatpush1.msra.mxu0 0.0
    %3168 = vmatprep.subr.mxu0 0.0
    %3169 = vmatpush1.msra.mxu0 0.0
    %3170 = vmatprep.subr.mxu0 0.0
    %3171 = vmatpush1.msra.mxu0 0.0
    %3172 = vmatprep.subr.mxu0 0.0
    %3173 = vmatpush1.msra.mxu0 0.0
    %3174 = vmatprep.subr.mxu0 0.0
    %3175 = vmatpush1.msra.mxu0 0.0
    %3176 = vmatprep.subr.mxu0 0.0
    %3177 = vmatpush1.msra.mxu0 0.0
    %3178 = vmatprep.subr.mxu0 0.0
    %3179 = vmatpush1.msra.mxu0 0.0
    %3180 = vmatprep.mubr.f32.mxu0 0.0
    %3181 = vmatmul.mubr.f32.gmra.mrb[0].mxu0 %v3111
    %v3182 = vpop.f32.mrb[0].mxu0
    %v3183 = vadd.f32 0.0, %v3182
    %v3184 = vpop.f32.mrb[0].mxu0
    %3185 = vmatprep.mubr.f32.mxu0 0.0
    %3186 = vmatmul.mubr.f32.gmra.mrb[0].mxu0 %v3114
    %v3187 = vpop.f32.mrb[0].mxu0
    %v3188 = vadd.f32 0.0, %v3187
    %v3189 = vpop.f32.mrb[0].mxu0
    %3190 = vdwg.mxu0
    %v3192 = vsel %vm2706, %v2896, 0
    %v3195 = vsel %vm2706, %v2901, 0
    %3197 = vmatprep.subr.mxu0 0.0
    %3198 = vmatpush1.msra.mxu0 %v2904
    %3199 = vmatprep.subr.mxu0 0.0
    %3200 = vmatpush1.msra.mxu0 0.0
    %3201 = vmatprep.subr.mxu0 0.0
    %3202 = vmatpush1.msra.mxu0 0.0
    %3203 = vmatprep.subr.mxu0 0.0
    %3204 = vmatpush1.msra.mxu0 0.0
    %3205 = vmatprep.subr.mxu0 0.0
    %3206 = vmatpush1.msra.mxu0 0.0
    %3207 = vmatprep.subr.mxu0 0.0
    %3208 = vmatpush1.msra.mxu0 0.0
    %3209 = vmatprep.subr.mxu0 0.0
    %3210 = vmatpush1.msra.mxu0 0.0
    %3211 = vmatprep.subr.mxu0 0.0
    %3212 = vmatpush1.msra.mxu0 0.0
    %3213 = vmatprep.subr.mxu0 0.0
    %3214 = vmatpush1.msra.mxu0 0.0
    %3215 = vmatprep.subr.mxu0 0.0
    %3216 = vmatpush1.msra.mxu0 0.0
    %3217 = vmatprep.subr.mxu0 0.0
    %3218 = vmatpush1.msra.mxu0 0.0
    %3219 = vmatprep.subr.mxu0 0.0
    %3220 = vmatpush1.msra.mxu0 0.0
    %3221 = vmatprep.subr.mxu0 0.0
    %3222 = vmatpush1.msra.mxu0 0.0
    %3223 = vmatprep.subr.mxu0 0.0
    %3224 = vmatpush1.msra.mxu0 0.0
    %3225 = vmatprep.subr.mxu0 0.0
    %3226 = vmatpush1.msra.mxu0 0.0
    %3227 = vmatprep.subr.mxu0 0.0
    %3228 = vmatpush1.msra.mxu0 0.0
    %3229 = vmatprep.subr.mxu0 0.0
    %3230 = vmatpush1.msra.mxu0 0.0
    %3231 = vmatprep.subr.mxu0 0.0
    %3232 = vmatpush1.msra.mxu0 0.0
    %3233 = vmatprep.subr.mxu0 0.0
    %3234 = vmatpush1.msra.mxu0 0.0
    %3235 = vmatprep.subr.mxu0 0.0
    %3236 = vmatpush1.msra.mxu0 0.0
    %3237 = vmatprep.subr.mxu0 0.0
    %3238 = vmatpush1.msra.mxu0 0.0
    %3239 = vmatprep.subr.mxu0 0.0
    %3240 = vmatpush1.msra.mxu0 0.0
    %3241 = vmatprep.subr.mxu0 0.0
    %3242 = vmatpush1.msra.mxu0 0.0
    %3243 = vmatprep.subr.mxu0 0.0
    %3244 = vmatpush1.msra.mxu0 0.0
    %3245 = vmatprep.subr.mxu0 0.0
    %3246 = vmatpush1.msra.mxu0 0.0
    %3247 = vmatprep.subr.mxu0 0.0
    %3248 = vmatpush1.msra.mxu0 0.0
    %3249 = vmatprep.subr.mxu0 0.0
    %3250 = vmatpush1.msra.mxu0 0.0
    %3251 = vmatprep.subr.mxu0 0.0
    %3252 = vmatpush1.msra.mxu0 0.0
    %3253 = vmatprep.subr.mxu0 0.0
    %3254 = vmatpush1.msra.mxu0 0.0
    %3255 = vmatprep.subr.mxu0 0.0
    %3256 = vmatpush1.msra.mxu0 0.0
    %3257 = vmatprep.subr.mxu0 0.0
    %3258 = vmatpush1.msra.mxu0 0.0
    %3259 = vmatprep.subr.mxu0 0.0
    %3260 = vmatpush1.msra.mxu0 0.0
    %3261 = vmatprep.mubr.f32.mxu0 0.0
    %3262 = vmatmul.mubr.f32.gmra.mrb[0].mxu0 %v3192
    %v3263 = vpop.f32.mrb[0].mxu0
    %v3264 = vadd.f32 %v3183, %v3263
    %v3265 = vpop.f32.mrb[0].mxu0
    %3266 = vmatprep.mubr.f32.mxu0 0.0
    %3267 = vmatmul.mubr.f32.gmra.mrb[0].mxu0 %v3195
    %v3268 = vpop.f32.mrb[0].mxu0
    %v3269 = vadd.f32 %v3188, %v3268
    %v3270 = vpop.f32.mrb[0].mxu0
    %3271 = vdwg.mxu0
    %3272 = vrot.lane.b32.xlu0 %v2692, 112
    %v3273 = vpop.permute.xlu0 %3272
    %3274 = vrot.lane.b32.xlu0 %v2697, 112
    %v3275 = vpop.permute.xlu0 %3274
    %3276 = vrot.lane.b32.xlu0 %v2692, 80
    %v3277 = vpop.permute.xlu0 %3276
    %3278 = vrot.lane.b32.xlu0 %v2697, 80
    %v3279 = vpop.permute.xlu0 %3278
    %v3280 = vsel %vm2706, %v3273, 0
    %v3282 = vsel %vm2706, %v3275, 0
    %v3284 = vsel %vm2706, %v3277, 0
    %v3286 = vsel %vm2706, %v3279, 0
    %3288 = vmatprep.subr.mxu0 0.0
    %3289 = vmatpush1.xpose.msra.mxu0 %v3284
    %3290 = vmatprep.subr.mxu0 0.0
    %3291 = vmatpush1.xpose.msra.mxu0 %v3286
    %3292 = vmatprep.subr.mxu0 0.0
    %3293 = vmatpush1.xpose.msra.mxu0 0.0
    %3294 = vmatprep.subr.mxu0 0.0
    %3295 = vmatpush1.xpose.msra.mxu0 0.0
    %3296 = vmatprep.subr.mxu0 0.0
    %3297 = vmatpush1.xpose.msra.mxu0 0.0
    %3298 = vmatprep.subr.mxu0 0.0
    %3299 = vmatpush1.xpose.msra.mxu0 0.0
    %3300 = vmatprep.subr.mxu0 0.0
    %3301 = vmatpush1.xpose.msra.mxu0 0.0
    %3302 = vmatprep.subr.mxu0 0.0
    %3303 = vmatpush1.xpose.msra.mxu0 0.0
    %3304 = vmatprep.subr.mxu0 0.0
    %3305 = vmatpush1.xpose.msra.mxu0 0.0
    %3306 = vmatprep.subr.mxu0 0.0
    %3307 = vmatpush1.xpose.msra.mxu0 0.0
    %3308 = vmatprep.subr.mxu0 0.0
    %3309 = vmatpush1.xpose.msra.mxu0 0.0
    %3310 = vmatprep.subr.mxu0 0.0
    %3311 = vmatpush1.xpose.msra.mxu0 0.0
    %3312 = vmatprep.subr.mxu0 0.0
    %3313 = vmatpush1.xpose.msra.mxu0 0.0
    %3314 = vmatprep.subr.mxu0 0.0
    %3315 = vmatpush1.xpose.msra.mxu0 0.0
    %3316 = vmatprep.subr.mxu0 0.0
    %3317 = vmatpush1.xpose.msra.mxu0 0.0
    %3318 = vmatprep.subr.mxu0 0.0
    %3319 = vmatpush1.xpose.msra.mxu0 0.0
    %3320 = vmatprep.subr.mxu0 0.0
    %3321 = vmatpush1.xpose.msra.mxu0 0.0
    %3322 = vmatprep.subr.mxu0 0.0
    %3323 = vmatpush1.xpose.msra.mxu0 0.0
    %3324 = vmatprep.subr.mxu0 0.0
    %3325 = vmatpush1.xpose.msra.mxu0 0.0
    %3326 = vmatprep.subr.mxu0 0.0
    %3327 = vmatpush1.xpose.msra.mxu0 0.0
    %3328 = vmatprep.subr.mxu0 0.0
    %3329 = vmatpush1.xpose.msra.mxu0 0.0
    %3330 = vmatprep.subr.mxu0 0.0
    %3331 = vmatpush1.xpose.msra.mxu0 0.0
    %3332 = vmatprep.subr.mxu0 0.0
    %3333 = vmatpush1.xpose.msra.mxu0 0.0
    %3334 = vmatprep.subr.mxu0 0.0
    %3335 = vmatpush1.xpose.msra.mxu0 0.0
    %3336 = vmatprep.subr.mxu0 0.0
    %3337 = vmatpush1.xpose.msra.mxu0 0.0
    %3338 = vmatprep.subr.mxu0 0.0
    %3339 = vmatpush1.xpose.msra.mxu0 0.0
    %3340 = vmatprep.subr.mxu0 0.0
    %3341 = vmatpush1.xpose.msra.mxu0 0.0
    %3342 = vmatprep.subr.mxu0 0.0
    %3343 = vmatpush1.xpose.msra.mxu0 0.0
    %3344 = vmatprep.subr.mxu0 0.0
    %3345 = vmatpush1.xpose.msra.mxu0 0.0
    %3346 = vmatprep.subr.mxu0 0.0
    %3347 = vmatpush1.xpose.msra.mxu0 0.0
    %3348 = vmatprep.subr.mxu0 0.0
    %3349 = vmatpush1.xpose.msra.mxu0 0.0
    %3350 = vmatprep.subr.mxu0 0.0
    %3351 = vmatpush1.xpose.msra.mxu0 0.0
    %3352 = vmatprep.mubr.f32.mxu0 0.0
    %3353 = vmatmul.mubr.f32.gmra.mrb[0].mxu0 %v3280
    %v3354 = vpop.f32.mrb[0].mxu0
    %v3355 = vadd.f32 0.0, %v3354
    %v3356 = vpop.f32.mrb[0].mxu0
    %3357 = vmatprep.mubr.f32.mxu0 0.0
    %3358 = vmatmul.mubr.f32.gmra.mrb[0].mxu0 %v3282
    %v3359 = vpop.f32.mrb[0].mxu0
    %v3360 = vadd.f32 0.0, %v3359
    %v3361 = vpop.f32.mrb[0].mxu0
    %3362 = vdwg.mxu0
    %v3363 = vmul.f32 %v3355, 0.35355338
    %v3364 = vmul.f32 %v3360, 0.35355338
    %v3365 = vsel %vm38, -1e+09, %v3363
    %v3366 = vsel %vm39, -1e+09, %v3364
    %v3367 = vsel %vm2794, %v3365, -inf
    %3368 = vmax.xlane.f32.xlu0 %v3367
    %v3369 = vpop.xlane.xlu0 %3368
    %v3370 = vsel %vm2794, %v3366, -inf
    %3371 = vmax.xlane.f32.xlu0 %v3370
    %v3372 = vpop.xlane.xlu0 %3371
    %v3373 = vsub.f32 %v3365, %v3369
    %v3374 = vsub.f32 %v3366, %v3372
    %v3375 = vmul.f32 %v3373, 1.442695
    %v3376 = vpow.pop %v3375
    %v3377 = vmul.f32 %v3374, 1.442695
    %v3378 = vpow.pop %v3377
    %v3379 = vsel %vm2794, %v3376, 0.0
    %3380 = vadd.xlane.f32.xlu0 %v3379
    %v3381 = vpop.xlane.xlu0 %3380
    %v3382 = vsel %vm2794, %v3378, 0.0
    %3383 = vadd.xlane.f32.xlu0 %v3382
    %v3384 = vpop.xlane.xlu0 %3383
    %v3385 = vrcp.pop %v3381
    %v3386 = vrcp.pop %v3384
    %v3387 = vmul.f32 %v3376, %v3385
    %v3388 = vmul.f32 %v3378, %v3386
    %3389 = vrot.lane.b32.xlu0 %v2692, 48
    %v3390 = vpop.permute.xlu0 %3389
    %3391 = vrot.lane.b32.xlu0 %v2697, 48
    %v3392 = vpop.permute.xlu0 %3391
    %v3396 = vsel %vm2794, %v3387, 0
    %v3399 = vsel %vm2794, %v3388, 0
    %3401 = vmatprep.subr.mxu0 0.0
    %3402 = vmatpush1.msra.mxu0 %v3390
    %3403 = vmatprep.subr.mxu0 0.0
    %3404 = vmatpush1.msra.mxu0 %v3392
    %3405 = vmatprep.subr.mxu0 0.0
    %3406 = vmatpush1.msra.mxu0 0.0
    %3407 = vmatprep.subr.mxu0 0.0
    %3408 = vmatpush1.msra.mxu0 0.0
    %3409 = vmatprep.subr.mxu0 0.0
    %3410 = vmatpush1.msra.mxu0 0.0
    %3411 = vmatprep.subr.mxu0 0.0
    %3412 = vmatpush1.msra.mxu0 0.0
    %3413 = vmatprep.subr.mxu0 0.0
    %3414 = vmatpush1.msra.mxu0 0.0
    %3415 = vmatprep.subr.mxu0 0.0
    %3416 = vmatpush1.msra.mxu0 0.0
    %3417 = vmatprep.subr.mxu0 0.0
    %3418 = vmatpush1.msra.mxu0 0.0
    %3419 = vmatprep.subr.mxu0 0.0
    %3420 = vmatpush1.msra.mxu0 0.0
    %3421 = vmatprep.subr.mxu0 0.0
    %3422 = vmatpush1.msra.mxu0 0.0
    %3423 = vmatprep.subr.mxu0 0.0
    %3424 = vmatpush1.msra.mxu0 0.0
    %3425 = vmatprep.subr.mxu0 0.0
    %3426 = vmatpush1.msra.mxu0 0.0
    %3427 = vmatprep.subr.mxu0 0.0
    %3428 = vmatpush1.msra.mxu0 0.0
    %3429 = vmatprep.subr.mxu0 0.0
    %3430 = vmatpush1.msra.mxu0 0.0
    %3431 = vmatprep.subr.mxu0 0.0
    %3432 = vmatpush1.msra.mxu0 0.0
    %3433 = vmatprep.subr.mxu0 0.0
    %3434 = vmatpush1.msra.mxu0 0.0
    %3435 = vmatprep.subr.mxu0 0.0
    %3436 = vmatpush1.msra.mxu0 0.0
    %3437 = vmatprep.subr.mxu0 0.0
    %3438 = vmatpush1.msra.mxu0 0.0
    %3439 = vmatprep.subr.mxu0 0.0
    %3440 = vmatpush1.msra.mxu0 0.0
    %3441 = vmatprep.subr.mxu0 0.0
    %3442 = vmatpush1.msra.mxu0 0.0
    %3443 = vmatprep.subr.mxu0 0.0
    %3444 = vmatpush1.msra.mxu0 0.0
    %3445 = vmatprep.subr.mxu0 0.0
    %3446 = vmatpush1.msra.mxu0 0.0
    %3447 = vmatprep.subr.mxu0 0.0
    %3448 = vmatpush1.msra.mxu0 0.0
    %3449 = vmatprep.subr.mxu0 0.0
    %3450 = vmatpush1.msra.mxu0 0.0
    %3451 = vmatprep.subr.mxu0 0.0
    %3452 = vmatpush1.msra.mxu0 0.0
    %3453 = vmatprep.subr.mxu0 0.0
    %3454 = vmatpush1.msra.mxu0 0.0
    %3455 = vmatprep.subr.mxu0 0.0
    %3456 = vmatpush1.msra.mxu0 0.0
    %3457 = vmatprep.subr.mxu0 0.0
    %3458 = vmatpush1.msra.mxu0 0.0
    %3459 = vmatprep.subr.mxu0 0.0
    %3460 = vmatpush1.msra.mxu0 0.0
    %3461 = vmatprep.subr.mxu0 0.0
    %3462 = vmatpush1.msra.mxu0 0.0
    %3463 = vmatprep.subr.mxu0 0.0
    %3464 = vmatpush1.msra.mxu0 0.0
    %3465 = vmatprep.mubr.f32.mxu0 0.0
    %3466 = vmatmul.mubr.f32.gmra.mrb[0].mxu0 %v3396
    %v3467 = vpop.f32.mrb[0].mxu0
    %v3468 = vadd.f32 0.0, %v3467
    %v3469 = vpop.f32.mrb[0].mxu0
    %3470 = vmatprep.mubr.f32.mxu0 0.0
    %3471 = vmatmul.mubr.f32.gmra.mrb[0].mxu0 %v3399
    %v3472 = vpop.f32.mrb[0].mxu0
    %v3473 = vadd.f32 0.0, %v3472
    %v3474 = vpop.f32.mrb[0].mxu0
    %3475 = vdwg.mxu0
    %v3476 = vld [vmem:[#allocation3 + $0xb0] sm:$0xff]
    %v3478 = vsel %vm2706, %v3468, 0
    %v3481 = vsel %vm2706, %v3473, 0
    %3483 = vmatprep.subr.mxu0 0.0
    %3484 = vmatpush1.msra.mxu0 %v3476
    %3485 = vmatprep.subr.mxu0 0.0
    %3486 = vmatpush1.msra.mxu0 0.0
    %3487 = vmatprep.subr.mxu0 0.0
    %3488 = vmatpush1.msra.mxu0 0.0
    %3489 = vmatprep.subr.mxu0 0.0
    %3490 = vmatpush1.msra.mxu0 0.0
    %3491 = vmatprep.subr.mxu0 0.0
    %3492 = vmatpush1.msra.mxu0 0.0
    %3493 = vmatprep.subr.mxu0 0.0
    %3494 = vmatpush1.msra.mxu0 0.0
    %3495 = vmatprep.subr.mxu0 0.0
    %3496 = vmatpush1.msra.mxu0 0.0
    %3497 = vmatprep.subr.mxu0 0.0
    %3498 = vmatpush1.msra.mxu0 0.0
    %3499 = vmatprep.subr.mxu0 0.0
    %3500 = vmatpush1.msra.mxu0 0.0
    %3501 = vmatprep.subr.mxu0 0.0
    %3502 = vmatpush1.msra.mxu0 0.0
    %3503 = vmatprep.subr.mxu0 0.0
    %3504 = vmatpush1.msra.mxu0 0.0
    %3505 = vmatprep.subr.mxu0 0.0
    %3506 = vmatpush1.msra.mxu0 0.0
    %3507 = vmatprep.subr.mxu0 0.0
    %3508 = vmatpush1.msra.mxu0 0.0
    %3509 = vmatprep.subr.mxu0 0.0
    %3510 = vmatpush1.msra.mxu0 0.0
    %3511 = vmatprep.subr.mxu0 0.0
    %3512 = vmatpush1.msra.mxu0 0.0
    %3513 = vmatprep.subr.mxu0 0.0
    %3514 = vmatpush1.msra.mxu0 0.0
    %3515 = vmatprep.subr.mxu0 0.0
    %3516 = vmatpush1.msra.mxu0 0.0
    %3517 = vmatprep.subr.mxu0 0.0
    %3518 = vmatpush1.msra.mxu0 0.0
    %3519 = vmatprep.subr.mxu0 0.0
    %3520 = vmatpush1.msra.mxu0 0.0
    %3521 = vmatprep.subr.mxu0 0.0
    %3522 = vmatpush1.msra.mxu0 0.0
    %3523 = vmatprep.subr.mxu0 0.0
    %3524 = vmatpush1.msra.mxu0 0.0
    %3525 = vmatprep.subr.mxu0 0.0
    %3526 = vmatpush1.msra.mxu0 0.0
    %3527 = vmatprep.subr.mxu0 0.0
    %3528 = vmatpush1.msra.mxu0 0.0
    %3529 = vmatprep.subr.mxu0 0.0
    %3530 = vmatpush1.msra.mxu0 0.0
    %3531 = vmatprep.subr.mxu0 0.0
    %3532 = vmatpush1.msra.mxu0 0.0
    %3533 = vmatprep.subr.mxu0 0.0
    %3534 = vmatpush1.msra.mxu0 0.0
    %3535 = vmatprep.subr.mxu0 0.0
    %3536 = vmatpush1.msra.mxu0 0.0
    %3537 = vmatprep.subr.mxu0 0.0
    %3538 = vmatpush1.msra.mxu0 0.0
    %3539 = vmatprep.subr.mxu0 0.0
    %3540 = vmatpush1.msra.mxu0 0.0
    %3541 = vmatprep.subr.mxu0 0.0
    %3542 = vmatpush1.msra.mxu0 0.0
    %3543 = vmatprep.subr.mxu0 0.0
    %3544 = vmatpush1.msra.mxu0 0.0
    %3545 = vmatprep.subr.mxu0 0.0
    %3546 = vmatpush1.msra.mxu0 0.0
    %3547 = vmatprep.mubr.f32.mxu0 0.0
    %3548 = vmatmul.mubr.f32.gmra.mrb[0].mxu0 %v3478
    %v3549 = vpop.f32.mrb[0].mxu0
    %v3550 = vadd.f32 0.0, %v3549
    %v3551 = vpop.f32.mrb[0].mxu0
    %3552 = vmatprep.mubr.f32.mxu0 0.0
    %3553 = vmatmul.mubr.f32.gmra.mrb[0].mxu0 %v3481
    %v3554 = vpop.f32.mrb[0].mxu0
    %v3555 = vadd.f32 0.0, %v3554
    %v3556 = vpop.f32.mrb[0].mxu0
    %3557 = vdwg.mxu0
    %v3558 = vadd.f32 %v3264, %v3550
    %v3559 = vadd.f32 %v3269, %v3555
    %3560 = vrot.lane.b32.xlu0 %v2692, 104
    %v3561 = vpop.permute.xlu0 %3560
    %3562 = vrot.lane.b32.xlu0 %v2697, 104
    %v3563 = vpop.permute.xlu0 %3562
    %3564 = vrot.lane.b32.xlu0 %v2692, 72
    %v3565 = vpop.permute.xlu0 %3564
    %3566 = vrot.lane.b32.xlu0 %v2697, 72
    %v3567 = vpop.permute.xlu0 %3566
    %v3568 = vsel %vm2706, %v3561, 0
    %v3570 = vsel %vm2706, %v3563, 0
    %v3572 = vsel %vm2706, %v3565, 0
    %v3574 = vsel %vm2706, %v3567, 0
    %3576 = vmatprep.subr.mxu0 0.0
    %3577 = vmatpush1.xpose.msra.mxu0 %v3572
    %3578 = vmatprep.subr.mxu0 0.0
    %3579 = vmatpush1.xpose.msra.mxu0 %v3574
    %3580 = vmatprep.subr.mxu0 0.0
    %3581 = vmatpush1.xpose.msra.mxu0 0.0
    %3582 = vmatprep.subr.mxu0 0.0
    %3583 = vmatpush1.xpose.msra.mxu0 0.0
    %3584 = vmatprep.subr.mxu0 0.0
    %3585 = vmatpush1.xpose.msra.mxu0 0.0
    %3586 = vmatprep.subr.mxu0 0.0
    %3587 = vmatpush1.xpose.msra.mxu0 0.0
    %3588 = vmatprep.subr.mxu0 0.0
    %3589 = vmatpush1.xpose.msra.mxu0 0.0
    %3590 = vmatprep.subr.mxu0 0.0
    %3591 = vmatpush1.xpose.msra.mxu0 0.0
    %3592 = vmatprep.subr.mxu0 0.0
    %3593 = vmatpush1.xpose.msra.mxu0 0.0
    %3594 = vmatprep.subr.mxu0 0.0
    %3595 = vmatpush1.xpose.msra.mxu0 0.0
    %3596 = vmatprep.subr.mxu0 0.0
    %3597 = vmatpush1.xpose.msra.mxu0 0.0
    %3598 = vmatprep.subr.mxu0 0.0
    %3599 = vmatpush1.xpose.msra.mxu0 0.0
    %3600 = vmatprep.subr.mxu0 0.0
    %3601 = vmatpush1.xpose.msra.mxu0 0.0
    %3602 = vmatprep.subr.mxu0 0.0
    %3603 = vmatpush1.xpose.msra.mxu0 0.0
    %3604 = vmatprep.subr.mxu0 0.0
    %3605 = vmatpush1.xpose.msra.mxu0 0.0
    %3606 = vmatprep.subr.mxu0 0.0
    %3607 = vmatpush1.xpose.msra.mxu0 0.0
    %3608 = vmatprep.subr.mxu0 0.0
    %3609 = vmatpush1.xpose.msra.mxu0 0.0
    %3610 = vmatprep.subr.mxu0 0.0
    %3611 = vmatpush1.xpose.msra.mxu0 0.0
    %3612 = vmatprep.subr.mxu0 0.0
    %3613 = vmatpush1.xpose.msra.mxu0 0.0
    %3614 = vmatprep.subr.mxu0 0.0
    %3615 = vmatpush1.xpose.msra.mxu0 0.0
    %3616 = vmatprep.subr.mxu0 0.0
    %3617 = vmatpush1.xpose.msra.mxu0 0.0
    %3618 = vmatprep.subr.mxu0 0.0
    %3619 = vmatpush1.xpose.msra.mxu0 0.0
    %3620 = vmatprep.subr.mxu0 0.0
    %3621 = vmatpush1.xpose.msra.mxu0 0.0
    %3622 = vmatprep.subr.mxu0 0.0
    %3623 = vmatpush1.xpose.msra.mxu0 0.0
    %3624 = vmatprep.subr.mxu0 0.0
    %3625 = vmatpush1.xpose.msra.mxu0 0.0
    %3626 = vmatprep.subr.mxu0 0.0
    %3627 = vmatpush1.xpose.msra.mxu0 0.0
    %3628 = vmatprep.subr.mxu0 0.0
    %3629 = vmatpush1.xpose.msra.mxu0 0.0
    %3630 = vmatprep.subr.mxu0 0.0
    %3631 = vmatpush1.xpose.msra.mxu0 0.0
    %3632 = vmatprep.subr.mxu0 0.0
    %3633 = vmatpush1.xpose.msra.mxu0 0.0
    %3634 = vmatprep.subr.mxu0 0.0
    %3635 = vmatpush1.xpose.msra.mxu0 0.0
    %3636 = vmatprep.subr.mxu0 0.0
    %3637 = vmatpush1.xpose.msra.mxu0 0.0
    %3638 = vmatprep.subr.mxu0 0.0
    %3639 = vmatpush1.xpose.msra.mxu0 0.0
    %3640 = vmatprep.mubr.f32.mxu0 0.0
    %3641 = vmatmul.mubr.f32.gmra.mrb[0].mxu0 %v3568
    %v3642 = vpop.f32.mrb[0].mxu0
    %v3643 = vadd.f32 0.0, %v3642
    %v3644 = vpop.f32.mrb[0].mxu0
    %3645 = vmatprep.mubr.f32.mxu0 0.0
    %3646 = vmatmul.mubr.f32.gmra.mrb[0].mxu0 %v3570
    %v3647 = vpop.f32.mrb[0].mxu0
    %v3648 = vadd.f32 0.0, %v3647
    %v3649 = vpop.f32.mrb[0].mxu0
    %3650 = vdwg.mxu0
    %v3651 = vmul.f32 %v3643, 0.35355338
    %v3652 = vmul.f32 %v3648, 0.35355338
    %v3653 = vsel %vm38, -1e+09, %v3651
    %v3654 = vsel %vm39, -1e+09, %v3652
    %v3655 = vsel %vm2794, %v3653, -inf
    %3656 = vmax.xlane.f32.xlu0 %v3655
    %v3657 = vpop.xlane.xlu0 %3656
    %v3658 = vsel %vm2794, %v3654, -inf
    %3659 = vmax.xlane.f32.xlu0 %v3658
    %v3660 = vpop.xlane.xlu0 %3659
    %v3661 = vsub.f32 %v3653, %v3657
    %v3662 = vsub.f32 %v3654, %v3660
    %v3663 = vmul.f32 %v3661, 1.442695
    %v3664 = vpow.pop %v3663
    %v3665 = vmul.f32 %v3662, 1.442695
    %v3666 = vpow.pop %v3665
    %v3667 = vsel %vm2794, %v3664, 0.0
    %3668 = vadd.xlane.f32.xlu0 %v3667
    %v3669 = vpop.xlane.xlu0 %3668
    %v3670 = vsel %vm2794, %v3666, 0.0
    %3671 = vadd.xlane.f32.xlu0 %v3670
    %v3672 = vpop.xlane.xlu0 %3671
    %v3673 = vrcp.pop %v3669
    %v3674 = vrcp.pop %v3672
    %v3675 = vmul.f32 %v3664, %v3673
    %v3676 = vmul.f32 %v3666, %v3674
    %3677 = vrot.lane.b32.xlu0 %v2692, 40
    %v3678 = vpop.permute.xlu0 %3677
    %3679 = vrot.lane.b32.xlu0 %v2697, 40
    %v3680 = vpop.permute.xlu0 %3679
    %v3684 = vsel %vm2794, %v3675, 0
    %v3687 = vsel %vm2794, %v3676, 0
    %3689 = vmatprep.subr.mxu0 0.0
    %3690 = vmatpush1.msra.mxu0 %v3678
    %3691 = vmatprep.subr.mxu0 0.0
    %3692 = vmatpush1.msra.mxu0 %v3680
    %3693 = vmatprep.subr.mxu0 0.0
    %3694 = vmatpush1.msra.mxu0 0.0
    %3695 = vmatprep.subr.mxu0 0.0
    %3696 = vmatpush1.msra.mxu0 0.0
    %3697 = vmatprep.subr.mxu0 0.0
    %3698 = vmatpush1.msra.mxu0 0.0
    %3699 = vmatprep.subr.mxu0 0.0
    %3700 = vmatpush1.msra.mxu0 0.0
    %3701 = vmatprep.subr.mxu0 0.0
    %3702 = vmatpush1.msra.mxu0 0.0
    %3703 = vmatprep.subr.mxu0 0.0
    %3704 = vmatpush1.msra.mxu0 0.0
    %3705 = vmatprep.subr.mxu0 0.0
    %3706 = vmatpush1.msra.mxu0 0.0
    %3707 = vmatprep.subr.mxu0 0.0
    %3708 = vmatpush1.msra.mxu0 0.0
    %3709 = vmatprep.subr.mxu0 0.0
    %3710 = vmatpush1.msra.mxu0 0.0
    %3711 = vmatprep.subr.mxu0 0.0
    %3712 = vmatpush1.msra.mxu0 0.0
    %3713 = vmatprep.subr.mxu0 0.0
    %3714 = vmatpush1.msra.mxu0 0.0
    %3715 = vmatprep.subr.mxu0 0.0
    %3716 = vmatpush1.msra.mxu0 0.0
    %3717 = vmatprep.subr.mxu0 0.0
    %3718 = vmatpush1.msra.mxu0 0.0
    %3719 = vmatprep.subr.mxu0 0.0
    %3720 = vmatpush1.msra.mxu0 0.0
    %3721 = vmatprep.subr.mxu0 0.0
    %3722 = vmatpush1.msra.mxu0 0.0
    %3723 = vmatprep.subr.mxu0 0.0
    %3724 = vmatpush1.msra.mxu0 0.0
    %3725 = vmatprep.subr.mxu0 0.0
    %3726 = vmatpush1.msra.mxu0 0.0
    %3727 = vmatprep.subr.mxu0 0.0
    %3728 = vmatpush1.msra.mxu0 0.0
    %3729 = vmatprep.subr.mxu0 0.0
    %3730 = vmatpush1.msra.mxu0 0.0
    %3731 = vmatprep.subr.mxu0 0.0
    %3732 = vmatpush1.msra.mxu0 0.0
    %3733 = vmatprep.subr.mxu0 0.0
    %3734 = vmatpush1.msra.mxu0 0.0
    %3735 = vmatprep.subr.mxu0 0.0
    %3736 = vmatpush1.msra.mxu0 0.0
    %3737 = vmatprep.subr.mxu0 0.0
    %3738 = vmatpush1.msra.mxu0 0.0
    %3739 = vmatprep.subr.mxu0 0.0
    %3740 = vmatpush1.msra.mxu0 0.0
    %3741 = vmatprep.subr.mxu0 0.0
    %3742 = vmatpush1.msra.mxu0 0.0
    %3743 = vmatprep.subr.mxu0 0.0
    %3744 = vmatpush1.msra.mxu0 0.0
    %3745 = vmatprep.subr.mxu0 0.0
    %3746 = vmatpush1.msra.mxu0 0.0
    %3747 = vmatprep.subr.mxu0 0.0
    %3748 = vmatpush1.msra.mxu0 0.0
    %3749 = vmatprep.subr.mxu0 0.0
    %3750 = vmatpush1.msra.mxu0 0.0
    %3751 = vmatprep.subr.mxu0 0.0
    %3752 = vmatpush1.msra.mxu0 0.0
    %3753 = vmatprep.mubr.f32.mxu0 0.0
    %3754 = vmatmul.mubr.f32.gmra.mrb[0].mxu0 %v3684
    %v3755 = vpop.f32.mrb[0].mxu0
    %v3756 = vadd.f32 0.0, %v3755
    %v3757 = vpop.f32.mrb[0].mxu0
    %3758 = vmatprep.mubr.f32.mxu0 0.0
    %3759 = vmatmul.mubr.f32.gmra.mrb[0].mxu0 %v3687
    %v3760 = vpop.f32.mrb[0].mxu0
    %v3761 = vadd.f32 0.0, %v3760
    %v3762 = vpop.f32.mrb[0].mxu0
    %3763 = vdwg.mxu0
    %v3764 = vld [vmem:[#allocation3 + $0xb8] sm:$0xff]
    %v3766 = vsel %vm2706, %v3756, 0
    %v3769 = vsel %vm2706, %v3761, 0
    %3771 = vmatprep.subr.mxu0 0.0
    %3772 = vmatpush1.msra.mxu0 %v3764
    %3773 = vmatprep.subr.mxu0 0.0
    %3774 = vmatpush1.msra.mxu0 0.0
    %3775 = vmatprep.subr.mxu0 0.0
    %3776 = vmatpush1.msra.mxu0 0.0
    %3777 = vmatprep.subr.mxu0 0.0
    %3778 = vmatpush1.msra.mxu0 0.0
    %3779 = vmatprep.subr.mxu0 0.0
    %3780 = vmatpush1.msra.mxu0 0.0
    %3781 = vmatprep.subr.mxu0 0.0
    %3782 = vmatpush1.msra.mxu0 0.0
    %3783 = vmatprep.subr.mxu0 0.0
    %3784 = vmatpush1.msra.mxu0 0.0
    %3785 = vmatprep.subr.mxu0 0.0
    %3786 = vmatpush1.msra.mxu0 0.0
    %3787 = vmatprep.subr.mxu0 0.0
    %3788 = vmatpush1.msra.mxu0 0.0
    %3789 = vmatprep.subr.mxu0 0.0
    %3790 = vmatpush1.msra.mxu0 0.0
    %3791 = vmatprep.subr.mxu0 0.0
    %3792 = vmatpush1.msra.mxu0 0.0
    %3793 = vmatprep.subr.mxu0 0.0
    %3794 = vmatpush1.msra.mxu0 0.0
    %3795 = vmatprep.subr.mxu0 0.0
    %3796 = vmatpush1.msra.mxu0 0.0
    %3797 = vmatprep.subr.mxu0 0.0
    %3798 = vmatpush1.msra.mxu0 0.0
    %3799 = vmatprep.subr.mxu0 0.0
    %3800 = vmatpush1.msra.mxu0 0.0
    %3801 = vmatprep.subr.mxu0 0.0
    %3802 = vmatpush1.msra.mxu0 0.0
    %3803 = vmatprep.subr.mxu0 0.0
    %3804 = vmatpush1.msra.mxu0 0.0
    %3805 = vmatprep.subr.mxu0 0.0
    %3806 = vmatpush1.msra.mxu0 0.0
    %3807 = vmatprep.subr.mxu0 0.0
    %3808 = vmatpush1.msra.mxu0 0.0
    %3809 = vmatprep.subr.mxu0 0.0
    %3810 = vmatpush1.msra.mxu0 0.0
    %3811 = vmatprep.subr.mxu0 0.0
    %3812 = vmatpush1.msra.mxu0 0.0
    %3813 = vmatprep.subr.mxu0 0.0
    %3814 = vmatpush1.msra.mxu0 0.0
    %3815 = vmatprep.subr.mxu0 0.0
    %3816 = vmatpush1.msra.mxu0 0.0
    %3817 = vmatprep.subr.mxu0 0.0
    %3818 = vmatpush1.msra.mxu0 0.0
    %3819 = vmatprep.subr.mxu0 0.0
    %3820 = vmatpush1.msra.mxu0 0.0
    %3821 = vmatprep.subr.mxu0 0.0
    %3822 = vmatpush1.msra.mxu0 0.0
    %3823 = vmatprep.subr.mxu0 0.0
    %3824 = vmatpush1.msra.mxu0 0.0
    %3825 = vmatprep.subr.mxu0 0.0
    %3826 = vmatpush1.msra.mxu0 0.0
    %3827 = vmatprep.subr.mxu0 0.0
    %3828 = vmatpush1.msra.mxu0 0.0
    %3829 = vmatprep.subr.mxu0 0.0
    %3830 = vmatpush1.msra.mxu0 0.0
    %3831 = vmatprep.subr.mxu0 0.0
    %3832 = vmatpush1.msra.mxu0 0.0
    %3833 = vmatprep.subr.mxu0 0.0
    %3834 = vmatpush1.msra.mxu0 0.0
    %3835 = vmatprep.mubr.f32.mxu0 0.0
    %3836 = vmatmul.mubr.f32.gmra.mrb[0].mxu0 %v3766
    %v3837 = vpop.f32.mrb[0].mxu0
    %v3838 = vadd.f32 0.0, %v3837
    %v3839 = vpop.f32.mrb[0].mxu0
    %3840 = vmatprep.mubr.f32.mxu0 0.0
    %3841 = vmatmul.mubr.f32.gmra.mrb[0].mxu0 %v3769
    %v3842 = vpop.f32.mrb[0].mxu0
    %v3843 = vadd.f32 0.0, %v3842
    %v3844 = vpop.f32.mrb[0].mxu0
    %3845 = vdwg.mxu0
    %v3846 = vadd.f32 %v3558, %v3838
    %v3847 = vadd.f32 %v3559, %v3843
    %v3848 = vld [vmem:[%s4 + $0x3] sm:$0x1]
    %v3849 = vlaneseq
    %v3850 = vshrl.u32 %v3849, 7
    %v3851 = vsub.s32 0, %v3850
    %v3852 = vrot.slane %v3848, %v3851
    %v3853 = vadd.f32 %v3846, %v3852
    %v3854 = vadd.f32 %v3847, %v3852
    %v3855 = vadd.f32 %v2608, %v3853
    %v3856 = vadd.f32 %v2609, %v3854
    %v3857 = vld [vmem:[%s4 + $0x6] sm:$0x1]
    %v3858 = vld [vmem:[%s4 + $0x7] sm:$0x1]
    %v3859 = vsel %vm53, %v3855, 0.0
    %3860 = vadd.xlane.f32.xlu0 %v3859
    %v3861 = vpop.xlane.xlu0 %3860
    %v3862 = vsel %vm53, %v3856, 0.0
    %3863 = vadd.xlane.f32.xlu0 %v3862
    %v3864 = vpop.xlane.xlu0 %3863
    %v3865 = vrcp.pop 32.0
    %v3866 = vmul.f32 %v3861, %v3865
    %v3867 = vmul.f32 %v3864, %v3865
    %v3868 = vsub.f32 %v3855, %v3866
    %v3869 = vsub.f32 %v3856, %v3867
    %v3870 = vmul.f32 %v3868, %v3868
    %v3871 = vmul.f32 %v3869, %v3869
    %v3872 = vsel %vm53, %v3870, 0.0
    %3873 = vadd.xlane.f32.xlu0 %v3872
    %v3874 = vpop.xlane.xlu0 %3873
    %v3875 = vsel %vm53, %v3871, 0.0
    %3876 = vadd.xlane.f32.xlu0 %v3875
    %v3877 = vpop.xlane.xlu0 %3876
    %v3878 = vrcp.pop 31.0
    %v3879 = vmul.f32 %v3874, %v3878
    %v3880 = vmul.f32 %v3877, %v3878
    %v3881 = vlaneseq
    %v3882 = vshrl.u32 %v3881, 7
    %v3883 = vsub.s32 0, %v3882
    %v3884 = vrot.slane %v3857, %v3883
    %v3885 = vmul.f32 %v3884, %v3868
    %v3886 = vmul.f32 %v3884, %v3869
    %v3887 = vrsqrt.pop %v3879
    %v3888 = vmul.f32 %v3879, %v3887
    %vm3889 = vcmp.eq.f32.partialorder %v3879, inf
    %v3890 = vsel %vm3889, %v3879, %v3888
    %vm3891 = vcmp.eq.f32.partialorder %v3879, 0.0
    %v3892 = vand.u32 %v3879, 2147483648
    %v3893 = vsel %vm3891, %v3892, %v3890
    %v3894 = vrsqrt.pop %v3880
    %v3895 = vmul.f32 %v3880, %v3894
    %vm3896 = vcmp.eq.f32.partialorder %v3880, inf
    %v3897 = vsel %vm3896, %v3880, %v3895
    %vm3898 = vcmp.eq.f32.partialorder %v3880, 0.0
    %v3899 = vand.u32 %v3880, 2147483648
    %v3900 = vsel %vm3898, %v3899, %v3897
    %v3901 = vadd.f32 %v3893, 1e-06
    %v3902 = vadd.f32 %v3900, 1e-06
    %v3903 = vrcp.pop %v3901
    %v3904 = vmul.f32 %v3885, %v3903
    %v3905 = vrcp.pop %v3902
    %v3906 = vmul.f32 %v3886, %v3905
    %v3907 = vlaneseq
    %v3908 = vshrl.u32 %v3907, 7
    %v3909 = vsub.s32 0, %v3908
    %v3910 = vrot.slane %v3858, %v3909
    %v3911 = vadd.f32 %v3904, %v3910
    %v3912 = vadd.f32 %v3906, %v3910
    %v3913 = vld [vmem:[#allocation3 + $0xc0] sm:$0xff]
    %v3914 = vld [vmem:[#allocation3 + $0xc8] sm:$0xff]
    %v3915 = vld [vmem:[#allocation3 + $0xd0] sm:$0xff]
    %v3916 = vld [vmem:[#allocation3 + $0xd8] sm:$0xff]
    %v3917 = vld [vmem:[%s4 + $0x4] sm:$0x1]
    %v3918 = vlaneseq
    %v3919 = vshrl.u32 %v3918, 7
    %v3920 = vsub.s32 0, %v3919
    %v3921 = vrot.slane %v3917, %v3920
    %v3923 = vsel %vm53, %v3911, 0
    %v3926 = vsel %vm53, %v3912, 0
    %3928 = vmatprep.subr.mxu0 0.0
    %3929 = vmatpush1.msra.mxu0 %v3913
    %3930 = vmatprep.subr.mxu0 0.0
    %3931 = vmatpush1.msra.mxu0 %v3914
    %3932 = vmatprep.subr.mxu0 0.0
    %3933 = vmatpush1.msra.mxu0 %v3915
    %3934 = vmatprep.subr.mxu0 0.0
    %3935 = vmatpush1.msra.mxu0 %v3916
    %3936 = vmatprep.subr.mxu0 0.0
    %3937 = vmatpush1.msra.mxu0 0.0
    %3938 = vmatprep.subr.mxu0 0.0
    %3939 = vmatpush1.msra.mxu0 0.0
    %3940 = vmatprep.subr.mxu0 0.0
    %3941 = vmatpush1.msra.mxu0 0.0
    %3942 = vmatprep.subr.mxu0 0.0
    %3943 = vmatpush1.msra.mxu0 0.0
    %3944 = vmatprep.subr.mxu0 0.0
    %3945 = vmatpush1.msra.mxu0 0.0
    %3946 = vmatprep.subr.mxu0 0.0
    %3947 = vmatpush1.msra.mxu0 0.0
    %3948 = vmatprep.subr.mxu0 0.0
    %3949 = vmatpush1.msra.mxu0 0.0
    %3950 = vmatprep.subr.mxu0 0.0
    %3951 = vmatpush1.msra.mxu0 0.0
    %3952 = vmatprep.subr.mxu0 0.0
    %3953 = vmatpush1.msra.mxu0 0.0
    %3954 = vmatprep.subr.mxu0 0.0
    %3955 = vmatpush1.msra.mxu0 0.0
    %3956 = vmatprep.subr.mxu0 0.0
    %3957 = vmatpush1.msra.mxu0 0.0
    %3958 = vmatprep.subr.mxu0 0.0
    %3959 = vmatpush1.msra.mxu0 0.0
    %3960 = vmatprep.subr.mxu0 0.0
    %3961 = vmatpush1.msra.mxu0 0.0
    %3962 = vmatprep.subr.mxu0 0.0
    %3963 = vmatpush1.msra.mxu0 0.0
    %3964 = vmatprep.subr.mxu0 0.0
    %3965 = vmatpush1.msra.mxu0 0.0
    %3966 = vmatprep.subr.mxu0 0.0
    %3967 = vmatpush1.msra.mxu0 0.0
    %3968 = vmatprep.subr.mxu0 0.0
    %3969 = vmatpush1.msra.mxu0 0.0
    %3970 = vmatprep.subr.mxu0 0.0
    %3971 = vmatpush1.msra.mxu0 0.0
    %3972 = vmatprep.subr.mxu0 0.0
    %3973 = vmatpush1.msra.mxu0 0.0
    %3974 = vmatprep.subr.mxu0 0.0
    %3975 = vmatpush1.msra.mxu0 0.0
    %3976 = vmatprep.subr.mxu0 0.0
    %3977 = vmatpush1.msra.mxu0 0.0
    %3978 = vmatprep.subr.mxu0 0.0
    %3979 = vmatpush1.msra.mxu0 0.0
    %3980 = vmatprep.subr.mxu0 0.0
    %3981 = vmatpush1.msra.mxu0 0.0
    %3982 = vmatprep.subr.mxu0 0.0
    %3983 = vmatpush1.msra.mxu0 0.0
    %3984 = vmatprep.subr.mxu0 0.0
    %3985 = vmatpush1.msra.mxu0 0.0
    %3986 = vmatprep.subr.mxu0 0.0
    %3987 = vmatpush1.msra.mxu0 0.0
    %3988 = vmatprep.subr.mxu0 0.0
    %3989 = vmatpush1.msra.mxu0 0.0
    %3990 = vmatprep.subr.mxu0 0.0
    %3991 = vmatpush1.msra.mxu0 0.0
    %3992 = vmatprep.mubr.f32.mxu0 0.0
    %3993 = vmatmul.mubr.f32.gmra.mrb[0].mxu0 %v3923
    %v3994 = vpop.f32.mrb[0].mxu0
    %v3995 = vadd.f32 %v3921, %v3994
    %v3996 = vpop.f32.mrb[0].mxu0
    %3997 = vmatprep.mubr.f32.mxu0 0.0
    %3998 = vmatmul.mubr.f32.gmra.mrb[0].mxu0 %v3926
    %v3999 = vpop.f32.mrb[0].mxu0
    %v4000 = vadd.f32 %v3921, %v3999
    %v4001 = vpop.f32.mrb[0].mxu0
    %4002 = vdwg.mxu0
    %v4003 = vmax.f32 %v3995, 0.0
    %v4004 = vmax.f32 %v4000, 0.0
    %v4005 = vld [vmem:[#allocation3 + $0xe0] sm:$0xff]
    %v4006 = vld [vmem:[#allocation3 + $0xe8] sm:$0xff]
    %v4007 = vld [vmem:[#allocation3 + $0xf0] sm:$0xff]
    %v4008 = vld [vmem:[#allocation3 + $0xf8] sm:$0xff]
    %v4009 = vld [vmem:[#allocation3 + $0x100] sm:$0xff]
    %v4010 = vld [vmem:[#allocation3 + $0x108] sm:$0xff]
    %v4011 = vld [vmem:[#allocation3 + $0x110] sm:$0xff]
    %v4012 = vld [vmem:[#allocation3 + $0x118] sm:$0xff]
    %v4013 = vld [vmem:[%s4 + $0x5] sm:$0x1]
    %v4014 = vlaneseq
    %v4015 = vshrl.u32 %v4014, 7
    %v4016 = vsub.s32 0, %v4015
    %v4017 = vrot.slane %v4013, %v4016
    %vm4018 = vcmask 523264
    %v4020 = vsel %vm4018, %v4003, 0
    %v4023 = vsel %vm4018, %v4004, 0
    %4025 = vmatprep.subr.mxu0 0.0
    %4026 = vmatpush1.msra.mxu0 %v4005
    %4027 = vmatprep.subr.mxu0 0.0
    %4028 = vmatpush1.msra.mxu0 %v4006
    %4029 = vmatprep.subr.mxu0 0.0
    %4030 = vmatpush1.msra.mxu0 %v4007
    %4031 = vmatprep.subr.mxu0 0.0
    %4032 = vmatpush1.msra.mxu0 %v4008
    %4033 = vmatprep.subr.mxu0 0.0
    %4034 = vmatpush1.msra.mxu0 %v4009
    %4035 = vmatprep.subr.mxu0 0.0
    %4036 = vmatpush1.msra.mxu0 %v4010
    %4037 = vmatprep.subr.mxu0 0.0
    %4038 = vmatpush1.msra.mxu0 %v4011
    %4039 = vmatprep.subr.mxu0 0.0
    %4040 = vmatpush1.msra.mxu0 %v4012
    %4041 = vmatprep.subr.mxu0 0.0
    %4042 = vmatpush1.msra.mxu0 0.0
    %4043 = vmatprep.subr.mxu0 0.0
    %4044 = vmatpush1.msra.mxu0 0.0
    %4045 = vmatprep.subr.mxu0 0.0
    %4046 = vmatpush1.msra.mxu0 0.0
    %4047 = vmatprep.subr.mxu0 0.0
    %4048 = vmatpush1.msra.mxu0 0.0
    %4049 = vmatprep.subr.mxu0 0.0
    %4050 = vmatpush1.msra.mxu0 0.0
    %4051 = vmatprep.subr.mxu0 0.0
    %4052 = vmatpush1.msra.mxu0 0.0
    %4053 = vmatprep.subr.mxu0 0.0
    %4054 = vmatpush1.msra.mxu0 0.0
    %4055 = vmatprep.subr.mxu0 0.0
    %4056 = vmatpush1.msra.mxu0 0.0
    %4057 = vmatprep.subr.mxu0 0.0
    %4058 = vmatpush1.msra.mxu0 0.0
    %4059 = vmatprep.subr.mxu0 0.0
    %4060 = vmatpush1.msra.mxu0 0.0
    %4061 = vmatprep.subr.mxu0 0.0
    %4062 = vmatpush1.msra.mxu0 0.0
    %4063 = vmatprep.subr.mxu0 0.0
    %4064 = vmatpush1.msra.mxu0 0.0
    %4065 = vmatprep.subr.mxu0 0.0
    %4066 = vmatpush1.msra.mxu0 0.0
    %4067 = vmatprep.subr.mxu0 0.0
    %4068 = vmatpush1.msra.mxu0 0.0
    %4069 = vmatprep.subr.mxu0 0.0
    %4070 = vmatpush1.msra.mxu0 0.0
    %4071 = vmatprep.subr.mxu0 0.0
    %4072 = vmatpush1.msra.mxu0 0.0
    %4073 = vmatprep.subr.mxu0 0.0
    %4074 = vmatpush1.msra.mxu0 0.0
    %4075 = vmatprep.subr.mxu0 0.0
    %4076 = vmatpush1.msra.mxu0 0.0
    %4077 = vmatprep.subr.mxu0 0.0
    %4078 = vmatpush1.msra.mxu0 0.0
    %4079 = vmatprep.subr.mxu0 0.0
    %4080 = vmatpush1.msra.mxu0 0.0
    %4081 = vmatprep.subr.mxu0 0.0
    %4082 = vmatpush1.msra.mxu0 0.0
    %4083 = vmatprep.subr.mxu0 0.0
    %4084 = vmatpush1.msra.mxu0 0.0
    %4085 = vmatprep.subr.mxu0 0.0
    %4086 = vmatpush1.msra.mxu0 0.0
    %4087 = vmatprep.subr.mxu0 0.0
    %4088 = vmatpush1.msra.mxu0 0.0
    %4089 = vmatprep.mubr.f32.mxu0 0.0
    %4090 = vmatmul.mubr.f32.gmra.mrb[0].mxu0 %v4020
    %v4091 = vpop.f32.mrb[0].mxu0
    %v4092 = vadd.f32 %v4017, %v4091
    %v4093 = vpop.f32.mrb[0].mxu0
    %4094 = vmatprep.mubr.f32.mxu0 0.0
    %4095 = vmatmul.mubr.f32.gmra.mrb[0].mxu0 %v4023
    %v4096 = vpop.f32.mrb[0].mxu0
    %v4097 = vadd.f32 %v4017, %v4096
    %v4098 = vpop.f32.mrb[0].mxu0
    %4099 = vdwg.mxu0
    %v4100 = vadd.f32 %v3911, %v4092
    %v4101 = vadd.f32 %v3912, %v4097
    %v4102 = vld [vmem:[%s4 + $0x8] sm:$0x1]
    %v4103 = vld [vmem:[%s4 + $0x9] sm:$0x1]
    %v4104 = vsel %vm53, %v4100, 0.0
    %4105 = vadd.xlane.f32.xlu0 %v4104
    %v4106 = vpop.xlane.xlu0 %4105
    %v4107 = vsel %vm53, %v4101, 0.0
    %4108 = vadd.xlane.f32.xlu0 %v4107
    %v4109 = vpop.xlane.xlu0 %4108
    %v4110 = vmul.f32 %v4106, %v3865
    %v4111 = vmul.f32 %v4109, %v3865
    %v4112 = vsub.f32 %v4100, %v4110
    %v4113 = vsub.f32 %v4101, %v4111
    %v4114 = vmul.f32 %v4112, %v4112
    %v4115 = vmul.f32 %v4113, %v4113
    %v4116 = vsel %vm53, %v4114, 0.0
    %4117 = vadd.xlane.f32.xlu0 %v4116
    %v4118 = vpop.xlane.xlu0 %4117
    %v4119 = vsel %vm53, %v4115, 0.0
    %4120 = vadd.xlane.f32.xlu0 %v4119
    %v4121 = vpop.xlane.xlu0 %4120
    %v4122 = vmul.f32 %v4118, %v3878
    %v4123 = vmul.f32 %v4121, %v3878
    %v4124 = vlaneseq
    %v4125 = vshrl.u32 %v4124, 7
    %v4126 = vsub.s32 0, %v4125
    %v4127 = vrot.slane %v4102, %v4126
    %v4128 = vmul.f32 %v4127, %v4112
    %v4129 = vmul.f32 %v4127, %v4113
    %v4130 = vrsqrt.pop %v4122
    %v4131 = vmul.f32 %v4122, %v4130
    %vm4132 = vcmp.eq.f32.partialorder %v4122, inf
    %v4133 = vsel %vm4132, %v4122, %v4131
    %vm4134 = vcmp.eq.f32.partialorder %v4122, 0.0
    %v4135 = vand.u32 %v4122, 2147483648
    %v4136 = vsel %vm4134, %v4135, %v4133
    %v4137 = vrsqrt.pop %v4123
    %v4138 = vmul.f32 %v4123, %v4137
    %vm4139 = vcmp.eq.f32.partialorder %v4123, inf
    %v4140 = vsel %vm4139, %v4123, %v4138
    %vm4141 = vcmp.eq.f32.partialorder %v4123, 0.0
    %v4142 = vand.u32 %v4123, 2147483648
    %v4143 = vsel %vm4141, %v4142, %v4140
    %v4144 = vadd.f32 %v4136, 1e-06
    %v4145 = vadd.f32 %v4143, 1e-06
    %v4146 = vrcp.pop %v4144
    %v4147 = vmul.f32 %v4128, %v4146
    %v4148 = vrcp.pop %v4145
    %v4149 = vmul.f32 %v4129, %v4148
    %v4150 = vlaneseq
    %v4151 = vshrl.u32 %v4150, 7
    %v4152 = vsub.s32 0, %v4151
    %v4153 = vrot.slane %v4103, %v4152
    %v4154 = vadd.f32 %v4147, %v4153
    %v4155 = vadd.f32 %v4149, %v4153
    %v4156 = vld [vmem:[#allocation3 + $0x120] sm:$0xff]
    %v4157 = vld [vmem:[#allocation3 + $0x128] sm:$0xff]
    %v4158 = vld [vmem:[#allocation3 + $0x130] sm:$0xff]
    %v4159 = vld [vmem:[#allocation3 + $0x138] sm:$0xff]
    %v4160 = vld [vmem:[%s4 + $0xa] sm:$0x1]
    %v4161 = vlaneseq
    %v4162 = vshrl.u32 %v4161, 7
    %v4163 = vsub.s32 0, %v4162
    %v4164 = vrot.slane %v4160, %v4163
    %v4166 = vsel %vm53, %v4154, 0
    %v4169 = vsel %vm53, %v4155, 0
    %4171 = vmatprep.subr.mxu0 0.0
    %4172 = vmatpush1.msra.mxu0 %v4156
    %4173 = vmatprep.subr.mxu0 0.0
    %4174 = vmatpush1.msra.mxu0 %v4157
    %4175 = vmatprep.subr.mxu0 0.0
    %4176 = vmatpush1.msra.mxu0 %v4158
    %4177 = vmatprep.subr.mxu0 0.0
    %4178 = vmatpush1.msra.mxu0 %v4159
    %4179 = vmatprep.subr.mxu0 0.0
    %4180 = vmatpush1.msra.mxu0 0.0
    %4181 = vmatprep.subr.mxu0 0.0
    %4182 = vmatpush1.msra.mxu0 0.0
    %4183 = vmatprep.subr.mxu0 0.0
    %4184 = vmatpush1.msra.mxu0 0.0
    %4185 = vmatprep.subr.mxu0 0.0
    %4186 = vmatpush1.msra.mxu0 0.0
    %4187 = vmatprep.subr.mxu0 0.0
    %4188 = vmatpush1.msra.mxu0 0.0
    %4189 = vmatprep.subr.mxu0 0.0
    %4190 = vmatpush1.msra.mxu0 0.0
    %4191 = vmatprep.subr.mxu0 0.0
    %4192 = vmatpush1.msra.mxu0 0.0
    %4193 = vmatprep.subr.mxu0 0.0
    %4194 = vmatpush1.msra.mxu0 0.0
    %4195 = vmatprep.subr.mxu0 0.0
    %4196 = vmatpush1.msra.mxu0 0.0
    %4197 = vmatprep.subr.mxu0 0.0
    %4198 = vmatpush1.msra.mxu0 0.0
    %4199 = vmatprep.subr.mxu0 0.0
    %4200 = vmatpush1.msra.mxu0 0.0
    %4201 = vmatprep.subr.mxu0 0.0
    %4202 = vmatpush1.msra.mxu0 0.0
    %4203 = vmatprep.subr.mxu0 0.0
    %4204 = vmatpush1.msra.mxu0 0.0
    %4205 = vmatprep.subr.mxu0 0.0
    %4206 = vmatpush1.msra.mxu0 0.0
    %4207 = vmatprep.subr.mxu0 0.0
    %4208 = vmatpush1.msra.mxu0 0.0
    %4209 = vmatprep.subr.mxu0 0.0
    %4210 = vmatpush1.msra.mxu0 0.0
    %4211 = vmatprep.subr.mxu0 0.0
    %4212 = vmatpush1.msra.mxu0 0.0
    %4213 = vmatprep.subr.mxu0 0.0
    %4214 = vmatpush1.msra.mxu0 0.0
    %4215 = vmatprep.subr.mxu0 0.0
    %4216 = vmatpush1.msra.mxu0 0.0
    %4217 = vmatprep.subr.mxu0 0.0
    %4218 = vmatpush1.msra.mxu0 0.0
    %4219 = vmatprep.subr.mxu0 0.0
    %4220 = vmatpush1.msra.mxu0 0.0
    %4221 = vmatprep.subr.mxu0 0.0
    %4222 = vmatpush1.msra.mxu0 0.0
    %4223 = vmatprep.subr.mxu0 0.0
    %4224 = vmatpush1.msra.mxu0 0.0
    %4225 = vmatprep.subr.mxu0 0.0
    %4226 = vmatpush1.msra.mxu0 0.0
    %4227 = vmatprep.subr.mxu0 0.0
    %4228 = vmatpush1.msra.mxu0 0.0
    %4229 = vmatprep.subr.mxu0 0.0
    %4230 = vmatpush1.msra.mxu0 0.0
    %4231 = vmatprep.subr.mxu0 0.0
    %4232 = vmatpush1.msra.mxu0 0.0
    %4233 = vmatprep.subr.mxu0 0.0
    %4234 = vmatpush1.msra.mxu0 0.0
    %4235 = vmatprep.mubr.f32.mxu0 0.0
    %4236 = vmatmul.mubr.f32.gmra.mrb[0].mxu0 %v4166
    %v4237 = vpop.f32.mrb[0].mxu0
    %v4238 = vadd.f32 %v4164, %v4237
    %v4239 = vpop.f32.mrb[0].mxu0
    %4240 = vmatprep.mubr.f32.mxu0 0.0
    %4241 = vmatmul.mubr.f32.gmra.mrb[0].mxu0 %v4169
    %v4242 = vpop.f32.mrb[0].mxu0
    %v4243 = vadd.f32 %v4164, %v4242
    %v4244 = vpop.f32.mrb[0].mxu0
    %4245 = vdwg.mxu0
    %4248 = vrot.lane.b32.xlu0 %v4238, 96
    %v4249 = vpop.permute.xlu0 %4248
    %4250 = vrot.lane.b32.xlu0 %v4243, 96
    %v4251 = vpop.permute.xlu0 %4250
    %v4252 = vsel %vm2706, %v4238, 0
    %v4254 = vsel %vm2706, %v4243, 0
    %v4256 = vsel %vm2706, %v4249, 0
    %v4258 = vsel %vm2706, %v4251, 0
    %4260 = vmatprep.subr.mxu0 0.0
    %4261 = vmatpush1.xpose.msra.mxu0 %v4256
    %4262 = vmatprep.subr.mxu0 0.0
    %4263 = vmatpush1.xpose.msra.mxu0 %v4258
    %4264 = vmatprep.subr.mxu0 0.0
    %4265 = vmatpush1.xpose.msra.mxu0 0.0
    %4266 = vmatprep.subr.mxu0 0.0
    %4267 = vmatpush1.xpose.msra.mxu0 0.0
    %4268 = vmatprep.subr.mxu0 0.0
    %4269 = vmatpush1.xpose.msra.mxu0 0.0
    %4270 = vmatprep.subr.mxu0 0.0
    %4271 = vmatpush1.xpose.msra.mxu0 0.0
    %4272 = vmatprep.subr.mxu0 0.0
    %4273 = vmatpush1.xpose.msra.mxu0 0.0
    %4274 = vmatprep.subr.mxu0 0.0
    %4275 = vmatpush1.xpose.msra.mxu0 0.0
    %4276 = vmatprep.subr.mxu0 0.0
    %4277 = vmatpush1.xpose.msra.mxu0 0.0
    %4278 = vmatprep.subr.mxu0 0.0
    %4279 = vmatpush1.xpose.msra.mxu0 0.0
    %4280 = vmatprep.subr.mxu0 0.0
    %4281 = vmatpush1.xpose.msra.mxu0 0.0
    %4282 = vmatprep.subr.mxu0 0.0
    %4283 = vmatpush1.xpose.msra.mxu0 0.0
    %4284 = vmatprep.subr.mxu0 0.0
    %4285 = vmatpush1.xpose.msra.mxu0 0.0
    %4286 = vmatprep.subr.mxu0 0.0
    %4287 = vmatpush1.xpose.msra.mxu0 0.0
    %4288 = vmatprep.subr.mxu0 0.0
    %4289 = vmatpush1.xpose.msra.mxu0 0.0
    %4290 = vmatprep.subr.mxu0 0.0
    %4291 = vmatpush1.xpose.msra.mxu0 0.0
    %4292 = vmatprep.subr.mxu0 0.0
    %4293 = vmatpush1.xpose.msra.mxu0 0.0
    %4294 = vmatprep.subr.mxu0 0.0
    %4295 = vmatpush1.xpose.msra.mxu0 0.0
    %4296 = vmatprep.subr.mxu0 0.0
    %4297 = vmatpush1.xpose.msra.mxu0 0.0
    %4298 = vmatprep.subr.mxu0 0.0
    %4299 = vmatpush1.xpose.msra.mxu0 0.0
    %4300 = vmatprep.subr.mxu0 0.0
    %4301 = vmatpush1.xpose.msra.mxu0 0.0
    %4302 = vmatprep.subr.mxu0 0.0
    %4303 = vmatpush1.xpose.msra.mxu0 0.0
    %4304 = vmatprep.subr.mxu0 0.0
    %4305 = vmatpush1.xpose.msra.mxu0 0.0
    %4306 = vmatprep.subr.mxu0 0.0
    %4307 = vmatpush1.xpose.msra.mxu0 0.0
    %4308 = vmatprep.subr.mxu0 0.0
    %4309 = vmatpush1.xpose.msra.mxu0 0.0
    %4310 = vmatprep.subr.mxu0 0.0
    %4311 = vmatpush1.xpose.msra.mxu0 0.0
    %4312 = vmatprep.subr.mxu0 0.0
    %4313 = vmatpush1.xpose.msra.mxu0 0.0
    %4314 = vmatprep.subr.mxu0 0.0
    %4315 = vmatpush1.xpose.msra.mxu0 0.0
    %4316 = vmatprep.subr.mxu0 0.0
    %4317 = vmatpush1.xpose.msra.mxu0 0.0
    %4318 = vmatprep.subr.mxu0 0.0
    %4319 = vmatpush1.xpose.msra.mxu0 0.0
    %4320 = vmatprep.subr.mxu0 0.0
    %4321 = vmatpush1.xpose.msra.mxu0 0.0
    %4322 = vmatprep.subr.mxu0 0.0
    %4323 = vmatpush1.xpose.msra.mxu0 0.0
    %4324 = vmatprep.mubr.f32.mxu0 0.0
    %4325 = vmatmul.mubr.f32.gmra.mrb[0].mxu0 %v4252
    %v4326 = vpop.f32.mrb[0].mxu0
    %v4327 = vadd.f32 0.0, %v4326
    %v4328 = vpop.f32.mrb[0].mxu0
    %4329 = vmatprep.mubr.f32.mxu0 0.0
    %4330 = vmatmul.mubr.f32.gmra.mrb[0].mxu0 %v4254
    %v4331 = vpop.f32.mrb[0].mxu0
    %v4332 = vadd.f32 0.0, %v4331
    %v4333 = vpop.f32.mrb[0].mxu0
    %4334 = vdwg.mxu0
    %v4335 = vmul.f32 %v4327, 0.35355338
    %v4336 = vmul.f32 %v4332, 0.35355338
    %v4337 = vsel %vm38, -1e+09, %v4335
    %v4338 = vsel %vm39, -1e+09, %v4336
    %v4339 = vsel %vm2794, %v4337, -inf
    %4340 = vmax.xlane.f32.xlu0 %v4339
    %v4341 = vpop.xlane.xlu0 %4340
    %v4342 = vsel %vm2794, %v4338, -inf
    %4343 = vmax.xlane.f32.xlu0 %v4342
    %v4344 = vpop.xlane.xlu0 %4343
    %v4345 = vsub.f32 %v4337, %v4341
    %v4346 = vsub.f32 %v4338, %v4344
    %v4347 = vmul.f32 %v4345, 1.442695
    %v4348 = vpow.pop %v4347
    %v4349 = vmul.f32 %v4346, 1.442695
    %v4350 = vpow.pop %v4349
    %v4351 = vsel %vm2794, %v4348, 0.0
    %4352 = vadd.xlane.f32.xlu0 %v4351
    %v4353 = vpop.xlane.xlu0 %4352
    %v4354 = vsel %vm2794, %v4350, 0.0
    %4355 = vadd.xlane.f32.xlu0 %v4354
    %v4356 = vpop.xlane.xlu0 %4355
    %v4357 = vrcp.pop %v4353
    %v4358 = vrcp.pop %v4356
    %v4359 = vmul.f32 %v4348, %v4357
    %v4360 = vmul.f32 %v4350, %v4358
    %4361 = vrot.lane.b32.xlu0 %v4238, 64
    %v4362 = vpop.permute.xlu0 %4361
    %4363 = vrot.lane.b32.xlu0 %v4243, 64
    %v4364 = vpop.permute.xlu0 %4363
    %v4368 = vsel %vm2794, %v4359, 0
    %v4371 = vsel %vm2794, %v4360, 0
    %4373 = vmatprep.subr.mxu0 0.0
    %4374 = vmatpush1.msra.mxu0 %v4362
    %4375 = vmatprep.subr.mxu0 0.0
    %4376 = vmatpush1.msra.mxu0 %v4364
    %4377 = vmatprep.subr.mxu0 0.0
    %4378 = vmatpush1.msra.mxu0 0.0
    %4379 = vmatprep.subr.mxu0 0.0
    %4380 = vmatpush1.msra.mxu0 0.0
    %4381 = vmatprep.subr.mxu0 0.0
    %4382 = vmatpush1.msra.mxu0 0.0
    %4383 = vmatprep.subr.mxu0 0.0
    %4384 = vmatpush1.msra.mxu0 0.0
    %4385 = vmatprep.subr.mxu0 0.0
    %4386 = vmatpush1.msra.mxu0 0.0
    %4387 = vmatprep.subr.mxu0 0.0
    %4388 = vmatpush1.msra.mxu0 0.0
    %4389 = vmatprep.subr.mxu0 0.0
    %4390 = vmatpush1.msra.mxu0 0.0
    %4391 = vmatprep.subr.mxu0 0.0
    %4392 = vmatpush1.msra.mxu0 0.0
    %4393 = vmatprep.subr.mxu0 0.0
    %4394 = vmatpush1.msra.mxu0 0.0
    %4395 = vmatprep.subr.mxu0 0.0
    %4396 = vmatpush1.msra.mxu0 0.0
    %4397 = vmatprep.subr.mxu0 0.0
    %4398 = vmatpush1.msra.mxu0 0.0
    %4399 = vmatprep.subr.mxu0 0.0
    %4400 = vmatpush1.msra.mxu0 0.0
    %4401 = vmatprep.subr.mxu0 0.0
    %4402 = vmatpush1.msra.mxu0 0.0
    %4403 = vmatprep.subr.mxu0 0.0
    %4404 = vmatpush1.msra.mxu0 0.0
    %4405 = vmatprep.subr.mxu0 0.0
    %4406 = vmatpush1.msra.mxu0 0.0
    %4407 = vmatprep.subr.mxu0 0.0
    %4408 = vmatpush1.msra.mxu0 0.0
    %4409 = vmatprep.subr.mxu0 0.0
    %4410 = vmatpush1.msra.mxu0 0.0
    %4411 = vmatprep.subr.mxu0 0.0
    %4412 = vmatpush1.msra.mxu0 0.0
    %4413 = vmatprep.subr.mxu0 0.0
    %4414 = vmatpush1.msra.mxu0 0.0
    %4415 = vmatprep.subr.mxu0 0.0
    %4416 = vmatpush1.msra.mxu0 0.0
    %4417 = vmatprep.subr.mxu0 0.0
    %4418 = vmatpush1.msra.mxu0 0.0
    %4419 = vmatprep.subr.mxu0 0.0
    %4420 = vmatpush1.msra.mxu0 0.0
    %4421 = vmatprep.subr.mxu0 0.0
    %4422 = vmatpush1.msra.mxu0 0.0
    %4423 = vmatprep.subr.mxu0 0.0
    %4424 = vmatpush1.msra.mxu0 0.0
    %4425 = vmatprep.subr.mxu0 0.0
    %4426 = vmatpush1.msra.mxu0 0.0
    %4427 = vmatprep.subr.mxu0 0.0
    %4428 = vmatpush1.msra.mxu0 0.0
    %4429 = vmatprep.subr.mxu0 0.0
    %4430 = vmatpush1.msra.mxu0 0.0
    %4431 = vmatprep.subr.mxu0 0.0
    %4432 = vmatpush1.msra.mxu0 0.0
    %4433 = vmatprep.subr.mxu0 0.0
    %4434 = vmatpush1.msra.mxu0 0.0
    %4435 = vmatprep.subr.mxu0 0.0
    %4436 = vmatpush1.msra.mxu0 0.0
    %4437 = vmatprep.mubr.f32.mxu0 0.0
    %4438 = vmatmul.mubr.f32.gmra.mrb[0].mxu0 %v4368
    %v4439 = vpop.f32.mrb[0].mxu0
    %v4440 = vadd.f32 0.0, %v4439
    %v4441 = vpop.f32.mrb[0].mxu0
    %4442 = vmatprep.mubr.f32.mxu0 0.0
    %4443 = vmatmul.mubr.f32.gmra.mrb[0].mxu0 %v4371
    %v4444 = vpop.f32.mrb[0].mxu0
    %v4445 = vadd.f32 0.0, %v4444
    %v4446 = vpop.f32.mrb[0].mxu0
    %4447 = vdwg.mxu0
    %v4448 = vld [vmem:[#allocation3 + $0x140] sm:$0xff]
    %4449 = vrot.lane.b32.xlu0 %v4238, 120
    %v4450 = vpop.permute.xlu0 %4449
    %4451 = vrot.lane.b32.xlu0 %v4243, 120
    %v4452 = vpop.permute.xlu0 %4451
    %4453 = vrot.lane.b32.xlu0 %v4238, 88
    %v4454 = vpop.permute.xlu0 %4453
    %4455 = vrot.lane.b32.xlu0 %v4243, 88
    %v4456 = vpop.permute.xlu0 %4455
    %v4457 = vsel %vm2706, %v4450, 0
    %v4459 = vsel %vm2706, %v4452, 0
    %v4461 = vsel %vm2706, %v4454, 0
    %v4463 = vsel %vm2706, %v4456, 0
    %4465 = vmatprep.subr.mxu0 0.0
    %4466 = vmatpush1.xpose.msra.mxu0 %v4461
    %4467 = vmatprep.subr.mxu0 0.0
    %4468 = vmatpush1.xpose.msra.mxu0 %v4463
    %4469 = vmatprep.subr.mxu0 0.0
    %4470 = vmatpush1.xpose.msra.mxu0 0.0
    %4471 = vmatprep.subr.mxu0 0.0
    %4472 = vmatpush1.xpose.msra.mxu0 0.0
    %4473 = vmatprep.subr.mxu0 0.0
    %4474 = vmatpush1.xpose.msra.mxu0 0.0
    %4475 = vmatprep.subr.mxu0 0.0
    %4476 = vmatpush1.xpose.msra.mxu0 0.0
    %4477 = vmatprep.subr.mxu0 0.0
    %4478 = vmatpush1.xpose.msra.mxu0 0.0
    %4479 = vmatprep.subr.mxu0 0.0
    %4480 = vmatpush1.xpose.msra.mxu0 0.0
    %4481 = vmatprep.subr.mxu0 0.0
    %4482 = vmatpush1.xpose.msra.mxu0 0.0
    %4483 = vmatprep.subr.mxu0 0.0
    %4484 = vmatpush1.xpose.msra.mxu0 0.0
    %4485 = vmatprep.subr.mxu0 0.0
    %4486 = vmatpush1.xpose.msra.mxu0 0.0
    %4487 = vmatprep.subr.mxu0 0.0
    %4488 = vmatpush1.xpose.msra.mxu0 0.0
    %4489 = vmatprep.subr.mxu0 0.0
    %4490 = vmatpush1.xpose.msra.mxu0 0.0
    %4491 = vmatprep.subr.mxu0 0.0
    %4492 = vmatpush1.xpose.msra.mxu0 0.0
    %4493 = vmatprep.subr.mxu0 0.0
    %4494 = vmatpush1.xpose.msra.mxu0 0.0
    %4495 = vmatprep.subr.mxu0 0.0
    %4496 = vmatpush1.xpose.msra.mxu0 0.0
    %4497 = vmatprep.subr.mxu0 0.0
    %4498 = vmatpush1.xpose.msra.mxu0 0.0
    %4499 = vmatprep.subr.mxu0 0.0
    %4500 = vmatpush1.xpose.msra.mxu0 0.0
    %4501 = vmatprep.subr.mxu0 0.0
    %4502 = vmatpush1.xpose.msra.mxu0 0.0
    %4503 = vmatprep.subr.mxu0 0.0
    %4504 = vmatpush1.xpose.msra.mxu0 0.0
    %4505 = vmatprep.subr.mxu0 0.0
    %4506 = vmatpush1.xpose.msra.mxu0 0.0
    %4507 = vmatprep.subr.mxu0 0.0
    %4508 = vmatpush1.xpose.msra.mxu0 0.0
    %4509 = vmatprep.subr.mxu0 0.0
    %4510 = vmatpush1.xpose.msra.mxu0 0.0
    %4511 = vmatprep.subr.mxu0 0.0
    %4512 = vmatpush1.xpose.msra.mxu0 0.0
    %4513 = vmatprep.subr.mxu0 0.0
    %4514 = vmatpush1.xpose.msra.mxu0 0.0
    %4515 = vmatprep.subr.mxu0 0.0
    %4516 = vmatpush1.xpose.msra.mxu0 0.0
    %4517 = vmatprep.subr.mxu0 0.0
    %4518 = vmatpush1.xpose.msra.mxu0 0.0
    %4519 = vmatprep.subr.mxu0 0.0
    %4520 = vmatpush1.xpose.msra.mxu0 0.0
    %4521 = vmatprep.subr.mxu0 0.0
    %4522 = vmatpush1.xpose.msra.mxu0 0.0
    %4523 = vmatprep.subr.mxu0 0.0
    %4524 = vmatpush1.xpose.msra.mxu0 0.0
    %4525 = vmatprep.subr.mxu0 0.0
    %4526 = vmatpush1.xpose.msra.mxu0 0.0
    %4527 = vmatprep.subr.mxu0 0.0
    %4528 = vmatpush1.xpose.msra.mxu0 0.0
    %4529 = vmatprep.mubr.f32.mxu0 0.0
    %4530 = vmatmul.mubr.f32.gmra.mrb[0].mxu0 %v4457
    %v4531 = vpop.f32.mrb[0].mxu0
    %v4532 = vadd.f32 0.0, %v4531
    %v4533 = vpop.f32.mrb[0].mxu0
    %4534 = vmatprep.mubr.f32.mxu0 0.0
    %4535 = vmatmul.mubr.f32.gmra.mrb[0].mxu0 %v4459
    %v4536 = vpop.f32.mrb[0].mxu0
    %v4537 = vadd.f32 0.0, %v4536
    %v4538 = vpop.f32.mrb[0].mxu0
    %4539 = vdwg.mxu0
    %v4540 = vmul.f32 %v4532, 0.35355338
    %v4541 = vmul.f32 %v4537, 0.35355338
    %v4542 = vsel %vm38, -1e+09, %v4540
    %v4543 = vsel %vm39, -1e+09, %v4541
    %v4544 = vsel %vm2794, %v4542, -inf
    %4545 = vmax.xlane.f32.xlu0 %v4544
    %v4546 = vpop.xlane.xlu0 %4545
    %v4547 = vsel %vm2794, %v4543, -inf
    %4548 = vmax.xlane.f32.xlu0 %v4547
    %v4549 = vpop.xlane.xlu0 %4548
    %v4550 = vsub.f32 %v4542, %v4546
    %v4551 = vsub.f32 %v4543, %v4549
    %v4552 = vmul.f32 %v4550, 1.442695
    %v4553 = vpow.pop %v4552
    %v4554 = vmul.f32 %v4551, 1.442695
    %v4555 = vpow.pop %v4554
    %v4556 = vsel %vm2794, %v4553, 0.0
    %4557 = vadd.xlane.f32.xlu0 %v4556
    %v4558 = vpop.xlane.xlu0 %4557
    %v4559 = vsel %vm2794, %v4555, 0.0
    %4560 = vadd.xlane.f32.xlu0 %v4559
    %v4561 = vpop.xlane.xlu0 %4560
    %v4562 = vrcp.pop %v4558
    %v4563 = vrcp.pop %v4561
    %v4564 = vmul.f32 %v4553, %v4562
    %v4565 = vmul.f32 %v4555, %v4563
    %4566 = vrot.lane.b32.xlu0 %v4238, 56
    %v4567 = vpop.permute.xlu0 %4566
    %4568 = vrot.lane.b32.xlu0 %v4243, 56
    %v4569 = vpop.permute.xlu0 %4568
    %v4573 = vsel %vm2794, %v4564, 0
    %v4576 = vsel %vm2794, %v4565, 0
    %4578 = vmatprep.subr.mxu0 0.0
    %4579 = vmatpush1.msra.mxu0 %v4567
    %4580 = vmatprep.subr.mxu0 0.0
    %4581 = vmatpush1.msra.mxu0 %v4569
    %4582 = vmatprep.subr.mxu0 0.0
    %4583 = vmatpush1.msra.mxu0 0.0
    %4584 = vmatprep.subr.mxu0 0.0
    %4585 = vmatpush1.msra.mxu0 0.0
    %4586 = vmatprep.subr.mxu0 0.0
    %4587 = vmatpush1.msra.mxu0 0.0
    %4588 = vmatprep.subr.mxu0 0.0
    %4589 = vmatpush1.msra.mxu0 0.0
    %4590 = vmatprep.subr.mxu0 0.0
    %4591 = vmatpush1.msra.mxu0 0.0
    %4592 = vmatprep.subr.mxu0 0.0
    %4593 = vmatpush1.msra.mxu0 0.0
    %4594 = vmatprep.subr.mxu0 0.0
    %4595 = vmatpush1.msra.mxu0 0.0
    %4596 = vmatprep.subr.mxu0 0.0
    %4597 = vmatpush1.msra.mxu0 0.0
    %4598 = vmatprep.subr.mxu0 0.0
    %4599 = vmatpush1.msra.mxu0 0.0
    %4600 = vmatprep.subr.mxu0 0.0
    %4601 = vmatpush1.msra.mxu0 0.0
    %4602 = vmatprep.subr.mxu0 0.0
    %4603 = vmatpush1.msra.mxu0 0.0
    %4604 = vmatprep.subr.mxu0 0.0
    %4605 = vmatpush1.msra.mxu0 0.0
    %4606 = vmatprep.subr.mxu0 0.0
    %4607 = vmatpush1.msra.mxu0 0.0
    %4608 = vmatprep.subr.mxu0 0.0
    %4609 = vmatpush1.msra.mxu0 0.0
    %4610 = vmatprep.subr.mxu0 0.0
    %4611 = vmatpush1.msra.mxu0 0.0
    %4612 = vmatprep.subr.mxu0 0.0
    %4613 = vmatpush1.msra.mxu0 0.0
    %4614 = vmatprep.subr.mxu0 0.0
    %4615 = vmatpush1.msra.mxu0 0.0
    %4616 = vmatprep.subr.mxu0 0.0
    %4617 = vmatpush1.msra.mxu0 0.0
    %4618 = vmatprep.subr.mxu0 0.0
    %4619 = vmatpush1.msra.mxu0 0.0
    %4620 = vmatprep.subr.mxu0 0.0
    %4621 = vmatpush1.msra.mxu0 0.0
    %4622 = vmatprep.subr.mxu0 0.0
    %4623 = vmatpush1.msra.mxu0 0.0
    %4624 = vmatprep.subr.mxu0 0.0
    %4625 = vmatpush1.msra.mxu0 0.0
    %4626 = vmatprep.subr.mxu0 0.0
    %4627 = vmatpush1.msra.mxu0 0.0
    %4628 = vmatprep.subr.mxu0 0.0
    %4629 = vmatpush1.msra.mxu0 0.0
    %4630 = vmatprep.subr.mxu0 0.0
    %4631 = vmatpush1.msra.mxu0 0.0
    %4632 = vmatprep.subr.mxu0 0.0
    %4633 = vmatpush1.msra.mxu0 0.0
    %4634 = vmatprep.subr.mxu0 0.0
    %4635 = vmatpush1.msra.mxu0 0.0
    %4636 = vmatprep.subr.mxu0 0.0
    %4637 = vmatpush1.msra.mxu0 0.0
    %4638 = vmatprep.subr.mxu0 0.0
    %4639 = vmatpush1.msra.mxu0 0.0
    %4640 = vmatprep.subr.mxu0 0.0
    %4641 = vmatpush1.msra.mxu0 0.0
    %4642 = vmatprep.mubr.f32.mxu0 0.0
    %4643 = vmatmul.mubr.f32.gmra.mrb[0].mxu0 %v4573
    %v4644 = vpop.f32.mrb[0].mxu0
    %v4645 = vadd.f32 0.0, %v4644
    %v4646 = vpop.f32.mrb[0].mxu0
    %4647 = vmatprep.mubr.f32.mxu0 0.0
    %4648 = vmatmul.mubr.f32.gmra.mrb[0].mxu0 %v4576
    %v4649 = vpop.f32.mrb[0].mxu0
    %v4650 = vadd.f32 0.0, %v4649
    %v4651 = vpop.f32.mrb[0].mxu0
    %4652 = vdwg.mxu0
    %v4653 = vld [vmem:[#allocation3 + $0x148] sm:$0xff]
    %v4655 = vsel %vm2706, %v4645, 0
    %v4658 = vsel %vm2706, %v4650, 0
    %4660 = vmatprep.subr.mxu0 0.0
    %4661 = vmatpush1.msra.mxu0 %v4653
    %4662 = vmatprep.subr.mxu0 0.0
    %4663 = vmatpush1.msra.mxu0 0.0
    %4664 = vmatprep.subr.mxu0 0.0
    %4665 = vmatpush1.msra.mxu0 0.0
    %4666 = vmatprep.subr.mxu0 0.0
    %4667 = vmatpush1.msra.mxu0 0.0
    %4668 = vmatprep.subr.mxu0 0.0
    %4669 = vmatpush1.msra.mxu0 0.0
    %4670 = vmatprep.subr.mxu0 0.0
    %4671 = vmatpush1.msra.mxu0 0.0
    %4672 = vmatprep.subr.mxu0 0.0
    %4673 = vmatpush1.msra.mxu0 0.0
    %4674 = vmatprep.subr.mxu0 0.0
    %4675 = vmatpush1.msra.mxu0 0.0
    %4676 = vmatprep.subr.mxu0 0.0
    %4677 = vmatpush1.msra.mxu0 0.0
    %4678 = vmatprep.subr.mxu0 0.0
    %4679 = vmatpush1.msra.mxu0 0.0
    %4680 = vmatprep.subr.mxu0 0.0
    %4681 = vmatpush1.msra.mxu0 0.0
    %4682 = vmatprep.subr.mxu0 0.0
    %4683 = vmatpush1.msra.mxu0 0.0
    %4684 = vmatprep.subr.mxu0 0.0
    %4685 = vmatpush1.msra.mxu0 0.0
    %4686 = vmatprep.subr.mxu0 0.0
    %4687 = vmatpush1.msra.mxu0 0.0
    %4688 = vmatprep.subr.mxu0 0.0
    %4689 = vmatpush1.msra.mxu0 0.0
    %4690 = vmatprep.subr.mxu0 0.0
    %4691 = vmatpush1.msra.mxu0 0.0
    %4692 = vmatprep.subr.mxu0 0.0
    %4693 = vmatpush1.msra.mxu0 0.0
    %4694 = vmatprep.subr.mxu0 0.0
    %4695 = vmatpush1.msra.mxu0 0.0
    %4696 = vmatprep.subr.mxu0 0.0
    %4697 = vmatpush1.msra.mxu0 0.0
    %4698 = vmatprep.subr.mxu0 0.0
    %4699 = vmatpush1.msra.mxu0 0.0
    %4700 = vmatprep.subr.mxu0 0.0
    %4701 = vmatpush1.msra.mxu0 0.0
    %4702 = vmatprep.subr.mxu0 0.0
    %4703 = vmatpush1.msra.mxu0 0.0
    %4704 = vmatprep.subr.mxu0 0.0
    %4705 = vmatpush1.msra.mxu0 0.0
    %4706 = vmatprep.subr.mxu0 0.0
    %4707 = vmatpush1.msra.mxu0 0.0
    %4708 = vmatprep.subr.mxu0 0.0
    %4709 = vmatpush1.msra.mxu0 0.0
    %4710 = vmatprep.subr.mxu0 0.0
    %4711 = vmatpush1.msra.mxu0 0.0
    %4712 = vmatprep.subr.mxu0 0.0
    %4713 = vmatpush1.msra.mxu0 0.0
    %4714 = vmatprep.subr.mxu0 0.0
    %4715 = vmatpush1.msra.mxu0 0.0
    %4716 = vmatprep.subr.mxu0 0.0
    %4717 = vmatpush1.msra.mxu0 0.0
    %4718 = vmatprep.subr.mxu0 0.0
    %4719 = vmatpush1.msra.mxu0 0.0
    %4720 = vmatprep.subr.mxu0 0.0
    %4721 = vmatpush1.msra.mxu0 0.0
    %4722 = vmatprep.subr.mxu0 0.0
    %4723 = vmatpush1.msra.mxu0 0.0
    %4724 = vmatprep.mubr.f32.mxu0 0.0
    %4725 = vmatmul.mubr.f32.gmra.mrb[0].mxu0 %v4655
    %v4726 = vpop.f32.mrb[0].mxu0
    %v4727 = vadd.f32 0.0, %v4726
    %v4728 = vpop.f32.mrb[0].mxu0
    %4729 = vmatprep.mubr.f32.mxu0 0.0
    %4730 = vmatmul.mubr.f32.gmra.mrb[0].mxu0 %v4658
    %v4731 = vpop.f32.mrb[0].mxu0
    %v4732 = vadd.f32 0.0, %v4731
    %v4733 = vpop.f32.mrb[0].mxu0
    %4734 = vdwg.mxu0
    %v4736 = vsel %vm2706, %v4440, 0
    %v4739 = vsel %vm2706, %v4445, 0
    %4741 = vmatprep.subr.mxu0 0.0
    %4742 = vmatpush1.msra.mxu0 %v4448
    %4743 = vmatprep.subr.mxu0 0.0
    %4744 = vmatpush1.msra.mxu0 0.0
    %4745 = vmatprep.subr.mxu0 0.0
    %4746 = vmatpush1.msra.mxu0 0.0
    %4747 = vmatprep.subr.mxu0 0.0
    %4748 = vmatpush1.msra.mxu0 0.0
    %4749 = vmatprep.subr.mxu0 0.0
    %4750 = vmatpush1.msra.mxu0 0.0
    %4751 = vmatprep.subr.mxu0 0.0
    %4752 = vmatpush1.msra.mxu0 0.0
    %4753 = vmatprep.subr.mxu0 0.0
    %4754 = vmatpush1.msra.mxu0 0.0
    %4755 = vmatprep.subr.mxu0 0.0
    %4756 = vmatpush1.msra.mxu0 0.0
    %4757 = vmatprep.subr.mxu0 0.0
    %4758 = vmatpush1.msra.mxu0 0.0
    %4759 = vmatprep.subr.mxu0 0.0
    %4760 = vmatpush1.msra.mxu0 0.0
    %4761 = vmatprep.subr.mxu0 0.0
    %4762 = vmatpush1.msra.mxu0 0.0
    %4763 = vmatprep.subr.mxu0 0.0
    %4764 = vmatpush1.msra.mxu0 0.0
    %4765 = vmatprep.subr.mxu0 0.0
    %4766 = vmatpush1.msra.mxu0 0.0
    %4767 = vmatprep.subr.mxu0 0.0
    %4768 = vmatpush1.msra.mxu0 0.0
    %4769 = vmatprep.subr.mxu0 0.0
    %4770 = vmatpush1.msra.mxu0 0.0
    %4771 = vmatprep.subr.mxu0 0.0
    %4772 = vmatpush1.msra.mxu0 0.0
    %4773 = vmatprep.subr.mxu0 0.0
    %4774 = vmatpush1.msra.mxu0 0.0
    %4775 = vmatprep.subr.mxu0 0.0
    %4776 = vmatpush1.msra.mxu0 0.0
    %4777 = vmatprep.subr.mxu0 0.0
    %4778 = vmatpush1.msra.mxu0 0.0
    %4779 = vmatprep.subr.mxu0 0.0
    %4780 = vmatpush1.msra.mxu0 0.0
    %4781 = vmatprep.subr.mxu0 0.0
    %4782 = vmatpush1.msra.mxu0 0.0
    %4783 = vmatprep.subr.mxu0 0.0
    %4784 = vmatpush1.msra.mxu0 0.0
    %4785 = vmatprep.subr.mxu0 0.0
    %4786 = vmatpush1.msra.mxu0 0.0
    %4787 = vmatprep.subr.mxu0 0.0
    %4788 = vmatpush1.msra.mxu0 0.0
    %4789 = vmatprep.subr.mxu0 0.0
    %4790 = vmatpush1.msra.mxu0 0.0
    %4791 = vmatprep.subr.mxu0 0.0
    %4792 = vmatpush1.msra.mxu0 0.0
    %4793 = vmatprep.subr.mxu0 0.0
    %4794 = vmatpush1.msra.mxu0 0.0
    %4795 = vmatprep.subr.mxu0 0.0
    %4796 = vmatpush1.msra.mxu0 0.0
    %4797 = vmatprep.subr.mxu0 0.0
    %4798 = vmatpush1.msra.mxu0 0.0
    %4799 = vmatprep.subr.mxu0 0.0
    %4800 = vmatpush1.msra.mxu0 0.0
    %4801 = vmatprep.subr.mxu0 0.0
    %4802 = vmatpush1.msra.mxu0 0.0
    %4803 = vmatprep.subr.mxu0 0.0
    %4804 = vmatpush1.msra.mxu0 0.0
    %4805 = vmatprep.mubr.f32.mxu0 0.0
    %4806 = vmatmul.mubr.f32.gmra.mrb[0].mxu0 %v4736
    %v4807 = vpop.f32.mrb[0].mxu0
    %v4808 = vadd.f32 %v4727, %v4807
    %v4809 = vpop.f32.mrb[0].mxu0
    %4810 = vmatprep.mubr.f32.mxu0 0.0
    %4811 = vmatmul.mubr.f32.gmra.mrb[0].mxu0 %v4739
    %v4812 = vpop.f32.mrb[0].mxu0
    %v4813 = vadd.f32 %v4732, %v4812
    %v4814 = vpop.f32.mrb[0].mxu0
    %4815 = vdwg.mxu0
    %4816 = vrot.lane.b32.xlu0 %v4238, 112
    %v4817 = vpop.permute.xlu0 %4816
    %4818 = vrot.lane.b32.xlu0 %v4243, 112
    %v4819 = vpop.permute.xlu0 %4818
    %4820 = vrot.lane.b32.xlu0 %v4238, 80
    %v4821 = vpop.permute.xlu0 %4820
    %4822 = vrot.lane.b32.xlu0 %v4243, 80
    %v4823 = vpop.permute.xlu0 %4822
    %v4824 = vsel %vm2706, %v4817, 0
    %v4826 = vsel %vm2706, %v4819, 0
    %v4828 = vsel %vm2706, %v4821, 0
    %v4830 = vsel %vm2706, %v4823, 0
    %4832 = vmatprep.subr.mxu0 0.0
    %4833 = vmatpush1.xpose.msra.mxu0 %v4828
    %4834 = vmatprep.subr.mxu0 0.0
    %4835 = vmatpush1.xpose.msra.mxu0 %v4830
    %4836 = vmatprep.subr.mxu0 0.0
    %4837 = vmatpush1.xpose.msra.mxu0 0.0
    %4838 = vmatprep.subr.mxu0 0.0
    %4839 = vmatpush1.xpose.msra.mxu0 0.0
    %4840 = vmatprep.subr.mxu0 0.0
    %4841 = vmatpush1.xpose.msra.mxu0 0.0
    %4842 = vmatprep.subr.mxu0 0.0
    %4843 = vmatpush1.xpose.msra.mxu0 0.0
    %4844 = vmatprep.subr.mxu0 0.0
    %4845 = vmatpush1.xpose.msra.mxu0 0.0
    %4846 = vmatprep.subr.mxu0 0.0
    %4847 = vmatpush1.xpose.msra.mxu0 0.0
    %4848 = vmatprep.subr.mxu0 0.0
    %4849 = vmatpush1.xpose.msra.mxu0 0.0
    %4850 = vmatprep.subr.mxu0 0.0
    %4851 = vmatpush1.xpose.msra.mxu0 0.0
    %4852 = vmatprep.subr.mxu0 0.0
    %4853 = vmatpush1.xpose.msra.mxu0 0.0
    %4854 = vmatprep.subr.mxu0 0.0
    %4855 = vmatpush1.xpose.msra.mxu0 0.0
    %4856 = vmatprep.subr.mxu0 0.0
    %4857 = vmatpush1.xpose.msra.mxu0 0.0
    %4858 = vmatprep.subr.mxu0 0.0
    %4859 = vmatpush1.xpose.msra.mxu0 0.0
    %4860 = vmatprep.subr.mxu0 0.0
    %4861 = vmatpush1.xpose.msra.mxu0 0.0
    %4862 = vmatprep.subr.mxu0 0.0
    %4863 = vmatpush1.xpose.msra.mxu0 0.0
    %4864 = vmatprep.subr.mxu0 0.0
    %4865 = vmatpush1.xpose.msra.mxu0 0.0
    %4866 = vmatprep.subr.mxu0 0.0
    %4867 = vmatpush1.xpose.msra.mxu0 0.0
    %4868 = vmatprep.subr.mxu0 0.0
    %4869 = vmatpush1.xpose.msra.mxu0 0.0
    %4870 = vmatprep.subr.mxu0 0.0
    %4871 = vmatpush1.xpose.msra.mxu0 0.0
    %4872 = vmatprep.subr.mxu0 0.0
    %4873 = vmatpush1.xpose.msra.mxu0 0.0
    %4874 = vmatprep.subr.mxu0 0.0
    %4875 = vmatpush1.xpose.msra.mxu0 0.0
    %4876 = vmatprep.subr.mxu0 0.0
    %4877 = vmatpush1.xpose.msra.mxu0 0.0
    %4878 = vmatprep.subr.mxu0 0.0
    %4879 = vmatpush1.xpose.msra.mxu0 0.0
    %4880 = vmatprep.subr.mxu0 0.0
    %4881 = vmatpush1.xpose.msra.mxu0 0.0
    %4882 = vmatprep.subr.mxu0 0.0
    %4883 = vmatpush1.xpose.msra.mxu0 0.0
    %4884 = vmatprep.subr.mxu0 0.0
    %4885 = vmatpush1.xpose.msra.mxu0 0.0
    %4886 = vmatprep.subr.mxu0 0.0
    %4887 = vmatpush1.xpose.msra.mxu0 0.0
    %4888 = vmatprep.subr.mxu0 0.0
    %4889 = vmatpush1.xpose.msra.mxu0 0.0
    %4890 = vmatprep.subr.mxu0 0.0
    %4891 = vmatpush1.xpose.msra.mxu0 0.0
    %4892 = vmatprep.subr.mxu0 0.0
    %4893 = vmatpush1.xpose.msra.mxu0 0.0
    %4894 = vmatprep.subr.mxu0 0.0
    %4895 = vmatpush1.xpose.msra.mxu0 0.0
    %4896 = vmatprep.mubr.f32.mxu0 0.0
    %4897 = vmatmul.mubr.f32.gmra.mrb[0].mxu0 %v4824
    %v4898 = vpop.f32.mrb[0].mxu0
    %v4899 = vadd.f32 0.0, %v4898
    %v4900 = vpop.f32.mrb[0].mxu0
    %4901 = vmatprep.mubr.f32.mxu0 0.0
    %4902 = vmatmul.mubr.f32.gmra.mrb[0].mxu0 %v4826
    %v4903 = vpop.f32.mrb[0].mxu0
    %v4904 = vadd.f32 0.0, %v4903
    %v4905 = vpop.f32.mrb[0].mxu0
    %4906 = vdwg.mxu0
    %v4907 = vmul.f32 %v4899, 0.35355338
    %v4908 = vmul.f32 %v4904, 0.35355338
    %v4909 = vsel %vm38, -1e+09, %v4907
    %v4910 = vsel %vm39, -1e+09, %v4908
    %v4911 = vsel %vm2794, %v4909, -inf
    %4912 = vmax.xlane.f32.xlu0 %v4911
    %v4913 = vpop.xlane.xlu0 %4912
    %v4914 = vsel %vm2794, %v4910, -inf
    %4915 = vmax.xlane.f32.xlu0 %v4914
    %v4916 = vpop.xlane.xlu0 %4915
    %v4917 = vsub.f32 %v4909, %v4913
    %v4918 = vsub.f32 %v4910, %v4916
    %v4919 = vmul.f32 %v4917, 1.442695
    %v4920 = vpow.pop %v4919
    %v4921 = vmul.f32 %v4918, 1.442695
    %v4922 = vpow.pop %v4921
    %v4923 = vsel %vm2794, %v4920, 0.0
    %4924 = vadd.xlane.f32.xlu0 %v4923
    %v4925 = vpop.xlane.xlu0 %4924
    %v4926 = vsel %vm2794, %v4922, 0.0
    %4927 = vadd.xlane.f32.xlu0 %v4926
    %v4928 = vpop.xlane.xlu0 %4927
    %v4929 = vrcp.pop %v4925
    %v4930 = vrcp.pop %v4928
    %v4931 = vmul.f32 %v4920, %v4929
    %v4932 = vmul.f32 %v4922, %v4930
    %4933 = vrot.lane.b32.xlu0 %v4238, 48
    %v4934 = vpop.permute.xlu0 %4933
    %4935 = vrot.lane.b32.xlu0 %v4243, 48
    %v4936 = vpop.permute.xlu0 %4935
    %v4940 = vsel %vm2794, %v4931, 0
    %v4943 = vsel %vm2794, %v4932, 0
    %4945 = vmatprep.subr.mxu0 0.0
    %4946 = vmatpush1.msra.mxu0 %v4934
    %4947 = vmatprep.subr.mxu0 0.0
    %4948 = vmatpush1.msra.mxu0 %v4936
    %4949 = vmatprep.subr.mxu0 0.0
    %4950 = vmatpush1.msra.mxu0 0.0
    %4951 = vmatprep.subr.mxu0 0.0
    %4952 = vmatpush1.msra.mxu0 0.0
    %4953 = vmatprep.subr.mxu0 0.0
    %4954 = vmatpush1.msra.mxu0 0.0
    %4955 = vmatprep.subr.mxu0 0.0
    %4956 = vmatpush1.msra.mxu0 0.0
    %4957 = vmatprep.subr.mxu0 0.0
    %4958 = vmatpush1.msra.mxu0 0.0
    %4959 = vmatprep.subr.mxu0 0.0
    %4960 = vmatpush1.msra.mxu0 0.0
    %4961 = vmatprep.subr.mxu0 0.0
    %4962 = vmatpush1.msra.mxu0 0.0
    %4963 = vmatprep.subr.mxu0 0.0
    %4964 = vmatpush1.msra.mxu0 0.0
    %4965 = vmatprep.subr.mxu0 0.0
    %4966 = vmatpush1.msra.mxu0 0.0
    %4967 = vmatprep.subr.mxu0 0.0
    %4968 = vmatpush1.msra.mxu0 0.0
    %4969 = vmatprep.subr.mxu0 0.0
    %4970 = vmatpush1.msra.mxu0 0.0
    %4971 = vmatprep.subr.mxu0 0.0
    %4972 = vmatpush1.msra.mxu0 0.0
    %4973 = vmatprep.subr.mxu0 0.0
    %4974 = vmatpush1.msra.mxu0 0.0
    %4975 = vmatprep.subr.mxu0 0.0
    %4976 = vmatpush1.msra.mxu0 0.0
    %4977 = vmatprep.subr.mxu0 0.0
    %4978 = vmatpush1.msra.mxu0 0.0
    %4979 = vmatprep.subr.mxu0 0.0
    %4980 = vmatpush1.msra.mxu0 0.0
    %4981 = vmatprep.subr.mxu0 0.0
    %4982 = vmatpush1.msra.mxu0 0.0
    %4983 = vmatprep.subr.mxu0 0.0
    %4984 = vmatpush1.msra.mxu0 0.0
    %4985 = vmatprep.subr.mxu0 0.0
    %4986 = vmatpush1.msra.mxu0 0.0
    %4987 = vmatprep.subr.mxu0 0.0
    %4988 = vmatpush1.msra.mxu0 0.0
    %4989 = vmatprep.subr.mxu0 0.0
    %4990 = vmatpush1.msra.mxu0 0.0
    %4991 = vmatprep.subr.mxu0 0.0
    %4992 = vmatpush1.msra.mxu0 0.0
    %4993 = vmatprep.subr.mxu0 0.0
    %4994 = vmatpush1.msra.mxu0 0.0
    %4995 = vmatprep.subr.mxu0 0.0
    %4996 = vmatpush1.msra.mxu0 0.0
    %4997 = vmatprep.subr.mxu0 0.0
    %4998 = vmatpush1.msra.mxu0 0.0
    %4999 = vmatprep.subr.mxu0 0.0
    %5000 = vmatpush1.msra.mxu0 0.0
    %5001 = vmatprep.subr.mxu0 0.0
    %5002 = vmatpush1.msra.mxu0 0.0
    %5003 = vmatprep.subr.mxu0 0.0
    %5004 = vmatpush1.msra.mxu0 0.0
    %5005 = vmatprep.subr.mxu0 0.0
    %5006 = vmatpush1.msra.mxu0 0.0
    %5007 = vmatprep.subr.mxu0 0.0
    %5008 = vmatpush1.msra.mxu0 0.0
    %5009 = vmatprep.mubr.f32.mxu0 0.0
    %5010 = vmatmul.mubr.f32.gmra.mrb[0].mxu0 %v4940
    %v5011 = vpop.f32.mrb[0].mxu0
    %v5012 = vadd.f32 0.0, %v5011
    %v5013 = vpop.f32.mrb[0].mxu0
    %5014 = vmatprep.mubr.f32.mxu0 0.0
    %5015 = vmatmul.mubr.f32.gmra.mrb[0].mxu0 %v4943
    %v5016 = vpop.f32.mrb[0].mxu0
    %v5017 = vadd.f32 0.0, %v5016
    %v5018 = vpop.f32.mrb[0].mxu0
    %5019 = vdwg.mxu0
    %v5020 = vld [vmem:[#allocation3 + $0x150] sm:$0xff]
    %v5022 = vsel %vm2706, %v5012, 0
    %v5025 = vsel %vm2706, %v5017, 0
    %5027 = vmatprep.subr.mxu0 0.0
    %5028 = vmatpush1.msra.mxu0 %v5020
    %5029 = vmatprep.subr.mxu0 0.0
    %5030 = vmatpush1.msra.mxu0 0.0
    %5031 = vmatprep.subr.mxu0 0.0
    %5032 = vmatpush1.msra.mxu0 0.0
    %5033 = vmatprep.subr.mxu0 0.0
    %5034 = vmatpush1.msra.mxu0 0.0
    %5035 = vmatprep.subr.mxu0 0.0
    %5036 = vmatpush1.msra.mxu0 0.0
    %5037 = vmatprep.subr.mxu0 0.0
    %5038 = vmatpush1.msra.mxu0 0.0
    %5039 = vmatprep.subr.mxu0 0.0
    %5040 = vmatpush1.msra.mxu0 0.0
    %5041 = vmatprep.subr.mxu0 0.0
    %5042 = vmatpush1.msra.mxu0 0.0
    %5043 = vmatprep.subr.mxu0 0.0
    %5044 = vmatpush1.msra.mxu0 0.0
    %5045 = vmatprep.subr.mxu0 0.0
    %5046 = vmatpush1.msra.mxu0 0.0
    %5047 = vmatprep.subr.mxu0 0.0
    %5048 = vmatpush1.msra.mxu0 0.0
    %5049 = vmatprep.subr.mxu0 0.0
    %5050 = vmatpush1.msra.mxu0 0.0
    %5051 = vmatprep.subr.mxu0 0.0
    %5052 = vmatpush1.msra.mxu0 0.0
    %5053 = vmatprep.subr.mxu0 0.0
    %5054 = vmatpush1.msra.mxu0 0.0
    %5055 = vmatprep.subr.mxu0 0.0
    %5056 = vmatpush1.msra.mxu0 0.0
    %5057 = vmatprep.subr.mxu0 0.0
    %5058 = vmatpush1.msra.mxu0 0.0
    %5059 = vmatprep.subr.mxu0 0.0
    %5060 = vmatpush1.msra.mxu0 0.0
    %5061 = vmatprep.subr.mxu0 0.0
    %5062 = vmatpush1.msra.mxu0 0.0
    %5063 = vmatprep.subr.mxu0 0.0
    %5064 = vmatpush1.msra.mxu0 0.0
    %5065 = vmatprep.subr.mxu0 0.0
    %5066 = vmatpush1.msra.mxu0 0.0
    %5067 = vmatprep.subr.mxu0 0.0
    %5068 = vmatpush1.msra.mxu0 0.0
    %5069 = vmatprep.subr.mxu0 0.0
    %5070 = vmatpush1.msra.mxu0 0.0
    %5071 = vmatprep.subr.mxu0 0.0
    %5072 = vmatpush1.msra.mxu0 0.0
    %5073 = vmatprep.subr.mxu0 0.0
    %5074 = vmatpush1.msra.mxu0 0.0
    %5075 = vmatprep.subr.mxu0 0.0
    %5076 = vmatpush1.msra.mxu0 0.0
    %5077 = vmatprep.subr.mxu0 0.0
    %5078 = vmatpush1.msra.mxu0 0.0
    %5079 = vmatprep.subr.mxu0 0.0
    %5080 = vmatpush1.msra.mxu0 0.0
    %5081 = vmatprep.subr.mxu0 0.0
    %5082 = vmatpush1.msra.mxu0 0.0
    %5083 = vmatprep.subr.mxu0 0.0
    %5084 = vmatpush1.msra.mxu0 0.0
    %5085 = vmatprep.subr.mxu0 0.0
    %5086 = vmatpush1.msra.mxu0 0.0
    %5087 = vmatprep.subr.mxu0 0.0
    %5088 = vmatpush1.msra.mxu0 0.0
    %5089 = vmatprep.subr.mxu0 0.0
    %5090 = vmatpush1.msra.mxu0 0.0
    %5091 = vmatprep.mubr.f32.mxu0 0.0
    %5092 = vmatmul.mubr.f32.gmra.mrb[0].mxu0 %v5022
    %v5093 = vpop.f32.mrb[0].mxu0
    %v5094 = vadd.f32 0.0, %v5093
    %v5095 = vpop.f32.mrb[0].mxu0
    %5096 = vmatprep.mubr.f32.mxu0 0.0
    %5097 = vmatmul.mubr.f32.gmra.mrb[0].mxu0 %v5025
    %v5098 = vpop.f32.mrb[0].mxu0
    %v5099 = vadd.f32 0.0, %v5098
    %v5100 = vpop.f32.mrb[0].mxu0
    %5101 = vdwg.mxu0
    %v5102 = vadd.f32 %v4808, %v5094
    %v5103 = vadd.f32 %v4813, %v5099
    %5104 = vrot.lane.b32.xlu0 %v4238, 104
    %v5105 = vpop.permute.xlu0 %5104
    %5106 = vrot.lane.b32.xlu0 %v4243, 104
    %v5107 = vpop.permute.xlu0 %5106
    %5108 = vrot.lane.b32.xlu0 %v4238, 72
    %v5109 = vpop.permute.xlu0 %5108
    %5110 = vrot.lane.b32.xlu0 %v4243, 72
    %v5111 = vpop.permute.xlu0 %5110
    %v5112 = vsel %vm2706, %v5105, 0
    %v5114 = vsel %vm2706, %v5107, 0
    %v5116 = vsel %vm2706, %v5109, 0
    %v5118 = vsel %vm2706, %v5111, 0
    %5120 = vmatprep.subr.mxu0 0.0
    %5121 = vmatpush1.xpose.msra.mxu0 %v5116
    %5122 = vmatprep.subr.mxu0 0.0
    %5123 = vmatpush1.xpose.msra.mxu0 %v5118
    %5124 = vmatprep.subr.mxu0 0.0
    %5125 = vmatpush1.xpose.msra.mxu0 0.0
    %5126 = vmatprep.subr.mxu0 0.0
    %5127 = vmatpush1.xpose.msra.mxu0 0.0
    %5128 = vmatprep.subr.mxu0 0.0
    %5129 = vmatpush1.xpose.msra.mxu0 0.0
    %5130 = vmatprep.subr.mxu0 0.0
    %5131 = vmatpush1.xpose.msra.mxu0 0.0
    %5132 = vmatprep.subr.mxu0 0.0
    %5133 = vmatpush1.xpose.msra.mxu0 0.0
    %5134 = vmatprep.subr.mxu0 0.0
    %5135 = vmatpush1.xpose.msra.mxu0 0.0
    %5136 = vmatprep.subr.mxu0 0.0
    %5137 = vmatpush1.xpose.msra.mxu0 0.0
    %5138 = vmatprep.subr.mxu0 0.0
    %5139 = vmatpush1.xpose.msra.mxu0 0.0
    %5140 = vmatprep.subr.mxu0 0.0
    %5141 = vmatpush1.xpose.msra.mxu0 0.0
    %5142 = vmatprep.subr.mxu0 0.0
    %5143 = vmatpush1.xpose.msra.mxu0 0.0
    %5144 = vmatprep.subr.mxu0 0.0
    %5145 = vmatpush1.xpose.msra.mxu0 0.0
    %5146 = vmatprep.subr.mxu0 0.0
    %5147 = vmatpush1.xpose.msra.mxu0 0.0
    %5148 = vmatprep.subr.mxu0 0.0
    %5149 = vmatpush1.xpose.msra.mxu0 0.0
    %5150 = vmatprep.subr.mxu0 0.0
    %5151 = vmatpush1.xpose.msra.mxu0 0.0
    %5152 = vmatprep.subr.mxu0 0.0
    %5153 = vmatpush1.xpose.msra.mxu0 0.0
    %5154 = vmatprep.subr.mxu0 0.0
    %5155 = vmatpush1.xpose.msra.mxu0 0.0
    %5156 = vmatprep.subr.mxu0 0.0
    %5157 = vmatpush1.xpose.msra.mxu0 0.0
    %5158 = vmatprep.subr.mxu0 0.0
    %5159 = vmatpush1.xpose.msra.mxu0 0.0
    %5160 = vmatprep.subr.mxu0 0.0
    %5161 = vmatpush1.xpose.msra.mxu0 0.0
    %5162 = vmatprep.subr.mxu0 0.0
    %5163 = vmatpush1.xpose.msra.mxu0 0.0
    %5164 = vmatprep.subr.mxu0 0.0
    %5165 = vmatpush1.xpose.msra.mxu0 0.0
    %5166 = vmatprep.subr.mxu0 0.0
    %5167 = vmatpush1.xpose.msra.mxu0 0.0
    %5168 = vmatprep.subr.mxu0 0.0
    %5169 = vmatpush1.xpose.msra.mxu0 0.0
    %5170 = vmatprep.subr.mxu0 0.0
    %5171 = vmatpush1.xpose.msra.mxu0 0.0
    %5172 = vmatprep.subr.mxu0 0.0
    %5173 = vmatpush1.xpose.msra.mxu0 0.0
    %5174 = vmatprep.subr.mxu0 0.0
    %5175 = vmatpush1.xpose.msra.mxu0 0.0
    %5176 = vmatprep.subr.mxu0 0.0
    %5177 = vmatpush1.xpose.msra.mxu0 0.0
    %5178 = vmatprep.subr.mxu0 0.0
    %5179 = vmatpush1.xpose.msra.mxu0 0.0
    %5180 = vmatprep.subr.mxu0 0.0
    %5181 = vmatpush1.xpose.msra.mxu0 0.0
    %5182 = vmatprep.subr.mxu0 0.0
    %5183 = vmatpush1.xpose.msra.mxu0 0.0
    %5184 = vmatprep.mubr.f32.mxu0 0.0
    %5185 = vmatmul.mubr.f32.gmra.mrb[0].mxu0 %v5112
    %v5186 = vpop.f32.mrb[0].mxu0
    %v5187 = vadd.f32 0.0, %v5186
    %v5188 = vpop.f32.mrb[0].mxu0
    %5189 = vmatprep.mubr.f32.mxu0 0.0
    %5190 = vmatmul.mubr.f32.gmra.mrb[0].mxu0 %v5114
    %v5191 = vpop.f32.mrb[0].mxu0
    %v5192 = vadd.f32 0.0, %v5191
    %v5193 = vpop.f32.mrb[0].mxu0
    %5194 = vdwg.mxu0
    %v5195 = vmul.f32 %v5187, 0.35355338
    %v5196 = vmul.f32 %v5192, 0.35355338
    %v5197 = vsel %vm38, -1e+09, %v5195
    %v5198 = vsel %vm39, -1e+09, %v5196
    %v5199 = vsel %vm2794, %v5197, -inf
    %5200 = vmax.xlane.f32.xlu0 %v5199
    %v5201 = vpop.xlane.xlu0 %5200
    %v5202 = vsel %vm2794, %v5198, -inf
    %5203 = vmax.xlane.f32.xlu0 %v5202
    %v5204 = vpop.xlane.xlu0 %5203
    %v5205 = vsub.f32 %v5197, %v5201
    %v5206 = vsub.f32 %v5198, %v5204
    %v5207 = vmul.f32 %v5205, 1.442695
    %v5208 = vpow.pop %v5207
    %v5209 = vmul.f32 %v5206, 1.442695
    %v5210 = vpow.pop %v5209
    %v5211 = vsel %vm2794, %v5208, 0.0
    %5212 = vadd.xlane.f32.xlu0 %v5211
    %v5213 = vpop.xlane.xlu0 %5212
    %v5214 = vsel %vm2794, %v5210, 0.0
    %5215 = vadd.xlane.f32.xlu0 %v5214
    %v5216 = vpop.xlane.xlu0 %5215
    %v5217 = vrcp.pop %v5213
    %v5218 = vrcp.pop %v5216
    %v5219 = vmul.f32 %v5208, %v5217
    %v5220 = vmul.f32 %v5210, %v5218
    %5221 = vrot.lane.b32.xlu0 %v4238, 40
    %v5222 = vpop.permute.xlu0 %5221
    %5223 = vrot.lane.b32.xlu0 %v4243, 40
    %v5224 = vpop.permute.xlu0 %5223
    %v5228 = vsel %vm2794, %v5219, 0
    %v5231 = vsel %vm2794, %v5220, 0
    %5233 = vmatprep.subr.mxu0 0.0
    %5234 = vmatpush1.msra.mxu0 %v5222
    %5235 = vmatprep.subr.mxu0 0.0
    %5236 = vmatpush1.msra.mxu0 %v5224
    %5237 = vmatprep.subr.mxu0 0.0
    %5238 = vmatpush1.msra.mxu0 0.0
    %5239 = vmatprep.subr.mxu0 0.0
    %5240 = vmatpush1.msra.mxu0 0.0
    %5241 = vmatprep.subr.mxu0 0.0
    %5242 = vmatpush1.msra.mxu0 0.0
    %5243 = vmatprep.subr.mxu0 0.0
    %5244 = vmatpush1.msra.mxu0 0.0
    %5245 = vmatprep.subr.mxu0 0.0
    %5246 = vmatpush1.msra.mxu0 0.0
    %5247 = vmatprep.subr.mxu0 0.0
    %5248 = vmatpush1.msra.mxu0 0.0
    %5249 = vmatprep.subr.mxu0 0.0
    %5250 = vmatpush1.msra.mxu0 0.0
    %5251 = vmatprep.subr.mxu0 0.0
    %5252 = vmatpush1.msra.mxu0 0.0
    %5253 = vmatprep.subr.mxu0 0.0
    %5254 = vmatpush1.msra.mxu0 0.0
    %5255 = vmatprep.subr.mxu0 0.0
    %5256 = vmatpush1.msra.mxu0 0.0
    %5257 = vmatprep.subr.mxu0 0.0
    %5258 = vmatpush1.msra.mxu0 0.0
    %5259 = vmatprep.subr.mxu0 0.0
    %5260 = vmatpush1.msra.mxu0 0.0
    %5261 = vmatprep.subr.mxu0 0.0
    %5262 = vmatpush1.msra.mxu0 0.0
    %5263 = vmatprep.subr.mxu0 0.0
    %5264 = vmatpush1.msra.mxu0 0.0
    %5265 = vmatprep.subr.mxu0 0.0
    %5266 = vmatpush1.msra.mxu0 0.0
    %5267 = vmatprep.subr.mxu0 0.0
    %5268 = vmatpush1.msra.mxu0 0.0
    %5269 = vmatprep.subr.mxu0 0.0
    %5270 = vmatpush1.msra.mxu0 0.0
    %5271 = vmatprep.subr.mxu0 0.0
    %5272 = vmatpush1.msra.mxu0 0.0
    %5273 = vmatprep.subr.mxu0 0.0
    %5274 = vmatpush1.msra.mxu0 0.0
    %5275 = vmatprep.subr.mxu0 0.0
    %5276 = vmatpush1.msra.mxu0 0.0
    %5277 = vmatprep.subr.mxu0 0.0
    %5278 = vmatpush1.msra.mxu0 0.0
    %5279 = vmatprep.subr.mxu0 0.0
    %5280 = vmatpush1.msra.mxu0 0.0
    %5281 = vmatprep.subr.mxu0 0.0
    %5282 = vmatpush1.msra.mxu0 0.0
    %5283 = vmatprep.subr.mxu0 0.0
    %5284 = vmatpush1.msra.mxu0 0.0
    %5285 = vmatprep.subr.mxu0 0.0
    %5286 = vmatpush1.msra.mxu0 0.0
    %5287 = vmatprep.subr.mxu0 0.0
    %5288 = vmatpush1.msra.mxu0 0.0
    %5289 = vmatprep.subr.mxu0 0.0
    %5290 = vmatpush1.msra.mxu0 0.0
    %5291 = vmatprep.subr.mxu0 0.0
    %5292 = vmatpush1.msra.mxu0 0.0
    %5293 = vmatprep.subr.mxu0 0.0
    %5294 = vmatpush1.msra.mxu0 0.0
    %5295 = vmatprep.subr.mxu0 0.0
    %5296 = vmatpush1.msra.mxu0 0.0
    %5297 = vmatprep.mubr.f32.mxu0 0.0
    %5298 = vmatmul.mubr.f32.gmra.mrb[0].mxu0 %v5228
    %v5299 = vpop.f32.mrb[0].mxu0
    %v5300 = vadd.f32 0.0, %v5299
    %v5301 = vpop.f32.mrb[0].mxu0
    %5302 = vmatprep.mubr.f32.mxu0 0.0
    %5303 = vmatmul.mubr.f32.gmra.mrb[0].mxu0 %v5231
    %v5304 = vpop.f32.mrb[0].mxu0
    %v5305 = vadd.f32 0.0, %v5304
    %v5306 = vpop.f32.mrb[0].mxu0
    %5307 = vdwg.mxu0
    %v5308 = vld [vmem:[#allocation3 + $0x158] sm:$0xff]
    %v5310 = vsel %vm2706, %v5300, 0
    %v5313 = vsel %vm2706, %v5305, 0
    %5315 = vmatprep.subr.mxu0 0.0
    %5316 = vmatpush1.msra.mxu0 %v5308
    %5317 = vmatprep.subr.mxu0 0.0
    %5318 = vmatpush1.msra.mxu0 0.0
    %5319 = vmatprep.subr.mxu0 0.0
    %5320 = vmatpush1.msra.mxu0 0.0
    %5321 = vmatprep.subr.mxu0 0.0
    %5322 = vmatpush1.msra.mxu0 0.0
    %5323 = vmatprep.subr.mxu0 0.0
    %5324 = vmatpush1.msra.mxu0 0.0
    %5325 = vmatprep.subr.mxu0 0.0
    %5326 = vmatpush1.msra.mxu0 0.0
    %5327 = vmatprep.subr.mxu0 0.0
    %5328 = vmatpush1.msra.mxu0 0.0
    %5329 = vmatprep.subr.mxu0 0.0
    %5330 = vmatpush1.msra.mxu0 0.0
    %5331 = vmatprep.subr.mxu0 0.0
    %5332 = vmatpush1.msra.mxu0 0.0
    %5333 = vmatprep.subr.mxu0 0.0
    %5334 = vmatpush1.msra.mxu0 0.0
    %5335 = vmatprep.subr.mxu0 0.0
    %5336 = vmatpush1.msra.mxu0 0.0
    %5337 = vmatprep.subr.mxu0 0.0
    %5338 = vmatpush1.msra.mxu0 0.0
    %5339 = vmatprep.subr.mxu0 0.0
    %5340 = vmatpush1.msra.mxu0 0.0
    %5341 = vmatprep.subr.mxu0 0.0
    %5342 = vmatpush1.msra.mxu0 0.0
    %5343 = vmatprep.subr.mxu0 0.0
    %5344 = vmatpush1.msra.mxu0 0.0
    %5345 = vmatprep.subr.mxu0 0.0
    %5346 = vmatpush1.msra.mxu0 0.0
    %5347 = vmatprep.subr.mxu0 0.0
    %5348 = vmatpush1.msra.mxu0 0.0
    %5349 = vmatprep.subr.mxu0 0.0
    %5350 = vmatpush1.msra.mxu0 0.0
    %5351 = vmatprep.subr.mxu0 0.0
    %5352 = vmatpush1.msra.mxu0 0.0
    %5353 = vmatprep.subr.mxu0 0.0
    %5354 = vmatpush1.msra.mxu0 0.0
    %5355 = vmatprep.subr.mxu0 0.0
    %5356 = vmatpush1.msra.mxu0 0.0
    %5357 = vmatprep.subr.mxu0 0.0
    %5358 = vmatpush1.msra.mxu0 0.0
    %5359 = vmatprep.subr.mxu0 0.0
    %5360 = vmatpush1.msra.mxu0 0.0
    %5361 = vmatprep.subr.mxu0 0.0
    %5362 = vmatpush1.msra.mxu0 0.0
    %5363 = vmatprep.subr.mxu0 0.0
    %5364 = vmatpush1.msra.mxu0 0.0
    %5365 = vmatprep.subr.mxu0 0.0
    %5366 = vmatpush1.msra.mxu0 0.0
    %5367 = vmatprep.subr.mxu0 0.0
    %5368 = vmatpush1.msra.mxu0 0.0
    %5369 = vmatprep.subr.mxu0 0.0
    %5370 = vmatpush1.msra.mxu0 0.0
    %5371 = vmatprep.subr.mxu0 0.0
    %5372 = vmatpush1.msra.mxu0 0.0
    %5373 = vmatprep.subr.mxu0 0.0
    %5374 = vmatpush1.msra.mxu0 0.0
    %5375 = vmatprep.subr.mxu0 0.0
    %5376 = vmatpush1.msra.mxu0 0.0
    %5377 = vmatprep.subr.mxu0 0.0
    %5378 = vmatpush1.msra.mxu0 0.0
    %5379 = vmatprep.mubr.f32.mxu0 0.0
    %5380 = vmatmul.mubr.f32.gmra.mrb[0].mxu0 %v5310
    %v5381 = vpop.f32.mrb[0].mxu0
    %v5382 = vadd.f32 0.0, %v5381
    %v5383 = vpop.f32.mrb[0].mxu0
    %5384 = vmatprep.mubr.f32.mxu0 0.0
    %5385 = vmatmul.mubr.f32.gmra.mrb[0].mxu0 %v5313
    %v5386 = vpop.f32.mrb[0].mxu0
    %v5387 = vadd.f32 0.0, %v5386
    %v5388 = vpop.f32.mrb[0].mxu0
    %5389 = vdwg.mxu0
    %v5390 = vadd.f32 %v5102, %v5382
    %v5391 = vadd.f32 %v5103, %v5387
    %v5392 = vld [vmem:[%s4 + $0xb] sm:$0x1]
    %v5393 = vlaneseq
    %v5394 = vshrl.u32 %v5393, 7
    %v5395 = vsub.s32 0, %v5394
    %v5396 = vrot.slane %v5392, %v5395
    %v5397 = vadd.f32 %v5390, %v5396
    %v5398 = vadd.f32 %v5391, %v5396
    %v5399 = vadd.f32 %v4154, %v5397
    %v5400 = vadd.f32 %v4155, %v5398
    %v5401 = vld [vmem:[%s4 + $0xe] sm:$0x1]
    %v5402 = vld [vmem:[%s4 + $0xf] sm:$0x1]
    %v5403 = vsel %vm53, %v5399, 0.0
    %5404 = vadd.xlane.f32.xlu0 %v5403
    %v5405 = vpop.xlane.xlu0 %5404
    %v5406 = vsel %vm53, %v5400, 0.0
    %5407 = vadd.xlane.f32.xlu0 %v5406
    %v5408 = vpop.xlane.xlu0 %5407
    %v5409 = vmul.f32 %v5405, %v3865
    %v5410 = vmul.f32 %v5408, %v3865
    %v5411 = vsub.f32 %v5399, %v5409
    %v5412 = vsub.f32 %v5400, %v5410
    %v5413 = vmul.f32 %v5411, %v5411
    %v5414 = vmul.f32 %v5412, %v5412
    %v5415 = vsel %vm53, %v5413, 0.0
    %5416 = vadd.xlane.f32.xlu0 %v5415
    %v5417 = vpop.xlane.xlu0 %5416
    %v5418 = vsel %vm53, %v5414, 0.0
    %5419 = vadd.xlane.f32.xlu0 %v5418
    %v5420 = vpop.xlane.xlu0 %5419
    %v5421 = vmul.f32 %v5417, %v3878
    %v5422 = vmul.f32 %v5420, %v3878
    %v5423 = vlaneseq
    %v5424 = vshrl.u32 %v5423, 7
    %v5425 = vsub.s32 0, %v5424
    %v5426 = vrot.slane %v5401, %v5425
    %v5427 = vmul.f32 %v5426, %v5411
    %v5428 = vmul.f32 %v5426, %v5412
    %v5429 = vrsqrt.pop %v5421
    %v5430 = vmul.f32 %v5421, %v5429
    %vm5431 = vcmp.eq.f32.partialorder %v5421, inf
    %v5432 = vsel %vm5431, %v5421, %v5430
    %vm5433 = vcmp.eq.f32.partialorder %v5421, 0.0
    %v5434 = vand.u32 %v5421, 2147483648
    %v5435 = vsel %vm5433, %v5434, %v5432
    %v5436 = vrsqrt.pop %v5422
    %v5437 = vmul.f32 %v5422, %v5436
    %vm5438 = vcmp.eq.f32.partialorder %v5422, inf
    %v5439 = vsel %vm5438, %v5422, %v5437
    %vm5440 = vcmp.eq.f32.partialorder %v5422, 0.0
    %v5441 = vand.u32 %v5422, 2147483648
    %v5442 = vsel %vm5440, %v5441, %v5439
    %v5443 = vadd.f32 %v5435, 1e-06
    %v5444 = vadd.f32 %v5442, 1e-06
    %v5445 = vrcp.pop %v5443
    %v5446 = vmul.f32 %v5427, %v5445
    %v5447 = vrcp.pop %v5444
    %v5448 = vmul.f32 %v5428, %v5447
    %v5449 = vlaneseq
    %v5450 = vshrl.u32 %v5449, 7
    %v5451 = vsub.s32 0, %v5450
    %v5452 = vrot.slane %v5402, %v5451
    %v5453 = vadd.f32 %v5446, %v5452
    %v5454 = vadd.f32 %v5448, %v5452
    %v5455 = vld [vmem:[#allocation3 + $0x160] sm:$0xff]
    %v5456 = vld [vmem:[#allocation3 + $0x168] sm:$0xff]
    %v5457 = vld [vmem:[#allocation3 + $0x170] sm:$0xff]
    %v5458 = vld [vmem:[#allocation3 + $0x178] sm:$0xff]
    %v5459 = vld [vmem:[%s4 + $0xc] sm:$0x1]
    %v5460 = vlaneseq
    %v5461 = vshrl.u32 %v5460, 7
    %v5462 = vsub.s32 0, %v5461
    %v5463 = vrot.slane %v5459, %v5462
    %v5465 = vsel %vm53, %v5453, 0
    %v5468 = vsel %vm53, %v5454, 0
    %5470 = vmatprep.subr.mxu0 0.0
    %5471 = vmatpush1.msra.mxu0 %v5455
    %5472 = vmatprep.subr.mxu0 0.0
    %5473 = vmatpush1.msra.mxu0 %v5456
    %5474 = vmatprep.subr.mxu0 0.0
    %5475 = vmatpush1.msra.mxu0 %v5457
    %5476 = vmatprep.subr.mxu0 0.0
    %5477 = vmatpush1.msra.mxu0 %v5458
    %5478 = vmatprep.subr.mxu0 0.0
    %5479 = vmatpush1.msra.mxu0 0.0
    %5480 = vmatprep.subr.mxu0 0.0
    %5481 = vmatpush1.msra.mxu0 0.0
    %5482 = vmatprep.subr.mxu0 0.0
    %5483 = vmatpush1.msra.mxu0 0.0
    %5484 = vmatprep.subr.mxu0 0.0
    %5485 = vmatpush1.msra.mxu0 0.0
    %5486 = vmatprep.subr.mxu0 0.0
    %5487 = vmatpush1.msra.mxu0 0.0
    %5488 = vmatprep.subr.mxu0 0.0
    %5489 = vmatpush1.msra.mxu0 0.0
    %5490 = vmatprep.subr.mxu0 0.0
    %5491 = vmatpush1.msra.mxu0 0.0
    %5492 = vmatprep.subr.mxu0 0.0
    %5493 = vmatpush1.msra.mxu0 0.0
    %5494 = vmatprep.subr.mxu0 0.0
    %5495 = vmatpush1.msra.mxu0 0.0
    %5496 = vmatprep.subr.mxu0 0.0
    %5497 = vmatpush1.msra.mxu0 0.0
    %5498 = vmatprep.subr.mxu0 0.0
    %5499 = vmatpush1.msra.mxu0 0.0
    %5500 = vmatprep.subr.mxu0 0.0
    %5501 = vmatpush1.msra.mxu0 0.0
    %5502 = vmatprep.subr.mxu0 0.0
    %5503 = vmatpush1.msra.mxu0 0.0
    %5504 = vmatprep.subr.mxu0 0.0
    %5505 = vmatpush1.msra.mxu0 0.0
    %5506 = vmatprep.subr.mxu0 0.0
    %5507 = vmatpush1.msra.mxu0 0.0
    %5508 = vmatprep.subr.mxu0 0.0
    %5509 = vmatpush1.msra.mxu0 0.0
    %5510 = vmatprep.subr.mxu0 0.0
    %5511 = vmatpush1.msra.mxu0 0.0
    %5512 = vmatprep.subr.mxu0 0.0
    %5513 = vmatpush1.msra.mxu0 0.0
    %5514 = vmatprep.subr.mxu0 0.0
    %5515 = vmatpush1.msra.mxu0 0.0
    %5516 = vmatprep.subr.mxu0 0.0
    %5517 = vmatpush1.msra.mxu0 0.0
    %5518 = vmatprep.subr.mxu0 0.0
    %5519 = vmatpush1.msra.mxu0 0.0
    %5520 = vmatprep.subr.mxu0 0.0
    %5521 = vmatpush1.msra.mxu0 0.0
    %5522 = vmatprep.subr.mxu0 0.0
    %5523 = vmatpush1.msra.mxu0 0.0
    %5524 = vmatprep.subr.mxu0 0.0
    %5525 = vmatpush1.msra.mxu0 0.0
    %5526 = vmatprep.subr.mxu0 0.0
    %5527 = vmatpush1.msra.mxu0 0.0
    %5528 = vmatprep.subr.mxu0 0.0
    %5529 = vmatpush1.msra.mxu0 0.0
    %5530 = vmatprep.subr.mxu0 0.0
    %5531 = vmatpush1.msra.mxu0 0.0
    %5532 = vmatprep.subr.mxu0 0.0
    %5533 = vmatpush1.msra.mxu0 0.0
    %5534 = vmatprep.mubr.f32.mxu0 0.0
    %5535 = vmatmul.mubr.f32.gmra.mrb[0].mxu0 %v5465
    %v5536 = vpop.f32.mrb[0].mxu0
    %v5537 = vadd.f32 %v5463, %v5536
    %v5538 = vpop.f32.mrb[0].mxu0
    %5539 = vmatprep.mubr.f32.mxu0 0.0
    %5540 = vmatmul.mubr.f32.gmra.mrb[0].mxu0 %v5468
    %v5541 = vpop.f32.mrb[0].mxu0
    %v5542 = vadd.f32 %v5463, %v5541
    %v5543 = vpop.f32.mrb[0].mxu0
    %5544 = vdwg.mxu0
    %v5545 = vmax.f32 %v5537, 0.0
    %v5546 = vmax.f32 %v5542, 0.0
    %v5547 = vld [vmem:[#allocation3 + $0x180] sm:$0xff]
    %v5548 = vld [vmem:[#allocation3 + $0x188] sm:$0xff]
    %v5549 = vld [vmem:[#allocation3 + $0x190] sm:$0xff]
    %v5550 = vld [vmem:[#allocation3 + $0x198] sm:$0xff]
    %v5551 = vld [vmem:[#allocation3 + $0x1a0] sm:$0xff]
    %v5552 = vld [vmem:[#allocation3 + $0x1a8] sm:$0xff]
    %v5553 = vld [vmem:[#allocation3 + $0x1b0] sm:$0xff]
    %v5554 = vld [vmem:[#allocation3 + $0x1b8] sm:$0xff]
    %v5555 = vld [vmem:[%s4 + $0xd] sm:$0x1]
    %v5556 = vlaneseq
    %v5557 = vshrl.u32 %v5556, 7
    %v5558 = vsub.s32 0, %v5557
    %v5559 = vrot.slane %v5555, %v5558
    %v5561 = vsel %vm4018, %v5545, 0
    %v5564 = vsel %vm4018, %v5546, 0
    %5566 = vmatprep.subr.mxu0 0.0
    %5567 = vmatpush1.msra.mxu0 %v5547
    %5568 = vmatprep.subr.mxu0 0.0
    %5569 = vmatpush1.msra.mxu0 %v5548
    %5570 = vmatprep.subr.mxu0 0.0
    %5571 = vmatpush1.msra.mxu0 %v5549
    %5572 = vmatprep.subr.mxu0 0.0
    %5573 = vmatpush1.msra.mxu0 %v5550
    %5574 = vmatprep.subr.mxu0 0.0
    %5575 = vmatpush1.msra.mxu0 %v5551
    %5576 = vmatprep.subr.mxu0 0.0
    %5577 = vmatpush1.msra.mxu0 %v5552
    %5578 = vmatprep.subr.mxu0 0.0
    %5579 = vmatpush1.msra.mxu0 %v5553
    %5580 = vmatprep.subr.mxu0 0.0
    %5581 = vmatpush1.msra.mxu0 %v5554
    %5582 = vmatprep.subr.mxu0 0.0
    %5583 = vmatpush1.msra.mxu0 0.0
    %5584 = vmatprep.subr.mxu0 0.0
    %5585 = vmatpush1.msra.mxu0 0.0
    %5586 = vmatprep.subr.mxu0 0.0
    %5587 = vmatpush1.msra.mxu0 0.0
    %5588 = vmatprep.subr.mxu0 0.0
    %5589 = vmatpush1.msra.mxu0 0.0
    %5590 = vmatprep.subr.mxu0 0.0
    %5591 = vmatpush1.msra.mxu0 0.0
    %5592 = vmatprep.subr.mxu0 0.0
    %5593 = vmatpush1.msra.mxu0 0.0
    %5594 = vmatprep.subr.mxu0 0.0
    %5595 = vmatpush1.msra.mxu0 0.0
    %5596 = vmatprep.subr.mxu0 0.0
    %5597 = vmatpush1.msra.mxu0 0.0
    %5598 = vmatprep.subr.mxu0 0.0
    %5599 = vmatpush1.msra.mxu0 0.0
    %5600 = vmatprep.subr.mxu0 0.0
    %5601 = vmatpush1.msra.mxu0 0.0
    %5602 = vmatprep.subr.mxu0 0.0
    %5603 = vmatpush1.msra.mxu0 0.0
    %5604 = vmatprep.subr.mxu0 0.0
    %5605 = vmatpush1.msra.mxu0 0.0
    %5606 = vmatprep.subr.mxu0 0.0
    %5607 = vmatpush1.msra.mxu0 0.0
    %5608 = vmatprep.subr.mxu0 0.0
    %5609 = vmatpush1.msra.mxu0 0.0
    %5610 = vmatprep.subr.mxu0 0.0
    %5611 = vmatpush1.msra.mxu0 0.0
    %5612 = vmatprep.subr.mxu0 0.0
    %5613 = vmatpush1.msra.mxu0 0.0
    %5614 = vmatprep.subr.mxu0 0.0
    %5615 = vmatpush1.msra.mxu0 0.0
    %5616 = vmatprep.subr.mxu0 0.0
    %5617 = vmatpush1.msra.mxu0 0.0
    %5618 = vmatprep.subr.mxu0 0.0
    %5619 = vmatpush1.msra.mxu0 0.0
    %5620 = vmatprep.subr.mxu0 0.0
    %5621 = vmatpush1.msra.mxu0 0.0
    %5622 = vmatprep.subr.mxu0 0.0
    %5623 = vmatpush1.msra.mxu0 0.0
    %5624 = vmatprep.subr.mxu0 0.0
    %5625 = vmatpush1.msra.mxu0 0.0
    %5626 = vmatprep.subr.mxu0 0.0
    %5627 = vmatpush1.msra.mxu0 0.0
    %5628 = vmatprep.subr.mxu0 0.0
    %5629 = vmatpush1.msra.mxu0 0.0
    %5630 = vmatprep.mubr.f32.mxu0 0.0
    %5631 = vmatmul.mubr.f32.gmra.mrb[0].mxu0 %v5561
    %v5632 = vpop.f32.mrb[0].mxu0
    %v5633 = vadd.f32 %v5559, %v5632
    %v5634 = vpop.f32.mrb[0].mxu0
    %5635 = vmatprep.mubr.f32.mxu0 0.0
    %5636 = vmatmul.mubr.f32.gmra.mrb[0].mxu0 %v5564
    %v5637 = vpop.f32.mrb[0].mxu0
    %v5638 = vadd.f32 %v5559, %v5637
    %v5639 = vpop.f32.mrb[0].mxu0
    %5640 = vdwg.mxu0
    %v5641 = vadd.f32 %v5453, %v5633
    %v5642 = vadd.f32 %v5454, %v5638
    %v5643 = vld [vmem:[%s4 + $0x10] sm:$0x1]
    %v5644 = vld [vmem:[%s4 + $0x11] sm:$0x1]
    %v5645 = vsel %vm53, %v5641, 0.0
    %5646 = vadd.xlane.f32.xlu0 %v5645
    %v5647 = vpop.xlane.xlu0 %5646
    %v5648 = vsel %vm53, %v5642, 0.0
    %5649 = vadd.xlane.f32.xlu0 %v5648
    %v5650 = vpop.xlane.xlu0 %5649
    %v5651 = vmul.f32 %v5647, %v3865
    %v5652 = vmul.f32 %v5650, %v3865
    %v5653 = vsub.f32 %v5641, %v5651
    %v5654 = vsub.f32 %v5642, %v5652
    %v5655 = vmul.f32 %v5653, %v5653
    %v5656 = vmul.f32 %v5654, %v5654
    %v5657 = vsel %vm53, %v5655, 0.0
    %5658 = vadd.xlane.f32.xlu0 %v5657
    %v5659 = vpop.xlane.xlu0 %5658
    %v5660 = vsel %vm53, %v5656, 0.0
    %5661 = vadd.xlane.f32.xlu0 %v5660
    %v5662 = vpop.xlane.xlu0 %5661
    %v5663 = vmul.f32 %v5659, %v3878
    %v5664 = vmul.f32 %v5662, %v3878
    %v5665 = vlaneseq
    %v5666 = vshrl.u32 %v5665, 7
    %v5667 = vsub.s32 0, %v5666
    %v5668 = vrot.slane %v5643, %v5667
    %v5669 = vmul.f32 %v5668, %v5653
    %v5670 = vmul.f32 %v5668, %v5654
    %v5671 = vrsqrt.pop %v5663
    %v5672 = vmul.f32 %v5663, %v5671
    %vm5673 = vcmp.eq.f32.partialorder %v5663, inf
    %v5674 = vsel %vm5673, %v5663, %v5672
    %vm5675 = vcmp.eq.f32.partialorder %v5663, 0.0
    %v5676 = vand.u32 %v5663, 2147483648
    %v5677 = vsel %vm5675, %v5676, %v5674
    %v5678 = vrsqrt.pop %v5664
    %v5679 = vmul.f32 %v5664, %v5678
    %vm5680 = vcmp.eq.f32.partialorder %v5664, inf
    %v5681 = vsel %vm5680, %v5664, %v5679
    %vm5682 = vcmp.eq.f32.partialorder %v5664, 0.0
    %v5683 = vand.u32 %v5664, 2147483648
    %v5684 = vsel %vm5682, %v5683, %v5681
    %v5685 = vadd.f32 %v5677, 1e-06
    %v5686 = vadd.f32 %v5684, 1e-06
    %v5687 = vrcp.pop %v5685
    %v5688 = vmul.f32 %v5669, %v5687
    %v5689 = vrcp.pop %v5686
    %v5690 = vmul.f32 %v5670, %v5689
    %v5691 = vlaneseq
    %v5692 = vshrl.u32 %v5691, 7
    %v5693 = vsub.s32 0, %v5692
    %v5694 = vrot.slane %v5644, %v5693
    %v5695 = vadd.f32 %v5688, %v5694
    %v5696 = vadd.f32 %v5690, %v5694
    %v5697 = vld [vmem:[#allocation3 + $0x1c0] sm:$0xff]
    %v5698 = vld [vmem:[#allocation3 + $0x1c8] sm:$0xff]
    %v5699 = vld [vmem:[#allocation3 + $0x1d0] sm:$0xff]
    %v5700 = vld [vmem:[#allocation3 + $0x1d8] sm:$0xff]
    %v5701 = vld [vmem:[%s4 + $0x12] sm:$0x1]
    %v5702 = vlaneseq
    %v5703 = vshrl.u32 %v5702, 7
    %v5704 = vsub.s32 0, %v5703
    %v5705 = vrot.slane %v5701, %v5704
    %v5707 = vsel %vm53, %v5695, 0
    %v5710 = vsel %vm53, %v5696, 0
    %5712 = vmatprep.subr.mxu0 0.0
    %5713 = vmatpush1.msra.mxu0 %v5697
    %5714 = vmatprep.subr.mxu0 0.0
    %5715 = vmatpush1.msra.mxu0 %v5698
    %5716 = vmatprep.subr.mxu0 0.0
    %5717 = vmatpush1.msra.mxu0 %v5699
    %5718 = vmatprep.subr.mxu0 0.0
    %5719 = vmatpush1.msra.mxu0 %v5700
    %5720 = vmatprep.subr.mxu0 0.0
    %5721 = vmatpush1.msra.mxu0 0.0
    %5722 = vmatprep.subr.mxu0 0.0
    %5723 = vmatpush1.msra.mxu0 0.0
    %5724 = vmatprep.subr.mxu0 0.0
    %5725 = vmatpush1.msra.mxu0 0.0
    %5726 = vmatprep.subr.mxu0 0.0
    %5727 = vmatpush1.msra.mxu0 0.0
    %5728 = vmatprep.subr.mxu0 0.0
    %5729 = vmatpush1.msra.mxu0 0.0
    %5730 = vmatprep.subr.mxu0 0.0
    %5731 = vmatpush1.msra.mxu0 0.0
    %5732 = vmatprep.subr.mxu0 0.0
    %5733 = vmatpush1.msra.mxu0 0.0
    %5734 = vmatprep.subr.mxu0 0.0
    %5735 = vmatpush1.msra.mxu0 0.0
    %5736 = vmatprep.subr.mxu0 0.0
    %5737 = vmatpush1.msra.mxu0 0.0
    %5738 = vmatprep.subr.mxu0 0.0
    %5739 = vmatpush1.msra.mxu0 0.0
    %5740 = vmatprep.subr.mxu0 0.0
    %5741 = vmatpush1.msra.mxu0 0.0
    %5742 = vmatprep.subr.mxu0 0.0
    %5743 = vmatpush1.msra.mxu0 0.0
    %5744 = vmatprep.subr.mxu0 0.0
    %5745 = vmatpush1.msra.mxu0 0.0
    %5746 = vmatprep.subr.mxu0 0.0
    %5747 = vmatpush1.msra.mxu0 0.0
    %5748 = vmatprep.subr.mxu0 0.0
    %5749 = vmatpush1.msra.mxu0 0.0
    %5750 = vmatprep.subr.mxu0 0.0
    %5751 = vmatpush1.msra.mxu0 0.0
    %5752 = vmatprep.subr.mxu0 0.0
    %5753 = vmatpush1.msra.mxu0 0.0
    %5754 = vmatprep.subr.mxu0 0.0
    %5755 = vmatpush1.msra.mxu0 0.0
    %5756 = vmatprep.subr.mxu0 0.0
    %5757 = vmatpush1.msra.mxu0 0.0
    %5758 = vmatprep.subr.mxu0 0.0
    %5759 = vmatpush1.msra.mxu0 0.0
    %5760 = vmatprep.subr.mxu0 0.0
    %5761 = vmatpush1.msra.mxu0 0.0
    %5762 = vmatprep.subr.mxu0 0.0
    %5763 = vmatpush1.msra.mxu0 0.0
    %5764 = vmatprep.subr.mxu0 0.0
    %5765 = vmatpush1.msra.mxu0 0.0
    %5766 = vmatprep.subr.mxu0 0.0
    %5767 = vmatpush1.msra.mxu0 0.0
    %5768 = vmatprep.subr.mxu0 0.0
    %5769 = vmatpush1.msra.mxu0 0.0
    %5770 = vmatprep.subr.mxu0 0.0
    %5771 = vmatpush1.msra.mxu0 0.0
    %5772 = vmatprep.subr.mxu0 0.0
    %5773 = vmatpush1.msra.mxu0 0.0
    %5774 = vmatprep.subr.mxu0 0.0
    %5775 = vmatpush1.msra.mxu0 0.0
    %5776 = vmatprep.mubr.f32.mxu0 0.0
    %5777 = vmatmul.mubr.f32.gmra.mrb[0].mxu0 %v5707
    %v5778 = vpop.f32.mrb[0].mxu0
    %v5779 = vadd.f32 %v5705, %v5778
    %v5780 = vpop.f32.mrb[0].mxu0
    %5781 = vmatprep.mubr.f32.mxu0 0.0
    %5782 = vmatmul.mubr.f32.gmra.mrb[0].mxu0 %v5710
    %v5783 = vpop.f32.mrb[0].mxu0
    %v5784 = vadd.f32 %v5705, %v5783
    %v5785 = vpop.f32.mrb[0].mxu0
    %5786 = vdwg.mxu0
    %v5787 = vmax.f32 %v5779, 0.0
    %v5788 = vmax.f32 %v5784, 0.0
    %v5789 = vld [vmem:[#allocation3 + $0x1e0] sm:$0xff]
    %v5790 = vld [vmem:[#allocation3 + $0x1e8] sm:$0xff]
    %v5791 = vld [vmem:[#allocation3 + $0x1f0] sm:$0xff]
    %v5792 = vld [vmem:[#allocation3 + $0x1f8] sm:$0xff]
    %v5793 = vld [vmem:[%s4 + $0x13] sm:$0x1]
    %v5794 = vlaneseq
    %v5795 = vshrl.u32 %v5794, 7
    %v5796 = vsub.s32 0, %v5795
    %v5797 = vrot.slane %v5793, %v5796
    %v5799 = vsel %vm53, %v5787, 0
    %v5802 = vsel %vm53, %v5788, 0
    %5804 = vmatprep.subr.mxu0 0.0
    %5805 = vmatpush1.msra.mxu0 %v5789
    %5806 = vmatprep.subr.mxu0 0.0
    %5807 = vmatpush1.msra.mxu0 %v5790
    %5808 = vmatprep.subr.mxu0 0.0
    %5809 = vmatpush1.msra.mxu0 %v5791
    %5810 = vmatprep.subr.mxu0 0.0
    %5811 = vmatpush1.msra.mxu0 %v5792
    %5812 = vmatprep.subr.mxu0 0.0
    %5813 = vmatpush1.msra.mxu0 0.0
    %5814 = vmatprep.subr.mxu0 0.0
    %5815 = vmatpush1.msra.mxu0 0.0
    %5816 = vmatprep.subr.mxu0 0.0
    %5817 = vmatpush1.msra.mxu0 0.0
    %5818 = vmatprep.subr.mxu0 0.0
    %5819 = vmatpush1.msra.mxu0 0.0
    %5820 = vmatprep.subr.mxu0 0.0
    %5821 = vmatpush1.msra.mxu0 0.0
    %5822 = vmatprep.subr.mxu0 0.0
    %5823 = vmatpush1.msra.mxu0 0.0
    %5824 = vmatprep.subr.mxu0 0.0
    %5825 = vmatpush1.msra.mxu0 0.0
    %5826 = vmatprep.subr.mxu0 0.0
    %5827 = vmatpush1.msra.mxu0 0.0
    %5828 = vmatprep.subr.mxu0 0.0
    %5829 = vmatpush1.msra.mxu0 0.0
    %5830 = vmatprep.subr.mxu0 0.0
    %5831 = vmatpush1.msra.mxu0 0.0
    %5832 = vmatprep.subr.mxu0 0.0
    %5833 = vmatpush1.msra.mxu0 0.0
    %5834 = vmatprep.subr.mxu0 0.0
    %5835 = vmatpush1.msra.mxu0 0.0
    %5836 = vmatprep.subr.mxu0 0.0
    %5837 = vmatpush1.msra.mxu0 0.0
    %5838 = vmatprep.subr.mxu0 0.0
    %5839 = vmatpush1.msra.mxu0 0.0
    %5840 = vmatprep.subr.mxu0 0.0
    %5841 = vmatpush1.msra.mxu0 0.0
    %5842 = vmatprep.subr.mxu0 0.0
    %5843 = vmatpush1.msra.mxu0 0.0
    %5844 = vmatprep.subr.mxu0 0.0
    %5845 = vmatpush1.msra.mxu0 0.0
    %5846 = vmatprep.subr.mxu0 0.0
    %5847 = vmatpush1.msra.mxu0 0.0
    %5848 = vmatprep.subr.mxu0 0.0
    %5849 = vmatpush1.msra.mxu0 0.0
    %5850 = vmatprep.subr.mxu0 0.0
    %5851 = vmatpush1.msra.mxu0 0.0
    %5852 = vmatprep.subr.mxu0 0.0
    %5853 = vmatpush1.msra.mxu0 0.0
    %5854 = vmatprep.subr.mxu0 0.0
    %5855 = vmatpush1.msra.mxu0 0.0
    %5856 = vmatprep.subr.mxu0 0.0
    %5857 = vmatpush1.msra.mxu0 0.0
    %5858 = vmatprep.subr.mxu0 0.0
    %5859 = vmatpush1.msra.mxu0 0.0
    %5860 = vmatprep.subr.mxu0 0.0
    %5861 = vmatpush1.msra.mxu0 0.0
    %5862 = vmatprep.subr.mxu0 0.0
    %5863 = vmatpush1.msra.mxu0 0.0
    %5864 = vmatprep.subr.mxu0 0.0
    %5865 = vmatpush1.msra.mxu0 0.0
    %5866 = vmatprep.subr.mxu0 0.0
    %5867 = vmatpush1.msra.mxu0 0.0
    %5868 = vmatprep.mubr.f32.mxu0 0.0
    %5869 = vmatmul.mubr.f32.gmra.mrb[0].mxu0 %v5799
    %v5870 = vpop.f32.mrb[0].mxu0
    %v5871 = vadd.f32 %v5797, %v5870
    %v5872 = vpop.f32.mrb[0].mxu0
    %5873 = vmatprep.mubr.f32.mxu0 0.0
    %5874 = vmatmul.mubr.f32.gmra.mrb[0].mxu0 %v5802
    %v5875 = vpop.f32.mrb[0].mxu0
    %v5876 = vadd.f32 %v5797, %v5875
    %v5877 = vpop.f32.mrb[0].mxu0
    %5878 = vdwg.mxu0
    %v5879 = vsel %vm42, 1, 0
    %v5880 = vsel %vm43, 1, 0
    %5881 = vset.pattern.permute.xlu0 0
    %5882 = vperm.xlu0 %5881, %v5879
    %v5883 = vpop.permute.xlu0 %5882
    %5884 = vset.pattern.permute.xlu0 0
    %5885 = vperm.xlu0 %5884, %v5880
    %v5886 = vpop.permute.xlu0 %5885
    %vm5887 = vcmp.eq.s32.totalorder %v5883, 1
    %vm5888 = vcmp.eq.s32.totalorder %v5886, 1
    %v5889 = vsel %vm5887, -1e+09, %v5871
    %v5890 = vsel %vm5888, -1e+09, %v5876
    %vm5891 = vcmask 15360
    %v5892 = vsel %vm5891, %v5889, -inf
    %v5893 = vrot.slane %v5892, 4
    %v5894 = vmax.f32 %v5892, %v5893
    %v5895 = vrot.slane %v5894, 2
    %v5896 = vmax.f32 %v5894, %v5895
    %v5897 = vrot.slane %v5896, 1
    %v5898 = vmax.f32 %v5896, %v5897
    %v5899 = vsel %vm5891, %v5890, -inf
    %v5900 = vrot.slane %v5899, 4
    %v5901 = vmax.f32 %v5899, %v5900
    %v5902 = vrot.slane %v5901, 2
    %v5903 = vmax.f32 %v5901, %v5902
    %v5904 = vrot.slane %v5903, 1
    %v5905 = vmax.f32 %v5903, %v5904
    %v5906 = vsub.f32 %v5889, %v5898
    %v5907 = vsub.f32 %v5890, %v5905
    %v5908 = vmul.f32 %v5906, 1.442695
    %v5909 = vpow.pop %v5908
    %v5910 = vmul.f32 %v5907, 1.442695
    %v5911 = vpow.pop %v5910
    %v5912 = vsel %vm5891, %v5909, 0.0
    %v5913 = vrot.slane %v5912, 4
    %v5914 = vadd.f32 %v5912, %v5913
    %v5915 = vrot.slane %v5914, 2
    %v5916 = vadd.f32 %v5914, %v5915
    %v5917 = vrot.slane %v5916, 1
    %v5918 = vadd.f32 %v5916, %v5917
    %v5919 = vsel %vm5891, %v5911, 0.0
    %v5920 = vrot.slane %v5919, 4
    %v5921 = vadd.f32 %v5919, %v5920
    %v5922 = vrot.slane %v5921, 2
    %v5923 = vadd.f32 %v5921, %v5922
    %v5924 = vrot.slane %v5923, 1
    %v5925 = vadd.f32 %v5923, %v5924
    %v5926 = vrcp.pop %v5918
    %v5927 = vrcp.pop %v5925
    %v5928 = vmul.f32 %v5909, %v5926
    %v5929 = vmul.f32 %v5911, %v5927
    %v5930 = vld [vmem:[%s4 + $0x14] sm:$0x1]
    %5932 = vset.pattern.permute.xlu0 0
    %5933 = vperm.xlu0 %5932, %v5928
    %v5934 = vpop.permute.xlu0 %5933
    %5937 = vset.pattern.permute.xlu0 0
    %5938 = vperm.xlu0 %5937, %v5929
    %v5939 = vpop.permute.xlu0 %5938
    %v5941 = vmul.f32 %v5934, %v5695
    %v5942 = vmul.f32 %v5939, %v5696
    %v5943 = vsel %vm53, %v5941, 0.0
    %v5944 = vrot.slane %v5943, 4
    %v5945 = vadd.f32 %v5943, %v5944
    %v5946 = vrot.slane %v5945, 2
    %v5947 = vadd.f32 %v5945, %v5946
    %v5948 = vrot.slane %v5947, 1
    %v5949 = vadd.f32 %v5947, %v5948
    %v5950 = vsel %vm53, %v5942, 0.0
    %v5951 = vrot.slane %v5950, 4
    %v5952 = vadd.f32 %v5950, %v5951
    %v5953 = vrot.slane %v5952, 2
    %v5954 = vadd.f32 %v5952, %v5953
    %v5955 = vrot.slane %v5954, 1
    %v5956 = vadd.f32 %v5954, %v5955
    %v5957 = vld [vmem:[#allocation3 + $0x200] sm:$0xff]
    %v5958 = vld [vmem:[#allocation3 + $0x208] sm:$0xff]
    %v5959 = vld [vmem:[#allocation3 + $0x210] sm:$0xff]
    %v5960 = vld [vmem:[#allocation3 + $0x218] sm:$0xff]
    %v5963 = vsel %vm451, %v5956, %v5949
    %v5964 = vsel %vm53, %v5963, 0
    %5966 = vmatprep.subr.mxu0 0.0
    %5967 = vmatpush1.msra.mxu0 %v5957
    %5968 = vmatprep.subr.mxu0 0.0
    %5969 = vmatpush1.msra.mxu0 %v5958
    %5970 = vmatprep.subr.mxu0 0.0
    %5971 = vmatpush1.msra.mxu0 %v5959
    %5972 = vmatprep.subr.mxu0 0.0
    %5973 = vmatpush1.msra.mxu0 %v5960
    %5974 = vmatprep.subr.mxu0 0.0
    %5975 = vmatpush1.msra.mxu0 0.0
    %5976 = vmatprep.subr.mxu0 0.0
    %5977 = vmatpush1.msra.mxu0 0.0
    %5978 = vmatprep.subr.mxu0 0.0
    %5979 = vmatpush1.msra.mxu0 0.0
    %5980 = vmatprep.subr.mxu0 0.0
    %5981 = vmatpush1.msra.mxu0 0.0
    %5982 = vmatprep.subr.mxu0 0.0
    %5983 = vmatpush1.msra.mxu0 0.0
    %5984 = vmatprep.subr.mxu0 0.0
    %5985 = vmatpush1.msra.mxu0 0.0
    %5986 = vmatprep.subr.mxu0 0.0
    %5987 = vmatpush1.msra.mxu0 0.0
    %5988 = vmatprep.subr.mxu0 0.0
    %5989 = vmatpush1.msra.mxu0 0.0
    %5990 = vmatprep.subr.mxu0 0.0
    %5991 = vmatpush1.msra.mxu0 0.0
    %5992 = vmatprep.subr.mxu0 0.0
    %5993 = vmatpush1.msra.mxu0 0.0
    %5994 = vmatprep.subr.mxu0 0.0
    %5995 = vmatpush1.msra.mxu0 0.0
    %5996 = vmatprep.subr.mxu0 0.0
    %5997 = vmatpush1.msra.mxu0 0.0
    %5998 = vmatprep.subr.mxu0 0.0
    %5999 = vmatpush1.msra.mxu0 0.0
    %6000 = vmatprep.subr.mxu0 0.0
    %6001 = vmatpush1.msra.mxu0 0.0
    %6002 = vmatprep.subr.mxu0 0.0
    %6003 = vmatpush1.msra.mxu0 0.0
    %6004 = vmatprep.subr.mxu0 0.0
    %6005 = vmatpush1.msra.mxu0 0.0
    %6006 = vmatprep.subr.mxu0 0.0
    %6007 = vmatpush1.msra.mxu0 0.0
    %6008 = vmatprep.subr.mxu0 0.0
    %6009 = vmatpush1.msra.mxu0 0.0
    %6010 = vmatprep.subr.mxu0 0.0
    %6011 = vmatpush1.msra.mxu0 0.0
    %6012 = vmatprep.subr.mxu0 0.0
    %6013 = vmatpush1.msra.mxu0 0.0
    %6014 = vmatprep.subr.mxu0 0.0
    %6015 = vmatpush1.msra.mxu0 0.0
    %6016 = vmatprep.subr.mxu0 0.0
    %6017 = vmatpush1.msra.mxu0 0.0
    %6018 = vmatprep.subr.mxu0 0.0
    %6019 = vmatpush1.msra.mxu0 0.0
    %6020 = vmatprep.subr.mxu0 0.0
    %6021 = vmatpush1.msra.mxu0 0.0
    %6022 = vmatprep.subr.mxu0 0.0
    %6023 = vmatpush1.msra.mxu0 0.0
    %6024 = vmatprep.subr.mxu0 0.0
    %6025 = vmatpush1.msra.mxu0 0.0
    %6026 = vmatprep.subr.mxu0 0.0
    %6027 = vmatpush1.msra.mxu0 0.0
    %6028 = vmatprep.subr.mxu0 0.0
    %6029 = vmatpush1.msra.mxu0 0.0
    %6030 = vmatprep.mubr.f32.mxu0 0.0
    %6031 = vmatmul.mubr.f32.gmra.mrb[0].mxu0 %v5964
    %v6032 = vpop.f32.mrb[0].mxu0
    %v6033 = vadd.f32 0.0, %v6032
    %v6034 = vpop.f32.mrb[0].mxu0
    %6035 = vdwg.mxu0
    %v6036 = vlaneseq
    %v6037 = vshrl.u32 %v6036, 7
    %v6038 = vsub.s32 0, %v6037
    %v6039 = vrot.slane %v5930, %v6038
    %v6040 = vadd.f32 %v6039, %v6033
    %6041 = vset.pattern.permute.xlu0 1
    %6042 = vperm.xlu0 %6041, %v5928
    %v6043 = vpop.permute.xlu0 %6042
    %6045 = vset.pattern.permute.xlu0 1
    %6046 = vperm.xlu0 %6045, %v5929
    %v6047 = vpop.permute.xlu0 %6046
    %v6049 = vmul.f32 %v6043, %v5695
    %v6050 = vmul.f32 %v6047, %v5696
    %v6051 = vsel %vm53, %v6049, 0.0
    %v6052 = vrot.slane %v6051, 4
    %v6053 = vadd.f32 %v6051, %v6052
    %v6054 = vrot.slane %v6053, 2
    %v6055 = vadd.f32 %v6053, %v6054
    %v6056 = vrot.slane %v6055, 1
    %v6057 = vadd.f32 %v6055, %v6056
    %v6058 = vsel %vm53, %v6050, 0.0
    %v6059 = vrot.slane %v6058, 4
    %v6060 = vadd.f32 %v6058, %v6059
    %v6061 = vrot.slane %v6060, 2
    %v6062 = vadd.f32 %v6060, %v6061
    %v6063 = vrot.slane %v6062, 1
    %v6064 = vadd.f32 %v6062, %v6063
    %v6065 = vld [vmem:[#allocation3 + $0x220] sm:$0xff]
    %v6066 = vld [vmem:[#allocation3 + $0x228] sm:$0xff]
    %v6067 = vld [vmem:[#allocation3 + $0x230] sm:$0xff]
    %v6068 = vld [vmem:[#allocation3 + $0x238] sm:$0xff]
    %v6071 = vsel %vm451, %v6064, %v6057
    %v6072 = vsel %vm53, %v6071, 0
    %6074 = vmatprep.subr.mxu0 0.0
    %6075 = vmatpush1.msra.mxu0 %v6065
    %6076 = vmatprep.subr.mxu0 0.0
    %6077 = vmatpush1.msra.mxu0 %v6066
    %6078 = vmatprep.subr.mxu0 0.0
    %6079 = vmatpush1.msra.mxu0 %v6067
    %6080 = vmatprep.subr.mxu0 0.0
    %6081 = vmatpush1.msra.mxu0 %v6068
    %6082 = vmatprep.subr.mxu0 0.0
    %6083 = vmatpush1.msra.mxu0 0.0
    %6084 = vmatprep.subr.mxu0 0.0
    %6085 = vmatpush1.msra.mxu0 0.0
    %6086 = vmatprep.subr.mxu0 0.0
    %6087 = vmatpush1.msra.mxu0 0.0
    %6088 = vmatprep.subr.mxu0 0.0
    %6089 = vmatpush1.msra.mxu0 0.0
    %6090 = vmatprep.subr.mxu0 0.0
    %6091 = vmatpush1.msra.mxu0 0.0
    %6092 = vmatprep.subr.mxu0 0.0
    %6093 = vmatpush1.msra.mxu0 0.0
    %6094 = vmatprep.subr.mxu0 0.0
    %6095 = vmatpush1.msra.mxu0 0.0
    %6096 = vmatprep.subr.mxu0 0.0
    %6097 = vmatpush1.msra.mxu0 0.0
    %6098 = vmatprep.subr.mxu0 0.0
    %6099 = vmatpush1.msra.mxu0 0.0
    %6100 = vmatprep.subr.mxu0 0.0
    %6101 = vmatpush1.msra.mxu0 0.0
    %6102 = vmatprep.subr.mxu0 0.0
    %6103 = vmatpush1.msra.mxu0 0.0
    %6104 = vmatprep.subr.mxu0 0.0
    %6105 = vmatpush1.msra.mxu0 0.0
    %6106 = vmatprep.subr.mxu0 0.0
    %6107 = vmatpush1.msra.mxu0 0.0
    %6108 = vmatprep.subr.mxu0 0.0
    %6109 = vmatpush1.msra.mxu0 0.0
    %6110 = vmatprep.subr.mxu0 0.0
    %6111 = vmatpush1.msra.mxu0 0.0
    %6112 = vmatprep.subr.mxu0 0.0
    %6113 = vmatpush1.msra.mxu0 0.0
    %6114 = vmatprep.subr.mxu0 0.0
    %6115 = vmatpush1.msra.mxu0 0.0
    %6116 = vmatprep.subr.mxu0 0.0
    %6117 = vmatpush1.msra.mxu0 0.0
    %6118 = vmatprep.subr.mxu0 0.0
    %6119 = vmatpush1.msra.mxu0 0.0
    %6120 = vmatprep.subr.mxu0 0.0
    %6121 = vmatpush1.msra.mxu0 0.0
    %6122 = vmatprep.subr.mxu0 0.0
    %6123 = vmatpush1.msra.mxu0 0.0
    %6124 = vmatprep.subr.mxu0 0.0
    %6125 = vmatpush1.msra.mxu0 0.0
    %6126 = vmatprep.subr.mxu0 0.0
    %6127 = vmatpush1.msra.mxu0 0.0
    %6128 = vmatprep.subr.mxu0 0.0
    %6129 = vmatpush1.msra.mxu0 0.0
    %6130 = vmatprep.subr.mxu0 0.0
    %6131 = vmatpush1.msra.mxu0 0.0
    %6132 = vmatprep.subr.mxu0 0.0
    %6133 = vmatpush1.msra.mxu0 0.0
    %6134 = vmatprep.subr.mxu0 0.0
    %6135 = vmatpush1.msra.mxu0 0.0
    %6136 = vmatprep.subr.mxu0 0.0
    %6137 = vmatpush1.msra.mxu0 0.0
    %6138 = vmatprep.mubr.f32.mxu0 0.0
    %6139 = vmatmul.mubr.f32.gmra.mrb[0].mxu0 %v6072
    %v6140 = vpop.f32.mrb[0].mxu0
    %v6141 = vadd.f32 0.0, %v6140
    %v6142 = vpop.f32.mrb[0].mxu0
    %6143 = vdwg.mxu0
    %v6144 = vadd.f32 %v6040, %v6141
    %6145 = vst.msk [vmem:[%s5] sm:$0xff] %vm53, %v5695
    %6146 = vst.msk [vmem:[%s5 + $0x8] sm:$0xff] %vm53, %v5696
    %vm6147 = vcmask 254976
    %6148 = vst.msk [vmem:[%s5 + $0x10] sm:$0x3] %vm6147, %v6144
    // Predicated region
    $region26: #{lstm_sa_forward.1} parent=1 // pred_check
      _
    $region27: #{lstm_sa_forward.1} parent=1 // pred_check_branch
      %6150 = sbr.rel (0) target = $region29
    $region28: #{lstm_sa_forward.1} parent=1 // pred_region
      _
    $region29: #{lstm_sa_forward.1} parent=1 // pred_fallthru
      _
    // Predicated region
    $region30: #{lstm_sa_forward.1} parent=1 // pred_check
      _
    $region31: #{lstm_sa_forward.1} parent=1 // pred_check_branch
      %6152 = sbr.rel (0) target = $region33
    $region32: #{lstm_sa_forward.1} parent=1 // pred_region
      _
    $region33: #{lstm_sa_forward.1} parent=1 // pred_fallthru
      _
    %6153 = vsyncpa [#allocation4], 1

</llo_original>
